<compile_context>
chip_gen: v6e
topology: v6e:2x2x1
jax: 0.10.0
libtpu: 0.0.40
codegen_flags: <defaults>
</compile_context>

<pallas_src>
import functools

import jax
import jax.numpy as jnp
from jax import lax
from jax.experimental import pallas as pl
from jax.experimental.pallas import tpu as pltpu

D_IN = 384          # path_input_dim
D = 192             # size_dict_path['small'][1]
N_HEADS = 3
HEAD_DIM = D // N_HEADS
N_LAYERS = 2
N_CLASSES = 4
N_TOKENS = 256      # 256 patch tokens per 4k region
LN_EPS = 1e-5       # nn.TransformerEncoderLayer default
NEG_INF = -1e30


# ----------------------------------------------------------------------------
# helpers
# ----------------------------------------------------------------------------
def _layernorm(x, g, b):
    mu = jnp.mean(x, axis=-1, keepdims=True)
    var = jnp.mean(jnp.square(x - mu), axis=-1, keepdims=True)
    return (x - mu) * lax.rsqrt(var + LN_EPS) * g + b


def _const_spec(shape):
    n = len(shape)
    return pl.BlockSpec(shape, lambda i, _n=n: (0,) * _n)


def _vmem_capacity_bytes():
    # Trace-time query; conservative (v7x = 64 MiB / TC) fallback.
    try:
        return int(pltpu.get_tpu_info().vmem_capacity_bytes)
    except Exception:
        return 64 * 1024 * 1024


def _plan_tiles(m, vmem_cap_bytes):
    """Pick (M_pad, row-tile) based on the VMEM budget of this generation."""
    # bf16 x tile = tm * 256 * 384 * 2 B; double-buffered by the pipeline.
    tm_target = 64 if vmem_cap_bytes >= (96 << 20) else 16   # v5e/v6e vs v7x
    m_pad = max(16, -(-m // 16) * 16)                        # multiple of 16
    tm = tm_target if (m_pad >= tm_target and m_pad % tm_target == 0) else 16
    return m_pad, tm


# ----------------------------------------------------------------------------
# fused kernel
# ----------------------------------------------------------------------------
def _fused_kernel(
    x_ref,            # [tm*256, 384] bf16 row tile (tokens flattened)
    pool_ref,         # [tm, tm*256] bf16 block-diagonal mean-pool matrix
    w_embed_ref, b_embed_ref,   # fused (embed stand-in @ global_phi): [384,D],[1,D]
    attn_w_ref, attn_b_ref,     # [L*4, D, D] / [L*4, 1, D]  (Wq,Wk,Wv,Wo per layer)
    ffn_w_ref, ffn_b_ref,       # [L*2, D, D] / [L*2, 1, D]
    ln_g_ref, ln_b_ref,         # [L*2, 1, D]
    wab_ref, bab_ref,           # Attn_Net_Gated a/b: [2, D, D] / [2, 1, D]
    wc_ref, bc_ref,             # [D, 1] / [1, 1]
    rho_w_ref, rho_b_ref,       # global_rho: [D, D] / [1, D]
    cls_w_ref, cls_b_ref,       # classifier: [D, C] / [1, C]
    logits_ref,                 # out [1, C]
    h_scratch,                  # VMEM [M_pad, D] f32, resident across grid
    *, m_valid,                 # static: number of real (unpadded) regions
):
    i = pl.program_id(0)
    tm = pool_ref.shape[0]
    m_pad = h_scratch.shape[0]

    # --- stage 1 (per row tile): token mean-pool + fused embed/global_phi ----
    # TODO(synk): vit4k_xs (HIPT's pretrained Local ViT-4K) is an external
    # module not in the reference file; replaced by a deterministic mean-pool
    # over the 256 patch tokens + a 384->192 linear (fused with global_phi).
    pooled = jnp.dot(pool_ref[...], x_ref[...],
                     preferred_element_type=jnp.float32)                 # [tm, 384]
    h = jnp.dot(pooled, w_embed_ref[...],
                preferred_element_type=jnp.float32) + b_embed_ref[...]   # [tm, D]
    h = jnp.maximum(h, 0.0)                                              # global_phi ReLU
    h_scratch[pl.ds(pl.multiple_of(i * tm, tm), tm), :] = h

    # --- stage 2 (last grid step): transformer + pooling + classifier --------
    @pl.when(i == pl.num_programs(0) - 1)
    def _():
        scale = 1.0 / (HEAD_DIM ** 0.5)
        h0 = h_scratch[...]                                              # [M_pad, D]

        if m_valid < m_pad:
            key_bias = jnp.where(
                lax.broadcasted_iota(jnp.int32, (1, m_pad), 1) < m_valid,
                0.0, NEG_INF).astype(jnp.float32)                        # [1, M_pad]
        else:
            key_bias = None

        def layer_body(l, h_all):     # post-norm nn.TransformerEncoderLayer
            # full-width Q/K/V projections (MXU-friendly 192-wide outputs)
            q = jnp.dot(h_all, attn_w_ref[4 * l + 0],
                        preferred_element_type=jnp.float32) + attn_b_ref[4 * l + 0]
            k = jnp.dot(h_all, attn_w_ref[4 * l + 1],
                        preferred_element_type=jnp.float32) + attn_b_ref[4 * l + 1]
            v = jnp.dot(h_all, attn_w_ref[4 * l + 2],
                        preferred_element_type=jnp.float32) + attn_b_ref[4 * l + 2]

            heads = []
            for hh in range(N_HEADS):            # per-head [M,M] scores only
                sl = slice(hh * HEAD_DIM, (hh + 1) * HEAD_DIM)
                s = lax.dot_general(q[:, sl], k[:, sl], (((1,), (1,)), ((), ())),
                                    preferred_element_type=jnp.float32) * scale
                if key_bias is not None:
                    s = s + key_bias             # mask padded keys
                m = jnp.max(s, axis=-1, keepdims=True)
                p = jnp.exp(s - m)
                head = jnp.dot(p, v[:, sl], preferred_element_type=jnp.float32)
                denom = jnp.sum(p, axis=-1, keepdims=True)
                # deferred softmax normalization (EUP reciprocal, [M,64] scale)
                heads.append(head * pl.reciprocal(denom, approx=True))

            attn = jnp.concatenate(heads, axis=-1)                       # [M, D]
            attn = jnp.dot(attn, attn_w_ref[4 * l + 3],
                           preferred_element_type=jnp.float32) + attn_b_ref[4 * l + 3]
            h_all = _layernorm(h_all + attn, ln_g_ref[2 * l + 0], ln_b_ref[2 * l + 0])

            ff = jnp.maximum(
                jnp.dot(h_all, ffn_w_ref[2 * l + 0],
                        preferred_element_type=jnp.float32) + ffn_b_ref[2 * l + 0],
                0.0)
            ff = jnp.dot(ff, ffn_w_ref[2 * l + 1],
                         preferred_element_type=jnp.float32) + ffn_b_ref[2 * l + 1]
            return _layernorm(h_all + ff, ln_g_ref[2 * l + 1], ln_b_ref[2 * l + 1])

        h_all = lax.fori_loop(0, N_LAYERS, layer_body, h0)

        # Attn_Net_Gated -> softmax over region tokens -> weighted pool
        a = jnp.tanh(jnp.dot(h_all, wab_ref[0],
                             preferred_element_type=jnp.float32) + bab_ref[0])
        b = jax.nn.sigmoid(jnp.dot(h_all, wab_ref[1],
                                   preferred_element_type=jnp.float32) + bab_ref[1])
        A = jnp.dot(a * b, wc_ref[...],
                    preferred_element_type=jnp.float32) + bc_ref[...]    # [M, 1]
        if m_valid < m_pad:
            A = jnp.where(
                lax.broadcasted_iota(jnp.int32, (m_pad, 1), 0) < m_valid, A, NEG_INF)
        A = A - jnp.max(A, axis=0, keepdims=True)
        e = jnp.exp(A)
        w = e * pl.reciprocal(jnp.sum(e, axis=0, keepdims=True), approx=True)
        # h_path = softmax(A)^T @ h_all on the MXU (contract over M)
        h_path = lax.dot_general(w, h_all, (((0,), (0,)), ((), ())),
                                 preferred_element_type=jnp.float32)     # [1, D]

        h_wsi = jnp.maximum(
            jnp.dot(h_path, rho_w_ref[...],
                    preferred_element_type=jnp.float32) + rho_b_ref[...],
            0.0)                                                         # global_rho
        logits_ref[...] = (
            jnp.dot(h_wsi, cls_w_ref[...],
                    preferred_element_type=jnp.float32) + cls_b_ref[...])


# ----------------------------------------------------------------------------
# parameters (torch [out, in] conventions) + one-time kernel repack
# ----------------------------------------------------------------------------
def init_params(key):
    keys = jax.random.split(key, 64)
    kit = iter(keys)

    def w(shape, scale=0.02):
        return scale * jax.random.normal(next(kit), shape, jnp.float32)

    def b(shape):
        return 0.01 * jax.random.normal(next(kit), shape, jnp.float32)

    params = {
        'embed_w': w((D, D_IN)), 'embed_b': b((D,)),           # local_vit stand-in
        'phi_w': w((D, D)), 'phi_b': b((D,)),                  # global_phi
        'attn_a_w': w((D, D)), 'attn_a_b': b((D,)),            # Attn_Net_Gated a
        'attn_b_w': w((D, D)), 'attn_b_b': b((D,)),            # Attn_Net_Gated b
        'attn_c_w': w((1, D)), 'attn_c_b': b((1,)),            # Attn_Net_Gated c
        'rho_w': w((D, D)), 'rho_b': b((D,)),                  # global_rho
        'cls_w': w((N_CLASSES, D)), 'cls_b': b((N_CLASSES,)),  # classifier
        'layers': [],
    }
    for _ in range(N_LAYERS):                                  # 2 encoder layers
        params['layers'].append({
            'in_proj_w': w((3 * D, D)), 'in_proj_b': b((3 * D,)),
            'out_proj_w': w((D, D)), 'out_proj_b': b((D,)),
            'ln1_w': jnp.ones((D,), jnp.float32), 'ln1_b': jnp.zeros((D,), jnp.float32),
            'lin1_w': w((D, D)), 'lin1_b': b((D,)),
            'lin2_w': w((D, D)), 'lin2_b': b((D,)),
            'ln2_w': jnp.ones((D,), jnp.float32), 'ln2_b': jnp.zeros((D,), jnp.float32),
        })
    return params


def prepare_params(p):
    """One-time repack: transpose, fuse embed+phi, stack per-layer tensors."""
    # embed (mean-pool linear) and global_phi linear fuse exactly (no nonlinearity
    # in between):  x @ We^T + be  ->  @ Wphi^T + bphi
    w_embed = p['embed_w'].T @ p['phi_w'].T                               # [384, D]
    b_embed = p['embed_b'][None, :] @ p['phi_w'].T + p['phi_b'][None, :]  # [1, D]

    attn_w, attn_b, ffn_w, ffn_b, ln_g, ln_b = [], [], [], [], [], []
    for lyr in p['layers']:
        ipw, ipb = lyr['in_proj_w'], lyr['in_proj_b']
        attn_w += [ipw[0:D].T, ipw[D:2 * D].T, ipw[2 * D:3 * D].T, lyr['out_proj_w'].T]
        attn_b += [ipb[0:D][None, :], ipb[D:2 * D][None, :],
                   ipb[2 * D:3 * D][None, :], lyr['out_proj_b'][None, :]]
        ffn_w += [lyr['lin1_w'].T, lyr['lin2_w'].T]
        ffn_b += [lyr['lin1_b'][None, :], lyr['lin2_b'][None, :]]
        ln_g += [lyr['ln1_w'][None, :], lyr['ln2_w'][None, :]]
        ln_b += [lyr['ln1_b'][None, :], lyr['ln2_b'][None, :]]

    return {
        'w_embed': w_embed, 'b_embed': b_embed,
        'attn_w': jnp.stack(attn_w), 'attn_b': jnp.stack(attn_b),   # [L*4,...]
        'ffn_w': jnp.stack(ffn_w), 'ffn_b': jnp.stack(ffn_b),       # [L*2,...]
        'ln_g': jnp.stack(ln_g), 'ln_b': jnp.stack(ln_b),           # [L*2,1,D]
        'wab': jnp.stack([p['attn_a_w'].T, p['attn_b_w'].T]),       # [2, D, D]
        'bab': jnp.stack([p['attn_a_b'][None, :], p['attn_b_b'][None, :]]),
        'wc': p['attn_c_w'].T, 'bc': p['attn_c_b'][None, :],
        'rho_w': p['rho_w'].T, 'rho_b': p['rho_b'][None, :],
        'cls_w': p['cls_w'].T, 'cls_b': p['cls_b'][None, :],
    }


# ----------------------------------------------------------------------------
# forward: one fused pallas_call, tiny softmax/argmax epilogue in JAX
# ----------------------------------------------------------------------------
@jax.jit
def hipt_lgp_fc_forward(x_256, kp):
    # torch: x_256.unfold(1,16,16).transpose(1,2) is an identity re-arrangement
    # w.r.t. the mean-pool stand-in, so x_256 [M, 256, 384] is used directly.
    M, T, Din = x_256.shape
    vmem_cap = _vmem_capacity_bytes()
    m_pad, tm = _plan_tiles(M, vmem_cap)

    # bf16 streaming of the only large input; pad M and flatten token axis.
    x = x_256.astype(jnp.bfloat16)
    if m_pad != M:
        x = jnp.pad(x, ((0, m_pad - M), (0, 0), (0, 0)))
    x = x.reshape(m_pad * T, Din)

    # block-diagonal mean-pool matrix: pool[r, r*T + t] = 1/T  (MXU pooling)
    pool = (jnp.repeat(jnp.eye(tm, dtype=jnp.float32), T, axis=1) / T
            ).astype(jnp.bfloat16)

    weight_args = (
        kp['w_embed'], kp['b_embed'],
        kp['attn_w'], kp['attn_b'],
        kp['ffn_w'], kp['ffn_b'],
        kp['ln_g'], kp['ln_b'],
        kp['wab'], kp['bab'], kp['wc'], kp['bc'],
        kp['rho_w'], kp['rho_b'], kp['cls_w'], kp['cls_b'],
    )
    in_specs = [pl.BlockSpec((tm * T, Din), lambda i: (i, 0)),
                _const_spec(pool.shape)]
    in_specs += [_const_spec(a.shape) for a in weight_args]

    # programmatic VMEM budget (tile double-buffer + weights + scratch + tail)
    weight_bytes = sum(int(a.size) * a.dtype.itemsize for a in weight_args)
    need = (2 * tm * T * Din * 2                 # bf16 x tile, double-buffered
            + 2 * tm * tm * T * 2                # pooling matrix
            + 2 * weight_bytes                   # double-buffered weights
            + m_pad * D * 4                      # h_scratch
            + 4 * m_pad * m_pad * 4              # [M,M] score/prob headroom
            + 16 * m_pad * D * 4                 # q/k/v/ffn intermediates
            + (8 << 20))                         # margin
    vmem_limit = int(min(max(need, 32 << 20), int(vmem_cap * 0.75)))

    kernel = functools.partial(_fused_kernel, m_valid=M)
    logits = pl.pallas_call(
        kernel,
        out_shape=jax.ShapeDtypeStruct((1, N_CLASSES), jnp.float32),
        grid=(m_pad // tm,),
        in_specs=in_specs,
        out_specs=pl.BlockSpec((1, N_CLASSES), lambda i: (0, 0)),
        scratch_shapes=[pltpu.VMEM((m_pad, D), jnp.float32)],
        compiler_params=pltpu.CompilerParams(
            dimension_semantics=("arbitrary",),   # tail depends on all row tiles
            vmem_limit_bytes=vmem_limit),
    )(x, pool, *weight_args)

    y_prob = jax.nn.softmax(logits, axis=1)
    y_hat = jnp.argmax(logits, axis=1)[:, None]   # torch.topk(logits, 1, dim=1)[1]
    return logits, y_prob, y_hat, None, None


# ----------------------------------------------------------------------------
if __name__ == "__main__":
    key = jax.random.PRNGKey(0)
    pkey, xkey = jax.random.split(key)
    params = init_params(pkey)
    kparams = prepare_params(params)   # one-time weight repack / fusion / stacking

    M = 12  # number of 4k regions (bag size); exercises the padding/masking path
    # x_256: [M, 256, 384] — M regions, 256 patch tokens each, 384-dim features
    x_256 = jax.random.normal(xkey, (M, N_TOKENS, D_IN), jnp.float32)

    logits, y_prob, y_hat, _, _ = hipt_lgp_fc_forward(x_256, kparams)
    jax.block_until_ready((logits, y_prob, y_hat))

    assert logits.shape == (1, N_CLASSES)
    assert y_prob.shape == (1, N_CLASSES)
    assert y_hat.shape == (1, 1)
    print("KERNEL_OK")
</pallas_src>

<mosaic_0001>
module attributes {stable_mosaic.version = 11 : i64} {
  func.func @_fused_kernel(%arg0: i32, %arg1: memref<4096x384xbf16, #tpu.memory_space<vmem>>, %arg2: memref<16x4096xbf16, #tpu.memory_space<vmem>>, %arg3: memref<384x192xf32, #tpu.memory_space<vmem>>, %arg4: memref<1x192xf32, #tpu.memory_space<vmem>>, %arg5: memref<8x192x192xf32, #tpu.memory_space<vmem>>, %arg6: memref<8x1x192xf32, #tpu.memory_space<vmem>>, %arg7: memref<4x192x192xf32, #tpu.memory_space<vmem>>, %arg8: memref<4x1x192xf32, #tpu.memory_space<vmem>>, %arg9: memref<4x1x192xf32, #tpu.memory_space<vmem>>, %arg10: memref<4x1x192xf32, #tpu.memory_space<vmem>>, %arg11: memref<2x192x192xf32, #tpu.memory_space<vmem>>, %arg12: memref<2x1x192xf32, #tpu.memory_space<vmem>>, %arg13: memref<192x1xf32, #tpu.memory_space<vmem>>, %arg14: memref<1x1xf32, #tpu.memory_space<vmem>>, %arg15: memref<192x192xf32, #tpu.memory_space<vmem>>, %arg16: memref<1x192xf32, #tpu.memory_space<vmem>>, %arg17: memref<192x4xf32, #tpu.memory_space<vmem>>, %arg18: memref<1x4xf32, #tpu.memory_space<vmem>>, %arg19: memref<1x4xf32, #tpu.memory_space<vmem>>, %arg20: memref<16x192xf32, #tpu.memory_space<vmem>>) attributes {dimension_semantics = [#tpu.dimension_semantics<arbitrary>], iteration_bounds = array<i64: 1>, scalar_prefetch = 0 : i64, scratch_operands = 1 : i64, tpu.core_type = #tpu.core_type<tc>, window_params = [{transform_indices = @transform_0, window_bounds = array<i64: 4096, 384>}, {pipeline_mode = #tpu.pipeline_mode<synchronous>, transform_indices = @transform_1, window_bounds = array<i64: 16, 4096>}, {pipeline_mode = #tpu.pipeline_mode<synchronous>, transform_indices = @transform_2, window_bounds = array<i64: 384, 192>}, {pipeline_mode = #tpu.pipeline_mode<synchronous>, transform_indices = @transform_3, window_bounds = array<i64: 1, 192>}, {pipeline_mode = #tpu.pipeline_mode<synchronous>, transform_indices = @transform_4, window_bounds = array<i64: 8, 192, 192>}, {pipeline_mode = #tpu.pipeline_mode<synchronous>, transform_indices = @transform_5, window_bounds = array<i64: 8, 1, 192>}, {pipeline_mode = #tpu.pipeline_mode<synchronous>, transform_indices = @transform_6, window_bounds = array<i64: 4, 192, 192>}, {pipeline_mode = #tpu.pipeline_mode<synchronous>, transform_indices = @transform_7, window_bounds = array<i64: 4, 1, 192>}, {pipeline_mode = #tpu.pipeline_mode<synchronous>, transform_indices = @transform_8, window_bounds = array<i64: 4, 1, 192>}, {pipeline_mode = #tpu.pipeline_mode<synchronous>, transform_indices = @transform_9, window_bounds = array<i64: 4, 1, 192>}, {pipeline_mode = #tpu.pipeline_mode<synchronous>, transform_indices = @transform_10, window_bounds = array<i64: 2, 192, 192>}, {pipeline_mode = #tpu.pipeline_mode<synchronous>, transform_indices = @transform_11, window_bounds = array<i64: 2, 1, 192>}, {pipeline_mode = #tpu.pipeline_mode<synchronous>, transform_indices = @transform_12, window_bounds = array<i64: 192, 1>}, {pipeline_mode = #tpu.pipeline_mode<synchronous>, transform_indices = @transform_13, window_bounds = array<i64: 1, 1>}, {pipeline_mode = #tpu.pipeline_mode<synchronous>, transform_indices = @transform_14, window_bounds = array<i64: 192, 192>}, {pipeline_mode = #tpu.pipeline_mode<synchronous>, transform_indices = @transform_15, window_bounds = array<i64: 1, 192>}, {pipeline_mode = #tpu.pipeline_mode<synchronous>, transform_indices = @transform_16, window_bounds = array<i64: 192, 4>}, {pipeline_mode = #tpu.pipeline_mode<synchronous>, transform_indices = @transform_17, window_bounds = array<i64: 1, 4>}, {pipeline_mode = #tpu.pipeline_mode<synchronous>, transform_indices = @transform_18, window_bounds = array<i64: 1, 4>}]} {
    %c0 = arith.constant 0 : index
    %c0_0 = arith.constant 0 : index
    %0 = vector.load %arg2[%c0, %c0_0] : memref<16x4096xbf16, #tpu.memory_space<vmem>>, vector<16x4096xbf16>
    %c0_1 = arith.constant 0 : index
    %c0_2 = arith.constant 0 : index
    %1 = vector.load %arg1[%c0_1, %c0_2] : memref<4096x384xbf16, #tpu.memory_space<vmem>>, vector<4096x384xbf16>
    %cst = arith.constant dense<0.000000e+00> : vector<16x384xf32>
    %2 = tpu.matmul %0, %1, %cst {dimension_numbers = #tpu.dot_dimension_numbers<[1], [0], [0], [1], [0, 0, 1, 1], [], []>} : vector<16x4096xbf16>, vector<4096x384xbf16>, vector<16x384xf32> -> vector<16x384xf32>
    %c0_3 = arith.constant 0 : index
    %c0_4 = arith.constant 0 : index
    %3 = vector.load %arg3[%c0_3, %c0_4] : memref<384x192xf32, #tpu.memory_space<vmem>>, vector<384x192xf32>
    %cst_5 = arith.constant dense<0.000000e+00> : vector<16x192xf32>
    %4 = tpu.matmul %2, %3, %cst_5 {dimension_numbers = #tpu.dot_dimension_numbers<[1], [0], [0], [1], [0, 0, 1, 1], [], []>} : vector<16x384xf32>, vector<384x192xf32>, vector<16x192xf32> -> vector<16x192xf32>
    %c0_6 = arith.constant 0 : index
    %c0_7 = arith.constant 0 : index
    %5 = vector.load %arg4[%c0_6, %c0_7] : memref<1x192xf32, #tpu.memory_space<vmem>>, vector<1x192xf32>
    %6 = vector.broadcast %5 : vector<1x192xf32> to vector<16x192xf32>
    %7 = arith.addf %4, %6 : vector<16x192xf32>
    %cst_8 = arith.constant 0.000000e+00 : f32
    %8 = vector.broadcast %cst_8 : f32 to vector<16x192xf32>
    %9 = arith.maximumf %7, %8 : vector<16x192xf32>
    %c16_i32 = arith.constant 16 : i32
    %10 = arith.muli %arg0, %c16_i32 : i32
    %11 = tpu.assume_multiple %10, 16 : i32
    %12 = arith.index_cast %11 : i32 to index
    %c0_9 = arith.constant 0 : index
    %13 = vector.load %arg20[%12, %c0_9] : memref<16x192xf32, #tpu.memory_space<vmem>>, vector<16x192xf32>
    tpu.vector_store %arg20[%12, %c0_9], %9 {strides = array<i32>} : memref<16x192xf32, #tpu.memory_space<vmem>>, vector<16x192xf32>,
    %c0_i32 = arith.constant 0 : i32
    %14 = arith.cmpi eq, %arg0, %c0_i32 : i32
    %15 = arith.extui %14 : i1 to i32
    %c0_i32_10 = arith.constant 0 : i32
    %16 = arith.cmpi ne, %15, %c0_i32_10 : i32
    scf.if %16 {
      %c0_11 = arith.constant 0 : index
      %c0_12 = arith.constant 0 : index
      %17 = vector.load %arg20[%c0_11, %c0_12] : memref<16x192xf32, #tpu.memory_space<vmem>>, vector<16x192xf32>
      %18 = tpu.iota {dimensions = array<i32: 1>} : vector<1x16xi32>
      %c12_i32 = arith.constant 12 : i32
      %19 = vector.broadcast %c12_i32 : i32 to vector<1x16xi32>
      %20 = arith.cmpi slt, %18, %19 : vector<1x16xi32>
      %cst_13 = arith.constant 0.000000e+00 : f32
      %cst_14 = arith.constant -1.000000e+30 : f32
      %21 = vector.broadcast %cst_13 : f32 to vector<1x16xf32>
      %22 = vector.broadcast %cst_14 : f32 to vector<1x16xf32>
      %23 = arith.select %20, %21, %22 : vector<1x16xi1>, vector<1x16xf32>
      %c0_i32_15 = arith.constant 0 : i32
      %c2_i32 = arith.constant 2 : i32
      %24 = arith.addi %c0_i32_15, %c2_i32 : i32
      %c1_i32 = arith.constant 1 : i32
      %25 = scf.for %arg21 = %c0_i32_15 to %24 step %c1_i32 iter_args(%arg22 = %17) -> (vector<16x192xf32>)  : i32 {
        %c4_i32 = arith.constant 4 : i32
        %79 = arith.muli %c4_i32, %arg21 : i32
        %c0_i32_54 = arith.constant 0 : i32
        %80 = arith.addi %79, %c0_i32_54 : i32
        %81 = arith.index_cast %80 : i32 to index
        %c0_55 = arith.constant 0 : index
        %c0_56 = arith.constant 0 : index
        %82 = vector.load %arg5[%81, %c0_55, %c0_56] : memref<8x192x192xf32, #tpu.memory_space<vmem>>, vector<1x192x192xf32>
        %83 = vector.shape_cast %82 : vector<1x192x192xf32> to vector<192x192xf32>
        %cst_57 = arith.constant dense<0.000000e+00> : vector<16x192xf32>
        %84 = tpu.matmul %arg22, %83, %cst_57 {dimension_numbers = #tpu.dot_dimension_numbers<[1], [0], [0], [1], [0, 0, 1, 1], [], []>} : vector<16x192xf32>, vector<192x192xf32>, vector<16x192xf32> -> vector<16x192xf32>
        %c4_i32_58 = arith.constant 4 : i32
        %85 = arith.muli %c4_i32_58, %arg21 : i32
        %c0_i32_59 = arith.constant 0 : i32
        %86 = arith.addi %85, %c0_i32_59 : i32
        %87 = arith.index_cast %86 : i32 to index
        %c0_60 = arith.constant 0 : index
        %c0_61 = arith.constant 0 : index
        %88 = vector.load %arg6[%87, %c0_60, %c0_61] : memref<8x1x192xf32, #tpu.memory_space<vmem>>, vector<1x1x192xf32>
        %89 = vector.shape_cast %88 : vector<1x1x192xf32> to vector<1x192xf32>
        %90 = vector.broadcast %89 : vector<1x192xf32> to vector<16x192xf32>
        %91 = arith.addf %84, %90 : vector<16x192xf32>
        %c4_i32_62 = arith.constant 4 : i32
        %92 = arith.muli %c4_i32_62, %arg21 : i32
        %c1_i32_63 = arith.constant 1 : i32
        %93 = arith.addi %92, %c1_i32_63 : i32
        %94 = arith.index_cast %93 : i32 to index
        %c0_64 = arith.constant 0 : index
        %c0_65 = arith.constant 0 : index
        %95 = vector.load %arg5[%94, %c0_64, %c0_65] : memref<8x192x192xf32, #tpu.memory_space<vmem>>, vector<1x192x192xf32>
        %96 = vector.shape_cast %95 : vector<1x192x192xf32> to vector<192x192xf32>
        %cst_66 = arith.constant dense<0.000000e+00> : vector<16x192xf32>
        %97 = tpu.matmul %arg22, %96, %cst_66 {dimension_numbers = #tpu.dot_dimension_numbers<[1], [0], [0], [1], [0, 0, 1, 1], [], []>} : vector<16x192xf32>, vector<192x192xf32>, vector<16x192xf32> -> vector<16x192xf32>
        %c4_i32_67 = arith.constant 4 : i32
        %98 = arith.muli %c4_i32_67, %arg21 : i32
        %c1_i32_68 = arith.constant 1 : i32
        %99 = arith.addi %98, %c1_i32_68 : i32
        %100 = arith.index_cast %99 : i32 to index
        %c0_69 = arith.constant 0 : index
        %c0_70 = arith.constant 0 : index
        %101 = vector.load %arg6[%100, %c0_69, %c0_70] : memref<8x1x192xf32, #tpu.memory_space<vmem>>, vector<1x1x192xf32>
        %102 = vector.shape_cast %101 : vector<1x1x192xf32> to vector<1x192xf32>
        %103 = vector.broadcast %102 : vector<1x192xf32> to vector<16x192xf32>
        %104 = arith.addf %97, %103 : vector<16x192xf32>
        %c4_i32_71 = arith.constant 4 : i32
        %105 = arith.muli %c4_i32_71, %arg21 : i32
        %c2_i32_72 = arith.constant 2 : i32
        %106 = arith.addi %105, %c2_i32_72 : i32
        %107 = arith.index_cast %106 : i32 to index
        %c0_73 = arith.constant 0 : index
        %c0_74 = arith.constant 0 : index
        %108 = vector.load %arg5[%107, %c0_73, %c0_74] : memref<8x192x192xf32, #tpu.memory_space<vmem>>, vector<1x192x192xf32>
        %109 = vector.shape_cast %108 : vector<1x192x192xf32> to vector<192x192xf32>
        %cst_75 = arith.constant dense<0.000000e+00> : vector<16x192xf32>
        %110 = tpu.matmul %arg22, %109, %cst_75 {dimension_numbers = #tpu.dot_dimension_numbers<[1], [0], [0], [1], [0, 0, 1, 1], [], []>} : vector<16x192xf32>, vector<192x192xf32>, vector<16x192xf32> -> vector<16x192xf32>
        %c4_i32_76 = arith.constant 4 : i32
        %111 = arith.muli %c4_i32_76, %arg21 : i32
        %c2_i32_77 = arith.constant 2 : i32
        %112 = arith.addi %111, %c2_i32_77 : i32
        %113 = arith.index_cast %112 : i32 to index
        %c0_78 = arith.constant 0 : index
        %c0_79 = arith.constant 0 : index
        %114 = vector.load %arg6[%113, %c0_78, %c0_79] : memref<8x1x192xf32, #tpu.memory_space<vmem>>, vector<1x1x192xf32>
        %115 = vector.shape_cast %114 : vector<1x1x192xf32> to vector<1x192xf32>
        %116 = vector.broadcast %115 : vector<1x192xf32> to vector<16x192xf32>
        %117 = arith.addf %110, %116 : vector<16x192xf32>
        %118 = vector.extract_strided_slice %91 {offsets = [0, 0], sizes = [16, 64], strides = [1, 1]} : vector<16x192xf32> to vector<16x64xf32>
        %119 = vector.extract_strided_slice %104 {offsets = [0, 0], sizes = [16, 64], strides = [1, 1]} : vector<16x192xf32> to vector<16x64xf32>
        %cst_80 = arith.constant dense<0.000000e+00> : vector<16x16xf32>
        %120 = tpu.matmul %118, %119, %cst_80 {dimension_numbers = #tpu.dot_dimension_numbers<[1], [1], [0], [0], [0, 0, 1, 0], [], []>} : vector<16x64xf32>, vector<16x64xf32>, vector<16x16xf32> -> vector<16x16xf32>
        %cst_81 = arith.constant 1.250000e-01 : f32
        %121 = vector.broadcast %cst_81 : f32 to vector<16x16xf32>
        %122 = arith.mulf %120, %121 : vector<16x16xf32>
        %123 = vector.broadcast %23 : vector<1x16xf32> to vector<16x16xf32>
        %124 = arith.addf %122, %123 : vector<16x16xf32>
        %cst_82 = arith.constant dense<0xFF800000> : vector<16xf32>
        %125 = vector.multi_reduction <maximumf>, %124, %cst_82 [1] : vector<16x16xf32> to vector<16xf32>
        %126 = vector.shape_cast %125 : vector<16xf32> to vector<16x1xf32>
        %127 = vector.broadcast %126 : vector<16x1xf32> to vector<16x16xf32>
        %128 = arith.subf %124, %127 : vector<16x16xf32>
        %129 = math.exp %128 : vector<16x16xf32>
        %130 = vector.extract_strided_slice %117 {offsets = [0, 0], sizes = [16, 64], strides = [1, 1]} : vector<16x192xf32> to vector<16x64xf32>
        %cst_83 = arith.constant dense<0.000000e+00> : vector<16x64xf32>
        %131 = tpu.matmul %129, %130, %cst_83 {dimension_numbers = #tpu.dot_dimension_numbers<[1], [0], [0], [1], [0, 0, 1, 1], [], []>} : vector<16x16xf32>, vector<16x64xf32>, vector<16x64xf32> -> vector<16x64xf32>
        %cst_84 = arith.constant dense<0.000000e+00> : vector<16xf32>
        %132 = vector.multi_reduction <add>, %129, %cst_84 [1] : vector<16x16xf32> to vector<16xf32>
        %133 = vector.shape_cast %132 : vector<16xf32> to vector<16x1xf32>
        %134 = tpu.reciprocal %133 {approx = true} : vector<16x1xf32> -> vector<16x1xf32>
        %135 = vector.broadcast %134 : vector<16x1xf32> to vector<16x64xf32>
        %136 = arith.mulf %131, %135 : vector<16x64xf32>
        %137 = vector.extract_strided_slice %91 {offsets = [0, 64], sizes = [16, 64], strides = [1, 1]} : vector<16x192xf32> to vector<16x64xf32>
        %138 = vector.extract_strided_slice %104 {offsets = [0, 64], sizes = [16, 64], strides = [1, 1]} : vector<16x192xf32> to vector<16x64xf32>
        %cst_85 = arith.constant dense<0.000000e+00> : vector<16x16xf32>
        %139 = tpu.matmul %137, %138, %cst_85 {dimension_numbers = #tpu.dot_dimension_numbers<[1], [1], [0], [0], [0, 0, 1, 0], [], []>} : vector<16x64xf32>, vector<16x64xf32>, vector<16x16xf32> -> vector<16x16xf32>
        %cst_86 = arith.constant 1.250000e-01 : f32
        %140 = vector.broadcast %cst_86 : f32 to vector<16x16xf32>
        %141 = arith.mulf %139, %140 : vector<16x16xf32>
        %142 = vector.broadcast %23 : vector<1x16xf32> to vector<16x16xf32>
        %143 = arith.addf %141, %142 : vector<16x16xf32>
        %cst_87 = arith.constant dense<0xFF800000> : vector<16xf32>
        %144 = vector.multi_reduction <maximumf>, %143, %cst_87 [1] : vector<16x16xf32> to vector<16xf32>
        %145 = vector.shape_cast %144 : vector<16xf32> to vector<16x1xf32>
        %146 = vector.broadcast %145 : vector<16x1xf32> to vector<16x16xf32>
        %147 = arith.subf %143, %146 : vector<16x16xf32>
        %148 = math.exp %147 : vector<16x16xf32>
        %149 = vector.extract_strided_slice %117 {offsets = [0, 64], sizes = [16, 64], strides = [1, 1]} : vector<16x192xf32> to vector<16x64xf32>
        %cst_88 = arith.constant dense<0.000000e+00> : vector<16x64xf32>
        %150 = tpu.matmul %148, %149, %cst_88 {dimension_numbers = #tpu.dot_dimension_numbers<[1], [0], [0], [1], [0, 0, 1, 1], [], []>} : vector<16x16xf32>, vector<16x64xf32>, vector<16x64xf32> -> vector<16x64xf32>
        %cst_89 = arith.constant dense<0.000000e+00> : vector<16xf32>
        %151 = vector.multi_reduction <add>, %148, %cst_89 [1] : vector<16x16xf32> to vector<16xf32>
        %152 = vector.shape_cast %151 : vector<16xf32> to vector<16x1xf32>
        %153 = tpu.reciprocal %152 {approx = true} : vector<16x1xf32> -> vector<16x1xf32>
        %154 = vector.broadcast %153 : vector<16x1xf32> to vector<16x64xf32>
        %155 = arith.mulf %150, %154 : vector<16x64xf32>
        %156 = vector.extract_strided_slice %91 {offsets = [0, 128], sizes = [16, 64], strides = [1, 1]} : vector<16x192xf32> to vector<16x64xf32>
        %157 = vector.extract_strided_slice %104 {offsets = [0, 128], sizes = [16, 64], strides = [1, 1]} : vector<16x192xf32> to vector<16x64xf32>
        %cst_90 = arith.constant dense<0.000000e+00> : vector<16x16xf32>
        %158 = tpu.matmul %156, %157, %cst_90 {dimension_numbers = #tpu.dot_dimension_numbers<[1], [1], [0], [0], [0, 0, 1, 0], [], []>} : vector<16x64xf32>, vector<16x64xf32>, vector<16x16xf32> -> vector<16x16xf32>
        %cst_91 = arith.constant 1.250000e-01 : f32
        %159 = vector.broadcast %cst_91 : f32 to vector<16x16xf32>
        %160 = arith.mulf %158, %159 : vector<16x16xf32>
        %161 = vector.broadcast %23 : vector<1x16xf32> to vector<16x16xf32>
        %162 = arith.addf %160, %161 : vector<16x16xf32>
        %cst_92 = arith.constant dense<0xFF800000> : vector<16xf32>
        %163 = vector.multi_reduction <maximumf>, %162, %cst_92 [1] : vector<16x16xf32> to vector<16xf32>
        %164 = vector.shape_cast %163 : vector<16xf32> to vector<16x1xf32>
        %165 = vector.broadcast %164 : vector<16x1xf32> to vector<16x16xf32>
        %166 = arith.subf %162, %165 : vector<16x16xf32>
        %167 = math.exp %166 : vector<16x16xf32>
        %168 = vector.extract_strided_slice %117 {offsets = [0, 128], sizes = [16, 64], strides = [1, 1]} : vector<16x192xf32> to vector<16x64xf32>
        %cst_93 = arith.constant dense<0.000000e+00> : vector<16x64xf32>
        %169 = tpu.matmul %167, %168, %cst_93 {dimension_numbers = #tpu.dot_dimension_numbers<[1], [0], [0], [1], [0, 0, 1, 1], [], []>} : vector<16x16xf32>, vector<16x64xf32>, vector<16x64xf32> -> vector<16x64xf32>
        %cst_94 = arith.constant dense<0.000000e+00> : vector<16xf32>
        %170 = vector.multi_reduction <add>, %167, %cst_94 [1] : vector<16x16xf32> to vector<16xf32>
        %171 = vector.shape_cast %170 : vector<16xf32> to vector<16x1xf32>
        %172 = tpu.reciprocal %171 {approx = true} : vector<16x1xf32> -> vector<16x1xf32>
        %173 = vector.broadcast %172 : vector<16x1xf32> to vector<16x64xf32>
        %174 = arith.mulf %169, %173 : vector<16x64xf32>
        %175 = tpu.concatenate %136, %155, %174 in 1 : vector<16x64xf32>, vector<16x64xf32>, vector<16x64xf32> -> vector<16x192xf32>
        %c4_i32_95 = arith.constant 4 : i32
        %176 = arith.muli %c4_i32_95, %arg21 : i32
        %c3_i32 = arith.constant 3 : i32
        %177 = arith.addi %176, %c3_i32 : i32
        %178 = arith.index_cast %177 : i32 to index
        %c0_96 = arith.constant 0 : index
        %c0_97 = arith.constant 0 : index
        %179 = vector.load %arg5[%178, %c0_96, %c0_97] : memref<8x192x192xf32, #tpu.memory_space<vmem>>, vector<1x192x192xf32>
        %180 = vector.shape_cast %179 : vector<1x192x192xf32> to vector<192x192xf32>
        %cst_98 = arith.constant dense<0.000000e+00> : vector<16x192xf32>
        %181 = tpu.matmul %175, %180, %cst_98 {dimension_numbers = #tpu.dot_dimension_numbers<[1], [0], [0], [1], [0, 0, 1, 1], [], []>} : vector<16x192xf32>, vector<192x192xf32>, vector<16x192xf32> -> vector<16x192xf32>
        %c4_i32_99 = arith.constant 4 : i32
        %182 = arith.muli %c4_i32_99, %arg21 : i32
        %c3_i32_100 = arith.constant 3 : i32
        %183 = arith.addi %182, %c3_i32_100 : i32
        %184 = arith.index_cast %183 : i32 to index
        %c0_101 = arith.constant 0 : index
        %c0_102 = arith.constant 0 : index
        %185 = vector.load %arg6[%184, %c0_101, %c0_102] : memref<8x1x192xf32, #tpu.memory_space<vmem>>, vector<1x1x192xf32>
        %186 = vector.shape_cast %185 : vector<1x1x192xf32> to vector<1x192xf32>
        %187 = vector.broadcast %186 : vector<1x192xf32> to vector<16x192xf32>
        %188 = arith.addf %181, %187 : vector<16x192xf32>
        %189 = arith.addf %arg22, %188 : vector<16x192xf32>
        %c2_i32_103 = arith.constant 2 : i32
        %190 = arith.muli %c2_i32_103, %arg21 : i32
        %c0_i32_104 = arith.constant 0 : i32
        %191 = arith.addi %190, %c0_i32_104 : i32
        %192 = arith.index_cast %191 : i32 to index
        %c0_105 = arith.constant 0 : index
        %c0_106 = arith.constant 0 : index
        %193 = vector.load %arg9[%192, %c0_105, %c0_106] : memref<4x1x192xf32, #tpu.memory_space<vmem>>, vector<1x1x192xf32>
        %194 = vector.shape_cast %193 : vector<1x1x192xf32> to vector<1x192xf32>
        %c2_i32_107 = arith.constant 2 : i32
        %195 = arith.muli %c2_i32_107, %arg21 : i32
        %c0_i32_108 = arith.constant 0 : i32
        %196 = arith.addi %195, %c0_i32_108 : i32
        %197 = arith.index_cast %196 : i32 to index
        %c0_109 = arith.constant 0 : index
        %c0_110 = arith.constant 0 : index
        %198 = vector.load %arg10[%197, %c0_109, %c0_110] : memref<4x1x192xf32, #tpu.memory_space<vmem>>, vector<1x1x192xf32>
        %199 = vector.shape_cast %198 : vector<1x1x192xf32> to vector<1x192xf32>
        %cst_111 = arith.constant dense<0.000000e+00> : vector<16xf32>
        %200 = vector.multi_reduction <add>, %189, %cst_111 [1] : vector<16x192xf32> to vector<16xf32>
        %201 = vector.shape_cast %200 : vector<16xf32> to vector<16x1xf32>
        %cst_112 = arith.constant 1.920000e+02 : f32
        %202 = vector.broadcast %cst_112 : f32 to vector<16x1xf32>
        %203 = arith.divf %201, %202 : vector<16x1xf32>
        %204 = vector.broadcast %203 : vector<16x1xf32> to vector<16x192xf32>
        %205 = arith.subf %189, %204 : vector<16x192xf32>
        %206 = arith.mulf %205, %205 : vector<16x192xf32>
        %cst_113 = arith.constant dense<0.000000e+00> : vector<16xf32>
        %207 = vector.multi_reduction <add>, %206, %cst_113 [1] : vector<16x192xf32> to vector<16xf32>
        %208 = vector.shape_cast %207 : vector<16xf32> to vector<16x1xf32>
        %cst_114 = arith.constant 1.920000e+02 : f32
        %209 = vector.broadcast %cst_114 : f32 to vector<16x1xf32>
        %210 = arith.divf %208, %209 : vector<16x1xf32>
        %211 = vector.broadcast %203 : vector<16x1xf32> to vector<16x192xf32>
        %212 = arith.subf %189, %211 : vector<16x192xf32>
        %cst_115 = arith.constant 9.99999974E-6 : f32
        %213 = vector.broadcast %cst_115 : f32 to vector<16x1xf32>
        %214 = arith.addf %210, %213 : vector<16x1xf32>
        %215 = math.rsqrt %214 : vector<16x1xf32>
        %216 = vector.broadcast %215 : vector<16x1xf32> to vector<16x192xf32>
        %217 = arith.mulf %212, %216 : vector<16x192xf32>
        %218 = vector.broadcast %194 : vector<1x192xf32> to vector<16x192xf32>
        %219 = arith.mulf %217, %218 : vector<16x192xf32>
        %220 = vector.broadcast %199 : vector<1x192xf32> to vector<16x192xf32>
        %221 = arith.addf %219, %220 : vector<16x192xf32>
        %c2_i32_116 = arith.constant 2 : i32
        %222 = arith.muli %c2_i32_116, %arg21 : i32
        %c0_i32_117 = arith.constant 0 : i32
        %223 = arith.addi %222, %c0_i32_117 : i32
        %224 = arith.index_cast %223 : i32 to index
        %c0_118 = arith.constant 0 : index
        %c0_119 = arith.constant 0 : index
        %225 = vector.load %arg7[%224, %c0_118, %c0_119] : memref<4x192x192xf32, #tpu.memory_space<vmem>>, vector<1x192x192xf32>
        %226 = vector.shape_cast %225 : vector<1x192x192xf32> to vector<192x192xf32>
        %cst_120 = arith.constant dense<0.000000e+00> : vector<16x192xf32>
        %227 = tpu.matmul %221, %226, %cst_120 {dimension_numbers = #tpu.dot_dimension_numbers<[1], [0], [0], [1], [0, 0, 1, 1], [], []>} : vector<16x192xf32>, vector<192x192xf32>, vector<16x192xf32> -> vector<16x192xf32>
        %c2_i32_121 = arith.constant 2 : i32
        %228 = arith.muli %c2_i32_121, %arg21 : i32
        %c0_i32_122 = arith.constant 0 : i32
        %229 = arith.addi %228, %c0_i32_122 : i32
        %230 = arith.index_cast %229 : i32 to index
        %c0_123 = arith.constant 0 : index
        %c0_124 = arith.constant 0 : index
        %231 = vector.load %arg8[%230, %c0_123, %c0_124] : memref<4x1x192xf32, #tpu.memory_space<vmem>>, vector<1x1x192xf32>
        %232 = vector.shape_cast %231 : vector<1x1x192xf32> to vector<1x192xf32>
        %233 = vector.broadcast %232 : vector<1x192xf32> to vector<16x192xf32>
        %234 = arith.addf %227, %233 : vector<16x192xf32>
        %cst_125 = arith.constant 0.000000e+00 : f32
        %235 = vector.broadcast %cst_125 : f32 to vector<16x192xf32>
        %236 = arith.maximumf %234, %235 : vector<16x192xf32>
        %c2_i32_126 = arith.constant 2 : i32
        %237 = arith.muli %c2_i32_126, %arg21 : i32
        %c1_i32_127 = arith.constant 1 : i32
        %238 = arith.addi %237, %c1_i32_127 : i32
        %239 = arith.index_cast %238 : i32 to index
        %c0_128 = arith.constant 0 : index
        %c0_129 = arith.constant 0 : index
        %240 = vector.load %arg7[%239, %c0_128, %c0_129] : memref<4x192x192xf32, #tpu.memory_space<vmem>>, vector<1x192x192xf32>
        %241 = vector.shape_cast %240 : vector<1x192x192xf32> to vector<192x192xf32>
        %cst_130 = arith.constant dense<0.000000e+00> : vector<16x192xf32>
        %242 = tpu.matmul %236, %241, %cst_130 {dimension_numbers = #tpu.dot_dimension_numbers<[1], [0], [0], [1], [0, 0, 1, 1], [], []>} : vector<16x192xf32>, vector<192x192xf32>, vector<16x192xf32> -> vector<16x192xf32>
        %c2_i32_131 = arith.constant 2 : i32
        %243 = arith.muli %c2_i32_131, %arg21 : i32
        %c1_i32_132 = arith.constant 1 : i32
        %244 = arith.addi %243, %c1_i32_132 : i32
        %245 = arith.index_cast %244 : i32 to index
        %c0_133 = arith.constant 0 : index
        %c0_134 = arith.constant 0 : index
        %246 = vector.load %arg8[%245, %c0_133, %c0_134] : memref<4x1x192xf32, #tpu.memory_space<vmem>>, vector<1x1x192xf32>
        %247 = vector.shape_cast %246 : vector<1x1x192xf32> to vector<1x192xf32>
        %248 = vector.broadcast %247 : vector<1x192xf32> to vector<16x192xf32>
        %249 = arith.addf %242, %248 : vector<16x192xf32>
        %250 = arith.addf %221, %249 : vector<16x192xf32>
        %c2_i32_135 = arith.constant 2 : i32
        %251 = arith.muli %c2_i32_135, %arg21 : i32
        %c1_i32_136 = arith.constant 1 : i32
        %252 = arith.addi %251, %c1_i32_136 : i32
        %253 = arith.index_cast %252 : i32 to index
        %c0_137 = arith.constant 0 : index
        %c0_138 = arith.constant 0 : index
        %254 = vector.load %arg9[%253, %c0_137, %c0_138] : memref<4x1x192xf32, #tpu.memory_space<vmem>>, vector<1x1x192xf32>
        %255 = vector.shape_cast %254 : vector<1x1x192xf32> to vector<1x192xf32>
        %c2_i32_139 = arith.constant 2 : i32
        %256 = arith.muli %c2_i32_139, %arg21 : i32
        %c1_i32_140 = arith.constant 1 : i32
        %257 = arith.addi %256, %c1_i32_140 : i32
        %258 = arith.index_cast %257 : i32 to index
        %c0_141 = arith.constant 0 : index
        %c0_142 = arith.constant 0 : index
        %259 = vector.load %arg10[%258, %c0_141, %c0_142] : memref<4x1x192xf32, #tpu.memory_space<vmem>>, vector<1x1x192xf32>
        %260 = vector.shape_cast %259 : vector<1x1x192xf32> to vector<1x192xf32>
        %cst_143 = arith.constant dense<0.000000e+00> : vector<16xf32>
        %261 = vector.multi_reduction <add>, %250, %cst_143 [1] : vector<16x192xf32> to vector<16xf32>
        %262 = vector.shape_cast %261 : vector<16xf32> to vector<16x1xf32>
        %cst_144 = arith.constant 1.920000e+02 : f32
        %263 = vector.broadcast %cst_144 : f32 to vector<16x1xf32>
        %264 = arith.divf %262, %263 : vector<16x1xf32>
        %265 = vector.broadcast %264 : vector<16x1xf32> to vector<16x192xf32>
        %266 = arith.subf %250, %265 : vector<16x192xf32>
        %267 = arith.mulf %266, %266 : vector<16x192xf32>
        %cst_145 = arith.constant dense<0.000000e+00> : vector<16xf32>
        %268 = vector.multi_reduction <add>, %267, %cst_145 [1] : vector<16x192xf32> to vector<16xf32>
        %269 = vector.shape_cast %268 : vector<16xf32> to vector<16x1xf32>
        %cst_146 = arith.constant 1.920000e+02 : f32
        %270 = vector.broadcast %cst_146 : f32 to vector<16x1xf32>
        %271 = arith.divf %269, %270 : vector<16x1xf32>
        %272 = vector.broadcast %264 : vector<16x1xf32> to vector<16x192xf32>
        %273 = arith.subf %250, %272 : vector<16x192xf32>
        %cst_147 = arith.constant 9.99999974E-6 : f32
        %274 = vector.broadcast %cst_147 : f32 to vector<16x1xf32>
        %275 = arith.addf %271, %274 : vector<16x1xf32>
        %276 = math.rsqrt %275 : vector<16x1xf32>
        %277 = vector.broadcast %276 : vector<16x1xf32> to vector<16x192xf32>
        %278 = arith.mulf %273, %277 : vector<16x192xf32>
        %279 = vector.broadcast %255 : vector<1x192xf32> to vector<16x192xf32>
        %280 = arith.mulf %278, %279 : vector<16x192xf32>
        %281 = vector.broadcast %260 : vector<1x192xf32> to vector<16x192xf32>
        %282 = arith.addf %280, %281 : vector<16x192xf32>
        scf.yield %282 : vector<16x192xf32>
      }
      %c2_i32_16 = arith.constant 2 : i32
      %c0_17 = arith.constant 0 : index
      %c0_18 = arith.constant 0 : index
      %c0_19 = arith.constant 0 : index
      %26 = vector.load %arg11[%c0_17, %c0_18, %c0_19] : memref<2x192x192xf32, #tpu.memory_space<vmem>>, vector<1x192x192xf32>
      %27 = vector.shape_cast %26 : vector<1x192x192xf32> to vector<192x192xf32>
      %cst_20 = arith.constant dense<0.000000e+00> : vector<16x192xf32>
      %28 = tpu.matmul %25, %27, %cst_20 {dimension_numbers = #tpu.dot_dimension_numbers<[1], [0], [0], [1], [0, 0, 1, 1], [], []>} : vector<16x192xf32>, vector<192x192xf32>, vector<16x192xf32> -> vector<16x192xf32>
      %c0_21 = arith.constant 0 : index
      %c0_22 = arith.constant 0 : index
      %c0_23 = arith.constant 0 : index
      %29 = vector.load %arg12[%c0_21, %c0_22, %c0_23] : memref<2x1x192xf32, #tpu.memory_space<vmem>>, vector<1x1x192xf32>
      %30 = vector.shape_cast %29 : vector<1x1x192xf32> to vector<1x192xf32>
      %31 = vector.broadcast %30 : vector<1x192xf32> to vector<16x192xf32>
      %32 = arith.addf %28, %31 : vector<16x192xf32>
      %33 = math.tanh %32 : vector<16x192xf32>
      %c1 = arith.constant 1 : index
      %c0_24 = arith.constant 0 : index
      %c0_25 = arith.constant 0 : index
      %34 = vector.load %arg11[%c1, %c0_24, %c0_25] : memref<2x192x192xf32, #tpu.memory_space<vmem>>, vector<1x192x192xf32>
      %35 = vector.shape_cast %34 : vector<1x192x192xf32> to vector<192x192xf32>
      %cst_26 = arith.constant dense<0.000000e+00> : vector<16x192xf32>
      %36 = tpu.matmul %25, %35, %cst_26 {dimension_numbers = #tpu.dot_dimension_numbers<[1], [0], [0], [1], [0, 0, 1, 1], [], []>} : vector<16x192xf32>, vector<192x192xf32>, vector<16x192xf32> -> vector<16x192xf32>
      %c1_27 = arith.constant 1 : index
      %c0_28 = arith.constant 0 : index
      %c0_29 = arith.constant 0 : index
      %37 = vector.load %arg12[%c1_27, %c0_28, %c0_29] : memref<2x1x192xf32, #tpu.memory_space<vmem>>, vector<1x1x192xf32>
      %38 = vector.shape_cast %37 : vector<1x1x192xf32> to vector<1x192xf32>
      %39 = vector.broadcast %38 : vector<1x192xf32> to vector<16x192xf32>
      %40 = arith.addf %36, %39 : vector<16x192xf32>
      %41 = arith.negf %40 : vector<16x192xf32>
      %42 = math.exp %41 : vector<16x192xf32>
      %cst_30 = arith.constant 1.000000e+00 : f32
      %43 = vector.broadcast %cst_30 : f32 to vector<16x192xf32>
      %44 = arith.addf %43, %42 : vector<16x192xf32>
      %45 = arith.divf %43, %44 : vector<16x192xf32>
      %46 = arith.mulf %33, %45 : vector<16x192xf32>
      %c0_31 = arith.constant 0 : index
      %c0_32 = arith.constant 0 : index
      %47 = vector.load %arg13[%c0_31, %c0_32] : memref<192x1xf32, #tpu.memory_space<vmem>>, vector<192x1xf32>
      %cst_33 = arith.constant dense<0.000000e+00> : vector<16x1xf32>
      %48 = tpu.matmul %46, %47, %cst_33 {dimension_numbers = #tpu.dot_dimension_numbers<[1], [0], [0], [1], [0, 0, 1, 1], [], []>} : vector<16x192xf32>, vector<192x1xf32>, vector<16x1xf32> -> vector<16x1xf32>
      %c0_34 = arith.constant 0 : index
      %c0_35 = arith.constant 0 : index
      %49 = vector.load %arg14[%c0_34, %c0_35] : memref<1x1xf32, #tpu.memory_space<vmem>>, vector<1x1xf32>
      %50 = vector.broadcast %49 : vector<1x1xf32> to vector<16x1xf32>
      %51 = arith.addf %48, %50 : vector<16x1xf32>
      %52 = tpu.iota {dimensions = array<i32: 0>} : vector<16x1xi32>
      %c12_i32_36 = arith.constant 12 : i32
      %53 = vector.broadcast %c12_i32_36 : i32 to vector<16x1xi32>
      %54 = arith.cmpi slt, %52, %53 : vector<16x1xi32>
      %cst_37 = arith.constant -1.000000e+30 : f32
      %55 = vector.broadcast %cst_37 : f32 to vector<16x1xf32>
      %56 = arith.select %54, %51, %55 : vector<16x1xi1>, vector<16x1xf32>
      %cst_38 = arith.constant dense<0xFF800000> : vector<1xf32>
      %57 = vector.multi_reduction <maximumf>, %56, %cst_38 [0] : vector<16x1xf32> to vector<1xf32>
      %58 = vector.shape_cast %57 : vector<1xf32> to vector<1x1xf32>
      %59 = vector.broadcast %58 : vector<1x1xf32> to vector<16x1xf32>
      %60 = arith.subf %56, %59 : vector<16x1xf32>
      %61 = math.exp %60 : vector<16x1xf32>
      %cst_39 = arith.constant dense<0.000000e+00> : vector<1xf32>
      %62 = vector.multi_reduction <add>, %61, %cst_39 [0] : vector<16x1xf32> to vector<1xf32>
      %63 = vector.shape_cast %62 : vector<1xf32> to vector<1x1xf32>
      %64 = tpu.reciprocal %63 {approx = true} : vector<1x1xf32> -> vector<1x1xf32>
      %65 = vector.broadcast %64 : vector<1x1xf32> to vector<16x1xf32>
      %66 = arith.mulf %61, %65 : vector<16x1xf32>
      %cst_40 = arith.constant dense<0.000000e+00> : vector<1x192xf32>
      %67 = tpu.matmul %66, %25, %cst_40 {dimension_numbers = #tpu.dot_dimension_numbers<[0], [0], [1], [1], [0, 1, 1, 1], [], []>} : vector<16x1xf32>, vector<16x192xf32>, vector<1x192xf32> -> vector<1x192xf32>
      %c0_41 = arith.constant 0 : index
      %c0_42 = arith.constant 0 : index
      %68 = vector.load %arg15[%c0_41, %c0_42] : memref<192x192xf32, #tpu.memory_space<vmem>>, vector<192x192xf32>
      %cst_43 = arith.constant dense<0.000000e+00> : vector<1x192xf32>
      %69 = tpu.matmul %67, %68, %cst_43 {dimension_numbers = #tpu.dot_dimension_numbers<[1], [0], [0], [1], [0, 0, 1, 1], [], []>} : vector<1x192xf32>, vector<192x192xf32>, vector<1x192xf32> -> vector<1x192xf32>
      %c0_44 = arith.constant 0 : index
      %c0_45 = arith.constant 0 : index
      %70 = vector.load %arg16[%c0_44, %c0_45] : memref<1x192xf32, #tpu.memory_space<vmem>>, vector<1x192xf32>
      %71 = arith.addf %69, %70 : vector<1x192xf32>
      %cst_46 = arith.constant 0.000000e+00 : f32
      %72 = vector.broadcast %cst_46 : f32 to vector<1x192xf32>
      %73 = arith.maximumf %71, %72 : vector<1x192xf32>
      %c0_47 = arith.constant 0 : index
      %c0_48 = arith.constant 0 : index
      %74 = vector.load %arg17[%c0_47, %c0_48] : memref<192x4xf32, #tpu.memory_space<vmem>>, vector<192x4xf32>
      %cst_49 = arith.constant dense<0.000000e+00> : vector<1x4xf32>
      %75 = tpu.matmul %73, %74, %cst_49 {dimension_numbers = #tpu.dot_dimension_numbers<[1], [0], [0], [1], [0, 0, 1, 1], [], []>} : vector<1x192xf32>, vector<192x4xf32>, vector<1x4xf32> -> vector<1x4xf32>
      %c0_50 = arith.constant 0 : index
      %c0_51 = arith.constant 0 : index
      %76 = vector.load %arg18[%c0_50, %c0_51] : memref<1x4xf32, #tpu.memory_space<vmem>>, vector<1x4xf32>
      %77 = arith.addf %75, %76 : vector<1x4xf32>
      %c0_52 = arith.constant 0 : index
      %c0_53 = arith.constant 0 : index
      %78 = vector.load %arg19[%c0_52, %c0_53] : memref<1x4xf32, #tpu.memory_space<vmem>>, vector<1x4xf32>
      tpu.vector_store %arg19[%c0_52, %c0_53], %77 {strides = array<i32>} : memref<1x4xf32, #tpu.memory_space<vmem>>, vector<1x4xf32>,
    } else {
    }
    return
  }
  func.func @transform_0(%arg0: i32) -> (i32, i32) {
    %c0_i32 = arith.constant 0 : i32
    %c0_i32_0 = arith.constant 0 : i32
    return %arg0, %c0_i32 : i32, i32
  }
  func.func @transform_1(%arg0: i32) -> (i32, i32) {
    %c0_i32 = arith.constant 0 : i32
    %c0_i32_0 = arith.constant 0 : i32
    %c0_i32_1 = arith.constant 0 : i32
    return %c0_i32, %c0_i32_0 : i32, i32
  }
  func.func @transform_2(%arg0: i32) -> (i32, i32) {
    %c0_i32 = arith.constant 0 : i32
    %c0_i32_0 = arith.constant 0 : i32
    %c0_i32_1 = arith.constant 0 : i32
    return %c0_i32, %c0_i32_0 : i32, i32
  }
  func.func @transform_3(%arg0: i32) -> (i32, i32) {
    %c0_i32 = arith.constant 0 : i32
    %c0_i32_0 = arith.constant 0 : i32
    %c0_i32_1 = arith.constant 0 : i32
    return %c0_i32, %c0_i32_0 : i32, i32
  }
  func.func @transform_4(%arg0: i32) -> (i32, i32, i32) {
    %c0_i32 = arith.constant 0 : i32
    %c0_i32_0 = arith.constant 0 : i32
    %c0_i32_1 = arith.constant 0 : i32
    %c0_i32_2 = arith.constant 0 : i32
    return %c0_i32, %c0_i32_0, %c0_i32_1 : i32, i32, i32
  }
  func.func @transform_5(%arg0: i32) -> (i32, i32, i32) {
    %c0_i32 = arith.constant 0 : i32
    %c0_i32_0 = arith.constant 0 : i32
    %c0_i32_1 = arith.constant 0 : i32
    %c0_i32_2 = arith.constant 0 : i32
    return %c0_i32, %c0_i32_0, %c0_i32_1 : i32, i32, i32
  }
  func.func @transform_6(%arg0: i32) -> (i32, i32, i32) {
    %c0_i32 = arith.constant 0 : i32
    %c0_i32_0 = arith.constant 0 : i32
    %c0_i32_1 = arith.constant 0 : i32
    %c0_i32_2 = arith.constant 0 : i32
    return %c0_i32, %c0_i32_0, %c0_i32_1 : i32, i32, i32
  }
  func.func @transform_7(%arg0: i32) -> (i32, i32, i32) {
    %c0_i32 = arith.constant 0 : i32
    %c0_i32_0 = arith.constant 0 : i32
    %c0_i32_1 = arith.constant 0 : i32
    %c0_i32_2 = arith.constant 0 : i32
    return %c0_i32, %c0_i32_0, %c0_i32_1 : i32, i32, i32
  }
  func.func @transform_8(%arg0: i32) -> (i32, i32, i32) {
    %c0_i32 = arith.constant 0 : i32
    %c0_i32_0 = arith.constant 0 : i32
    %c0_i32_1 = arith.constant 0 : i32
    %c0_i32_2 = arith.constant 0 : i32
    return %c0_i32, %c0_i32_0, %c0_i32_1 : i32, i32, i32
  }
  func.func @transform_9(%arg0: i32) -> (i32, i32, i32) {
    %c0_i32 = arith.constant 0 : i32
    %c0_i32_0 = arith.constant 0 : i32
    %c0_i32_1 = arith.constant 0 : i32
    %c0_i32_2 = arith.constant 0 : i32
    return %c0_i32, %c0_i32_0, %c0_i32_1 : i32, i32, i32
  }
  func.func @transform_10(%arg0: i32) -> (i32, i32, i32) {
    %c0_i32 = arith.constant 0 : i32
    %c0_i32_0 = arith.constant 0 : i32
    %c0_i32_1 = arith.constant 0 : i32
    %c0_i32_2 = arith.constant 0 : i32
    return %c0_i32, %c0_i32_0, %c0_i32_1 : i32, i32, i32
  }
  func.func @transform_11(%arg0: i32) -> (i32, i32, i32) {
    %c0_i32 = arith.constant 0 : i32
    %c0_i32_0 = arith.constant 0 : i32
    %c0_i32_1 = arith.constant 0 : i32
    %c0_i32_2 = arith.constant 0 : i32
    return %c0_i32, %c0_i32_0, %c0_i32_1 : i32, i32, i32
  }
  func.func @transform_12(%arg0: i32) -> (i32, i32) {
    %c0_i32 = arith.constant 0 : i32
    %c0_i32_0 = arith.constant 0 : i32
    %c0_i32_1 = arith.constant 0 : i32
    return %c0_i32, %c0_i32_0 : i32, i32
  }
  func.func @transform_13(%arg0: i32) -> (i32, i32) {
    %c0_i32 = arith.constant 0 : i32
    %c0_i32_0 = arith.constant 0 : i32
    %c0_i32_1 = arith.constant 0 : i32
    return %c0_i32, %c0_i32_0 : i32, i32
  }
  func.func @transform_14(%arg0: i32) -> (i32, i32) {
    %c0_i32 = arith.constant 0 : i32
    %c0_i32_0 = arith.constant 0 : i32
    %c0_i32_1 = arith.constant 0 : i32
    return %c0_i32, %c0_i32_0 : i32, i32
  }
  func.func @transform_15(%arg0: i32) -> (i32, i32) {
    %c0_i32 = arith.constant 0 : i32
    %c0_i32_0 = arith.constant 0 : i32
    %c0_i32_1 = arith.constant 0 : i32
    return %c0_i32, %c0_i32_0 : i32, i32
  }
  func.func @transform_16(%arg0: i32) -> (i32, i32) {
    %c0_i32 = arith.constant 0 : i32
    %c0_i32_0 = arith.constant 0 : i32
    %c0_i32_1 = arith.constant 0 : i32
    return %c0_i32, %c0_i32_0 : i32, i32
  }
  func.func @transform_17(%arg0: i32) -> (i32, i32) {
    %c0_i32 = arith.constant 0 : i32
    %c0_i32_0 = arith.constant 0 : i32
    %c0_i32_1 = arith.constant 0 : i32
    return %c0_i32, %c0_i32_0 : i32, i32
  }
  func.func @transform_18(%arg0: i32) -> (i32, i32) {
    %c0_i32 = arith.constant 0 : i32
    %c0_i32_0 = arith.constant 0 : i32
    %c0_i32_1 = arith.constant 0 : i32
    return %c0_i32, %c0_i32_0 : i32, i32
  }
}

</mosaic_0001>

<llo_original>
// kernel: hipt_lgp_fc_forward.1
$region0: #{hipt_lgp_fc_forward.1}
  #allocation0 [shape = 'u32[]', space=smem, size = 0x4, offset = 0x4, fixed_abs, tag = 'smem constant byte address 0x4 - core index']
  #allocation1 [shape = 'u32[144,128]{1,0:T(1,128)}', space=vmem, size = 0x12000, scoped, tag = 'internal scratch']
  #allocation2 [shape = 'f32[16,192]{1,0:T(8,128)}', space=vmem, size = 0x4000, scoped, tag = 'scratch operand']
  #allocation3 [shape = 'f32[1,1]{1,0:T(1,128)S(1)}', space=vmem, size = 0x200, scoped, tag = 'scoped memory for hipt_lgp_fc_forward.1']
  %s0 = inlined_call_operand.vmem [shape: bf16[4096,384], index: 0, kind: input, shape index: {}]
  %s1 = inlined_call_operand.vmem [shape: bf16[16,4096], index: 1, kind: input, shape index: {}]
  %s2 = inlined_call_operand.vmem [shape: f32[384,192], index: 2, kind: input, shape index: {}]
  %s3 = inlined_call_operand.vmem [shape: f32[1,192], index: 3, kind: input, shape index: {}]
  %s4 = inlined_call_operand.vmem [shape: f32[8,192,192], index: 4, kind: input, shape index: {}]
  %s5 = inlined_call_operand.vmem [shape: f32[8,1,192], index: 5, kind: input, shape index: {}]
  %s6 = inlined_call_operand.vmem [shape: f32[4,192,192], index: 6, kind: input, shape index: {}]
  %s7 = inlined_call_operand.vmem [shape: f32[4,1,192], index: 7, kind: input, shape index: {}]
  %s8 = inlined_call_operand.vmem [shape: f32[4,1,192], index: 8, kind: input, shape index: {}]
  %s9 = inlined_call_operand.vmem [shape: f32[4,1,192], index: 9, kind: input, shape index: {}]
  %s10 = inlined_call_operand.vmem [shape: f32[2,192,192], index: 10, kind: input, shape index: {}]
  %s11 = inlined_call_operand.vmem [shape: f32[2,1,192], index: 11, kind: input, shape index: {}]
  %s12 = inlined_call_operand.vmem [shape: f32[192,1], index: 12, kind: input, shape index: {}]
  %s13 = inlined_call_operand.<no memory space> [shape: f32[1,1], index: 13, kind: input, shape index: {}]
  %s14 = inlined_call_operand.vmem [shape: f32[192,192], index: 14, kind: input, shape index: {}]
  %s15 = inlined_call_operand.vmem [shape: f32[1,192], index: 15, kind: input, shape index: {}]
  %s16 = inlined_call_operand.vmem [shape: f32[192,4], index: 16, kind: input, shape index: {}]
  %s17 = inlined_call_operand.vmem [shape: f32[1,4], index: 17, kind: input, shape index: {}]
  %s18 = inlined_call_operand.vmem [shape: f32[1,4], index: 18, kind: output, shape index: {}]
  %s19 = sld [smem:[#allocation0]]
  $region93: #{hipt_lgp_fc_forward.1} parent=0
    _
  %s21 = ssub.s32 1, %s19
  %s22 = scalar_select 0, %s21, %s19
  %v23 = vstv %s13
  %24 = vst [vmem:[#allocation3] sm:$0x1] %v23
  // Predicated region
  $region2: #{hipt_lgp_fc_forward.1} parent=0 // pred_check
    _
  $region3: #{hipt_lgp_fc_forward.1} parent=0 // pred_check_branch
    %26 = sbr.rel (0) target = $region5
  $region4: #{hipt_lgp_fc_forward.1} parent=0 // pred_region
    _
  $region5: #{hipt_lgp_fc_forward.1} parent=0 // pred_fallthru
    _
  // Predicated region
  $region6: #{hipt_lgp_fc_forward.1} parent=0 // pred_check
    _
  $region7: #{hipt_lgp_fc_forward.1} parent=0 // pred_check_branch
    %28 = sbr.rel (0) target = $region9
  $region8: #{hipt_lgp_fc_forward.1} parent=0 // pred_region
    _
  $region9: #{hipt_lgp_fc_forward.1} parent=0 // pred_fallthru
    _
  // Predicated region
  $region10: #{hipt_lgp_fc_forward.1} parent=0 // pred_check
    _
  $region11: #{hipt_lgp_fc_forward.1} parent=0 // pred_check_branch
    %30 = sbr.rel (0) target = $region13
  $region12: #{hipt_lgp_fc_forward.1} parent=0 // pred_region
    _
  $region13: #{hipt_lgp_fc_forward.1} parent=0 // pred_fallthru
    _
  // Predicated region
  $region14: #{hipt_lgp_fc_forward.1} parent=0 // pred_check
    _
  $region15: #{hipt_lgp_fc_forward.1} parent=0 // pred_check_branch
    %32 = sbr.rel (0) target = $region17
  $region16: #{hipt_lgp_fc_forward.1} parent=0 // pred_region
    _
  $region17: #{hipt_lgp_fc_forward.1} parent=0 // pred_fallthru
    _
  // Predicated region
  $region18: #{hipt_lgp_fc_forward.1} parent=0 // pred_check
    _
  $region19: #{hipt_lgp_fc_forward.1} parent=0 // pred_check_branch
    %34 = sbr.rel (0) target = $region21
  $region20: #{hipt_lgp_fc_forward.1} parent=0 // pred_region
    _
  $region21: #{hipt_lgp_fc_forward.1} parent=0 // pred_fallthru
    _
  // Predicated region
  $region22: #{hipt_lgp_fc_forward.1} parent=0 // pred_check
    _
  $region23: #{hipt_lgp_fc_forward.1} parent=0 // pred_check_branch
    %36 = sbr.rel (0) target = $region25
  $region24: #{hipt_lgp_fc_forward.1} parent=0 // pred_region
    _
  $region25: #{hipt_lgp_fc_forward.1} parent=0 // pred_fallthru
    _
  // Predicated region
  $region26: #{hipt_lgp_fc_forward.1} parent=0 // pred_check
    _
  $region27: #{hipt_lgp_fc_forward.1} parent=0 // pred_check_branch
    %38 = sbr.rel (0) target = $region29
  $region28: #{hipt_lgp_fc_forward.1} parent=0 // pred_region
    _
  $region29: #{hipt_lgp_fc_forward.1} parent=0 // pred_fallthru
    _
  // Predicated region
  $region30: #{hipt_lgp_fc_forward.1} parent=0 // pred_check
    _
  $region31: #{hipt_lgp_fc_forward.1} parent=0 // pred_check_branch
    %40 = sbr.rel (0) target = $region33
  $region32: #{hipt_lgp_fc_forward.1} parent=0 // pred_region
    _
  $region33: #{hipt_lgp_fc_forward.1} parent=0 // pred_fallthru
    _
  // Predicated region
  $region34: #{hipt_lgp_fc_forward.1} parent=0 // pred_check
    _
  $region35: #{hipt_lgp_fc_forward.1} parent=0 // pred_check_branch
    %42 = sbr.rel (0) target = $region37
  $region36: #{hipt_lgp_fc_forward.1} parent=0 // pred_region
    _
  $region37: #{hipt_lgp_fc_forward.1} parent=0 // pred_fallthru
    _
  // Predicated region
  $region38: #{hipt_lgp_fc_forward.1} parent=0 // pred_check
    _
  $region39: #{hipt_lgp_fc_forward.1} parent=0 // pred_check_branch
    %44 = sbr.rel (0) target = $region41
  $region40: #{hipt_lgp_fc_forward.1} parent=0 // pred_region
    _
  $region41: #{hipt_lgp_fc_forward.1} parent=0 // pred_fallthru
    _
  // Predicated region
  $region42: #{hipt_lgp_fc_forward.1} parent=0 // pred_check
    _
  $region43: #{hipt_lgp_fc_forward.1} parent=0 // pred_check_branch
    %46 = sbr.rel (0) target = $region45
  $region44: #{hipt_lgp_fc_forward.1} parent=0 // pred_region
    _
  $region45: #{hipt_lgp_fc_forward.1} parent=0 // pred_fallthru
    _
  // Predicated region
  $region46: #{hipt_lgp_fc_forward.1} parent=0 // pred_check
    _
  $region47: #{hipt_lgp_fc_forward.1} parent=0 // pred_check_branch
    %48 = sbr.rel (0) target = $region49
  $region48: #{hipt_lgp_fc_forward.1} parent=0 // pred_region
    _
  $region49: #{hipt_lgp_fc_forward.1} parent=0 // pred_fallthru
    _
  // Predicated region
  $region50: #{hipt_lgp_fc_forward.1} parent=0 // pred_check
    _
  $region51: #{hipt_lgp_fc_forward.1} parent=0 // pred_check_branch
    %50 = sbr.rel (0) target = $region53
  $region52: #{hipt_lgp_fc_forward.1} parent=0 // pred_region
    _
  $region53: #{hipt_lgp_fc_forward.1} parent=0 // pred_fallthru
    _
  // Predicated region
  $region54: #{hipt_lgp_fc_forward.1} parent=0 // pred_check
    _
  $region55: #{hipt_lgp_fc_forward.1} parent=0 // pred_check_branch
    %52 = sbr.rel (0) target = $region57
  $region56: #{hipt_lgp_fc_forward.1} parent=0 // pred_region
    _
  $region57: #{hipt_lgp_fc_forward.1} parent=0 // pred_fallthru
    _
  // Predicated region
  $region58: #{hipt_lgp_fc_forward.1} parent=0 // pred_check
    _
  $region59: #{hipt_lgp_fc_forward.1} parent=0 // pred_check_branch
    %54 = sbr.rel (0) target = $region61
  $region60: #{hipt_lgp_fc_forward.1} parent=0 // pred_region
    _
  $region61: #{hipt_lgp_fc_forward.1} parent=0 // pred_fallthru
    _
  // Predicated region
  $region62: #{hipt_lgp_fc_forward.1} parent=0 // pred_check
    _
  $region63: #{hipt_lgp_fc_forward.1} parent=0 // pred_check_branch
    %56 = sbr.rel (0) target = $region65
  $region64: #{hipt_lgp_fc_forward.1} parent=0 // pred_region
    _
  $region65: #{hipt_lgp_fc_forward.1} parent=0 // pred_fallthru
    _
  // Predicated region
  $region66: #{hipt_lgp_fc_forward.1} parent=0 // pred_check
    _
  $region67: #{hipt_lgp_fc_forward.1} parent=0 // pred_check_branch
    %58 = sbr.rel (0) target = $region69
  $region68: #{hipt_lgp_fc_forward.1} parent=0 // pred_region
    _
  $region69: #{hipt_lgp_fc_forward.1} parent=0 // pred_fallthru
    _
  // Predicated region
  $region70: #{hipt_lgp_fc_forward.1} parent=0 // pred_check
    _
  $region71: #{hipt_lgp_fc_forward.1} parent=0 // pred_check_branch
    %60 = sbr.rel (0) target = $region73
  $region72: #{hipt_lgp_fc_forward.1} parent=0 // pred_region
    _
  $region73: #{hipt_lgp_fc_forward.1} parent=0 // pred_fallthru
    _
  %v62 = vld [vmem:[%s1] sm:$0xff]
  %v63 = vld [vmem:[%s1 + $0x8] sm:$0xff]
  %v64 = vld [vmem:[%s1 + $0x10] sm:$0xff]
  %v65 = vld [vmem:[%s1 + $0x18] sm:$0xff]
  %v66 = vld [vmem:[%s1 + $0x20] sm:$0xff]
  %v67 = vld [vmem:[%s1 + $0x28] sm:$0xff]
  %v68 = vld [vmem:[%s1 + $0x30] sm:$0xff]
  %v69 = vld [vmem:[%s1 + $0x38] sm:$0xff]
  %v70 = vld [vmem:[%s1 + $0x40] sm:$0xff]
  %v71 = vld [vmem:[%s1 + $0x48] sm:$0xff]
  %v72 = vld [vmem:[%s1 + $0x50] sm:$0xff]
  %v73 = vld [vmem:[%s1 + $0x58] sm:$0xff]
  %v74 = vld [vmem:[%s1 + $0x60] sm:$0xff]
  %v75 = vld [vmem:[%s1 + $0x68] sm:$0xff]
  %v76 = vld [vmem:[%s1 + $0x70] sm:$0xff]
  %v77 = vld [vmem:[%s1 + $0x78] sm:$0xff]
  %v78 = vld [vmem:[%s1 + $0x80] sm:$0xff]
  %v79 = vld [vmem:[%s1 + $0x88] sm:$0xff]
  %v80 = vld [vmem:[%s1 + $0x90] sm:$0xff]
  %v81 = vld [vmem:[%s1 + $0x98] sm:$0xff]
  %v82 = vld [vmem:[%s1 + $0xa0] sm:$0xff]
  %v83 = vld [vmem:[%s1 + $0xa8] sm:$0xff]
  %v84 = vld [vmem:[%s1 + $0xb0] sm:$0xff]
  %v85 = vld [vmem:[%s1 + $0xb8] sm:$0xff]
  %v86 = vld [vmem:[%s1 + $0xc0] sm:$0xff]
  %v87 = vld [vmem:[%s1 + $0xc8] sm:$0xff]
  %v88 = vld [vmem:[%s1 + $0xd0] sm:$0xff]
  %v89 = vld [vmem:[%s1 + $0xd8] sm:$0xff]
  %v90 = vld [vmem:[%s1 + $0xe0] sm:$0xff]
  %v91 = vld [vmem:[%s1 + $0xe8] sm:$0xff]
  %v92 = vld [vmem:[%s1 + $0xf0] sm:$0xff]
  %v93 = vld [vmem:[%s1 + $0xf8] sm:$0xff]
  %v94 = vld [vmem:[%s0] sm:$0xff]
  %v95 = vld [vmem:[%s0 + $0x8] sm:$0xf]
  %v96 = vld [vmem:[%s0 + $0xc] sm:$0xff]
  %v97 = vld [vmem:[%s0 + $0x14] sm:$0xf]
  %v98 = vld [vmem:[%s0 + $0x18] sm:$0xff]
  %v99 = vld [vmem:[%s0 + $0x20] sm:$0xf]
  %v100 = vld [vmem:[%s0 + $0x24] sm:$0xff]
  %v101 = vld [vmem:[%s0 + $0x2c] sm:$0xf]
  %v102 = vld [vmem:[%s0 + $0x30] sm:$0xff]
  %v103 = vld [vmem:[%s0 + $0x38] sm:$0xf]
  %v104 = vld [vmem:[%s0 + $0x3c] sm:$0xff]
  %v105 = vld [vmem:[%s0 + $0x44] sm:$0xf]
  %v106 = vld [vmem:[%s0 + $0x48] sm:$0xff]
  %v107 = vld [vmem:[%s0 + $0x50] sm:$0xf]
  %v108 = vld [vmem:[%s0 + $0x54] sm:$0xff]
  %v109 = vld [vmem:[%s0 + $0x5c] sm:$0xf]
  %v110 = vld [vmem:[%s0 + $0x60] sm:$0xff]
  %v111 = vld [vmem:[%s0 + $0x68] sm:$0xf]
  %v112 = vld [vmem:[%s0 + $0x6c] sm:$0xff]
  %v113 = vld [vmem:[%s0 + $0x74] sm:$0xf]
  %v114 = vld [vmem:[%s0 + $0x78] sm:$0xff]
  %v115 = vld [vmem:[%s0 + $0x80] sm:$0xf]
  %v116 = vld [vmem:[%s0 + $0x84] sm:$0xff]
  %v117 = vld [vmem:[%s0 + $0x8c] sm:$0xf]
  %v118 = vld [vmem:[%s0 + $0x90] sm:$0xff]
  %v119 = vld [vmem:[%s0 + $0x98] sm:$0xf]
  %v120 = vld [vmem:[%s0 + $0x9c] sm:$0xff]
  %v121 = vld [vmem:[%s0 + $0xa4] sm:$0xf]
  %v122 = vld [vmem:[%s0 + $0xa8] sm:$0xff]
  %v123 = vld [vmem:[%s0 + $0xb0] sm:$0xf]
  %v124 = vld [vmem:[%s0 + $0xb4] sm:$0xff]
  %v125 = vld [vmem:[%s0 + $0xbc] sm:$0xf]
  %v126 = vld [vmem:[%s0 + $0xc0] sm:$0xff]
  %v127 = vld [vmem:[%s0 + $0xc8] sm:$0xf]
  %v128 = vld [vmem:[%s0 + $0xcc] sm:$0xff]
  %v129 = vld [vmem:[%s0 + $0xd4] sm:$0xf]
  %v130 = vld [vmem:[%s0 + $0xd8] sm:$0xff]
  %v131 = vld [vmem:[%s0 + $0xe0] sm:$0xf]
  %v132 = vld [vmem:[%s0 + $0xe4] sm:$0xff]
  %v133 = vld [vmem:[%s0 + $0xec] sm:$0xf]
  %v134 = vld [vmem:[%s0 + $0xf0] sm:$0xff]
  %v135 = vld [vmem:[%s0 + $0xf8] sm:$0xf]
  %v136 = vld [vmem:[%s0 + $0xfc] sm:$0xff]
  %v137 = vld [vmem:[%s0 + $0x104] sm:$0xf]
  %v138 = vld [vmem:[%s0 + $0x108] sm:$0xff]
  %v139 = vld [vmem:[%s0 + $0x110] sm:$0xf]
  %v140 = vld [vmem:[%s0 + $0x114] sm:$0xff]
  %v141 = vld [vmem:[%s0 + $0x11c] sm:$0xf]
  %v142 = vld [vmem:[%s0 + $0x120] sm:$0xff]
  %v143 = vld [vmem:[%s0 + $0x128] sm:$0xf]
  %v144 = vld [vmem:[%s0 + $0x12c] sm:$0xff]
  %v145 = vld [vmem:[%s0 + $0x134] sm:$0xf]
  %v146 = vld [vmem:[%s0 + $0x138] sm:$0xff]
  %v147 = vld [vmem:[%s0 + $0x140] sm:$0xf]
  %v148 = vld [vmem:[%s0 + $0x144] sm:$0xff]
  %v149 = vld [vmem:[%s0 + $0x14c] sm:$0xf]
  %v150 = vld [vmem:[%s0 + $0x150] sm:$0xff]
  %v151 = vld [vmem:[%s0 + $0x158] sm:$0xf]
  %v152 = vld [vmem:[%s0 + $0x15c] sm:$0xff]
  %v153 = vld [vmem:[%s0 + $0x164] sm:$0xf]
  %v154 = vld [vmem:[%s0 + $0x168] sm:$0xff]
  %v155 = vld [vmem:[%s0 + $0x170] sm:$0xf]
  %v156 = vld [vmem:[%s0 + $0x174] sm:$0xff]
  %v157 = vld [vmem:[%s0 + $0x17c] sm:$0xf]
  %v158 = vld [vmem:[%s0 + $0x180] sm:$0xff]
  %v159 = vld [vmem:[%s0 + $0x188] sm:$0xf]
  %v160 = vld [vmem:[%s0 + $0x18c] sm:$0xff]
  %v161 = vld [vmem:[%s0 + $0x194] sm:$0xf]
  %v162 = vld [vmem:[%s0 + $0x198] sm:$0xff]
  %v163 = vld [vmem:[%s0 + $0x1a0] sm:$0xf]
  %v164 = vld [vmem:[%s0 + $0x1a4] sm:$0xff]
  %v165 = vld [vmem:[%s0 + $0x1ac] sm:$0xf]
  %v166 = vld [vmem:[%s0 + $0x1b0] sm:$0xff]
  %v167 = vld [vmem:[%s0 + $0x1b8] sm:$0xf]
  %v168 = vld [vmem:[%s0 + $0x1bc] sm:$0xff]
  %v169 = vld [vmem:[%s0 + $0x1c4] sm:$0xf]
  %v170 = vld [vmem:[%s0 + $0x1c8] sm:$0xff]
  %v171 = vld [vmem:[%s0 + $0x1d0] sm:$0xf]
  %v172 = vld [vmem:[%s0 + $0x1d4] sm:$0xff]
  %v173 = vld [vmem:[%s0 + $0x1dc] sm:$0xf]
  %v174 = vld [vmem:[%s0 + $0x1e0] sm:$0xff]
  %v175 = vld [vmem:[%s0 + $0x1e8] sm:$0xf]
  %v176 = vld [vmem:[%s0 + $0x1ec] sm:$0xff]
  %v177 = vld [vmem:[%s0 + $0x1f4] sm:$0xf]
  %v178 = vld [vmem:[%s0 + $0x1f8] sm:$0xff]
  %v179 = vld [vmem:[%s0 + $0x200] sm:$0xf]
  %v180 = vld [vmem:[%s0 + $0x204] sm:$0xff]
  %v181 = vld [vmem:[%s0 + $0x20c] sm:$0xf]
  %v182 = vld [vmem:[%s0 + $0x210] sm:$0xff]
  %v183 = vld [vmem:[%s0 + $0x218] sm:$0xf]
  %v184 = vld [vmem:[%s0 + $0x21c] sm:$0xff]
  %v185 = vld [vmem:[%s0 + $0x224] sm:$0xf]
  %v186 = vld [vmem:[%s0 + $0x228] sm:$0xff]
  %v187 = vld [vmem:[%s0 + $0x230] sm:$0xf]
  %v188 = vld [vmem:[%s0 + $0x234] sm:$0xff]
  %v189 = vld [vmem:[%s0 + $0x23c] sm:$0xf]
  %v190 = vld [vmem:[%s0 + $0x240] sm:$0xff]
  %v191 = vld [vmem:[%s0 + $0x248] sm:$0xf]
  %v192 = vld [vmem:[%s0 + $0x24c] sm:$0xff]
  %v193 = vld [vmem:[%s0 + $0x254] sm:$0xf]
  %v194 = vld [vmem:[%s0 + $0x258] sm:$0xff]
  %v195 = vld [vmem:[%s0 + $0x260] sm:$0xf]
  %v196 = vld [vmem:[%s0 + $0x264] sm:$0xff]
  %v197 = vld [vmem:[%s0 + $0x26c] sm:$0xf]
  %v198 = vld [vmem:[%s0 + $0x270] sm:$0xff]
  %v199 = vld [vmem:[%s0 + $0x278] sm:$0xf]
  %v200 = vld [vmem:[%s0 + $0x27c] sm:$0xff]
  %v201 = vld [vmem:[%s0 + $0x284] sm:$0xf]
  %v202 = vld [vmem:[%s0 + $0x288] sm:$0xff]
  %v203 = vld [vmem:[%s0 + $0x290] sm:$0xf]
  %v204 = vld [vmem:[%s0 + $0x294] sm:$0xff]
  %v205 = vld [vmem:[%s0 + $0x29c] sm:$0xf]
  %v206 = vld [vmem:[%s0 + $0x2a0] sm:$0xff]
  %v207 = vld [vmem:[%s0 + $0x2a8] sm:$0xf]
  %v208 = vld [vmem:[%s0 + $0x2ac] sm:$0xff]
  %v209 = vld [vmem:[%s0 + $0x2b4] sm:$0xf]
  %v210 = vld [vmem:[%s0 + $0x2b8] sm:$0xff]
  %v211 = vld [vmem:[%s0 + $0x2c0] sm:$0xf]
  %v212 = vld [vmem:[%s0 + $0x2c4] sm:$0xff]
  %v213 = vld [vmem:[%s0 + $0x2cc] sm:$0xf]
  %v214 = vld [vmem:[%s0 + $0x2d0] sm:$0xff]
  %v215 = vld [vmem:[%s0 + $0x2d8] sm:$0xf]
  %v216 = vld [vmem:[%s0 + $0x2dc] sm:$0xff]
  %v217 = vld [vmem:[%s0 + $0x2e4] sm:$0xf]
  %v218 = vld [vmem:[%s0 + $0x2e8] sm:$0xff]
  %v219 = vld [vmem:[%s0 + $0x2f0] sm:$0xf]
  %v220 = vld [vmem:[%s0 + $0x2f4] sm:$0xff]
  %v221 = vld [vmem:[%s0 + $0x2fc] sm:$0xf]
  %v222 = vld [vmem:[%s0 + $0x300] sm:$0xff]
  %v223 = vld [vmem:[%s0 + $0x308] sm:$0xf]
  %v224 = vld [vmem:[%s0 + $0x30c] sm:$0xff]
  %v225 = vld [vmem:[%s0 + $0x314] sm:$0xf]
  %v226 = vld [vmem:[%s0 + $0x318] sm:$0xff]
  %v227 = vld [vmem:[%s0 + $0x320] sm:$0xf]
  %v228 = vld [vmem:[%s0 + $0x324] sm:$0xff]
  %v229 = vld [vmem:[%s0 + $0x32c] sm:$0xf]
  %v230 = vld [vmem:[%s0 + $0x330] sm:$0xff]
  %v231 = vld [vmem:[%s0 + $0x338] sm:$0xf]
  %v232 = vld [vmem:[%s0 + $0x33c] sm:$0xff]
  %v233 = vld [vmem:[%s0 + $0x344] sm:$0xf]
  %v234 = vld [vmem:[%s0 + $0x348] sm:$0xff]
  %v235 = vld [vmem:[%s0 + $0x350] sm:$0xf]
  %v236 = vld [vmem:[%s0 + $0x354] sm:$0xff]
  %v237 = vld [vmem:[%s0 + $0x35c] sm:$0xf]
  %v238 = vld [vmem:[%s0 + $0x360] sm:$0xff]
  %v239 = vld [vmem:[%s0 + $0x368] sm:$0xf]
  %v240 = vld [vmem:[%s0 + $0x36c] sm:$0xff]
  %v241 = vld [vmem:[%s0 + $0x374] sm:$0xf]
  %v242 = vld [vmem:[%s0 + $0x378] sm:$0xff]
  %v243 = vld [vmem:[%s0 + $0x380] sm:$0xf]
  %v244 = vld [vmem:[%s0 + $0x384] sm:$0xff]
  %v245 = vld [vmem:[%s0 + $0x38c] sm:$0xf]
  %v246 = vld [vmem:[%s0 + $0x390] sm:$0xff]
  %v247 = vld [vmem:[%s0 + $0x398] sm:$0xf]
  %v248 = vld [vmem:[%s0 + $0x39c] sm:$0xff]
  %v249 = vld [vmem:[%s0 + $0x3a4] sm:$0xf]
  %v250 = vld [vmem:[%s0 + $0x3a8] sm:$0xff]
  %v251 = vld [vmem:[%s0 + $0x3b0] sm:$0xf]
  %v252 = vld [vmem:[%s0 + $0x3b4] sm:$0xff]
  %v253 = vld [vmem:[%s0 + $0x3bc] sm:$0xf]
  %v254 = vld [vmem:[%s0 + $0x3c0] sm:$0xff]
  %v255 = vld [vmem:[%s0 + $0x3c8] sm:$0xf]
  %v256 = vld [vmem:[%s0 + $0x3cc] sm:$0xff]
  %v257 = vld [vmem:[%s0 + $0x3d4] sm:$0xf]
  %v258 = vld [vmem:[%s0 + $0x3d8] sm:$0xff]
  %v259 = vld [vmem:[%s0 + $0x3e0] sm:$0xf]
  %v260 = vld [vmem:[%s0 + $0x3e4] sm:$0xff]
  %v261 = vld [vmem:[%s0 + $0x3ec] sm:$0xf]
  %v262 = vld [vmem:[%s0 + $0x3f0] sm:$0xff]
  %v263 = vld [vmem:[%s0 + $0x3f8] sm:$0xf]
  %v264 = vld [vmem:[%s0 + $0x3fc] sm:$0xff]
  %v265 = vld [vmem:[%s0 + $0x404] sm:$0xf]
  %v266 = vld [vmem:[%s0 + $0x408] sm:$0xff]
  %v267 = vld [vmem:[%s0 + $0x410] sm:$0xf]
  %v268 = vld [vmem:[%s0 + $0x414] sm:$0xff]
  %v269 = vld [vmem:[%s0 + $0x41c] sm:$0xf]
  %v270 = vld [vmem:[%s0 + $0x420] sm:$0xff]
  %v271 = vld [vmem:[%s0 + $0x428] sm:$0xf]
  %v272 = vld [vmem:[%s0 + $0x42c] sm:$0xff]
  %v273 = vld [vmem:[%s0 + $0x434] sm:$0xf]
  %v274 = vld [vmem:[%s0 + $0x438] sm:$0xff]
  %v275 = vld [vmem:[%s0 + $0x440] sm:$0xf]
  %v276 = vld [vmem:[%s0 + $0x444] sm:$0xff]
  %v277 = vld [vmem:[%s0 + $0x44c] sm:$0xf]
  %v278 = vld [vmem:[%s0 + $0x450] sm:$0xff]
  %v279 = vld [vmem:[%s0 + $0x458] sm:$0xf]
  %v280 = vld [vmem:[%s0 + $0x45c] sm:$0xff]
  %v281 = vld [vmem:[%s0 + $0x464] sm:$0xf]
  %v282 = vld [vmem:[%s0 + $0x468] sm:$0xff]
  %v283 = vld [vmem:[%s0 + $0x470] sm:$0xf]
  %v284 = vld [vmem:[%s0 + $0x474] sm:$0xff]
  %v285 = vld [vmem:[%s0 + $0x47c] sm:$0xf]
  %v286 = vld [vmem:[%s0 + $0x480] sm:$0xff]
  %v287 = vld [vmem:[%s0 + $0x488] sm:$0xf]
  %v288 = vld [vmem:[%s0 + $0x48c] sm:$0xff]
  %v289 = vld [vmem:[%s0 + $0x494] sm:$0xf]
  %v290 = vld [vmem:[%s0 + $0x498] sm:$0xff]
  %v291 = vld [vmem:[%s0 + $0x4a0] sm:$0xf]
  %v292 = vld [vmem:[%s0 + $0x4a4] sm:$0xff]
  %v293 = vld [vmem:[%s0 + $0x4ac] sm:$0xf]
  %v294 = vld [vmem:[%s0 + $0x4b0] sm:$0xff]
  %v295 = vld [vmem:[%s0 + $0x4b8] sm:$0xf]
  %v296 = vld [vmem:[%s0 + $0x4bc] sm:$0xff]
  %v297 = vld [vmem:[%s0 + $0x4c4] sm:$0xf]
  %v298 = vld [vmem:[%s0 + $0x4c8] sm:$0xff]
  %v299 = vld [vmem:[%s0 + $0x4d0] sm:$0xf]
  %v300 = vld [vmem:[%s0 + $0x4d4] sm:$0xff]
  %v301 = vld [vmem:[%s0 + $0x4dc] sm:$0xf]
  %v302 = vld [vmem:[%s0 + $0x4e0] sm:$0xff]
  %v303 = vld [vmem:[%s0 + $0x4e8] sm:$0xf]
  %v304 = vld [vmem:[%s0 + $0x4ec] sm:$0xff]
  %v305 = vld [vmem:[%s0 + $0x4f4] sm:$0xf]
  %v306 = vld [vmem:[%s0 + $0x4f8] sm:$0xff]
  %v307 = vld [vmem:[%s0 + $0x500] sm:$0xf]
  %v308 = vld [vmem:[%s0 + $0x504] sm:$0xff]
  %v309 = vld [vmem:[%s0 + $0x50c] sm:$0xf]
  %v310 = vld [vmem:[%s0 + $0x510] sm:$0xff]
  %v311 = vld [vmem:[%s0 + $0x518] sm:$0xf]
  %v312 = vld [vmem:[%s0 + $0x51c] sm:$0xff]
  %v313 = vld [vmem:[%s0 + $0x524] sm:$0xf]
  %v314 = vld [vmem:[%s0 + $0x528] sm:$0xff]
  %v315 = vld [vmem:[%s0 + $0x530] sm:$0xf]
  %v316 = vld [vmem:[%s0 + $0x534] sm:$0xff]
  %v317 = vld [vmem:[%s0 + $0x53c] sm:$0xf]
  %v318 = vld [vmem:[%s0 + $0x540] sm:$0xff]
  %v319 = vld [vmem:[%s0 + $0x548] sm:$0xf]
  %v320 = vld [vmem:[%s0 + $0x54c] sm:$0xff]
  %v321 = vld [vmem:[%s0 + $0x554] sm:$0xf]
  %v322 = vld [vmem:[%s0 + $0x558] sm:$0xff]
  %v323 = vld [vmem:[%s0 + $0x560] sm:$0xf]
  %v324 = vld [vmem:[%s0 + $0x564] sm:$0xff]
  %v325 = vld [vmem:[%s0 + $0x56c] sm:$0xf]
  %v326 = vld [vmem:[%s0 + $0x570] sm:$0xff]
  %v327 = vld [vmem:[%s0 + $0x578] sm:$0xf]
  %v328 = vld [vmem:[%s0 + $0x57c] sm:$0xff]
  %v329 = vld [vmem:[%s0 + $0x584] sm:$0xf]
  %v330 = vld [vmem:[%s0 + $0x588] sm:$0xff]
  %v331 = vld [vmem:[%s0 + $0x590] sm:$0xf]
  %v332 = vld [vmem:[%s0 + $0x594] sm:$0xff]
  %v333 = vld [vmem:[%s0 + $0x59c] sm:$0xf]
  %v334 = vld [vmem:[%s0 + $0x5a0] sm:$0xff]
  %v335 = vld [vmem:[%s0 + $0x5a8] sm:$0xf]
  %v336 = vld [vmem:[%s0 + $0x5ac] sm:$0xff]
  %v337 = vld [vmem:[%s0 + $0x5b4] sm:$0xf]
  %v338 = vld [vmem:[%s0 + $0x5b8] sm:$0xff]
  %v339 = vld [vmem:[%s0 + $0x5c0] sm:$0xf]
  %v340 = vld [vmem:[%s0 + $0x5c4] sm:$0xff]
  %v341 = vld [vmem:[%s0 + $0x5cc] sm:$0xf]
  %v342 = vld [vmem:[%s0 + $0x5d0] sm:$0xff]
  %v343 = vld [vmem:[%s0 + $0x5d8] sm:$0xf]
  %v344 = vld [vmem:[%s0 + $0x5dc] sm:$0xff]
  %v345 = vld [vmem:[%s0 + $0x5e4] sm:$0xf]
  %v346 = vld [vmem:[%s0 + $0x5e8] sm:$0xff]
  %v347 = vld [vmem:[%s0 + $0x5f0] sm:$0xf]
  %v348 = vld [vmem:[%s0 + $0x5f4] sm:$0xff]
  %v349 = vld [vmem:[%s0 + $0x5fc] sm:$0xf]
  %v350 = vld [vmem:[%s0 + $0x600] sm:$0xff]
  %v351 = vld [vmem:[%s0 + $0x608] sm:$0xf]
  %v352 = vld [vmem:[%s0 + $0x60c] sm:$0xff]
  %v353 = vld [vmem:[%s0 + $0x614] sm:$0xf]
  %v354 = vld [vmem:[%s0 + $0x618] sm:$0xff]
  %v355 = vld [vmem:[%s0 + $0x620] sm:$0xf]
  %v356 = vld [vmem:[%s0 + $0x624] sm:$0xff]
  %v357 = vld [vmem:[%s0 + $0x62c] sm:$0xf]
  %v358 = vld [vmem:[%s0 + $0x630] sm:$0xff]
  %v359 = vld [vmem:[%s0 + $0x638] sm:$0xf]
  %v360 = vld [vmem:[%s0 + $0x63c] sm:$0xff]
  %v361 = vld [vmem:[%s0 + $0x644] sm:$0xf]
  %v362 = vld [vmem:[%s0 + $0x648] sm:$0xff]
  %v363 = vld [vmem:[%s0 + $0x650] sm:$0xf]
  %v364 = vld [vmem:[%s0 + $0x654] sm:$0xff]
  %v365 = vld [vmem:[%s0 + $0x65c] sm:$0xf]
  %v366 = vld [vmem:[%s0 + $0x660] sm:$0xff]
  %v367 = vld [vmem:[%s0 + $0x668] sm:$0xf]
  %v368 = vld [vmem:[%s0 + $0x66c] sm:$0xff]
  %v369 = vld [vmem:[%s0 + $0x674] sm:$0xf]
  %v370 = vld [vmem:[%s0 + $0x678] sm:$0xff]
  %v371 = vld [vmem:[%s0 + $0x680] sm:$0xf]
  %v372 = vld [vmem:[%s0 + $0x684] sm:$0xff]
  %v373 = vld [vmem:[%s0 + $0x68c] sm:$0xf]
  %v374 = vld [vmem:[%s0 + $0x690] sm:$0xff]
  %v375 = vld [vmem:[%s0 + $0x698] sm:$0xf]
  %v376 = vld [vmem:[%s0 + $0x69c] sm:$0xff]
  %v377 = vld [vmem:[%s0 + $0x6a4] sm:$0xf]
  %v378 = vld [vmem:[%s0 + $0x6a8] sm:$0xff]
  %v379 = vld [vmem:[%s0 + $0x6b0] sm:$0xf]
  %v380 = vld [vmem:[%s0 + $0x6b4] sm:$0xff]
  %v381 = vld [vmem:[%s0 + $0x6bc] sm:$0xf]
  %v382 = vld [vmem:[%s0 + $0x6c0] sm:$0xff]
  %v383 = vld [vmem:[%s0 + $0x6c8] sm:$0xf]
  %v384 = vld [vmem:[%s0 + $0x6cc] sm:$0xff]
  %v385 = vld [vmem:[%s0 + $0x6d4] sm:$0xf]
  %v386 = vld [vmem:[%s0 + $0x6d8] sm:$0xff]
  %v387 = vld [vmem:[%s0 + $0x6e0] sm:$0xf]
  %v388 = vld [vmem:[%s0 + $0x6e4] sm:$0xff]
  %v389 = vld [vmem:[%s0 + $0x6ec] sm:$0xf]
  %v390 = vld [vmem:[%s0 + $0x6f0] sm:$0xff]
  %v391 = vld [vmem:[%s0 + $0x6f8] sm:$0xf]
  %v392 = vld [vmem:[%s0 + $0x6fc] sm:$0xff]
  %v393 = vld [vmem:[%s0 + $0x704] sm:$0xf]
  %v394 = vld [vmem:[%s0 + $0x708] sm:$0xff]
  %v395 = vld [vmem:[%s0 + $0x710] sm:$0xf]
  %v396 = vld [vmem:[%s0 + $0x714] sm:$0xff]
  %v397 = vld [vmem:[%s0 + $0x71c] sm:$0xf]
  %v398 = vld [vmem:[%s0 + $0x720] sm:$0xff]
  %v399 = vld [vmem:[%s0 + $0x728] sm:$0xf]
  %v400 = vld [vmem:[%s0 + $0x72c] sm:$0xff]
  %v401 = vld [vmem:[%s0 + $0x734] sm:$0xf]
  %v402 = vld [vmem:[%s0 + $0x738] sm:$0xff]
  %v403 = vld [vmem:[%s0 + $0x740] sm:$0xf]
  %v404 = vld [vmem:[%s0 + $0x744] sm:$0xff]
  %v405 = vld [vmem:[%s0 + $0x74c] sm:$0xf]
  %v406 = vld [vmem:[%s0 + $0x750] sm:$0xff]
  %v407 = vld [vmem:[%s0 + $0x758] sm:$0xf]
  %v408 = vld [vmem:[%s0 + $0x75c] sm:$0xff]
  %v409 = vld [vmem:[%s0 + $0x764] sm:$0xf]
  %v410 = vld [vmem:[%s0 + $0x768] sm:$0xff]
  %v411 = vld [vmem:[%s0 + $0x770] sm:$0xf]
  %v412 = vld [vmem:[%s0 + $0x774] sm:$0xff]
  %v413 = vld [vmem:[%s0 + $0x77c] sm:$0xf]
  %v414 = vld [vmem:[%s0 + $0x780] sm:$0xff]
  %v415 = vld [vmem:[%s0 + $0x788] sm:$0xf]
  %v416 = vld [vmem:[%s0 + $0x78c] sm:$0xff]
  %v417 = vld [vmem:[%s0 + $0x794] sm:$0xf]
  %v418 = vld [vmem:[%s0 + $0x798] sm:$0xff]
  %v419 = vld [vmem:[%s0 + $0x7a0] sm:$0xf]
  %v420 = vld [vmem:[%s0 + $0x7a4] sm:$0xff]
  %v421 = vld [vmem:[%s0 + $0x7ac] sm:$0xf]
  %v422 = vld [vmem:[%s0 + $0x7b0] sm:$0xff]
  %v423 = vld [vmem:[%s0 + $0x7b8] sm:$0xf]
  %v424 = vld [vmem:[%s0 + $0x7bc] sm:$0xff]
  %v425 = vld [vmem:[%s0 + $0x7c4] sm:$0xf]
  %v426 = vld [vmem:[%s0 + $0x7c8] sm:$0xff]
  %v427 = vld [vmem:[%s0 + $0x7d0] sm:$0xf]
  %v428 = vld [vmem:[%s0 + $0x7d4] sm:$0xff]
  %v429 = vld [vmem:[%s0 + $0x7dc] sm:$0xf]
  %v430 = vld [vmem:[%s0 + $0x7e0] sm:$0xff]
  %v431 = vld [vmem:[%s0 + $0x7e8] sm:$0xf]
  %v432 = vld [vmem:[%s0 + $0x7ec] sm:$0xff]
  %v433 = vld [vmem:[%s0 + $0x7f4] sm:$0xf]
  %v434 = vld [vmem:[%s0 + $0x7f8] sm:$0xff]
  %v435 = vld [vmem:[%s0 + $0x800] sm:$0xf]
  %v436 = vld [vmem:[%s0 + $0x804] sm:$0xff]
  %v437 = vld [vmem:[%s0 + $0x80c] sm:$0xf]
  %v438 = vld [vmem:[%s0 + $0x810] sm:$0xff]
  %v439 = vld [vmem:[%s0 + $0x818] sm:$0xf]
  %v440 = vld [vmem:[%s0 + $0x81c] sm:$0xff]
  %v441 = vld [vmem:[%s0 + $0x824] sm:$0xf]
  %v442 = vld [vmem:[%s0 + $0x828] sm:$0xff]
  %v443 = vld [vmem:[%s0 + $0x830] sm:$0xf]
  %v444 = vld [vmem:[%s0 + $0x834] sm:$0xff]
  %v445 = vld [vmem:[%s0 + $0x83c] sm:$0xf]
  %v446 = vld [vmem:[%s0 + $0x840] sm:$0xff]
  %v447 = vld [vmem:[%s0 + $0x848] sm:$0xf]
  %v448 = vld [vmem:[%s0 + $0x84c] sm:$0xff]
  %v449 = vld [vmem:[%s0 + $0x854] sm:$0xf]
  %v450 = vld [vmem:[%s0 + $0x858] sm:$0xff]
  %v451 = vld [vmem:[%s0 + $0x860] sm:$0xf]
  %v452 = vld [vmem:[%s0 + $0x864] sm:$0xff]
  %v453 = vld [vmem:[%s0 + $0x86c] sm:$0xf]
  %v454 = vld [vmem:[%s0 + $0x870] sm:$0xff]
  %v455 = vld [vmem:[%s0 + $0x878] sm:$0xf]
  %v456 = vld [vmem:[%s0 + $0x87c] sm:$0xff]
  %v457 = vld [vmem:[%s0 + $0x884] sm:$0xf]
  %v458 = vld [vmem:[%s0 + $0x888] sm:$0xff]
  %v459 = vld [vmem:[%s0 + $0x890] sm:$0xf]
  %v460 = vld [vmem:[%s0 + $0x894] sm:$0xff]
  %v461 = vld [vmem:[%s0 + $0x89c] sm:$0xf]
  %v462 = vld [vmem:[%s0 + $0x8a0] sm:$0xff]
  %v463 = vld [vmem:[%s0 + $0x8a8] sm:$0xf]
  %v464 = vld [vmem:[%s0 + $0x8ac] sm:$0xff]
  %v465 = vld [vmem:[%s0 + $0x8b4] sm:$0xf]
  %v466 = vld [vmem:[%s0 + $0x8b8] sm:$0xff]
  %v467 = vld [vmem:[%s0 + $0x8c0] sm:$0xf]
  %v468 = vld [vmem:[%s0 + $0x8c4] sm:$0xff]
  %v469 = vld [vmem:[%s0 + $0x8cc] sm:$0xf]
  %v470 = vld [vmem:[%s0 + $0x8d0] sm:$0xff]
  %v471 = vld [vmem:[%s0 + $0x8d8] sm:$0xf]
  %v472 = vld [vmem:[%s0 + $0x8dc] sm:$0xff]
  %v473 = vld [vmem:[%s0 + $0x8e4] sm:$0xf]
  %v474 = vld [vmem:[%s0 + $0x8e8] sm:$0xff]
  %v475 = vld [vmem:[%s0 + $0x8f0] sm:$0xf]
  %v476 = vld [vmem:[%s0 + $0x8f4] sm:$0xff]
  %v477 = vld [vmem:[%s0 + $0x8fc] sm:$0xf]
  %v478 = vld [vmem:[%s0 + $0x900] sm:$0xff]
  %v479 = vld [vmem:[%s0 + $0x908] sm:$0xf]
  %v480 = vld [vmem:[%s0 + $0x90c] sm:$0xff]
  %v481 = vld [vmem:[%s0 + $0x914] sm:$0xf]
  %v482 = vld [vmem:[%s0 + $0x918] sm:$0xff]
  %v483 = vld [vmem:[%s0 + $0x920] sm:$0xf]
  %v484 = vld [vmem:[%s0 + $0x924] sm:$0xff]
  %v485 = vld [vmem:[%s0 + $0x92c] sm:$0xf]
  %v486 = vld [vmem:[%s0 + $0x930] sm:$0xff]
  %v487 = vld [vmem:[%s0 + $0x938] sm:$0xf]
  %v488 = vld [vmem:[%s0 + $0x93c] sm:$0xff]
  %v489 = vld [vmem:[%s0 + $0x944] sm:$0xf]
  %v490 = vld [vmem:[%s0 + $0x948] sm:$0xff]
  %v491 = vld [vmem:[%s0 + $0x950] sm:$0xf]
  %v492 = vld [vmem:[%s0 + $0x954] sm:$0xff]
  %v493 = vld [vmem:[%s0 + $0x95c] sm:$0xf]
  %v494 = vld [vmem:[%s0 + $0x960] sm:$0xff]
  %v495 = vld [vmem:[%s0 + $0x968] sm:$0xf]
  %v496 = vld [vmem:[%s0 + $0x96c] sm:$0xff]
  %v497 = vld [vmem:[%s0 + $0x974] sm:$0xf]
  %v498 = vld [vmem:[%s0 + $0x978] sm:$0xff]
  %v499 = vld [vmem:[%s0 + $0x980] sm:$0xf]
  %v500 = vld [vmem:[%s0 + $0x984] sm:$0xff]
  %v501 = vld [vmem:[%s0 + $0x98c] sm:$0xf]
  %v502 = vld [vmem:[%s0 + $0x990] sm:$0xff]
  %v503 = vld [vmem:[%s0 + $0x998] sm:$0xf]
  %v504 = vld [vmem:[%s0 + $0x99c] sm:$0xff]
  %v505 = vld [vmem:[%s0 + $0x9a4] sm:$0xf]
  %v506 = vld [vmem:[%s0 + $0x9a8] sm:$0xff]
  %v507 = vld [vmem:[%s0 + $0x9b0] sm:$0xf]
  %v508 = vld [vmem:[%s0 + $0x9b4] sm:$0xff]
  %v509 = vld [vmem:[%s0 + $0x9bc] sm:$0xf]
  %v510 = vld [vmem:[%s0 + $0x9c0] sm:$0xff]
  %v511 = vld [vmem:[%s0 + $0x9c8] sm:$0xf]
  %v512 = vld [vmem:[%s0 + $0x9cc] sm:$0xff]
  %v513 = vld [vmem:[%s0 + $0x9d4] sm:$0xf]
  %v514 = vld [vmem:[%s0 + $0x9d8] sm:$0xff]
  %v515 = vld [vmem:[%s0 + $0x9e0] sm:$0xf]
  %v516 = vld [vmem:[%s0 + $0x9e4] sm:$0xff]
  %v517 = vld [vmem:[%s0 + $0x9ec] sm:$0xf]
  %v518 = vld [vmem:[%s0 + $0x9f0] sm:$0xff]
  %v519 = vld [vmem:[%s0 + $0x9f8] sm:$0xf]
  %v520 = vld [vmem:[%s0 + $0x9fc] sm:$0xff]
  %v521 = vld [vmem:[%s0 + $0xa04] sm:$0xf]
  %v522 = vld [vmem:[%s0 + $0xa08] sm:$0xff]
  %v523 = vld [vmem:[%s0 + $0xa10] sm:$0xf]
  %v524 = vld [vmem:[%s0 + $0xa14] sm:$0xff]
  %v525 = vld [vmem:[%s0 + $0xa1c] sm:$0xf]
  %v526 = vld [vmem:[%s0 + $0xa20] sm:$0xff]
  %v527 = vld [vmem:[%s0 + $0xa28] sm:$0xf]
  %v528 = vld [vmem:[%s0 + $0xa2c] sm:$0xff]
  %v529 = vld [vmem:[%s0 + $0xa34] sm:$0xf]
  %v530 = vld [vmem:[%s0 + $0xa38] sm:$0xff]
  %v531 = vld [vmem:[%s0 + $0xa40] sm:$0xf]
  %v532 = vld [vmem:[%s0 + $0xa44] sm:$0xff]
  %v533 = vld [vmem:[%s0 + $0xa4c] sm:$0xf]
  %v534 = vld [vmem:[%s0 + $0xa50] sm:$0xff]
  %v535 = vld [vmem:[%s0 + $0xa58] sm:$0xf]
  %v536 = vld [vmem:[%s0 + $0xa5c] sm:$0xff]
  %v537 = vld [vmem:[%s0 + $0xa64] sm:$0xf]
  %v538 = vld [vmem:[%s0 + $0xa68] sm:$0xff]
  %v539 = vld [vmem:[%s0 + $0xa70] sm:$0xf]
  %v540 = vld [vmem:[%s0 + $0xa74] sm:$0xff]
  %v541 = vld [vmem:[%s0 + $0xa7c] sm:$0xf]
  %v542 = vld [vmem:[%s0 + $0xa80] sm:$0xff]
  %v543 = vld [vmem:[%s0 + $0xa88] sm:$0xf]
  %v544 = vld [vmem:[%s0 + $0xa8c] sm:$0xff]
  %v545 = vld [vmem:[%s0 + $0xa94] sm:$0xf]
  %v546 = vld [vmem:[%s0 + $0xa98] sm:$0xff]
  %v547 = vld [vmem:[%s0 + $0xaa0] sm:$0xf]
  %v548 = vld [vmem:[%s0 + $0xaa4] sm:$0xff]
  %v549 = vld [vmem:[%s0 + $0xaac] sm:$0xf]
  %v550 = vld [vmem:[%s0 + $0xab0] sm:$0xff]
  %v551 = vld [vmem:[%s0 + $0xab8] sm:$0xf]
  %v552 = vld [vmem:[%s0 + $0xabc] sm:$0xff]
  %v553 = vld [vmem:[%s0 + $0xac4] sm:$0xf]
  %v554 = vld [vmem:[%s0 + $0xac8] sm:$0xff]
  %v555 = vld [vmem:[%s0 + $0xad0] sm:$0xf]
  %v556 = vld [vmem:[%s0 + $0xad4] sm:$0xff]
  %v557 = vld [vmem:[%s0 + $0xadc] sm:$0xf]
  %v558 = vld [vmem:[%s0 + $0xae0] sm:$0xff]
  %v559 = vld [vmem:[%s0 + $0xae8] sm:$0xf]
  %v560 = vld [vmem:[%s0 + $0xaec] sm:$0xff]
  %v561 = vld [vmem:[%s0 + $0xaf4] sm:$0xf]
  %v562 = vld [vmem:[%s0 + $0xaf8] sm:$0xff]
  %v563 = vld [vmem:[%s0 + $0xb00] sm:$0xf]
  %v564 = vld [vmem:[%s0 + $0xb04] sm:$0xff]
  %v565 = vld [vmem:[%s0 + $0xb0c] sm:$0xf]
  %v566 = vld [vmem:[%s0 + $0xb10] sm:$0xff]
  %v567 = vld [vmem:[%s0 + $0xb18] sm:$0xf]
  %v568 = vld [vmem:[%s0 + $0xb1c] sm:$0xff]
  %v569 = vld [vmem:[%s0 + $0xb24] sm:$0xf]
  %v570 = vld [vmem:[%s0 + $0xb28] sm:$0xff]
  %v571 = vld [vmem:[%s0 + $0xb30] sm:$0xf]
  %v572 = vld [vmem:[%s0 + $0xb34] sm:$0xff]
  %v573 = vld [vmem:[%s0 + $0xb3c] sm:$0xf]
  %v574 = vld [vmem:[%s0 + $0xb40] sm:$0xff]
  %v575 = vld [vmem:[%s0 + $0xb48] sm:$0xf]
  %v576 = vld [vmem:[%s0 + $0xb4c] sm:$0xff]
  %v577 = vld [vmem:[%s0 + $0xb54] sm:$0xf]
  %v578 = vld [vmem:[%s0 + $0xb58] sm:$0xff]
  %v579 = vld [vmem:[%s0 + $0xb60] sm:$0xf]
  %v580 = vld [vmem:[%s0 + $0xb64] sm:$0xff]
  %v581 = vld [vmem:[%s0 + $0xb6c] sm:$0xf]
  %v582 = vld [vmem:[%s0 + $0xb70] sm:$0xff]
  %v583 = vld [vmem:[%s0 + $0xb78] sm:$0xf]
  %v584 = vld [vmem:[%s0 + $0xb7c] sm:$0xff]
  %v585 = vld [vmem:[%s0 + $0xb84] sm:$0xf]
  %v586 = vld [vmem:[%s0 + $0xb88] sm:$0xff]
  %v587 = vld [vmem:[%s0 + $0xb90] sm:$0xf]
  %v588 = vld [vmem:[%s0 + $0xb94] sm:$0xff]
  %v589 = vld [vmem:[%s0 + $0xb9c] sm:$0xf]
  %v590 = vld [vmem:[%s0 + $0xba0] sm:$0xff]
  %v591 = vld [vmem:[%s0 + $0xba8] sm:$0xf]
  %v592 = vld [vmem:[%s0 + $0xbac] sm:$0xff]
  %v593 = vld [vmem:[%s0 + $0xbb4] sm:$0xf]
  %v594 = vld [vmem:[%s0 + $0xbb8] sm:$0xff]
  %v595 = vld [vmem:[%s0 + $0xbc0] sm:$0xf]
  %v596 = vld [vmem:[%s0 + $0xbc4] sm:$0xff]
  %v597 = vld [vmem:[%s0 + $0xbcc] sm:$0xf]
  %v598 = vld [vmem:[%s0 + $0xbd0] sm:$0xff]
  %v599 = vld [vmem:[%s0 + $0xbd8] sm:$0xf]
  %v600 = vld [vmem:[%s0 + $0xbdc] sm:$0xff]
  %v601 = vld [vmem:[%s0 + $0xbe4] sm:$0xf]
  %v602 = vld [vmem:[%s0 + $0xbe8] sm:$0xff]
  %v603 = vld [vmem:[%s0 + $0xbf0] sm:$0xf]
  %v604 = vld [vmem:[%s0 + $0xbf4] sm:$0xff]
  %v605 = vld [vmem:[%s0 + $0xbfc] sm:$0xf]
  %v606 = vld [vmem:[%s0 + $0xc00] sm:$0xff]
  %v607 = vld [vmem:[%s0 + $0xc08] sm:$0xf]
  %v608 = vld [vmem:[%s0 + $0xc0c] sm:$0xff]
  %v609 = vld [vmem:[%s0 + $0xc14] sm:$0xf]
  %v610 = vld [vmem:[%s0 + $0xc18] sm:$0xff]
  %v611 = vld [vmem:[%s0 + $0xc20] sm:$0xf]
  %v612 = vld [vmem:[%s0 + $0xc24] sm:$0xff]
  %v613 = vld [vmem:[%s0 + $0xc2c] sm:$0xf]
  %v614 = vld [vmem:[%s0 + $0xc30] sm:$0xff]
  %v615 = vld [vmem:[%s0 + $0xc38] sm:$0xf]
  %v616 = vld [vmem:[%s0 + $0xc3c] sm:$0xff]
  %v617 = vld [vmem:[%s0 + $0xc44] sm:$0xf]
  %v618 = vld [vmem:[%s0 + $0xc48] sm:$0xff]
  %v619 = vld [vmem:[%s0 + $0xc50] sm:$0xf]
  %v620 = vld [vmem:[%s0 + $0xc54] sm:$0xff]
  %v621 = vld [vmem:[%s0 + $0xc5c] sm:$0xf]
  %v622 = vld [vmem:[%s0 + $0xc60] sm:$0xff]
  %v623 = vld [vmem:[%s0 + $0xc68] sm:$0xf]
  %v624 = vld [vmem:[%s0 + $0xc6c] sm:$0xff]
  %v625 = vld [vmem:[%s0 + $0xc74] sm:$0xf]
  %v626 = vld [vmem:[%s0 + $0xc78] sm:$0xff]
  %v627 = vld [vmem:[%s0 + $0xc80] sm:$0xf]
  %v628 = vld [vmem:[%s0 + $0xc84] sm:$0xff]
  %v629 = vld [vmem:[%s0 + $0xc8c] sm:$0xf]
  %v630 = vld [vmem:[%s0 + $0xc90] sm:$0xff]
  %v631 = vld [vmem:[%s0 + $0xc98] sm:$0xf]
  %v632 = vld [vmem:[%s0 + $0xc9c] sm:$0xff]
  %v633 = vld [vmem:[%s0 + $0xca4] sm:$0xf]
  %v634 = vld [vmem:[%s0 + $0xca8] sm:$0xff]
  %v635 = vld [vmem:[%s0 + $0xcb0] sm:$0xf]
  %v636 = vld [vmem:[%s0 + $0xcb4] sm:$0xff]
  %v637 = vld [vmem:[%s0 + $0xcbc] sm:$0xf]
  %v638 = vld [vmem:[%s0 + $0xcc0] sm:$0xff]
  %v639 = vld [vmem:[%s0 + $0xcc8] sm:$0xf]
  %v640 = vld [vmem:[%s0 + $0xccc] sm:$0xff]
  %v641 = vld [vmem:[%s0 + $0xcd4] sm:$0xf]
  %v642 = vld [vmem:[%s0 + $0xcd8] sm:$0xff]
  %v643 = vld [vmem:[%s0 + $0xce0] sm:$0xf]
  %v644 = vld [vmem:[%s0 + $0xce4] sm:$0xff]
  %v645 = vld [vmem:[%s0 + $0xcec] sm:$0xf]
  %v646 = vld [vmem:[%s0 + $0xcf0] sm:$0xff]
  %v647 = vld [vmem:[%s0 + $0xcf8] sm:$0xf]
  %v648 = vld [vmem:[%s0 + $0xcfc] sm:$0xff]
  %v649 = vld [vmem:[%s0 + $0xd04] sm:$0xf]
  %v650 = vld [vmem:[%s0 + $0xd08] sm:$0xff]
  %v651 = vld [vmem:[%s0 + $0xd10] sm:$0xf]
  %v652 = vld [vmem:[%s0 + $0xd14] sm:$0xff]
  %v653 = vld [vmem:[%s0 + $0xd1c] sm:$0xf]
  %v654 = vld [vmem:[%s0 + $0xd20] sm:$0xff]
  %v655 = vld [vmem:[%s0 + $0xd28] sm:$0xf]
  %v656 = vld [vmem:[%s0 + $0xd2c] sm:$0xff]
  %v657 = vld [vmem:[%s0 + $0xd34] sm:$0xf]
  %v658 = vld [vmem:[%s0 + $0xd38] sm:$0xff]
  %v659 = vld [vmem:[%s0 + $0xd40] sm:$0xf]
  %v660 = vld [vmem:[%s0 + $0xd44] sm:$0xff]
  %v661 = vld [vmem:[%s0 + $0xd4c] sm:$0xf]
  %v662 = vld [vmem:[%s0 + $0xd50] sm:$0xff]
  %v663 = vld [vmem:[%s0 + $0xd58] sm:$0xf]
  %v664 = vld [vmem:[%s0 + $0xd5c] sm:$0xff]
  %v665 = vld [vmem:[%s0 + $0xd64] sm:$0xf]
  %v666 = vld [vmem:[%s0 + $0xd68] sm:$0xff]
  %v667 = vld [vmem:[%s0 + $0xd70] sm:$0xf]
  %v668 = vld [vmem:[%s0 + $0xd74] sm:$0xff]
  %v669 = vld [vmem:[%s0 + $0xd7c] sm:$0xf]
  %v670 = vld [vmem:[%s0 + $0xd80] sm:$0xff]
  %v671 = vld [vmem:[%s0 + $0xd88] sm:$0xf]
  %v672 = vld [vmem:[%s0 + $0xd8c] sm:$0xff]
  %v673 = vld [vmem:[%s0 + $0xd94] sm:$0xf]
  %v674 = vld [vmem:[%s0 + $0xd98] sm:$0xff]
  %v675 = vld [vmem:[%s0 + $0xda0] sm:$0xf]
  %v676 = vld [vmem:[%s0 + $0xda4] sm:$0xff]
  %v677 = vld [vmem:[%s0 + $0xdac] sm:$0xf]
  %v678 = vld [vmem:[%s0 + $0xdb0] sm:$0xff]
  %v679 = vld [vmem:[%s0 + $0xdb8] sm:$0xf]
  %v680 = vld [vmem:[%s0 + $0xdbc] sm:$0xff]
  %v681 = vld [vmem:[%s0 + $0xdc4] sm:$0xf]
  %v682 = vld [vmem:[%s0 + $0xdc8] sm:$0xff]
  %v683 = vld [vmem:[%s0 + $0xdd0] sm:$0xf]
  %v684 = vld [vmem:[%s0 + $0xdd4] sm:$0xff]
  %v685 = vld [vmem:[%s0 + $0xddc] sm:$0xf]
  %v686 = vld [vmem:[%s0 + $0xde0] sm:$0xff]
  %v687 = vld [vmem:[%s0 + $0xde8] sm:$0xf]
  %v688 = vld [vmem:[%s0 + $0xdec] sm:$0xff]
  %v689 = vld [vmem:[%s0 + $0xdf4] sm:$0xf]
  %v690 = vld [vmem:[%s0 + $0xdf8] sm:$0xff]
  %v691 = vld [vmem:[%s0 + $0xe00] sm:$0xf]
  %v692 = vld [vmem:[%s0 + $0xe04] sm:$0xff]
  %v693 = vld [vmem:[%s0 + $0xe0c] sm:$0xf]
  %v694 = vld [vmem:[%s0 + $0xe10] sm:$0xff]
  %v695 = vld [vmem:[%s0 + $0xe18] sm:$0xf]
  %v696 = vld [vmem:[%s0 + $0xe1c] sm:$0xff]
  %v697 = vld [vmem:[%s0 + $0xe24] sm:$0xf]
  %v698 = vld [vmem:[%s0 + $0xe28] sm:$0xff]
  %v699 = vld [vmem:[%s0 + $0xe30] sm:$0xf]
  %v700 = vld [vmem:[%s0 + $0xe34] sm:$0xff]
  %v701 = vld [vmem:[%s0 + $0xe3c] sm:$0xf]
  %v702 = vld [vmem:[%s0 + $0xe40] sm:$0xff]
  %v703 = vld [vmem:[%s0 + $0xe48] sm:$0xf]
  %v704 = vld [vmem:[%s0 + $0xe4c] sm:$0xff]
  %v705 = vld [vmem:[%s0 + $0xe54] sm:$0xf]
  %v706 = vld [vmem:[%s0 + $0xe58] sm:$0xff]
  %v707 = vld [vmem:[%s0 + $0xe60] sm:$0xf]
  %v708 = vld [vmem:[%s0 + $0xe64] sm:$0xff]
  %v709 = vld [vmem:[%s0 + $0xe6c] sm:$0xf]
  %v710 = vld [vmem:[%s0 + $0xe70] sm:$0xff]
  %v711 = vld [vmem:[%s0 + $0xe78] sm:$0xf]
  %v712 = vld [vmem:[%s0 + $0xe7c] sm:$0xff]
  %v713 = vld [vmem:[%s0 + $0xe84] sm:$0xf]
  %v714 = vld [vmem:[%s0 + $0xe88] sm:$0xff]
  %v715 = vld [vmem:[%s0 + $0xe90] sm:$0xf]
  %v716 = vld [vmem:[%s0 + $0xe94] sm:$0xff]
  %v717 = vld [vmem:[%s0 + $0xe9c] sm:$0xf]
  %v718 = vld [vmem:[%s0 + $0xea0] sm:$0xff]
  %v719 = vld [vmem:[%s0 + $0xea8] sm:$0xf]
  %v720 = vld [vmem:[%s0 + $0xeac] sm:$0xff]
  %v721 = vld [vmem:[%s0 + $0xeb4] sm:$0xf]
  %v722 = vld [vmem:[%s0 + $0xeb8] sm:$0xff]
  %v723 = vld [vmem:[%s0 + $0xec0] sm:$0xf]
  %v724 = vld [vmem:[%s0 + $0xec4] sm:$0xff]
  %v725 = vld [vmem:[%s0 + $0xecc] sm:$0xf]
  %v726 = vld [vmem:[%s0 + $0xed0] sm:$0xff]
  %v727 = vld [vmem:[%s0 + $0xed8] sm:$0xf]
  %v728 = vld [vmem:[%s0 + $0xedc] sm:$0xff]
  %v729 = vld [vmem:[%s0 + $0xee4] sm:$0xf]
  %v730 = vld [vmem:[%s0 + $0xee8] sm:$0xff]
  %v731 = vld [vmem:[%s0 + $0xef0] sm:$0xf]
  %v732 = vld [vmem:[%s0 + $0xef4] sm:$0xff]
  %v733 = vld [vmem:[%s0 + $0xefc] sm:$0xf]
  %v734 = vld [vmem:[%s0 + $0xf00] sm:$0xff]
  %v735 = vld [vmem:[%s0 + $0xf08] sm:$0xf]
  %v736 = vld [vmem:[%s0 + $0xf0c] sm:$0xff]
  %v737 = vld [vmem:[%s0 + $0xf14] sm:$0xf]
  %v738 = vld [vmem:[%s0 + $0xf18] sm:$0xff]
  %v739 = vld [vmem:[%s0 + $0xf20] sm:$0xf]
  %v740 = vld [vmem:[%s0 + $0xf24] sm:$0xff]
  %v741 = vld [vmem:[%s0 + $0xf2c] sm:$0xf]
  %v742 = vld [vmem:[%s0 + $0xf30] sm:$0xff]
  %v743 = vld [vmem:[%s0 + $0xf38] sm:$0xf]
  %v744 = vld [vmem:[%s0 + $0xf3c] sm:$0xff]
  %v745 = vld [vmem:[%s0 + $0xf44] sm:$0xf]
  %v746 = vld [vmem:[%s0 + $0xf48] sm:$0xff]
  %v747 = vld [vmem:[%s0 + $0xf50] sm:$0xf]
  %v748 = vld [vmem:[%s0 + $0xf54] sm:$0xff]
  %v749 = vld [vmem:[%s0 + $0xf5c] sm:$0xf]
  %v750 = vld [vmem:[%s0 + $0xf60] sm:$0xff]
  %v751 = vld [vmem:[%s0 + $0xf68] sm:$0xf]
  %v752 = vld [vmem:[%s0 + $0xf6c] sm:$0xff]
  %v753 = vld [vmem:[%s0 + $0xf74] sm:$0xf]
  %v754 = vld [vmem:[%s0 + $0xf78] sm:$0xff]
  %v755 = vld [vmem:[%s0 + $0xf80] sm:$0xf]
  %v756 = vld [vmem:[%s0 + $0xf84] sm:$0xff]
  %v757 = vld [vmem:[%s0 + $0xf8c] sm:$0xf]
  %v758 = vld [vmem:[%s0 + $0xf90] sm:$0xff]
  %v759 = vld [vmem:[%s0 + $0xf98] sm:$0xf]
  %v760 = vld [vmem:[%s0 + $0xf9c] sm:$0xff]
  %v761 = vld [vmem:[%s0 + $0xfa4] sm:$0xf]
  %v762 = vld [vmem:[%s0 + $0xfa8] sm:$0xff]
  %v763 = vld [vmem:[%s0 + $0xfb0] sm:$0xf]
  %v764 = vld [vmem:[%s0 + $0xfb4] sm:$0xff]
  %v765 = vld [vmem:[%s0 + $0xfbc] sm:$0xf]
  %v766 = vld [vmem:[%s0 + $0xfc0] sm:$0xff]
  %v767 = vld [vmem:[%s0 + $0xfc8] sm:$0xf]
  %v768 = vld [vmem:[%s0 + $0xfcc] sm:$0xff]
  %v769 = vld [vmem:[%s0 + $0xfd4] sm:$0xf]
  %v770 = vld [vmem:[%s0 + $0xfd8] sm:$0xff]
  %v771 = vld [vmem:[%s0 + $0xfe0] sm:$0xf]
  %v772 = vld [vmem:[%s0 + $0xfe4] sm:$0xff]
  %v773 = vld [vmem:[%s0 + $0xfec] sm:$0xf]
  %v774 = vld [vmem:[%s0 + $0xff0] sm:$0xff]
  %v775 = vld [vmem:[%s0 + $0xff8] sm:$0xf]
  %v776 = vld [vmem:[%s0 + $0xffc] sm:$0xff]
  %v777 = vld [vmem:[%s0 + $0x1004] sm:$0xf]
  %v778 = vld [vmem:[%s0 + $0x1008] sm:$0xff]
  %v779 = vld [vmem:[%s0 + $0x1010] sm:$0xf]
  %v780 = vld [vmem:[%s0 + $0x1014] sm:$0xff]
  %v781 = vld [vmem:[%s0 + $0x101c] sm:$0xf]
  %v782 = vld [vmem:[%s0 + $0x1020] sm:$0xff]
  %v783 = vld [vmem:[%s0 + $0x1028] sm:$0xf]
  %v784 = vld [vmem:[%s0 + $0x102c] sm:$0xff]
  %v785 = vld [vmem:[%s0 + $0x1034] sm:$0xf]
  %v786 = vld [vmem:[%s0 + $0x1038] sm:$0xff]
  %v787 = vld [vmem:[%s0 + $0x1040] sm:$0xf]
  %v788 = vld [vmem:[%s0 + $0x1044] sm:$0xff]
  %v789 = vld [vmem:[%s0 + $0x104c] sm:$0xf]
  %v790 = vld [vmem:[%s0 + $0x1050] sm:$0xff]
  %v791 = vld [vmem:[%s0 + $0x1058] sm:$0xf]
  %v792 = vld [vmem:[%s0 + $0x105c] sm:$0xff]
  %v793 = vld [vmem:[%s0 + $0x1064] sm:$0xf]
  %v794 = vld [vmem:[%s0 + $0x1068] sm:$0xff]
  %v795 = vld [vmem:[%s0 + $0x1070] sm:$0xf]
  %v796 = vld [vmem:[%s0 + $0x1074] sm:$0xff]
  %v797 = vld [vmem:[%s0 + $0x107c] sm:$0xf]
  %v798 = vld [vmem:[%s0 + $0x1080] sm:$0xff]
  %v799 = vld [vmem:[%s0 + $0x1088] sm:$0xf]
  %v800 = vld [vmem:[%s0 + $0x108c] sm:$0xff]
  %v801 = vld [vmem:[%s0 + $0x1094] sm:$0xf]
  %v802 = vld [vmem:[%s0 + $0x1098] sm:$0xff]
  %v803 = vld [vmem:[%s0 + $0x10a0] sm:$0xf]
  %v804 = vld [vmem:[%s0 + $0x10a4] sm:$0xff]
  %v805 = vld [vmem:[%s0 + $0x10ac] sm:$0xf]
  %v806 = vld [vmem:[%s0 + $0x10b0] sm:$0xff]
  %v807 = vld [vmem:[%s0 + $0x10b8] sm:$0xf]
  %v808 = vld [vmem:[%s0 + $0x10bc] sm:$0xff]
  %v809 = vld [vmem:[%s0 + $0x10c4] sm:$0xf]
  %v810 = vld [vmem:[%s0 + $0x10c8] sm:$0xff]
  %v811 = vld [vmem:[%s0 + $0x10d0] sm:$0xf]
  %v812 = vld [vmem:[%s0 + $0x10d4] sm:$0xff]
  %v813 = vld [vmem:[%s0 + $0x10dc] sm:$0xf]
  %v814 = vld [vmem:[%s0 + $0x10e0] sm:$0xff]
  %v815 = vld [vmem:[%s0 + $0x10e8] sm:$0xf]
  %v816 = vld [vmem:[%s0 + $0x10ec] sm:$0xff]
  %v817 = vld [vmem:[%s0 + $0x10f4] sm:$0xf]
  %v818 = vld [vmem:[%s0 + $0x10f8] sm:$0xff]
  %v819 = vld [vmem:[%s0 + $0x1100] sm:$0xf]
  %v820 = vld [vmem:[%s0 + $0x1104] sm:$0xff]
  %v821 = vld [vmem:[%s0 + $0x110c] sm:$0xf]
  %v822 = vld [vmem:[%s0 + $0x1110] sm:$0xff]
  %v823 = vld [vmem:[%s0 + $0x1118] sm:$0xf]
  %v824 = vld [vmem:[%s0 + $0x111c] sm:$0xff]
  %v825 = vld [vmem:[%s0 + $0x1124] sm:$0xf]
  %v826 = vld [vmem:[%s0 + $0x1128] sm:$0xff]
  %v827 = vld [vmem:[%s0 + $0x1130] sm:$0xf]
  %v828 = vld [vmem:[%s0 + $0x1134] sm:$0xff]
  %v829 = vld [vmem:[%s0 + $0x113c] sm:$0xf]
  %v830 = vld [vmem:[%s0 + $0x1140] sm:$0xff]
  %v831 = vld [vmem:[%s0 + $0x1148] sm:$0xf]
  %v832 = vld [vmem:[%s0 + $0x114c] sm:$0xff]
  %v833 = vld [vmem:[%s0 + $0x1154] sm:$0xf]
  %v834 = vld [vmem:[%s0 + $0x1158] sm:$0xff]
  %v835 = vld [vmem:[%s0 + $0x1160] sm:$0xf]
  %v836 = vld [vmem:[%s0 + $0x1164] sm:$0xff]
  %v837 = vld [vmem:[%s0 + $0x116c] sm:$0xf]
  %v838 = vld [vmem:[%s0 + $0x1170] sm:$0xff]
  %v839 = vld [vmem:[%s0 + $0x1178] sm:$0xf]
  %v840 = vld [vmem:[%s0 + $0x117c] sm:$0xff]
  %v841 = vld [vmem:[%s0 + $0x1184] sm:$0xf]
  %v842 = vld [vmem:[%s0 + $0x1188] sm:$0xff]
  %v843 = vld [vmem:[%s0 + $0x1190] sm:$0xf]
  %v844 = vld [vmem:[%s0 + $0x1194] sm:$0xff]
  %v845 = vld [vmem:[%s0 + $0x119c] sm:$0xf]
  %v846 = vld [vmem:[%s0 + $0x11a0] sm:$0xff]
  %v847 = vld [vmem:[%s0 + $0x11a8] sm:$0xf]
  %v848 = vld [vmem:[%s0 + $0x11ac] sm:$0xff]
  %v849 = vld [vmem:[%s0 + $0x11b4] sm:$0xf]
  %v850 = vld [vmem:[%s0 + $0x11b8] sm:$0xff]
  %v851 = vld [vmem:[%s0 + $0x11c0] sm:$0xf]
  %v852 = vld [vmem:[%s0 + $0x11c4] sm:$0xff]
  %v853 = vld [vmem:[%s0 + $0x11cc] sm:$0xf]
  %v854 = vld [vmem:[%s0 + $0x11d0] sm:$0xff]
  %v855 = vld [vmem:[%s0 + $0x11d8] sm:$0xf]
  %v856 = vld [vmem:[%s0 + $0x11dc] sm:$0xff]
  %v857 = vld [vmem:[%s0 + $0x11e4] sm:$0xf]
  %v858 = vld [vmem:[%s0 + $0x11e8] sm:$0xff]
  %v859 = vld [vmem:[%s0 + $0x11f0] sm:$0xf]
  %v860 = vld [vmem:[%s0 + $0x11f4] sm:$0xff]
  %v861 = vld [vmem:[%s0 + $0x11fc] sm:$0xf]
  %v862 = vld [vmem:[%s0 + $0x1200] sm:$0xff]
  %v863 = vld [vmem:[%s0 + $0x1208] sm:$0xf]
  %v864 = vld [vmem:[%s0 + $0x120c] sm:$0xff]
  %v865 = vld [vmem:[%s0 + $0x1214] sm:$0xf]
  %v866 = vld [vmem:[%s0 + $0x1218] sm:$0xff]
  %v867 = vld [vmem:[%s0 + $0x1220] sm:$0xf]
  %v868 = vld [vmem:[%s0 + $0x1224] sm:$0xff]
  %v869 = vld [vmem:[%s0 + $0x122c] sm:$0xf]
  %v870 = vld [vmem:[%s0 + $0x1230] sm:$0xff]
  %v871 = vld [vmem:[%s0 + $0x1238] sm:$0xf]
  %v872 = vld [vmem:[%s0 + $0x123c] sm:$0xff]
  %v873 = vld [vmem:[%s0 + $0x1244] sm:$0xf]
  %v874 = vld [vmem:[%s0 + $0x1248] sm:$0xff]
  %v875 = vld [vmem:[%s0 + $0x1250] sm:$0xf]
  %v876 = vld [vmem:[%s0 + $0x1254] sm:$0xff]
  %v877 = vld [vmem:[%s0 + $0x125c] sm:$0xf]
  %v878 = vld [vmem:[%s0 + $0x1260] sm:$0xff]
  %v879 = vld [vmem:[%s0 + $0x1268] sm:$0xf]
  %v880 = vld [vmem:[%s0 + $0x126c] sm:$0xff]
  %v881 = vld [vmem:[%s0 + $0x1274] sm:$0xf]
  %v882 = vld [vmem:[%s0 + $0x1278] sm:$0xff]
  %v883 = vld [vmem:[%s0 + $0x1280] sm:$0xf]
  %v884 = vld [vmem:[%s0 + $0x1284] sm:$0xff]
  %v885 = vld [vmem:[%s0 + $0x128c] sm:$0xf]
  %v886 = vld [vmem:[%s0 + $0x1290] sm:$0xff]
  %v887 = vld [vmem:[%s0 + $0x1298] sm:$0xf]
  %v888 = vld [vmem:[%s0 + $0x129c] sm:$0xff]
  %v889 = vld [vmem:[%s0 + $0x12a4] sm:$0xf]
  %v890 = vld [vmem:[%s0 + $0x12a8] sm:$0xff]
  %v891 = vld [vmem:[%s0 + $0x12b0] sm:$0xf]
  %v892 = vld [vmem:[%s0 + $0x12b4] sm:$0xff]
  %v893 = vld [vmem:[%s0 + $0x12bc] sm:$0xf]
  %v894 = vld [vmem:[%s0 + $0x12c0] sm:$0xff]
  %v895 = vld [vmem:[%s0 + $0x12c8] sm:$0xf]
  %v896 = vld [vmem:[%s0 + $0x12cc] sm:$0xff]
  %v897 = vld [vmem:[%s0 + $0x12d4] sm:$0xf]
  %v898 = vld [vmem:[%s0 + $0x12d8] sm:$0xff]
  %v899 = vld [vmem:[%s0 + $0x12e0] sm:$0xf]
  %v900 = vld [vmem:[%s0 + $0x12e4] sm:$0xff]
  %v901 = vld [vmem:[%s0 + $0x12ec] sm:$0xf]
  %v902 = vld [vmem:[%s0 + $0x12f0] sm:$0xff]
  %v903 = vld [vmem:[%s0 + $0x12f8] sm:$0xf]
  %v904 = vld [vmem:[%s0 + $0x12fc] sm:$0xff]
  %v905 = vld [vmem:[%s0 + $0x1304] sm:$0xf]
  %v906 = vld [vmem:[%s0 + $0x1308] sm:$0xff]
  %v907 = vld [vmem:[%s0 + $0x1310] sm:$0xf]
  %v908 = vld [vmem:[%s0 + $0x1314] sm:$0xff]
  %v909 = vld [vmem:[%s0 + $0x131c] sm:$0xf]
  %v910 = vld [vmem:[%s0 + $0x1320] sm:$0xff]
  %v911 = vld [vmem:[%s0 + $0x1328] sm:$0xf]
  %v912 = vld [vmem:[%s0 + $0x132c] sm:$0xff]
  %v913 = vld [vmem:[%s0 + $0x1334] sm:$0xf]
  %v914 = vld [vmem:[%s0 + $0x1338] sm:$0xff]
  %v915 = vld [vmem:[%s0 + $0x1340] sm:$0xf]
  %v916 = vld [vmem:[%s0 + $0x1344] sm:$0xff]
  %v917 = vld [vmem:[%s0 + $0x134c] sm:$0xf]
  %v918 = vld [vmem:[%s0 + $0x1350] sm:$0xff]
  %v919 = vld [vmem:[%s0 + $0x1358] sm:$0xf]
  %v920 = vld [vmem:[%s0 + $0x135c] sm:$0xff]
  %v921 = vld [vmem:[%s0 + $0x1364] sm:$0xf]
  %v922 = vld [vmem:[%s0 + $0x1368] sm:$0xff]
  %v923 = vld [vmem:[%s0 + $0x1370] sm:$0xf]
  %v924 = vld [vmem:[%s0 + $0x1374] sm:$0xff]
  %v925 = vld [vmem:[%s0 + $0x137c] sm:$0xf]
  %v926 = vld [vmem:[%s0 + $0x1380] sm:$0xff]
  %v927 = vld [vmem:[%s0 + $0x1388] sm:$0xf]
  %v928 = vld [vmem:[%s0 + $0x138c] sm:$0xff]
  %v929 = vld [vmem:[%s0 + $0x1394] sm:$0xf]
  %v930 = vld [vmem:[%s0 + $0x1398] sm:$0xff]
  %v931 = vld [vmem:[%s0 + $0x13a0] sm:$0xf]
  %v932 = vld [vmem:[%s0 + $0x13a4] sm:$0xff]
  %v933 = vld [vmem:[%s0 + $0x13ac] sm:$0xf]
  %v934 = vld [vmem:[%s0 + $0x13b0] sm:$0xff]
  %v935 = vld [vmem:[%s0 + $0x13b8] sm:$0xf]
  %v936 = vld [vmem:[%s0 + $0x13bc] sm:$0xff]
  %v937 = vld [vmem:[%s0 + $0x13c4] sm:$0xf]
  %v938 = vld [vmem:[%s0 + $0x13c8] sm:$0xff]
  %v939 = vld [vmem:[%s0 + $0x13d0] sm:$0xf]
  %v940 = vld [vmem:[%s0 + $0x13d4] sm:$0xff]
  %v941 = vld [vmem:[%s0 + $0x13dc] sm:$0xf]
  %v942 = vld [vmem:[%s0 + $0x13e0] sm:$0xff]
  %v943 = vld [vmem:[%s0 + $0x13e8] sm:$0xf]
  %v944 = vld [vmem:[%s0 + $0x13ec] sm:$0xff]
  %v945 = vld [vmem:[%s0 + $0x13f4] sm:$0xf]
  %v946 = vld [vmem:[%s0 + $0x13f8] sm:$0xff]
  %v947 = vld [vmem:[%s0 + $0x1400] sm:$0xf]
  %v948 = vld [vmem:[%s0 + $0x1404] sm:$0xff]
  %v949 = vld [vmem:[%s0 + $0x140c] sm:$0xf]
  %v950 = vld [vmem:[%s0 + $0x1410] sm:$0xff]
  %v951 = vld [vmem:[%s0 + $0x1418] sm:$0xf]
  %v952 = vld [vmem:[%s0 + $0x141c] sm:$0xff]
  %v953 = vld [vmem:[%s0 + $0x1424] sm:$0xf]
  %v954 = vld [vmem:[%s0 + $0x1428] sm:$0xff]
  %v955 = vld [vmem:[%s0 + $0x1430] sm:$0xf]
  %v956 = vld [vmem:[%s0 + $0x1434] sm:$0xff]
  %v957 = vld [vmem:[%s0 + $0x143c] sm:$0xf]
  %v958 = vld [vmem:[%s0 + $0x1440] sm:$0xff]
  %v959 = vld [vmem:[%s0 + $0x1448] sm:$0xf]
  %v960 = vld [vmem:[%s0 + $0x144c] sm:$0xff]
  %v961 = vld [vmem:[%s0 + $0x1454] sm:$0xf]
  %v962 = vld [vmem:[%s0 + $0x1458] sm:$0xff]
  %v963 = vld [vmem:[%s0 + $0x1460] sm:$0xf]
  %v964 = vld [vmem:[%s0 + $0x1464] sm:$0xff]
  %v965 = vld [vmem:[%s0 + $0x146c] sm:$0xf]
  %v966 = vld [vmem:[%s0 + $0x1470] sm:$0xff]
  %v967 = vld [vmem:[%s0 + $0x1478] sm:$0xf]
  %v968 = vld [vmem:[%s0 + $0x147c] sm:$0xff]
  %v969 = vld [vmem:[%s0 + $0x1484] sm:$0xf]
  %v970 = vld [vmem:[%s0 + $0x1488] sm:$0xff]
  %v971 = vld [vmem:[%s0 + $0x1490] sm:$0xf]
  %v972 = vld [vmem:[%s0 + $0x1494] sm:$0xff]
  %v973 = vld [vmem:[%s0 + $0x149c] sm:$0xf]
  %v974 = vld [vmem:[%s0 + $0x14a0] sm:$0xff]
  %v975 = vld [vmem:[%s0 + $0x14a8] sm:$0xf]
  %v976 = vld [vmem:[%s0 + $0x14ac] sm:$0xff]
  %v977 = vld [vmem:[%s0 + $0x14b4] sm:$0xf]
  %v978 = vld [vmem:[%s0 + $0x14b8] sm:$0xff]
  %v979 = vld [vmem:[%s0 + $0x14c0] sm:$0xf]
  %v980 = vld [vmem:[%s0 + $0x14c4] sm:$0xff]
  %v981 = vld [vmem:[%s0 + $0x14cc] sm:$0xf]
  %v982 = vld [vmem:[%s0 + $0x14d0] sm:$0xff]
  %v983 = vld [vmem:[%s0 + $0x14d8] sm:$0xf]
  %v984 = vld [vmem:[%s0 + $0x14dc] sm:$0xff]
  %v985 = vld [vmem:[%s0 + $0x14e4] sm:$0xf]
  %v986 = vld [vmem:[%s0 + $0x14e8] sm:$0xff]
  %v987 = vld [vmem:[%s0 + $0x14f0] sm:$0xf]
  %v988 = vld [vmem:[%s0 + $0x14f4] sm:$0xff]
  %v989 = vld [vmem:[%s0 + $0x14fc] sm:$0xf]
  %v990 = vld [vmem:[%s0 + $0x1500] sm:$0xff]
  %v991 = vld [vmem:[%s0 + $0x1508] sm:$0xf]
  %v992 = vld [vmem:[%s0 + $0x150c] sm:$0xff]
  %v993 = vld [vmem:[%s0 + $0x1514] sm:$0xf]
  %v994 = vld [vmem:[%s0 + $0x1518] sm:$0xff]
  %v995 = vld [vmem:[%s0 + $0x1520] sm:$0xf]
  %v996 = vld [vmem:[%s0 + $0x1524] sm:$0xff]
  %v997 = vld [vmem:[%s0 + $0x152c] sm:$0xf]
  %v998 = vld [vmem:[%s0 + $0x1530] sm:$0xff]
  %v999 = vld [vmem:[%s0 + $0x1538] sm:$0xf]
  %v1000 = vld [vmem:[%s0 + $0x153c] sm:$0xff]
  %v1001 = vld [vmem:[%s0 + $0x1544] sm:$0xf]
  %v1002 = vld [vmem:[%s0 + $0x1548] sm:$0xff]
  %v1003 = vld [vmem:[%s0 + $0x1550] sm:$0xf]
  %v1004 = vld [vmem:[%s0 + $0x1554] sm:$0xff]
  %v1005 = vld [vmem:[%s0 + $0x155c] sm:$0xf]
  %v1006 = vld [vmem:[%s0 + $0x1560] sm:$0xff]
  %v1007 = vld [vmem:[%s0 + $0x1568] sm:$0xf]
  %v1008 = vld [vmem:[%s0 + $0x156c] sm:$0xff]
  %v1009 = vld [vmem:[%s0 + $0x1574] sm:$0xf]
  %v1010 = vld [vmem:[%s0 + $0x1578] sm:$0xff]
  %v1011 = vld [vmem:[%s0 + $0x1580] sm:$0xf]
  %v1012 = vld [vmem:[%s0 + $0x1584] sm:$0xff]
  %v1013 = vld [vmem:[%s0 + $0x158c] sm:$0xf]
  %v1014 = vld [vmem:[%s0 + $0x1590] sm:$0xff]
  %v1015 = vld [vmem:[%s0 + $0x1598] sm:$0xf]
  %v1016 = vld [vmem:[%s0 + $0x159c] sm:$0xff]
  %v1017 = vld [vmem:[%s0 + $0x15a4] sm:$0xf]
  %v1018 = vld [vmem:[%s0 + $0x15a8] sm:$0xff]
  %v1019 = vld [vmem:[%s0 + $0x15b0] sm:$0xf]
  %v1020 = vld [vmem:[%s0 + $0x15b4] sm:$0xff]
  %v1021 = vld [vmem:[%s0 + $0x15bc] sm:$0xf]
  %v1022 = vld [vmem:[%s0 + $0x15c0] sm:$0xff]
  %v1023 = vld [vmem:[%s0 + $0x15c8] sm:$0xf]
  %v1024 = vld [vmem:[%s0 + $0x15cc] sm:$0xff]
  %v1025 = vld [vmem:[%s0 + $0x15d4] sm:$0xf]
  %v1026 = vld [vmem:[%s0 + $0x15d8] sm:$0xff]
  %v1027 = vld [vmem:[%s0 + $0x15e0] sm:$0xf]
  %v1028 = vld [vmem:[%s0 + $0x15e4] sm:$0xff]
  %v1029 = vld [vmem:[%s0 + $0x15ec] sm:$0xf]
  %v1030 = vld [vmem:[%s0 + $0x15f0] sm:$0xff]
  %v1031 = vld [vmem:[%s0 + $0x15f8] sm:$0xf]
  %v1032 = vld [vmem:[%s0 + $0x15fc] sm:$0xff]
  %v1033 = vld [vmem:[%s0 + $0x1604] sm:$0xf]
  %v1034 = vld [vmem:[%s0 + $0x1608] sm:$0xff]
  %v1035 = vld [vmem:[%s0 + $0x1610] sm:$0xf]
  %v1036 = vld [vmem:[%s0 + $0x1614] sm:$0xff]
  %v1037 = vld [vmem:[%s0 + $0x161c] sm:$0xf]
  %v1038 = vld [vmem:[%s0 + $0x1620] sm:$0xff]
  %v1039 = vld [vmem:[%s0 + $0x1628] sm:$0xf]
  %v1040 = vld [vmem:[%s0 + $0x162c] sm:$0xff]
  %v1041 = vld [vmem:[%s0 + $0x1634] sm:$0xf]
  %v1042 = vld [vmem:[%s0 + $0x1638] sm:$0xff]
  %v1043 = vld [vmem:[%s0 + $0x1640] sm:$0xf]
  %v1044 = vld [vmem:[%s0 + $0x1644] sm:$0xff]
  %v1045 = vld [vmem:[%s0 + $0x164c] sm:$0xf]
  %v1046 = vld [vmem:[%s0 + $0x1650] sm:$0xff]
  %v1047 = vld [vmem:[%s0 + $0x1658] sm:$0xf]
  %v1048 = vld [vmem:[%s0 + $0x165c] sm:$0xff]
  %v1049 = vld [vmem:[%s0 + $0x1664] sm:$0xf]
  %v1050 = vld [vmem:[%s0 + $0x1668] sm:$0xff]
  %v1051 = vld [vmem:[%s0 + $0x1670] sm:$0xf]
  %v1052 = vld [vmem:[%s0 + $0x1674] sm:$0xff]
  %v1053 = vld [vmem:[%s0 + $0x167c] sm:$0xf]
  %v1054 = vld [vmem:[%s0 + $0x1680] sm:$0xff]
  %v1055 = vld [vmem:[%s0 + $0x1688] sm:$0xf]
  %v1056 = vld [vmem:[%s0 + $0x168c] sm:$0xff]
  %v1057 = vld [vmem:[%s0 + $0x1694] sm:$0xf]
  %v1058 = vld [vmem:[%s0 + $0x1698] sm:$0xff]
  %v1059 = vld [vmem:[%s0 + $0x16a0] sm:$0xf]
  %v1060 = vld [vmem:[%s0 + $0x16a4] sm:$0xff]
  %v1061 = vld [vmem:[%s0 + $0x16ac] sm:$0xf]
  %v1062 = vld [vmem:[%s0 + $0x16b0] sm:$0xff]
  %v1063 = vld [vmem:[%s0 + $0x16b8] sm:$0xf]
  %v1064 = vld [vmem:[%s0 + $0x16bc] sm:$0xff]
  %v1065 = vld [vmem:[%s0 + $0x16c4] sm:$0xf]
  %v1066 = vld [vmem:[%s0 + $0x16c8] sm:$0xff]
  %v1067 = vld [vmem:[%s0 + $0x16d0] sm:$0xf]
  %v1068 = vld [vmem:[%s0 + $0x16d4] sm:$0xff]
  %v1069 = vld [vmem:[%s0 + $0x16dc] sm:$0xf]
  %v1070 = vld [vmem:[%s0 + $0x16e0] sm:$0xff]
  %v1071 = vld [vmem:[%s0 + $0x16e8] sm:$0xf]
  %v1072 = vld [vmem:[%s0 + $0x16ec] sm:$0xff]
  %v1073 = vld [vmem:[%s0 + $0x16f4] sm:$0xf]
  %v1074 = vld [vmem:[%s0 + $0x16f8] sm:$0xff]
  %v1075 = vld [vmem:[%s0 + $0x1700] sm:$0xf]
  %v1076 = vld [vmem:[%s0 + $0x1704] sm:$0xff]
  %v1077 = vld [vmem:[%s0 + $0x170c] sm:$0xf]
  %v1078 = vld [vmem:[%s0 + $0x1710] sm:$0xff]
  %v1079 = vld [vmem:[%s0 + $0x1718] sm:$0xf]
  %v1080 = vld [vmem:[%s0 + $0x171c] sm:$0xff]
  %v1081 = vld [vmem:[%s0 + $0x1724] sm:$0xf]
  %v1082 = vld [vmem:[%s0 + $0x1728] sm:$0xff]
  %v1083 = vld [vmem:[%s0 + $0x1730] sm:$0xf]
  %v1084 = vld [vmem:[%s0 + $0x1734] sm:$0xff]
  %v1085 = vld [vmem:[%s0 + $0x173c] sm:$0xf]
  %v1086 = vld [vmem:[%s0 + $0x1740] sm:$0xff]
  %v1087 = vld [vmem:[%s0 + $0x1748] sm:$0xf]
  %v1088 = vld [vmem:[%s0 + $0x174c] sm:$0xff]
  %v1089 = vld [vmem:[%s0 + $0x1754] sm:$0xf]
  %v1090 = vld [vmem:[%s0 + $0x1758] sm:$0xff]
  %v1091 = vld [vmem:[%s0 + $0x1760] sm:$0xf]
  %v1092 = vld [vmem:[%s0 + $0x1764] sm:$0xff]
  %v1093 = vld [vmem:[%s0 + $0x176c] sm:$0xf]
  %v1094 = vld [vmem:[%s0 + $0x1770] sm:$0xff]
  %v1095 = vld [vmem:[%s0 + $0x1778] sm:$0xf]
  %v1096 = vld [vmem:[%s0 + $0x177c] sm:$0xff]
  %v1097 = vld [vmem:[%s0 + $0x1784] sm:$0xf]
  %v1098 = vld [vmem:[%s0 + $0x1788] sm:$0xff]
  %v1099 = vld [vmem:[%s0 + $0x1790] sm:$0xf]
  %v1100 = vld [vmem:[%s0 + $0x1794] sm:$0xff]
  %v1101 = vld [vmem:[%s0 + $0x179c] sm:$0xf]
  %v1102 = vld [vmem:[%s0 + $0x17a0] sm:$0xff]
  %v1103 = vld [vmem:[%s0 + $0x17a8] sm:$0xf]
  %v1104 = vld [vmem:[%s0 + $0x17ac] sm:$0xff]
  %v1105 = vld [vmem:[%s0 + $0x17b4] sm:$0xf]
  %v1106 = vld [vmem:[%s0 + $0x17b8] sm:$0xff]
  %v1107 = vld [vmem:[%s0 + $0x17c0] sm:$0xf]
  %v1108 = vld [vmem:[%s0 + $0x17c4] sm:$0xff]
  %v1109 = vld [vmem:[%s0 + $0x17cc] sm:$0xf]
  %v1110 = vld [vmem:[%s0 + $0x17d0] sm:$0xff]
  %v1111 = vld [vmem:[%s0 + $0x17d8] sm:$0xf]
  %v1112 = vld [vmem:[%s0 + $0x17dc] sm:$0xff]
  %v1113 = vld [vmem:[%s0 + $0x17e4] sm:$0xf]
  %v1114 = vld [vmem:[%s0 + $0x17e8] sm:$0xff]
  %v1115 = vld [vmem:[%s0 + $0x17f0] sm:$0xf]
  %v1116 = vld [vmem:[%s0 + $0x17f4] sm:$0xff]
  %v1117 = vld [vmem:[%s0 + $0x17fc] sm:$0xf]
  %v1150 = vunpack.c.l.b16 %v62
  %v1151 = vunpack.c.h.b16 %v62
  %v1152 = vunpack.c.l.b16 %v63
  %v1153 = vunpack.c.h.b16 %v63
  %v1154 = vunpack.c.l.b16 %v64
  %v1155 = vunpack.c.h.b16 %v64
  %v1156 = vunpack.c.l.b16 %v65
  %v1157 = vunpack.c.h.b16 %v65
  %v1158 = vunpack.c.l.b16 %v66
  %v1159 = vunpack.c.h.b16 %v66
  %v1160 = vunpack.c.l.b16 %v67
  %v1161 = vunpack.c.h.b16 %v67
  %v1162 = vunpack.c.l.b16 %v68
  %v1163 = vunpack.c.h.b16 %v68
  %v1164 = vunpack.c.l.b16 %v69
  %v1165 = vunpack.c.h.b16 %v69
  %v1166 = vunpack.c.l.b16 %v70
  %v1167 = vunpack.c.h.b16 %v70
  %v1168 = vunpack.c.l.b16 %v71
  %v1169 = vunpack.c.h.b16 %v71
  %v1170 = vunpack.c.l.b16 %v72
  %v1171 = vunpack.c.h.b16 %v72
  %v1172 = vunpack.c.l.b16 %v73
  %v1173 = vunpack.c.h.b16 %v73
  %v1174 = vunpack.c.l.b16 %v74
  %v1175 = vunpack.c.h.b16 %v74
  %v1176 = vunpack.c.l.b16 %v75
  %v1177 = vunpack.c.h.b16 %v75
  %v1178 = vunpack.c.l.b16 %v76
  %v1179 = vunpack.c.h.b16 %v76
  %v1180 = vunpack.c.l.b16 %v77
  %v1181 = vunpack.c.h.b16 %v77
  %v1182 = vunpack.c.l.b16 %v78
  %v1183 = vunpack.c.h.b16 %v78
  %v1184 = vunpack.c.l.b16 %v79
  %v1185 = vunpack.c.h.b16 %v79
  %v1186 = vunpack.c.l.b16 %v80
  %v1187 = vunpack.c.h.b16 %v80
  %v1188 = vunpack.c.l.b16 %v81
  %v1189 = vunpack.c.h.b16 %v81
  %v1190 = vunpack.c.l.b16 %v82
  %v1191 = vunpack.c.h.b16 %v82
  %v1192 = vunpack.c.l.b16 %v83
  %v1193 = vunpack.c.h.b16 %v83
  %v1194 = vunpack.c.l.b16 %v84
  %v1195 = vunpack.c.h.b16 %v84
  %v1196 = vunpack.c.l.b16 %v85
  %v1197 = vunpack.c.h.b16 %v85
  %v1198 = vunpack.c.l.b16 %v86
  %v1199 = vunpack.c.h.b16 %v86
  %v1200 = vunpack.c.l.b16 %v87
  %v1201 = vunpack.c.h.b16 %v87
  %v1202 = vunpack.c.l.b16 %v88
  %v1203 = vunpack.c.h.b16 %v88
  %v1204 = vunpack.c.l.b16 %v89
  %v1205 = vunpack.c.h.b16 %v89
  %v1206 = vunpack.c.l.b16 %v90
  %v1207 = vunpack.c.h.b16 %v90
  %v1208 = vunpack.c.l.b16 %v91
  %v1209 = vunpack.c.h.b16 %v91
  %v1210 = vunpack.c.l.b16 %v92
  %v1211 = vunpack.c.h.b16 %v92
  %v1212 = vunpack.c.l.b16 %v93
  %v1213 = vunpack.c.h.b16 %v93
  %v1214 = vpack.c.b16 %v1182, %v1150
  %v1215 = vpack.c.b16 %v1183, %v1151
  %v1216 = vpack.c.b16 %v1184, %v1152
  %v1217 = vpack.c.b16 %v1185, %v1153
  %v1218 = vpack.c.b16 %v1186, %v1154
  %v1219 = vpack.c.b16 %v1187, %v1155
  %v1220 = vpack.c.b16 %v1188, %v1156
  %v1221 = vpack.c.b16 %v1189, %v1157
  %v1222 = vpack.c.b16 %v1190, %v1158
  %v1223 = vpack.c.b16 %v1191, %v1159
  %v1224 = vpack.c.b16 %v1192, %v1160
  %v1225 = vpack.c.b16 %v1193, %v1161
  %v1226 = vpack.c.b16 %v1194, %v1162
  %v1227 = vpack.c.b16 %v1195, %v1163
  %v1228 = vpack.c.b16 %v1196, %v1164
  %v1229 = vpack.c.b16 %v1197, %v1165
  %v1230 = vpack.c.b16 %v1198, %v1166
  %v1231 = vpack.c.b16 %v1199, %v1167
  %v1232 = vpack.c.b16 %v1200, %v1168
  %v1233 = vpack.c.b16 %v1201, %v1169
  %v1234 = vpack.c.b16 %v1202, %v1170
  %v1235 = vpack.c.b16 %v1203, %v1171
  %v1236 = vpack.c.b16 %v1204, %v1172
  %v1237 = vpack.c.b16 %v1205, %v1173
  %v1238 = vpack.c.b16 %v1206, %v1174
  %v1239 = vpack.c.b16 %v1207, %v1175
  %v1240 = vpack.c.b16 %v1208, %v1176
  %v1241 = vpack.c.b16 %v1209, %v1177
  %v1242 = vpack.c.b16 %v1210, %v1178
  %v1243 = vpack.c.b16 %v1211, %v1179
  %v1244 = vpack.c.b16 %v1212, %v1180
  %v1245 = vpack.c.b16 %v1213, %v1181
  %v2302 = vunpack.c.l.b16 %v94
  %v2303 = vunpack.c.h.b16 %v94
  %v2304 = vunpack.c.l.b16 %v95
  %v2305 = vunpack.c.l.b16 %v96
  %v2306 = vunpack.c.h.b16 %v96
  %v2307 = vunpack.c.l.b16 %v97
  %v2308 = vunpack.c.l.b16 %v98
  %v2309 = vunpack.c.h.b16 %v98
  %v2310 = vunpack.c.l.b16 %v99
  %v2311 = vunpack.c.l.b16 %v100
  %v2312 = vunpack.c.h.b16 %v100
  %v2313 = vunpack.c.l.b16 %v101
  %v2314 = vunpack.c.l.b16 %v102
  %v2315 = vunpack.c.h.b16 %v102
  %v2316 = vunpack.c.l.b16 %v103
  %v2317 = vunpack.c.l.b16 %v104
  %v2318 = vunpack.c.h.b16 %v104
  %v2319 = vunpack.c.l.b16 %v105
  %v2320 = vunpack.c.l.b16 %v106
  %v2321 = vunpack.c.h.b16 %v106
  %v2322 = vunpack.c.l.b16 %v107
  %v2323 = vunpack.c.l.b16 %v108
  %v2324 = vunpack.c.h.b16 %v108
  %v2325 = vunpack.c.l.b16 %v109
  %v2326 = vunpack.c.l.b16 %v110
  %v2327 = vunpack.c.h.b16 %v110
  %v2328 = vunpack.c.l.b16 %v111
  %v2329 = vunpack.c.l.b16 %v112
  %v2330 = vunpack.c.h.b16 %v112
  %v2331 = vunpack.c.l.b16 %v113
  %v2332 = vunpack.c.l.b16 %v114
  %v2333 = vunpack.c.h.b16 %v114
  %v2334 = vunpack.c.l.b16 %v115
  %v2335 = vunpack.c.l.b16 %v116
  %v2336 = vunpack.c.h.b16 %v116
  %v2337 = vunpack.c.l.b16 %v117
  %v2338 = vunpack.c.l.b16 %v118
  %v2339 = vunpack.c.h.b16 %v118
  %v2340 = vunpack.c.l.b16 %v119
  %v2341 = vunpack.c.l.b16 %v120
  %v2342 = vunpack.c.h.b16 %v120
  %v2343 = vunpack.c.l.b16 %v121
  %v2344 = vunpack.c.l.b16 %v122
  %v2345 = vunpack.c.h.b16 %v122
  %v2346 = vunpack.c.l.b16 %v123
  %v2347 = vunpack.c.l.b16 %v124
  %v2348 = vunpack.c.h.b16 %v124
  %v2349 = vunpack.c.l.b16 %v125
  %v2350 = vunpack.c.l.b16 %v126
  %v2351 = vunpack.c.h.b16 %v126
  %v2352 = vunpack.c.l.b16 %v127
  %v2353 = vunpack.c.l.b16 %v128
  %v2354 = vunpack.c.h.b16 %v128
  %v2355 = vunpack.c.l.b16 %v129
  %v2356 = vunpack.c.l.b16 %v130
  %v2357 = vunpack.c.h.b16 %v130
  %v2358 = vunpack.c.l.b16 %v131
  %v2359 = vunpack.c.l.b16 %v132
  %v2360 = vunpack.c.h.b16 %v132
  %v2361 = vunpack.c.l.b16 %v133
  %v2362 = vunpack.c.l.b16 %v134
  %v2363 = vunpack.c.h.b16 %v134
  %v2364 = vunpack.c.l.b16 %v135
  %v2365 = vunpack.c.l.b16 %v136
  %v2366 = vunpack.c.h.b16 %v136
  %v2367 = vunpack.c.l.b16 %v137
  %v2368 = vunpack.c.l.b16 %v138
  %v2369 = vunpack.c.h.b16 %v138
  %v2370 = vunpack.c.l.b16 %v139
  %v2371 = vunpack.c.l.b16 %v140
  %v2372 = vunpack.c.h.b16 %v140
  %v2373 = vunpack.c.l.b16 %v141
  %v2374 = vunpack.c.l.b16 %v142
  %v2375 = vunpack.c.h.b16 %v142
  %v2376 = vunpack.c.l.b16 %v143
  %v2377 = vunpack.c.l.b16 %v144
  %v2378 = vunpack.c.h.b16 %v144
  %v2379 = vunpack.c.l.b16 %v145
  %v2380 = vunpack.c.l.b16 %v146
  %v2381 = vunpack.c.h.b16 %v146
  %v2382 = vunpack.c.l.b16 %v147
  %v2383 = vunpack.c.l.b16 %v148
  %v2384 = vunpack.c.h.b16 %v148
  %v2385 = vunpack.c.l.b16 %v149
  %v2386 = vunpack.c.l.b16 %v150
  %v2387 = vunpack.c.h.b16 %v150
  %v2388 = vunpack.c.l.b16 %v151
  %v2389 = vunpack.c.l.b16 %v152
  %v2390 = vunpack.c.h.b16 %v152
  %v2391 = vunpack.c.l.b16 %v153
  %v2392 = vunpack.c.l.b16 %v154
  %v2393 = vunpack.c.h.b16 %v154
  %v2394 = vunpack.c.l.b16 %v155
  %v2395 = vunpack.c.l.b16 %v156
  %v2396 = vunpack.c.h.b16 %v156
  %v2397 = vunpack.c.l.b16 %v157
  %v2398 = vunpack.c.l.b16 %v158
  %v2399 = vunpack.c.h.b16 %v158
  %v2400 = vunpack.c.l.b16 %v159
  %v2401 = vunpack.c.l.b16 %v160
  %v2402 = vunpack.c.h.b16 %v160
  %v2403 = vunpack.c.l.b16 %v161
  %v2404 = vunpack.c.l.b16 %v162
  %v2405 = vunpack.c.h.b16 %v162
  %v2406 = vunpack.c.l.b16 %v163
  %v2407 = vunpack.c.l.b16 %v164
  %v2408 = vunpack.c.h.b16 %v164
  %v2409 = vunpack.c.l.b16 %v165
  %v2410 = vunpack.c.l.b16 %v166
  %v2411 = vunpack.c.h.b16 %v166
  %v2412 = vunpack.c.l.b16 %v167
  %v2413 = vunpack.c.l.b16 %v168
  %v2414 = vunpack.c.h.b16 %v168
  %v2415 = vunpack.c.l.b16 %v169
  %v2416 = vunpack.c.l.b16 %v170
  %v2417 = vunpack.c.h.b16 %v170
  %v2418 = vunpack.c.l.b16 %v171
  %v2419 = vunpack.c.l.b16 %v172
  %v2420 = vunpack.c.h.b16 %v172
  %v2421 = vunpack.c.l.b16 %v173
  %v2422 = vunpack.c.l.b16 %v174
  %v2423 = vunpack.c.h.b16 %v174
  %v2424 = vunpack.c.l.b16 %v175
  %v2425 = vunpack.c.l.b16 %v176
  %v2426 = vunpack.c.h.b16 %v176
  %v2427 = vunpack.c.l.b16 %v177
  %v2428 = vunpack.c.l.b16 %v178
  %v2429 = vunpack.c.h.b16 %v178
  %v2430 = vunpack.c.l.b16 %v179
  %v2431 = vunpack.c.l.b16 %v180
  %v2432 = vunpack.c.h.b16 %v180
  %v2433 = vunpack.c.l.b16 %v181
  %v2434 = vunpack.c.l.b16 %v182
  %v2435 = vunpack.c.h.b16 %v182
  %v2436 = vunpack.c.l.b16 %v183
  %v2437 = vunpack.c.l.b16 %v184
  %v2438 = vunpack.c.h.b16 %v184
  %v2439 = vunpack.c.l.b16 %v185
  %v2440 = vunpack.c.l.b16 %v186
  %v2441 = vunpack.c.h.b16 %v186
  %v2442 = vunpack.c.l.b16 %v187
  %v2443 = vunpack.c.l.b16 %v188
  %v2444 = vunpack.c.h.b16 %v188
  %v2445 = vunpack.c.l.b16 %v189
  %v2446 = vunpack.c.l.b16 %v190
  %v2447 = vunpack.c.h.b16 %v190
  %v2448 = vunpack.c.l.b16 %v191
  %v2449 = vunpack.c.l.b16 %v192
  %v2450 = vunpack.c.h.b16 %v192
  %v2451 = vunpack.c.l.b16 %v193
  %v2452 = vunpack.c.l.b16 %v194
  %v2453 = vunpack.c.h.b16 %v194
  %v2454 = vunpack.c.l.b16 %v195
  %v2455 = vunpack.c.l.b16 %v196
  %v2456 = vunpack.c.h.b16 %v196
  %v2457 = vunpack.c.l.b16 %v197
  %v2458 = vunpack.c.l.b16 %v198
  %v2459 = vunpack.c.h.b16 %v198
  %v2460 = vunpack.c.l.b16 %v199
  %v2461 = vunpack.c.l.b16 %v200
  %v2462 = vunpack.c.h.b16 %v200
  %v2463 = vunpack.c.l.b16 %v201
  %v2464 = vunpack.c.l.b16 %v202
  %v2465 = vunpack.c.h.b16 %v202
  %v2466 = vunpack.c.l.b16 %v203
  %v2467 = vunpack.c.l.b16 %v204
  %v2468 = vunpack.c.h.b16 %v204
  %v2469 = vunpack.c.l.b16 %v205
  %v2470 = vunpack.c.l.b16 %v206
  %v2471 = vunpack.c.h.b16 %v206
  %v2472 = vunpack.c.l.b16 %v207
  %v2473 = vunpack.c.l.b16 %v208
  %v2474 = vunpack.c.h.b16 %v208
  %v2475 = vunpack.c.l.b16 %v209
  %v2476 = vunpack.c.l.b16 %v210
  %v2477 = vunpack.c.h.b16 %v210
  %v2478 = vunpack.c.l.b16 %v211
  %v2479 = vunpack.c.l.b16 %v212
  %v2480 = vunpack.c.h.b16 %v212
  %v2481 = vunpack.c.l.b16 %v213
  %v2482 = vunpack.c.l.b16 %v214
  %v2483 = vunpack.c.h.b16 %v214
  %v2484 = vunpack.c.l.b16 %v215
  %v2485 = vunpack.c.l.b16 %v216
  %v2486 = vunpack.c.h.b16 %v216
  %v2487 = vunpack.c.l.b16 %v217
  %v2488 = vunpack.c.l.b16 %v218
  %v2489 = vunpack.c.h.b16 %v218
  %v2490 = vunpack.c.l.b16 %v219
  %v2491 = vunpack.c.l.b16 %v220
  %v2492 = vunpack.c.h.b16 %v220
  %v2493 = vunpack.c.l.b16 %v221
  %v2494 = vunpack.c.l.b16 %v222
  %v2495 = vunpack.c.h.b16 %v222
  %v2496 = vunpack.c.l.b16 %v223
  %v2497 = vunpack.c.l.b16 %v224
  %v2498 = vunpack.c.h.b16 %v224
  %v2499 = vunpack.c.l.b16 %v225
  %v2500 = vunpack.c.l.b16 %v226
  %v2501 = vunpack.c.h.b16 %v226
  %v2502 = vunpack.c.l.b16 %v227
  %v2503 = vunpack.c.l.b16 %v228
  %v2504 = vunpack.c.h.b16 %v228
  %v2505 = vunpack.c.l.b16 %v229
  %v2506 = vunpack.c.l.b16 %v230
  %v2507 = vunpack.c.h.b16 %v230
  %v2508 = vunpack.c.l.b16 %v231
  %v2509 = vunpack.c.l.b16 %v232
  %v2510 = vunpack.c.h.b16 %v232
  %v2511 = vunpack.c.l.b16 %v233
  %v2512 = vunpack.c.l.b16 %v234
  %v2513 = vunpack.c.h.b16 %v234
  %v2514 = vunpack.c.l.b16 %v235
  %v2515 = vunpack.c.l.b16 %v236
  %v2516 = vunpack.c.h.b16 %v236
  %v2517 = vunpack.c.l.b16 %v237
  %v2518 = vunpack.c.l.b16 %v238
  %v2519 = vunpack.c.h.b16 %v238
  %v2520 = vunpack.c.l.b16 %v239
  %v2521 = vunpack.c.l.b16 %v240
  %v2522 = vunpack.c.h.b16 %v240
  %v2523 = vunpack.c.l.b16 %v241
  %v2524 = vunpack.c.l.b16 %v242
  %v2525 = vunpack.c.h.b16 %v242
  %v2526 = vunpack.c.l.b16 %v243
  %v2527 = vunpack.c.l.b16 %v244
  %v2528 = vunpack.c.h.b16 %v244
  %v2529 = vunpack.c.l.b16 %v245
  %v2530 = vunpack.c.l.b16 %v246
  %v2531 = vunpack.c.h.b16 %v246
  %v2532 = vunpack.c.l.b16 %v247
  %v2533 = vunpack.c.l.b16 %v248
  %v2534 = vunpack.c.h.b16 %v248
  %v2535 = vunpack.c.l.b16 %v249
  %v2536 = vunpack.c.l.b16 %v250
  %v2537 = vunpack.c.h.b16 %v250
  %v2538 = vunpack.c.l.b16 %v251
  %v2539 = vunpack.c.l.b16 %v252
  %v2540 = vunpack.c.h.b16 %v252
  %v2541 = vunpack.c.l.b16 %v253
  %v2542 = vunpack.c.l.b16 %v254
  %v2543 = vunpack.c.h.b16 %v254
  %v2544 = vunpack.c.l.b16 %v255
  %v2545 = vunpack.c.l.b16 %v256
  %v2546 = vunpack.c.h.b16 %v256
  %v2547 = vunpack.c.l.b16 %v257
  %v2548 = vunpack.c.l.b16 %v258
  %v2549 = vunpack.c.h.b16 %v258
  %v2550 = vunpack.c.l.b16 %v259
  %v2551 = vunpack.c.l.b16 %v260
  %v2552 = vunpack.c.h.b16 %v260
  %v2553 = vunpack.c.l.b16 %v261
  %v2554 = vunpack.c.l.b16 %v262
  %v2555 = vunpack.c.h.b16 %v262
  %v2556 = vunpack.c.l.b16 %v263
  %v2557 = vunpack.c.l.b16 %v264
  %v2558 = vunpack.c.h.b16 %v264
  %v2559 = vunpack.c.l.b16 %v265
  %v2560 = vunpack.c.l.b16 %v266
  %v2561 = vunpack.c.h.b16 %v266
  %v2562 = vunpack.c.l.b16 %v267
  %v2563 = vunpack.c.l.b16 %v268
  %v2564 = vunpack.c.h.b16 %v268
  %v2565 = vunpack.c.l.b16 %v269
  %v2566 = vunpack.c.l.b16 %v270
  %v2567 = vunpack.c.h.b16 %v270
  %v2568 = vunpack.c.l.b16 %v271
  %v2569 = vunpack.c.l.b16 %v272
  %v2570 = vunpack.c.h.b16 %v272
  %v2571 = vunpack.c.l.b16 %v273
  %v2572 = vunpack.c.l.b16 %v274
  %v2573 = vunpack.c.h.b16 %v274
  %v2574 = vunpack.c.l.b16 %v275
  %v2575 = vunpack.c.l.b16 %v276
  %v2576 = vunpack.c.h.b16 %v276
  %v2577 = vunpack.c.l.b16 %v277
  %v2578 = vunpack.c.l.b16 %v278
  %v2579 = vunpack.c.h.b16 %v278
  %v2580 = vunpack.c.l.b16 %v279
  %v2581 = vunpack.c.l.b16 %v280
  %v2582 = vunpack.c.h.b16 %v280
  %v2583 = vunpack.c.l.b16 %v281
  %v2584 = vunpack.c.l.b16 %v282
  %v2585 = vunpack.c.h.b16 %v282
  %v2586 = vunpack.c.l.b16 %v283
  %v2587 = vunpack.c.l.b16 %v284
  %v2588 = vunpack.c.h.b16 %v284
  %v2589 = vunpack.c.l.b16 %v285
  %v2590 = vunpack.c.l.b16 %v286
  %v2591 = vunpack.c.h.b16 %v286
  %v2592 = vunpack.c.l.b16 %v287
  %v2593 = vunpack.c.l.b16 %v288
  %v2594 = vunpack.c.h.b16 %v288
  %v2595 = vunpack.c.l.b16 %v289
  %v2596 = vunpack.c.l.b16 %v290
  %v2597 = vunpack.c.h.b16 %v290
  %v2598 = vunpack.c.l.b16 %v291
  %v2599 = vunpack.c.l.b16 %v292
  %v2600 = vunpack.c.h.b16 %v292
  %v2601 = vunpack.c.l.b16 %v293
  %v2602 = vunpack.c.l.b16 %v294
  %v2603 = vunpack.c.h.b16 %v294
  %v2604 = vunpack.c.l.b16 %v295
  %v2605 = vunpack.c.l.b16 %v296
  %v2606 = vunpack.c.h.b16 %v296
  %v2607 = vunpack.c.l.b16 %v297
  %v2608 = vunpack.c.l.b16 %v298
  %v2609 = vunpack.c.h.b16 %v298
  %v2610 = vunpack.c.l.b16 %v299
  %v2611 = vunpack.c.l.b16 %v300
  %v2612 = vunpack.c.h.b16 %v300
  %v2613 = vunpack.c.l.b16 %v301
  %v2614 = vunpack.c.l.b16 %v302
  %v2615 = vunpack.c.h.b16 %v302
  %v2616 = vunpack.c.l.b16 %v303
  %v2617 = vunpack.c.l.b16 %v304
  %v2618 = vunpack.c.h.b16 %v304
  %v2619 = vunpack.c.l.b16 %v305
  %v2620 = vunpack.c.l.b16 %v306
  %v2621 = vunpack.c.h.b16 %v306
  %v2622 = vunpack.c.l.b16 %v307
  %v2623 = vunpack.c.l.b16 %v308
  %v2624 = vunpack.c.h.b16 %v308
  %v2625 = vunpack.c.l.b16 %v309
  %v2626 = vunpack.c.l.b16 %v310
  %v2627 = vunpack.c.h.b16 %v310
  %v2628 = vunpack.c.l.b16 %v311
  %v2629 = vunpack.c.l.b16 %v312
  %v2630 = vunpack.c.h.b16 %v312
  %v2631 = vunpack.c.l.b16 %v313
  %v2632 = vunpack.c.l.b16 %v314
  %v2633 = vunpack.c.h.b16 %v314
  %v2634 = vunpack.c.l.b16 %v315
  %v2635 = vunpack.c.l.b16 %v316
  %v2636 = vunpack.c.h.b16 %v316
  %v2637 = vunpack.c.l.b16 %v317
  %v2638 = vunpack.c.l.b16 %v318
  %v2639 = vunpack.c.h.b16 %v318
  %v2640 = vunpack.c.l.b16 %v319
  %v2641 = vunpack.c.l.b16 %v320
  %v2642 = vunpack.c.h.b16 %v320
  %v2643 = vunpack.c.l.b16 %v321
  %v2644 = vunpack.c.l.b16 %v322
  %v2645 = vunpack.c.h.b16 %v322
  %v2646 = vunpack.c.l.b16 %v323
  %v2647 = vunpack.c.l.b16 %v324
  %v2648 = vunpack.c.h.b16 %v324
  %v2649 = vunpack.c.l.b16 %v325
  %v2650 = vunpack.c.l.b16 %v326
  %v2651 = vunpack.c.h.b16 %v326
  %v2652 = vunpack.c.l.b16 %v327
  %v2653 = vunpack.c.l.b16 %v328
  %v2654 = vunpack.c.h.b16 %v328
  %v2655 = vunpack.c.l.b16 %v329
  %v2656 = vunpack.c.l.b16 %v330
  %v2657 = vunpack.c.h.b16 %v330
  %v2658 = vunpack.c.l.b16 %v331
  %v2659 = vunpack.c.l.b16 %v332
  %v2660 = vunpack.c.h.b16 %v332
  %v2661 = vunpack.c.l.b16 %v333
  %v2662 = vunpack.c.l.b16 %v334
  %v2663 = vunpack.c.h.b16 %v334
  %v2664 = vunpack.c.l.b16 %v335
  %v2665 = vunpack.c.l.b16 %v336
  %v2666 = vunpack.c.h.b16 %v336
  %v2667 = vunpack.c.l.b16 %v337
  %v2668 = vunpack.c.l.b16 %v338
  %v2669 = vunpack.c.h.b16 %v338
  %v2670 = vunpack.c.l.b16 %v339
  %v2671 = vunpack.c.l.b16 %v340
  %v2672 = vunpack.c.h.b16 %v340
  %v2673 = vunpack.c.l.b16 %v341
  %v2674 = vunpack.c.l.b16 %v342
  %v2675 = vunpack.c.h.b16 %v342
  %v2676 = vunpack.c.l.b16 %v343
  %v2677 = vunpack.c.l.b16 %v344
  %v2678 = vunpack.c.h.b16 %v344
  %v2679 = vunpack.c.l.b16 %v345
  %v2680 = vunpack.c.l.b16 %v346
  %v2681 = vunpack.c.h.b16 %v346
  %v2682 = vunpack.c.l.b16 %v347
  %v2683 = vunpack.c.l.b16 %v348
  %v2684 = vunpack.c.h.b16 %v348
  %v2685 = vunpack.c.l.b16 %v349
  %v2686 = vunpack.c.l.b16 %v350
  %v2687 = vunpack.c.h.b16 %v350
  %v2688 = vunpack.c.l.b16 %v351
  %v2689 = vunpack.c.l.b16 %v352
  %v2690 = vunpack.c.h.b16 %v352
  %v2691 = vunpack.c.l.b16 %v353
  %v2692 = vunpack.c.l.b16 %v354
  %v2693 = vunpack.c.h.b16 %v354
  %v2694 = vunpack.c.l.b16 %v355
  %v2695 = vunpack.c.l.b16 %v356
  %v2696 = vunpack.c.h.b16 %v356
  %v2697 = vunpack.c.l.b16 %v357
  %v2698 = vunpack.c.l.b16 %v358
  %v2699 = vunpack.c.h.b16 %v358
  %v2700 = vunpack.c.l.b16 %v359
  %v2701 = vunpack.c.l.b16 %v360
  %v2702 = vunpack.c.h.b16 %v360
  %v2703 = vunpack.c.l.b16 %v361
  %v2704 = vunpack.c.l.b16 %v362
  %v2705 = vunpack.c.h.b16 %v362
  %v2706 = vunpack.c.l.b16 %v363
  %v2707 = vunpack.c.l.b16 %v364
  %v2708 = vunpack.c.h.b16 %v364
  %v2709 = vunpack.c.l.b16 %v365
  %v2710 = vunpack.c.l.b16 %v366
  %v2711 = vunpack.c.h.b16 %v366
  %v2712 = vunpack.c.l.b16 %v367
  %v2713 = vunpack.c.l.b16 %v368
  %v2714 = vunpack.c.h.b16 %v368
  %v2715 = vunpack.c.l.b16 %v369
  %v2716 = vunpack.c.l.b16 %v370
  %v2717 = vunpack.c.h.b16 %v370
  %v2718 = vunpack.c.l.b16 %v371
  %v2719 = vunpack.c.l.b16 %v372
  %v2720 = vunpack.c.h.b16 %v372
  %v2721 = vunpack.c.l.b16 %v373
  %v2722 = vunpack.c.l.b16 %v374
  %v2723 = vunpack.c.h.b16 %v374
  %v2724 = vunpack.c.l.b16 %v375
  %v2725 = vunpack.c.l.b16 %v376
  %v2726 = vunpack.c.h.b16 %v376
  %v2727 = vunpack.c.l.b16 %v377
  %v2728 = vunpack.c.l.b16 %v378
  %v2729 = vunpack.c.h.b16 %v378
  %v2730 = vunpack.c.l.b16 %v379
  %v2731 = vunpack.c.l.b16 %v380
  %v2732 = vunpack.c.h.b16 %v380
  %v2733 = vunpack.c.l.b16 %v381
  %v2734 = vunpack.c.l.b16 %v382
  %v2735 = vunpack.c.h.b16 %v382
  %v2736 = vunpack.c.l.b16 %v383
  %v2737 = vunpack.c.l.b16 %v384
  %v2738 = vunpack.c.h.b16 %v384
  %v2739 = vunpack.c.l.b16 %v385
  %v2740 = vunpack.c.l.b16 %v386
  %v2741 = vunpack.c.h.b16 %v386
  %v2742 = vunpack.c.l.b16 %v387
  %v2743 = vunpack.c.l.b16 %v388
  %v2744 = vunpack.c.h.b16 %v388
  %v2745 = vunpack.c.l.b16 %v389
  %v2746 = vunpack.c.l.b16 %v390
  %v2747 = vunpack.c.h.b16 %v390
  %v2748 = vunpack.c.l.b16 %v391
  %v2749 = vunpack.c.l.b16 %v392
  %v2750 = vunpack.c.h.b16 %v392
  %v2751 = vunpack.c.l.b16 %v393
  %v2752 = vunpack.c.l.b16 %v394
  %v2753 = vunpack.c.h.b16 %v394
  %v2754 = vunpack.c.l.b16 %v395
  %v2755 = vunpack.c.l.b16 %v396
  %v2756 = vunpack.c.h.b16 %v396
  %v2757 = vunpack.c.l.b16 %v397
  %v2758 = vunpack.c.l.b16 %v398
  %v2759 = vunpack.c.h.b16 %v398
  %v2760 = vunpack.c.l.b16 %v399
  %v2761 = vunpack.c.l.b16 %v400
  %v2762 = vunpack.c.h.b16 %v400
  %v2763 = vunpack.c.l.b16 %v401
  %v2764 = vunpack.c.l.b16 %v402
  %v2765 = vunpack.c.h.b16 %v402
  %v2766 = vunpack.c.l.b16 %v403
  %v2767 = vunpack.c.l.b16 %v404
  %v2768 = vunpack.c.h.b16 %v404
  %v2769 = vunpack.c.l.b16 %v405
  %v2770 = vunpack.c.l.b16 %v406
  %v2771 = vunpack.c.h.b16 %v406
  %v2772 = vunpack.c.l.b16 %v407
  %v2773 = vunpack.c.l.b16 %v408
  %v2774 = vunpack.c.h.b16 %v408
  %v2775 = vunpack.c.l.b16 %v409
  %v2776 = vunpack.c.l.b16 %v410
  %v2777 = vunpack.c.h.b16 %v410
  %v2778 = vunpack.c.l.b16 %v411
  %v2779 = vunpack.c.l.b16 %v412
  %v2780 = vunpack.c.h.b16 %v412
  %v2781 = vunpack.c.l.b16 %v413
  %v2782 = vunpack.c.l.b16 %v414
  %v2783 = vunpack.c.h.b16 %v414
  %v2784 = vunpack.c.l.b16 %v415
  %v2785 = vunpack.c.l.b16 %v416
  %v2786 = vunpack.c.h.b16 %v416
  %v2787 = vunpack.c.l.b16 %v417
  %v2788 = vunpack.c.l.b16 %v418
  %v2789 = vunpack.c.h.b16 %v418
  %v2790 = vunpack.c.l.b16 %v419
  %v2791 = vunpack.c.l.b16 %v420
  %v2792 = vunpack.c.h.b16 %v420
  %v2793 = vunpack.c.l.b16 %v421
  %v2794 = vunpack.c.l.b16 %v422
  %v2795 = vunpack.c.h.b16 %v422
  %v2796 = vunpack.c.l.b16 %v423
  %v2797 = vunpack.c.l.b16 %v424
  %v2798 = vunpack.c.h.b16 %v424
  %v2799 = vunpack.c.l.b16 %v425
  %v2800 = vunpack.c.l.b16 %v426
  %v2801 = vunpack.c.h.b16 %v426
  %v2802 = vunpack.c.l.b16 %v427
  %v2803 = vunpack.c.l.b16 %v428
  %v2804 = vunpack.c.h.b16 %v428
  %v2805 = vunpack.c.l.b16 %v429
  %v2806 = vunpack.c.l.b16 %v430
  %v2807 = vunpack.c.h.b16 %v430
  %v2808 = vunpack.c.l.b16 %v431
  %v2809 = vunpack.c.l.b16 %v432
  %v2810 = vunpack.c.h.b16 %v432
  %v2811 = vunpack.c.l.b16 %v433
  %v2812 = vunpack.c.l.b16 %v434
  %v2813 = vunpack.c.h.b16 %v434
  %v2814 = vunpack.c.l.b16 %v435
  %v2815 = vunpack.c.l.b16 %v436
  %v2816 = vunpack.c.h.b16 %v436
  %v2817 = vunpack.c.l.b16 %v437
  %v2818 = vunpack.c.l.b16 %v438
  %v2819 = vunpack.c.h.b16 %v438
  %v2820 = vunpack.c.l.b16 %v439
  %v2821 = vunpack.c.l.b16 %v440
  %v2822 = vunpack.c.h.b16 %v440
  %v2823 = vunpack.c.l.b16 %v441
  %v2824 = vunpack.c.l.b16 %v442
  %v2825 = vunpack.c.h.b16 %v442
  %v2826 = vunpack.c.l.b16 %v443
  %v2827 = vunpack.c.l.b16 %v444
  %v2828 = vunpack.c.h.b16 %v444
  %v2829 = vunpack.c.l.b16 %v445
  %v2830 = vunpack.c.l.b16 %v446
  %v2831 = vunpack.c.h.b16 %v446
  %v2832 = vunpack.c.l.b16 %v447
  %v2833 = vunpack.c.l.b16 %v448
  %v2834 = vunpack.c.h.b16 %v448
  %v2835 = vunpack.c.l.b16 %v449
  %v2836 = vunpack.c.l.b16 %v450
  %v2837 = vunpack.c.h.b16 %v450
  %v2838 = vunpack.c.l.b16 %v451
  %v2839 = vunpack.c.l.b16 %v452
  %v2840 = vunpack.c.h.b16 %v452
  %v2841 = vunpack.c.l.b16 %v453
  %v2842 = vunpack.c.l.b16 %v454
  %v2843 = vunpack.c.h.b16 %v454
  %v2844 = vunpack.c.l.b16 %v455
  %v2845 = vunpack.c.l.b16 %v456
  %v2846 = vunpack.c.h.b16 %v456
  %v2847 = vunpack.c.l.b16 %v457
  %v2848 = vunpack.c.l.b16 %v458
  %v2849 = vunpack.c.h.b16 %v458
  %v2850 = vunpack.c.l.b16 %v459
  %v2851 = vunpack.c.l.b16 %v460
  %v2852 = vunpack.c.h.b16 %v460
  %v2853 = vunpack.c.l.b16 %v461
  %v2854 = vunpack.c.l.b16 %v462
  %v2855 = vunpack.c.h.b16 %v462
  %v2856 = vunpack.c.l.b16 %v463
  %v2857 = vunpack.c.l.b16 %v464
  %v2858 = vunpack.c.h.b16 %v464
  %v2859 = vunpack.c.l.b16 %v465
  %v2860 = vunpack.c.l.b16 %v466
  %v2861 = vunpack.c.h.b16 %v466
  %v2862 = vunpack.c.l.b16 %v467
  %v2863 = vunpack.c.l.b16 %v468
  %v2864 = vunpack.c.h.b16 %v468
  %v2865 = vunpack.c.l.b16 %v469
  %v2866 = vunpack.c.l.b16 %v470
  %v2867 = vunpack.c.h.b16 %v470
  %v2868 = vunpack.c.l.b16 %v471
  %v2869 = vunpack.c.l.b16 %v472
  %v2870 = vunpack.c.h.b16 %v472
  %v2871 = vunpack.c.l.b16 %v473
  %v2872 = vunpack.c.l.b16 %v474
  %v2873 = vunpack.c.h.b16 %v474
  %v2874 = vunpack.c.l.b16 %v475
  %v2875 = vunpack.c.l.b16 %v476
  %v2876 = vunpack.c.h.b16 %v476
  %v2877 = vunpack.c.l.b16 %v477
  %v2878 = vunpack.c.l.b16 %v478
  %v2879 = vunpack.c.h.b16 %v478
  %v2880 = vunpack.c.l.b16 %v479
  %v2881 = vunpack.c.l.b16 %v480
  %v2882 = vunpack.c.h.b16 %v480
  %v2883 = vunpack.c.l.b16 %v481
  %v2884 = vunpack.c.l.b16 %v482
  %v2885 = vunpack.c.h.b16 %v482
  %v2886 = vunpack.c.l.b16 %v483
  %v2887 = vunpack.c.l.b16 %v484
  %v2888 = vunpack.c.h.b16 %v484
  %v2889 = vunpack.c.l.b16 %v485
  %v2890 = vunpack.c.l.b16 %v486
  %v2891 = vunpack.c.h.b16 %v486
  %v2892 = vunpack.c.l.b16 %v487
  %v2893 = vunpack.c.l.b16 %v488
  %v2894 = vunpack.c.h.b16 %v488
  %v2895 = vunpack.c.l.b16 %v489
  %v2896 = vunpack.c.l.b16 %v490
  %v2897 = vunpack.c.h.b16 %v490
  %v2898 = vunpack.c.l.b16 %v491
  %v2899 = vunpack.c.l.b16 %v492
  %v2900 = vunpack.c.h.b16 %v492
  %v2901 = vunpack.c.l.b16 %v493
  %v2902 = vunpack.c.l.b16 %v494
  %v2903 = vunpack.c.h.b16 %v494
  %v2904 = vunpack.c.l.b16 %v495
  %v2905 = vunpack.c.l.b16 %v496
  %v2906 = vunpack.c.h.b16 %v496
  %v2907 = vunpack.c.l.b16 %v497
  %v2908 = vunpack.c.l.b16 %v498
  %v2909 = vunpack.c.h.b16 %v498
  %v2910 = vunpack.c.l.b16 %v499
  %v2911 = vunpack.c.l.b16 %v500
  %v2912 = vunpack.c.h.b16 %v500
  %v2913 = vunpack.c.l.b16 %v501
  %v2914 = vunpack.c.l.b16 %v502
  %v2915 = vunpack.c.h.b16 %v502
  %v2916 = vunpack.c.l.b16 %v503
  %v2917 = vunpack.c.l.b16 %v504
  %v2918 = vunpack.c.h.b16 %v504
  %v2919 = vunpack.c.l.b16 %v505
  %v2920 = vunpack.c.l.b16 %v506
  %v2921 = vunpack.c.h.b16 %v506
  %v2922 = vunpack.c.l.b16 %v507
  %v2923 = vunpack.c.l.b16 %v508
  %v2924 = vunpack.c.h.b16 %v508
  %v2925 = vunpack.c.l.b16 %v509
  %v2926 = vunpack.c.l.b16 %v510
  %v2927 = vunpack.c.h.b16 %v510
  %v2928 = vunpack.c.l.b16 %v511
  %v2929 = vunpack.c.l.b16 %v512
  %v2930 = vunpack.c.h.b16 %v512
  %v2931 = vunpack.c.l.b16 %v513
  %v2932 = vunpack.c.l.b16 %v514
  %v2933 = vunpack.c.h.b16 %v514
  %v2934 = vunpack.c.l.b16 %v515
  %v2935 = vunpack.c.l.b16 %v516
  %v2936 = vunpack.c.h.b16 %v516
  %v2937 = vunpack.c.l.b16 %v517
  %v2938 = vunpack.c.l.b16 %v518
  %v2939 = vunpack.c.h.b16 %v518
  %v2940 = vunpack.c.l.b16 %v519
  %v2941 = vunpack.c.l.b16 %v520
  %v2942 = vunpack.c.h.b16 %v520
  %v2943 = vunpack.c.l.b16 %v521
  %v2944 = vunpack.c.l.b16 %v522
  %v2945 = vunpack.c.h.b16 %v522
  %v2946 = vunpack.c.l.b16 %v523
  %v2947 = vunpack.c.l.b16 %v524
  %v2948 = vunpack.c.h.b16 %v524
  %v2949 = vunpack.c.l.b16 %v525
  %v2950 = vunpack.c.l.b16 %v526
  %v2951 = vunpack.c.h.b16 %v526
  %v2952 = vunpack.c.l.b16 %v527
  %v2953 = vunpack.c.l.b16 %v528
  %v2954 = vunpack.c.h.b16 %v528
  %v2955 = vunpack.c.l.b16 %v529
  %v2956 = vunpack.c.l.b16 %v530
  %v2957 = vunpack.c.h.b16 %v530
  %v2958 = vunpack.c.l.b16 %v531
  %v2959 = vunpack.c.l.b16 %v532
  %v2960 = vunpack.c.h.b16 %v532
  %v2961 = vunpack.c.l.b16 %v533
  %v2962 = vunpack.c.l.b16 %v534
  %v2963 = vunpack.c.h.b16 %v534
  %v2964 = vunpack.c.l.b16 %v535
  %v2965 = vunpack.c.l.b16 %v536
  %v2966 = vunpack.c.h.b16 %v536
  %v2967 = vunpack.c.l.b16 %v537
  %v2968 = vunpack.c.l.b16 %v538
  %v2969 = vunpack.c.h.b16 %v538
  %v2970 = vunpack.c.l.b16 %v539
  %v2971 = vunpack.c.l.b16 %v540
  %v2972 = vunpack.c.h.b16 %v540
  %v2973 = vunpack.c.l.b16 %v541
  %v2974 = vunpack.c.l.b16 %v542
  %v2975 = vunpack.c.h.b16 %v542
  %v2976 = vunpack.c.l.b16 %v543
  %v2977 = vunpack.c.l.b16 %v544
  %v2978 = vunpack.c.h.b16 %v544
  %v2979 = vunpack.c.l.b16 %v545
  %v2980 = vunpack.c.l.b16 %v546
  %v2981 = vunpack.c.h.b16 %v546
  %v2982 = vunpack.c.l.b16 %v547
  %v2983 = vunpack.c.l.b16 %v548
  %v2984 = vunpack.c.h.b16 %v548
  %v2985 = vunpack.c.l.b16 %v549
  %v2986 = vunpack.c.l.b16 %v550
  %v2987 = vunpack.c.h.b16 %v550
  %v2988 = vunpack.c.l.b16 %v551
  %v2989 = vunpack.c.l.b16 %v552
  %v2990 = vunpack.c.h.b16 %v552
  %v2991 = vunpack.c.l.b16 %v553
  %v2992 = vunpack.c.l.b16 %v554
  %v2993 = vunpack.c.h.b16 %v554
  %v2994 = vunpack.c.l.b16 %v555
  %v2995 = vunpack.c.l.b16 %v556
  %v2996 = vunpack.c.h.b16 %v556
  %v2997 = vunpack.c.l.b16 %v557
  %v2998 = vunpack.c.l.b16 %v558
  %v2999 = vunpack.c.h.b16 %v558
  %v3000 = vunpack.c.l.b16 %v559
  %v3001 = vunpack.c.l.b16 %v560
  %v3002 = vunpack.c.h.b16 %v560
  %v3003 = vunpack.c.l.b16 %v561
  %v3004 = vunpack.c.l.b16 %v562
  %v3005 = vunpack.c.h.b16 %v562
  %v3006 = vunpack.c.l.b16 %v563
  %v3007 = vunpack.c.l.b16 %v564
  %v3008 = vunpack.c.h.b16 %v564
  %v3009 = vunpack.c.l.b16 %v565
  %v3010 = vunpack.c.l.b16 %v566
  %v3011 = vunpack.c.h.b16 %v566
  %v3012 = vunpack.c.l.b16 %v567
  %v3013 = vunpack.c.l.b16 %v568
  %v3014 = vunpack.c.h.b16 %v568
  %v3015 = vunpack.c.l.b16 %v569
  %v3016 = vunpack.c.l.b16 %v570
  %v3017 = vunpack.c.h.b16 %v570
  %v3018 = vunpack.c.l.b16 %v571
  %v3019 = vunpack.c.l.b16 %v572
  %v3020 = vunpack.c.h.b16 %v572
  %v3021 = vunpack.c.l.b16 %v573
  %v3022 = vunpack.c.l.b16 %v574
  %v3023 = vunpack.c.h.b16 %v574
  %v3024 = vunpack.c.l.b16 %v575
  %v3025 = vunpack.c.l.b16 %v576
  %v3026 = vunpack.c.h.b16 %v576
  %v3027 = vunpack.c.l.b16 %v577
  %v3028 = vunpack.c.l.b16 %v578
  %v3029 = vunpack.c.h.b16 %v578
  %v3030 = vunpack.c.l.b16 %v579
  %v3031 = vunpack.c.l.b16 %v580
  %v3032 = vunpack.c.h.b16 %v580
  %v3033 = vunpack.c.l.b16 %v581
  %v3034 = vunpack.c.l.b16 %v582
  %v3035 = vunpack.c.h.b16 %v582
  %v3036 = vunpack.c.l.b16 %v583
  %v3037 = vunpack.c.l.b16 %v584
  %v3038 = vunpack.c.h.b16 %v584
  %v3039 = vunpack.c.l.b16 %v585
  %v3040 = vunpack.c.l.b16 %v586
  %v3041 = vunpack.c.h.b16 %v586
  %v3042 = vunpack.c.l.b16 %v587
  %v3043 = vunpack.c.l.b16 %v588
  %v3044 = vunpack.c.h.b16 %v588
  %v3045 = vunpack.c.l.b16 %v589
  %v3046 = vunpack.c.l.b16 %v590
  %v3047 = vunpack.c.h.b16 %v590
  %v3048 = vunpack.c.l.b16 %v591
  %v3049 = vunpack.c.l.b16 %v592
  %v3050 = vunpack.c.h.b16 %v592
  %v3051 = vunpack.c.l.b16 %v593
  %v3052 = vunpack.c.l.b16 %v594
  %v3053 = vunpack.c.h.b16 %v594
  %v3054 = vunpack.c.l.b16 %v595
  %v3055 = vunpack.c.l.b16 %v596
  %v3056 = vunpack.c.h.b16 %v596
  %v3057 = vunpack.c.l.b16 %v597
  %v3058 = vunpack.c.l.b16 %v598
  %v3059 = vunpack.c.h.b16 %v598
  %v3060 = vunpack.c.l.b16 %v599
  %v3061 = vunpack.c.l.b16 %v600
  %v3062 = vunpack.c.h.b16 %v600
  %v3063 = vunpack.c.l.b16 %v601
  %v3064 = vunpack.c.l.b16 %v602
  %v3065 = vunpack.c.h.b16 %v602
  %v3066 = vunpack.c.l.b16 %v603
  %v3067 = vunpack.c.l.b16 %v604
  %v3068 = vunpack.c.h.b16 %v604
  %v3069 = vunpack.c.l.b16 %v605
  %v3070 = vunpack.c.l.b16 %v606
  %v3071 = vunpack.c.h.b16 %v606
  %v3072 = vunpack.c.l.b16 %v607
  %v3073 = vunpack.c.l.b16 %v608
  %v3074 = vunpack.c.h.b16 %v608
  %v3075 = vunpack.c.l.b16 %v609
  %v3076 = vunpack.c.l.b16 %v610
  %v3077 = vunpack.c.h.b16 %v610
  %v3078 = vunpack.c.l.b16 %v611
  %v3079 = vunpack.c.l.b16 %v612
  %v3080 = vunpack.c.h.b16 %v612
  %v3081 = vunpack.c.l.b16 %v613
  %v3082 = vunpack.c.l.b16 %v614
  %v3083 = vunpack.c.h.b16 %v614
  %v3084 = vunpack.c.l.b16 %v615
  %v3085 = vunpack.c.l.b16 %v616
  %v3086 = vunpack.c.h.b16 %v616
  %v3087 = vunpack.c.l.b16 %v617
  %v3088 = vunpack.c.l.b16 %v618
  %v3089 = vunpack.c.h.b16 %v618
  %v3090 = vunpack.c.l.b16 %v619
  %v3091 = vunpack.c.l.b16 %v620
  %v3092 = vunpack.c.h.b16 %v620
  %v3093 = vunpack.c.l.b16 %v621
  %v3094 = vunpack.c.l.b16 %v622
  %v3095 = vunpack.c.h.b16 %v622
  %v3096 = vunpack.c.l.b16 %v623
  %v3097 = vunpack.c.l.b16 %v624
  %v3098 = vunpack.c.h.b16 %v624
  %v3099 = vunpack.c.l.b16 %v625
  %v3100 = vunpack.c.l.b16 %v626
  %v3101 = vunpack.c.h.b16 %v626
  %v3102 = vunpack.c.l.b16 %v627
  %v3103 = vunpack.c.l.b16 %v628
  %v3104 = vunpack.c.h.b16 %v628
  %v3105 = vunpack.c.l.b16 %v629
  %v3106 = vunpack.c.l.b16 %v630
  %v3107 = vunpack.c.h.b16 %v630
  %v3108 = vunpack.c.l.b16 %v631
  %v3109 = vunpack.c.l.b16 %v632
  %v3110 = vunpack.c.h.b16 %v632
  %v3111 = vunpack.c.l.b16 %v633
  %v3112 = vunpack.c.l.b16 %v634
  %v3113 = vunpack.c.h.b16 %v634
  %v3114 = vunpack.c.l.b16 %v635
  %v3115 = vunpack.c.l.b16 %v636
  %v3116 = vunpack.c.h.b16 %v636
  %v3117 = vunpack.c.l.b16 %v637
  %v3118 = vunpack.c.l.b16 %v638
  %v3119 = vunpack.c.h.b16 %v638
  %v3120 = vunpack.c.l.b16 %v639
  %v3121 = vunpack.c.l.b16 %v640
  %v3122 = vunpack.c.h.b16 %v640
  %v3123 = vunpack.c.l.b16 %v641
  %v3124 = vunpack.c.l.b16 %v642
  %v3125 = vunpack.c.h.b16 %v642
  %v3126 = vunpack.c.l.b16 %v643
  %v3127 = vunpack.c.l.b16 %v644
  %v3128 = vunpack.c.h.b16 %v644
  %v3129 = vunpack.c.l.b16 %v645
  %v3130 = vunpack.c.l.b16 %v646
  %v3131 = vunpack.c.h.b16 %v646
  %v3132 = vunpack.c.l.b16 %v647
  %v3133 = vunpack.c.l.b16 %v648
  %v3134 = vunpack.c.h.b16 %v648
  %v3135 = vunpack.c.l.b16 %v649
  %v3136 = vunpack.c.l.b16 %v650
  %v3137 = vunpack.c.h.b16 %v650
  %v3138 = vunpack.c.l.b16 %v651
  %v3139 = vunpack.c.l.b16 %v652
  %v3140 = vunpack.c.h.b16 %v652
  %v3141 = vunpack.c.l.b16 %v653
  %v3142 = vunpack.c.l.b16 %v654
  %v3143 = vunpack.c.h.b16 %v654
  %v3144 = vunpack.c.l.b16 %v655
  %v3145 = vunpack.c.l.b16 %v656
  %v3146 = vunpack.c.h.b16 %v656
  %v3147 = vunpack.c.l.b16 %v657
  %v3148 = vunpack.c.l.b16 %v658
  %v3149 = vunpack.c.h.b16 %v658
  %v3150 = vunpack.c.l.b16 %v659
  %v3151 = vunpack.c.l.b16 %v660
  %v3152 = vunpack.c.h.b16 %v660
  %v3153 = vunpack.c.l.b16 %v661
  %v3154 = vunpack.c.l.b16 %v662
  %v3155 = vunpack.c.h.b16 %v662
  %v3156 = vunpack.c.l.b16 %v663
  %v3157 = vunpack.c.l.b16 %v664
  %v3158 = vunpack.c.h.b16 %v664
  %v3159 = vunpack.c.l.b16 %v665
  %v3160 = vunpack.c.l.b16 %v666
  %v3161 = vunpack.c.h.b16 %v666
  %v3162 = vunpack.c.l.b16 %v667
  %v3163 = vunpack.c.l.b16 %v668
  %v3164 = vunpack.c.h.b16 %v668
  %v3165 = vunpack.c.l.b16 %v669
  %v3166 = vunpack.c.l.b16 %v670
  %v3167 = vunpack.c.h.b16 %v670
  %v3168 = vunpack.c.l.b16 %v671
  %v3169 = vunpack.c.l.b16 %v672
  %v3170 = vunpack.c.h.b16 %v672
  %v3171 = vunpack.c.l.b16 %v673
  %v3172 = vunpack.c.l.b16 %v674
  %v3173 = vunpack.c.h.b16 %v674
  %v3174 = vunpack.c.l.b16 %v675
  %v3175 = vunpack.c.l.b16 %v676
  %v3176 = vunpack.c.h.b16 %v676
  %v3177 = vunpack.c.l.b16 %v677
  %v3178 = vunpack.c.l.b16 %v678
  %v3179 = vunpack.c.h.b16 %v678
  %v3180 = vunpack.c.l.b16 %v679
  %v3181 = vunpack.c.l.b16 %v680
  %v3182 = vunpack.c.h.b16 %v680
  %v3183 = vunpack.c.l.b16 %v681
  %v3184 = vunpack.c.l.b16 %v682
  %v3185 = vunpack.c.h.b16 %v682
  %v3186 = vunpack.c.l.b16 %v683
  %v3187 = vunpack.c.l.b16 %v684
  %v3188 = vunpack.c.h.b16 %v684
  %v3189 = vunpack.c.l.b16 %v685
  %v3190 = vunpack.c.l.b16 %v686
  %v3191 = vunpack.c.h.b16 %v686
  %v3192 = vunpack.c.l.b16 %v687
  %v3193 = vunpack.c.l.b16 %v688
  %v3194 = vunpack.c.h.b16 %v688
  %v3195 = vunpack.c.l.b16 %v689
  %v3196 = vunpack.c.l.b16 %v690
  %v3197 = vunpack.c.h.b16 %v690
  %v3198 = vunpack.c.l.b16 %v691
  %v3199 = vunpack.c.l.b16 %v692
  %v3200 = vunpack.c.h.b16 %v692
  %v3201 = vunpack.c.l.b16 %v693
  %v3202 = vunpack.c.l.b16 %v694
  %v3203 = vunpack.c.h.b16 %v694
  %v3204 = vunpack.c.l.b16 %v695
  %v3205 = vunpack.c.l.b16 %v696
  %v3206 = vunpack.c.h.b16 %v696
  %v3207 = vunpack.c.l.b16 %v697
  %v3208 = vunpack.c.l.b16 %v698
  %v3209 = vunpack.c.h.b16 %v698
  %v3210 = vunpack.c.l.b16 %v699
  %v3211 = vunpack.c.l.b16 %v700
  %v3212 = vunpack.c.h.b16 %v700
  %v3213 = vunpack.c.l.b16 %v701
  %v3214 = vunpack.c.l.b16 %v702
  %v3215 = vunpack.c.h.b16 %v702
  %v3216 = vunpack.c.l.b16 %v703
  %v3217 = vunpack.c.l.b16 %v704
  %v3218 = vunpack.c.h.b16 %v704
  %v3219 = vunpack.c.l.b16 %v705
  %v3220 = vunpack.c.l.b16 %v706
  %v3221 = vunpack.c.h.b16 %v706
  %v3222 = vunpack.c.l.b16 %v707
  %v3223 = vunpack.c.l.b16 %v708
  %v3224 = vunpack.c.h.b16 %v708
  %v3225 = vunpack.c.l.b16 %v709
  %v3226 = vunpack.c.l.b16 %v710
  %v3227 = vunpack.c.h.b16 %v710
  %v3228 = vunpack.c.l.b16 %v711
  %v3229 = vunpack.c.l.b16 %v712
  %v3230 = vunpack.c.h.b16 %v712
  %v3231 = vunpack.c.l.b16 %v713
  %v3232 = vunpack.c.l.b16 %v714
  %v3233 = vunpack.c.h.b16 %v714
  %v3234 = vunpack.c.l.b16 %v715
  %v3235 = vunpack.c.l.b16 %v716
  %v3236 = vunpack.c.h.b16 %v716
  %v3237 = vunpack.c.l.b16 %v717
  %v3238 = vunpack.c.l.b16 %v718
  %v3239 = vunpack.c.h.b16 %v718
  %v3240 = vunpack.c.l.b16 %v719
  %v3241 = vunpack.c.l.b16 %v720
  %v3242 = vunpack.c.h.b16 %v720
  %v3243 = vunpack.c.l.b16 %v721
  %v3244 = vunpack.c.l.b16 %v722
  %v3245 = vunpack.c.h.b16 %v722
  %v3246 = vunpack.c.l.b16 %v723
  %v3247 = vunpack.c.l.b16 %v724
  %v3248 = vunpack.c.h.b16 %v724
  %v3249 = vunpack.c.l.b16 %v725
  %v3250 = vunpack.c.l.b16 %v726
  %v3251 = vunpack.c.h.b16 %v726
  %v3252 = vunpack.c.l.b16 %v727
  %v3253 = vunpack.c.l.b16 %v728
  %v3254 = vunpack.c.h.b16 %v728
  %v3255 = vunpack.c.l.b16 %v729
  %v3256 = vunpack.c.l.b16 %v730
  %v3257 = vunpack.c.h.b16 %v730
  %v3258 = vunpack.c.l.b16 %v731
  %v3259 = vunpack.c.l.b16 %v732
  %v3260 = vunpack.c.h.b16 %v732
  %v3261 = vunpack.c.l.b16 %v733
  %v3262 = vunpack.c.l.b16 %v734
  %v3263 = vunpack.c.h.b16 %v734
  %v3264 = vunpack.c.l.b16 %v735
  %v3265 = vunpack.c.l.b16 %v736
  %v3266 = vunpack.c.h.b16 %v736
  %v3267 = vunpack.c.l.b16 %v737
  %v3268 = vunpack.c.l.b16 %v738
  %v3269 = vunpack.c.h.b16 %v738
  %v3270 = vunpack.c.l.b16 %v739
  %v3271 = vunpack.c.l.b16 %v740
  %v3272 = vunpack.c.h.b16 %v740
  %v3273 = vunpack.c.l.b16 %v741
  %v3274 = vunpack.c.l.b16 %v742
  %v3275 = vunpack.c.h.b16 %v742
  %v3276 = vunpack.c.l.b16 %v743
  %v3277 = vunpack.c.l.b16 %v744
  %v3278 = vunpack.c.h.b16 %v744
  %v3279 = vunpack.c.l.b16 %v745
  %v3280 = vunpack.c.l.b16 %v746
  %v3281 = vunpack.c.h.b16 %v746
  %v3282 = vunpack.c.l.b16 %v747
  %v3283 = vunpack.c.l.b16 %v748
  %v3284 = vunpack.c.h.b16 %v748
  %v3285 = vunpack.c.l.b16 %v749
  %v3286 = vunpack.c.l.b16 %v750
  %v3287 = vunpack.c.h.b16 %v750
  %v3288 = vunpack.c.l.b16 %v751
  %v3289 = vunpack.c.l.b16 %v752
  %v3290 = vunpack.c.h.b16 %v752
  %v3291 = vunpack.c.l.b16 %v753
  %v3292 = vunpack.c.l.b16 %v754
  %v3293 = vunpack.c.h.b16 %v754
  %v3294 = vunpack.c.l.b16 %v755
  %v3295 = vunpack.c.l.b16 %v756
  %v3296 = vunpack.c.h.b16 %v756
  %v3297 = vunpack.c.l.b16 %v757
  %v3298 = vunpack.c.l.b16 %v758
  %v3299 = vunpack.c.h.b16 %v758
  %v3300 = vunpack.c.l.b16 %v759
  %v3301 = vunpack.c.l.b16 %v760
  %v3302 = vunpack.c.h.b16 %v760
  %v3303 = vunpack.c.l.b16 %v761
  %v3304 = vunpack.c.l.b16 %v762
  %v3305 = vunpack.c.h.b16 %v762
  %v3306 = vunpack.c.l.b16 %v763
  %v3307 = vunpack.c.l.b16 %v764
  %v3308 = vunpack.c.h.b16 %v764
  %v3309 = vunpack.c.l.b16 %v765
  %v3310 = vunpack.c.l.b16 %v766
  %v3311 = vunpack.c.h.b16 %v766
  %v3312 = vunpack.c.l.b16 %v767
  %v3313 = vunpack.c.l.b16 %v768
  %v3314 = vunpack.c.h.b16 %v768
  %v3315 = vunpack.c.l.b16 %v769
  %v3316 = vunpack.c.l.b16 %v770
  %v3317 = vunpack.c.h.b16 %v770
  %v3318 = vunpack.c.l.b16 %v771
  %v3319 = vunpack.c.l.b16 %v772
  %v3320 = vunpack.c.h.b16 %v772
  %v3321 = vunpack.c.l.b16 %v773
  %v3322 = vunpack.c.l.b16 %v774
  %v3323 = vunpack.c.h.b16 %v774
  %v3324 = vunpack.c.l.b16 %v775
  %v3325 = vunpack.c.l.b16 %v776
  %v3326 = vunpack.c.h.b16 %v776
  %v3327 = vunpack.c.l.b16 %v777
  %v3328 = vunpack.c.l.b16 %v778
  %v3329 = vunpack.c.h.b16 %v778
  %v3330 = vunpack.c.l.b16 %v779
  %v3331 = vunpack.c.l.b16 %v780
  %v3332 = vunpack.c.h.b16 %v780
  %v3333 = vunpack.c.l.b16 %v781
  %v3334 = vunpack.c.l.b16 %v782
  %v3335 = vunpack.c.h.b16 %v782
  %v3336 = vunpack.c.l.b16 %v783
  %v3337 = vunpack.c.l.b16 %v784
  %v3338 = vunpack.c.h.b16 %v784
  %v3339 = vunpack.c.l.b16 %v785
  %v3340 = vunpack.c.l.b16 %v786
  %v3341 = vunpack.c.h.b16 %v786
  %v3342 = vunpack.c.l.b16 %v787
  %v3343 = vunpack.c.l.b16 %v788
  %v3344 = vunpack.c.h.b16 %v788
  %v3345 = vunpack.c.l.b16 %v789
  %v3346 = vunpack.c.l.b16 %v790
  %v3347 = vunpack.c.h.b16 %v790
  %v3348 = vunpack.c.l.b16 %v791
  %v3349 = vunpack.c.l.b16 %v792
  %v3350 = vunpack.c.h.b16 %v792
  %v3351 = vunpack.c.l.b16 %v793
  %v3352 = vunpack.c.l.b16 %v794
  %v3353 = vunpack.c.h.b16 %v794
  %v3354 = vunpack.c.l.b16 %v795
  %v3355 = vunpack.c.l.b16 %v796
  %v3356 = vunpack.c.h.b16 %v796
  %v3357 = vunpack.c.l.b16 %v797
  %v3358 = vunpack.c.l.b16 %v798
  %v3359 = vunpack.c.h.b16 %v798
  %v3360 = vunpack.c.l.b16 %v799
  %v3361 = vunpack.c.l.b16 %v800
  %v3362 = vunpack.c.h.b16 %v800
  %v3363 = vunpack.c.l.b16 %v801
  %v3364 = vunpack.c.l.b16 %v802
  %v3365 = vunpack.c.h.b16 %v802
  %v3366 = vunpack.c.l.b16 %v803
  %v3367 = vunpack.c.l.b16 %v804
  %v3368 = vunpack.c.h.b16 %v804
  %v3369 = vunpack.c.l.b16 %v805
  %v3370 = vunpack.c.l.b16 %v806
  %v3371 = vunpack.c.h.b16 %v806
  %v3372 = vunpack.c.l.b16 %v807
  %v3373 = vunpack.c.l.b16 %v808
  %v3374 = vunpack.c.h.b16 %v808
  %v3375 = vunpack.c.l.b16 %v809
  %v3376 = vunpack.c.l.b16 %v810
  %v3377 = vunpack.c.h.b16 %v810
  %v3378 = vunpack.c.l.b16 %v811
  %v3379 = vunpack.c.l.b16 %v812
  %v3380 = vunpack.c.h.b16 %v812
  %v3381 = vunpack.c.l.b16 %v813
  %v3382 = vunpack.c.l.b16 %v814
  %v3383 = vunpack.c.h.b16 %v814
  %v3384 = vunpack.c.l.b16 %v815
  %v3385 = vunpack.c.l.b16 %v816
  %v3386 = vunpack.c.h.b16 %v816
  %v3387 = vunpack.c.l.b16 %v817
  %v3388 = vunpack.c.l.b16 %v818
  %v3389 = vunpack.c.h.b16 %v818
  %v3390 = vunpack.c.l.b16 %v819
  %v3391 = vunpack.c.l.b16 %v820
  %v3392 = vunpack.c.h.b16 %v820
  %v3393 = vunpack.c.l.b16 %v821
  %v3394 = vunpack.c.l.b16 %v822
  %v3395 = vunpack.c.h.b16 %v822
  %v3396 = vunpack.c.l.b16 %v823
  %v3397 = vunpack.c.l.b16 %v824
  %v3398 = vunpack.c.h.b16 %v824
  %v3399 = vunpack.c.l.b16 %v825
  %v3400 = vunpack.c.l.b16 %v826
  %v3401 = vunpack.c.h.b16 %v826
  %v3402 = vunpack.c.l.b16 %v827
  %v3403 = vunpack.c.l.b16 %v828
  %v3404 = vunpack.c.h.b16 %v828
  %v3405 = vunpack.c.l.b16 %v829
  %v3406 = vunpack.c.l.b16 %v830
  %v3407 = vunpack.c.h.b16 %v830
  %v3408 = vunpack.c.l.b16 %v831
  %v3409 = vunpack.c.l.b16 %v832
  %v3410 = vunpack.c.h.b16 %v832
  %v3411 = vunpack.c.l.b16 %v833
  %v3412 = vunpack.c.l.b16 %v834
  %v3413 = vunpack.c.h.b16 %v834
  %v3414 = vunpack.c.l.b16 %v835
  %v3415 = vunpack.c.l.b16 %v836
  %v3416 = vunpack.c.h.b16 %v836
  %v3417 = vunpack.c.l.b16 %v837
  %v3418 = vunpack.c.l.b16 %v838
  %v3419 = vunpack.c.h.b16 %v838
  %v3420 = vunpack.c.l.b16 %v839
  %v3421 = vunpack.c.l.b16 %v840
  %v3422 = vunpack.c.h.b16 %v840
  %v3423 = vunpack.c.l.b16 %v841
  %v3424 = vunpack.c.l.b16 %v842
  %v3425 = vunpack.c.h.b16 %v842
  %v3426 = vunpack.c.l.b16 %v843
  %v3427 = vunpack.c.l.b16 %v844
  %v3428 = vunpack.c.h.b16 %v844
  %v3429 = vunpack.c.l.b16 %v845
  %v3430 = vunpack.c.l.b16 %v846
  %v3431 = vunpack.c.h.b16 %v846
  %v3432 = vunpack.c.l.b16 %v847
  %v3433 = vunpack.c.l.b16 %v848
  %v3434 = vunpack.c.h.b16 %v848
  %v3435 = vunpack.c.l.b16 %v849
  %v3436 = vunpack.c.l.b16 %v850
  %v3437 = vunpack.c.h.b16 %v850
  %v3438 = vunpack.c.l.b16 %v851
  %v3439 = vunpack.c.l.b16 %v852
  %v3440 = vunpack.c.h.b16 %v852
  %v3441 = vunpack.c.l.b16 %v853
  %v3442 = vunpack.c.l.b16 %v854
  %v3443 = vunpack.c.h.b16 %v854
  %v3444 = vunpack.c.l.b16 %v855
  %v3445 = vunpack.c.l.b16 %v856
  %v3446 = vunpack.c.h.b16 %v856
  %v3447 = vunpack.c.l.b16 %v857
  %v3448 = vunpack.c.l.b16 %v858
  %v3449 = vunpack.c.h.b16 %v858
  %v3450 = vunpack.c.l.b16 %v859
  %v3451 = vunpack.c.l.b16 %v860
  %v3452 = vunpack.c.h.b16 %v860
  %v3453 = vunpack.c.l.b16 %v861
  %v3454 = vunpack.c.l.b16 %v862
  %v3455 = vunpack.c.h.b16 %v862
  %v3456 = vunpack.c.l.b16 %v863
  %v3457 = vunpack.c.l.b16 %v864
  %v3458 = vunpack.c.h.b16 %v864
  %v3459 = vunpack.c.l.b16 %v865
  %v3460 = vunpack.c.l.b16 %v866
  %v3461 = vunpack.c.h.b16 %v866
  %v3462 = vunpack.c.l.b16 %v867
  %v3463 = vunpack.c.l.b16 %v868
  %v3464 = vunpack.c.h.b16 %v868
  %v3465 = vunpack.c.l.b16 %v869
  %v3466 = vunpack.c.l.b16 %v870
  %v3467 = vunpack.c.h.b16 %v870
  %v3468 = vunpack.c.l.b16 %v871
  %v3469 = vunpack.c.l.b16 %v872
  %v3470 = vunpack.c.h.b16 %v872
  %v3471 = vunpack.c.l.b16 %v873
  %v3472 = vunpack.c.l.b16 %v874
  %v3473 = vunpack.c.h.b16 %v874
  %v3474 = vunpack.c.l.b16 %v875
  %v3475 = vunpack.c.l.b16 %v876
  %v3476 = vunpack.c.h.b16 %v876
  %v3477 = vunpack.c.l.b16 %v877
  %v3478 = vunpack.c.l.b16 %v878
  %v3479 = vunpack.c.h.b16 %v878
  %v3480 = vunpack.c.l.b16 %v879
  %v3481 = vunpack.c.l.b16 %v880
  %v3482 = vunpack.c.h.b16 %v880
  %v3483 = vunpack.c.l.b16 %v881
  %v3484 = vunpack.c.l.b16 %v882
  %v3485 = vunpack.c.h.b16 %v882
  %v3486 = vunpack.c.l.b16 %v883
  %v3487 = vunpack.c.l.b16 %v884
  %v3488 = vunpack.c.h.b16 %v884
  %v3489 = vunpack.c.l.b16 %v885
  %v3490 = vunpack.c.l.b16 %v886
  %v3491 = vunpack.c.h.b16 %v886
  %v3492 = vunpack.c.l.b16 %v887
  %v3493 = vunpack.c.l.b16 %v888
  %v3494 = vunpack.c.h.b16 %v888
  %v3495 = vunpack.c.l.b16 %v889
  %v3496 = vunpack.c.l.b16 %v890
  %v3497 = vunpack.c.h.b16 %v890
  %v3498 = vunpack.c.l.b16 %v891
  %v3499 = vunpack.c.l.b16 %v892
  %v3500 = vunpack.c.h.b16 %v892
  %v3501 = vunpack.c.l.b16 %v893
  %v3502 = vunpack.c.l.b16 %v894
  %v3503 = vunpack.c.h.b16 %v894
  %v3504 = vunpack.c.l.b16 %v895
  %v3505 = vunpack.c.l.b16 %v896
  %v3506 = vunpack.c.h.b16 %v896
  %v3507 = vunpack.c.l.b16 %v897
  %v3508 = vunpack.c.l.b16 %v898
  %v3509 = vunpack.c.h.b16 %v898
  %v3510 = vunpack.c.l.b16 %v899
  %v3511 = vunpack.c.l.b16 %v900
  %v3512 = vunpack.c.h.b16 %v900
  %v3513 = vunpack.c.l.b16 %v901
  %v3514 = vunpack.c.l.b16 %v902
  %v3515 = vunpack.c.h.b16 %v902
  %v3516 = vunpack.c.l.b16 %v903
  %v3517 = vunpack.c.l.b16 %v904
  %v3518 = vunpack.c.h.b16 %v904
  %v3519 = vunpack.c.l.b16 %v905
  %v3520 = vunpack.c.l.b16 %v906
  %v3521 = vunpack.c.h.b16 %v906
  %v3522 = vunpack.c.l.b16 %v907
  %v3523 = vunpack.c.l.b16 %v908
  %v3524 = vunpack.c.h.b16 %v908
  %v3525 = vunpack.c.l.b16 %v909
  %v3526 = vunpack.c.l.b16 %v910
  %v3527 = vunpack.c.h.b16 %v910
  %v3528 = vunpack.c.l.b16 %v911
  %v3529 = vunpack.c.l.b16 %v912
  %v3530 = vunpack.c.h.b16 %v912
  %v3531 = vunpack.c.l.b16 %v913
  %v3532 = vunpack.c.l.b16 %v914
  %v3533 = vunpack.c.h.b16 %v914
  %v3534 = vunpack.c.l.b16 %v915
  %v3535 = vunpack.c.l.b16 %v916
  %v3536 = vunpack.c.h.b16 %v916
  %v3537 = vunpack.c.l.b16 %v917
  %v3538 = vunpack.c.l.b16 %v918
  %v3539 = vunpack.c.h.b16 %v918
  %v3540 = vunpack.c.l.b16 %v919
  %v3541 = vunpack.c.l.b16 %v920
  %v3542 = vunpack.c.h.b16 %v920
  %v3543 = vunpack.c.l.b16 %v921
  %v3544 = vunpack.c.l.b16 %v922
  %v3545 = vunpack.c.h.b16 %v922
  %v3546 = vunpack.c.l.b16 %v923
  %v3547 = vunpack.c.l.b16 %v924
  %v3548 = vunpack.c.h.b16 %v924
  %v3549 = vunpack.c.l.b16 %v925
  %v3550 = vunpack.c.l.b16 %v926
  %v3551 = vunpack.c.h.b16 %v926
  %v3552 = vunpack.c.l.b16 %v927
  %v3553 = vunpack.c.l.b16 %v928
  %v3554 = vunpack.c.h.b16 %v928
  %v3555 = vunpack.c.l.b16 %v929
  %v3556 = vunpack.c.l.b16 %v930
  %v3557 = vunpack.c.h.b16 %v930
  %v3558 = vunpack.c.l.b16 %v931
  %v3559 = vunpack.c.l.b16 %v932
  %v3560 = vunpack.c.h.b16 %v932
  %v3561 = vunpack.c.l.b16 %v933
  %v3562 = vunpack.c.l.b16 %v934
  %v3563 = vunpack.c.h.b16 %v934
  %v3564 = vunpack.c.l.b16 %v935
  %v3565 = vunpack.c.l.b16 %v936
  %v3566 = vunpack.c.h.b16 %v936
  %v3567 = vunpack.c.l.b16 %v937
  %v3568 = vunpack.c.l.b16 %v938
  %v3569 = vunpack.c.h.b16 %v938
  %v3570 = vunpack.c.l.b16 %v939
  %v3571 = vunpack.c.l.b16 %v940
  %v3572 = vunpack.c.h.b16 %v940
  %v3573 = vunpack.c.l.b16 %v941
  %v3574 = vunpack.c.l.b16 %v942
  %v3575 = vunpack.c.h.b16 %v942
  %v3576 = vunpack.c.l.b16 %v943
  %v3577 = vunpack.c.l.b16 %v944
  %v3578 = vunpack.c.h.b16 %v944
  %v3579 = vunpack.c.l.b16 %v945
  %v3580 = vunpack.c.l.b16 %v946
  %v3581 = vunpack.c.h.b16 %v946
  %v3582 = vunpack.c.l.b16 %v947
  %v3583 = vunpack.c.l.b16 %v948
  %v3584 = vunpack.c.h.b16 %v948
  %v3585 = vunpack.c.l.b16 %v949
  %v3586 = vunpack.c.l.b16 %v950
  %v3587 = vunpack.c.h.b16 %v950
  %v3588 = vunpack.c.l.b16 %v951
  %v3589 = vunpack.c.l.b16 %v952
  %v3590 = vunpack.c.h.b16 %v952
  %v3591 = vunpack.c.l.b16 %v953
  %v3592 = vunpack.c.l.b16 %v954
  %v3593 = vunpack.c.h.b16 %v954
  %v3594 = vunpack.c.l.b16 %v955
  %v3595 = vunpack.c.l.b16 %v956
  %v3596 = vunpack.c.h.b16 %v956
  %v3597 = vunpack.c.l.b16 %v957
  %v3598 = vunpack.c.l.b16 %v958
  %v3599 = vunpack.c.h.b16 %v958
  %v3600 = vunpack.c.l.b16 %v959
  %v3601 = vunpack.c.l.b16 %v960
  %v3602 = vunpack.c.h.b16 %v960
  %v3603 = vunpack.c.l.b16 %v961
  %v3604 = vunpack.c.l.b16 %v962
  %v3605 = vunpack.c.h.b16 %v962
  %v3606 = vunpack.c.l.b16 %v963
  %v3607 = vunpack.c.l.b16 %v964
  %v3608 = vunpack.c.h.b16 %v964
  %v3609 = vunpack.c.l.b16 %v965
  %v3610 = vunpack.c.l.b16 %v966
  %v3611 = vunpack.c.h.b16 %v966
  %v3612 = vunpack.c.l.b16 %v967
  %v3613 = vunpack.c.l.b16 %v968
  %v3614 = vunpack.c.h.b16 %v968
  %v3615 = vunpack.c.l.b16 %v969
  %v3616 = vunpack.c.l.b16 %v970
  %v3617 = vunpack.c.h.b16 %v970
  %v3618 = vunpack.c.l.b16 %v971
  %v3619 = vunpack.c.l.b16 %v972
  %v3620 = vunpack.c.h.b16 %v972
  %v3621 = vunpack.c.l.b16 %v973
  %v3622 = vunpack.c.l.b16 %v974
  %v3623 = vunpack.c.h.b16 %v974
  %v3624 = vunpack.c.l.b16 %v975
  %v3625 = vunpack.c.l.b16 %v976
  %v3626 = vunpack.c.h.b16 %v976
  %v3627 = vunpack.c.l.b16 %v977
  %v3628 = vunpack.c.l.b16 %v978
  %v3629 = vunpack.c.h.b16 %v978
  %v3630 = vunpack.c.l.b16 %v979
  %v3631 = vunpack.c.l.b16 %v980
  %v3632 = vunpack.c.h.b16 %v980
  %v3633 = vunpack.c.l.b16 %v981
  %v3634 = vunpack.c.l.b16 %v982
  %v3635 = vunpack.c.h.b16 %v982
  %v3636 = vunpack.c.l.b16 %v983
  %v3637 = vunpack.c.l.b16 %v984
  %v3638 = vunpack.c.h.b16 %v984
  %v3639 = vunpack.c.l.b16 %v985
  %v3640 = vunpack.c.l.b16 %v986
  %v3641 = vunpack.c.h.b16 %v986
  %v3642 = vunpack.c.l.b16 %v987
  %v3643 = vunpack.c.l.b16 %v988
  %v3644 = vunpack.c.h.b16 %v988
  %v3645 = vunpack.c.l.b16 %v989
  %v3646 = vunpack.c.l.b16 %v990
  %v3647 = vunpack.c.h.b16 %v990
  %v3648 = vunpack.c.l.b16 %v991
  %v3649 = vunpack.c.l.b16 %v992
  %v3650 = vunpack.c.h.b16 %v992
  %v3651 = vunpack.c.l.b16 %v993
  %v3652 = vunpack.c.l.b16 %v994
  %v3653 = vunpack.c.h.b16 %v994
  %v3654 = vunpack.c.l.b16 %v995
  %v3655 = vunpack.c.l.b16 %v996
  %v3656 = vunpack.c.h.b16 %v996
  %v3657 = vunpack.c.l.b16 %v997
  %v3658 = vunpack.c.l.b16 %v998
  %v3659 = vunpack.c.h.b16 %v998
  %v3660 = vunpack.c.l.b16 %v999
  %v3661 = vunpack.c.l.b16 %v1000
  %v3662 = vunpack.c.h.b16 %v1000
  %v3663 = vunpack.c.l.b16 %v1001
  %v3664 = vunpack.c.l.b16 %v1002
  %v3665 = vunpack.c.h.b16 %v1002
  %v3666 = vunpack.c.l.b16 %v1003
  %v3667 = vunpack.c.l.b16 %v1004
  %v3668 = vunpack.c.h.b16 %v1004
  %v3669 = vunpack.c.l.b16 %v1005
  %v3670 = vunpack.c.l.b16 %v1006
  %v3671 = vunpack.c.h.b16 %v1006
  %v3672 = vunpack.c.l.b16 %v1007
  %v3673 = vunpack.c.l.b16 %v1008
  %v3674 = vunpack.c.h.b16 %v1008
  %v3675 = vunpack.c.l.b16 %v1009
  %v3676 = vunpack.c.l.b16 %v1010
  %v3677 = vunpack.c.h.b16 %v1010
  %v3678 = vunpack.c.l.b16 %v1011
  %v3679 = vunpack.c.l.b16 %v1012
  %v3680 = vunpack.c.h.b16 %v1012
  %v3681 = vunpack.c.l.b16 %v1013
  %v3682 = vunpack.c.l.b16 %v1014
  %v3683 = vunpack.c.h.b16 %v1014
  %v3684 = vunpack.c.l.b16 %v1015
  %v3685 = vunpack.c.l.b16 %v1016
  %v3686 = vunpack.c.h.b16 %v1016
  %v3687 = vunpack.c.l.b16 %v1017
  %v3688 = vunpack.c.l.b16 %v1018
  %v3689 = vunpack.c.h.b16 %v1018
  %v3690 = vunpack.c.l.b16 %v1019
  %v3691 = vunpack.c.l.b16 %v1020
  %v3692 = vunpack.c.h.b16 %v1020
  %v3693 = vunpack.c.l.b16 %v1021
  %v3694 = vunpack.c.l.b16 %v1022
  %v3695 = vunpack.c.h.b16 %v1022
  %v3696 = vunpack.c.l.b16 %v1023
  %v3697 = vunpack.c.l.b16 %v1024
  %v3698 = vunpack.c.h.b16 %v1024
  %v3699 = vunpack.c.l.b16 %v1025
  %v3700 = vunpack.c.l.b16 %v1026
  %v3701 = vunpack.c.h.b16 %v1026
  %v3702 = vunpack.c.l.b16 %v1027
  %v3703 = vunpack.c.l.b16 %v1028
  %v3704 = vunpack.c.h.b16 %v1028
  %v3705 = vunpack.c.l.b16 %v1029
  %v3706 = vunpack.c.l.b16 %v1030
  %v3707 = vunpack.c.h.b16 %v1030
  %v3708 = vunpack.c.l.b16 %v1031
  %v3709 = vunpack.c.l.b16 %v1032
  %v3710 = vunpack.c.h.b16 %v1032
  %v3711 = vunpack.c.l.b16 %v1033
  %v3712 = vunpack.c.l.b16 %v1034
  %v3713 = vunpack.c.h.b16 %v1034
  %v3714 = vunpack.c.l.b16 %v1035
  %v3715 = vunpack.c.l.b16 %v1036
  %v3716 = vunpack.c.h.b16 %v1036
  %v3717 = vunpack.c.l.b16 %v1037
  %v3718 = vunpack.c.l.b16 %v1038
  %v3719 = vunpack.c.h.b16 %v1038
  %v3720 = vunpack.c.l.b16 %v1039
  %v3721 = vunpack.c.l.b16 %v1040
  %v3722 = vunpack.c.h.b16 %v1040
  %v3723 = vunpack.c.l.b16 %v1041
  %v3724 = vunpack.c.l.b16 %v1042
  %v3725 = vunpack.c.h.b16 %v1042
  %v3726 = vunpack.c.l.b16 %v1043
  %v3727 = vunpack.c.l.b16 %v1044
  %v3728 = vunpack.c.h.b16 %v1044
  %v3729 = vunpack.c.l.b16 %v1045
  %v3730 = vunpack.c.l.b16 %v1046
  %v3731 = vunpack.c.h.b16 %v1046
  %v3732 = vunpack.c.l.b16 %v1047
  %v3733 = vunpack.c.l.b16 %v1048
  %v3734 = vunpack.c.h.b16 %v1048
  %v3735 = vunpack.c.l.b16 %v1049
  %v3736 = vunpack.c.l.b16 %v1050
  %v3737 = vunpack.c.h.b16 %v1050
  %v3738 = vunpack.c.l.b16 %v1051
  %v3739 = vunpack.c.l.b16 %v1052
  %v3740 = vunpack.c.h.b16 %v1052
  %v3741 = vunpack.c.l.b16 %v1053
  %v3742 = vunpack.c.l.b16 %v1054
  %v3743 = vunpack.c.h.b16 %v1054
  %v3744 = vunpack.c.l.b16 %v1055
  %v3745 = vunpack.c.l.b16 %v1056
  %v3746 = vunpack.c.h.b16 %v1056
  %v3747 = vunpack.c.l.b16 %v1057
  %v3748 = vunpack.c.l.b16 %v1058
  %v3749 = vunpack.c.h.b16 %v1058
  %v3750 = vunpack.c.l.b16 %v1059
  %v3751 = vunpack.c.l.b16 %v1060
  %v3752 = vunpack.c.h.b16 %v1060
  %v3753 = vunpack.c.l.b16 %v1061
  %v3754 = vunpack.c.l.b16 %v1062
  %v3755 = vunpack.c.h.b16 %v1062
  %v3756 = vunpack.c.l.b16 %v1063
  %v3757 = vunpack.c.l.b16 %v1064
  %v3758 = vunpack.c.h.b16 %v1064
  %v3759 = vunpack.c.l.b16 %v1065
  %v3760 = vunpack.c.l.b16 %v1066
  %v3761 = vunpack.c.h.b16 %v1066
  %v3762 = vunpack.c.l.b16 %v1067
  %v3763 = vunpack.c.l.b16 %v1068
  %v3764 = vunpack.c.h.b16 %v1068
  %v3765 = vunpack.c.l.b16 %v1069
  %v3766 = vunpack.c.l.b16 %v1070
  %v3767 = vunpack.c.h.b16 %v1070
  %v3768 = vunpack.c.l.b16 %v1071
  %v3769 = vunpack.c.l.b16 %v1072
  %v3770 = vunpack.c.h.b16 %v1072
  %v3771 = vunpack.c.l.b16 %v1073
  %v3772 = vunpack.c.l.b16 %v1074
  %v3773 = vunpack.c.h.b16 %v1074
  %v3774 = vunpack.c.l.b16 %v1075
  %v3775 = vunpack.c.l.b16 %v1076
  %v3776 = vunpack.c.h.b16 %v1076
  %v3777 = vunpack.c.l.b16 %v1077
  %v3778 = vunpack.c.l.b16 %v1078
  %v3779 = vunpack.c.h.b16 %v1078
  %v3780 = vunpack.c.l.b16 %v1079
  %v3781 = vunpack.c.l.b16 %v1080
  %v3782 = vunpack.c.h.b16 %v1080
  %v3783 = vunpack.c.l.b16 %v1081
  %v3784 = vunpack.c.l.b16 %v1082
  %v3785 = vunpack.c.h.b16 %v1082
  %v3786 = vunpack.c.l.b16 %v1083
  %v3787 = vunpack.c.l.b16 %v1084
  %v3788 = vunpack.c.h.b16 %v1084
  %v3789 = vunpack.c.l.b16 %v1085
  %v3790 = vunpack.c.l.b16 %v1086
  %v3791 = vunpack.c.h.b16 %v1086
  %v3792 = vunpack.c.l.b16 %v1087
  %v3793 = vunpack.c.l.b16 %v1088
  %v3794 = vunpack.c.h.b16 %v1088
  %v3795 = vunpack.c.l.b16 %v1089
  %v3796 = vunpack.c.l.b16 %v1090
  %v3797 = vunpack.c.h.b16 %v1090
  %v3798 = vunpack.c.l.b16 %v1091
  %v3799 = vunpack.c.l.b16 %v1092
  %v3800 = vunpack.c.h.b16 %v1092
  %v3801 = vunpack.c.l.b16 %v1093
  %v3802 = vunpack.c.l.b16 %v1094
  %v3803 = vunpack.c.h.b16 %v1094
  %v3804 = vunpack.c.l.b16 %v1095
  %v3805 = vunpack.c.l.b16 %v1096
  %v3806 = vunpack.c.h.b16 %v1096
  %v3807 = vunpack.c.l.b16 %v1097
  %v3808 = vunpack.c.l.b16 %v1098
  %v3809 = vunpack.c.h.b16 %v1098
  %v3810 = vunpack.c.l.b16 %v1099
  %v3811 = vunpack.c.l.b16 %v1100
  %v3812 = vunpack.c.h.b16 %v1100
  %v3813 = vunpack.c.l.b16 %v1101
  %v3814 = vunpack.c.l.b16 %v1102
  %v3815 = vunpack.c.h.b16 %v1102
  %v3816 = vunpack.c.l.b16 %v1103
  %v3817 = vunpack.c.l.b16 %v1104
  %v3818 = vunpack.c.h.b16 %v1104
  %v3819 = vunpack.c.l.b16 %v1105
  %v3820 = vunpack.c.l.b16 %v1106
  %v3821 = vunpack.c.h.b16 %v1106
  %v3822 = vunpack.c.l.b16 %v1107
  %v3823 = vunpack.c.l.b16 %v1108
  %v3824 = vunpack.c.h.b16 %v1108
  %v3825 = vunpack.c.l.b16 %v1109
  %v3826 = vunpack.c.l.b16 %v1110
  %v3827 = vunpack.c.h.b16 %v1110
  %v3828 = vunpack.c.l.b16 %v1111
  %v3829 = vunpack.c.l.b16 %v1112
  %v3830 = vunpack.c.h.b16 %v1112
  %v3831 = vunpack.c.l.b16 %v1113
  %v3832 = vunpack.c.l.b16 %v1114
  %v3833 = vunpack.c.h.b16 %v1114
  %v3834 = vunpack.c.l.b16 %v1115
  %v3835 = vunpack.c.l.b16 %v1116
  %v3836 = vunpack.c.h.b16 %v1116
  %v3837 = vunpack.c.l.b16 %v1117
  %v3838 = vpack.c.b16 %v2305, %v2302
  %v3839 = vpack.c.b16 %v2306, %v2303
  %v3840 = vpack.c.b16 %v2307, %v2304
  %v3841 = vpack.c.b16 %v2311, %v2308
  %v3842 = vpack.c.b16 %v2312, %v2309
  %v3843 = vpack.c.b16 %v2313, %v2310
  %v3844 = vpack.c.b16 %v2317, %v2314
  %v3845 = vpack.c.b16 %v2318, %v2315
  %v3846 = vpack.c.b16 %v2319, %v2316
  %v3847 = vpack.c.b16 %v2323, %v2320
  %v3848 = vpack.c.b16 %v2324, %v2321
  %v3849 = vpack.c.b16 %v2325, %v2322
  %v3850 = vpack.c.b16 %v2329, %v2326
  %v3851 = vpack.c.b16 %v2330, %v2327
  %v3852 = vpack.c.b16 %v2331, %v2328
  %v3853 = vpack.c.b16 %v2335, %v2332
  %v3854 = vpack.c.b16 %v2336, %v2333
  %v3855 = vpack.c.b16 %v2337, %v2334
  %v3856 = vpack.c.b16 %v2341, %v2338
  %v3857 = vpack.c.b16 %v2342, %v2339
  %v3858 = vpack.c.b16 %v2343, %v2340
  %v3859 = vpack.c.b16 %v2347, %v2344
  %v3860 = vpack.c.b16 %v2348, %v2345
  %v3861 = vpack.c.b16 %v2349, %v2346
  %v3862 = vpack.c.b16 %v2353, %v2350
  %v3863 = vpack.c.b16 %v2354, %v2351
  %v3864 = vpack.c.b16 %v2355, %v2352
  %v3865 = vpack.c.b16 %v2359, %v2356
  %v3866 = vpack.c.b16 %v2360, %v2357
  %v3867 = vpack.c.b16 %v2361, %v2358
  %v3868 = vpack.c.b16 %v2365, %v2362
  %v3869 = vpack.c.b16 %v2366, %v2363
  %v3870 = vpack.c.b16 %v2367, %v2364
  %v3871 = vpack.c.b16 %v2371, %v2368
  %v3872 = vpack.c.b16 %v2372, %v2369
  %v3873 = vpack.c.b16 %v2373, %v2370
  %v3874 = vpack.c.b16 %v2377, %v2374
  %v3875 = vpack.c.b16 %v2378, %v2375
  %v3876 = vpack.c.b16 %v2379, %v2376
  %v3877 = vpack.c.b16 %v2383, %v2380
  %v3878 = vpack.c.b16 %v2384, %v2381
  %v3879 = vpack.c.b16 %v2385, %v2382
  %v3880 = vpack.c.b16 %v2389, %v2386
  %v3881 = vpack.c.b16 %v2390, %v2387
  %v3882 = vpack.c.b16 %v2391, %v2388
  %v3883 = vpack.c.b16 %v2395, %v2392
  %v3884 = vpack.c.b16 %v2396, %v2393
  %v3885 = vpack.c.b16 %v2397, %v2394
  %v3886 = vpack.c.b16 %v2401, %v2398
  %v3887 = vpack.c.b16 %v2402, %v2399
  %v3888 = vpack.c.b16 %v2403, %v2400
  %v3889 = vpack.c.b16 %v2407, %v2404
  %v3890 = vpack.c.b16 %v2408, %v2405
  %v3891 = vpack.c.b16 %v2409, %v2406
  %v3892 = vpack.c.b16 %v2413, %v2410
  %v3893 = vpack.c.b16 %v2414, %v2411
  %v3894 = vpack.c.b16 %v2415, %v2412
  %v3895 = vpack.c.b16 %v2419, %v2416
  %v3896 = vpack.c.b16 %v2420, %v2417
  %v3897 = vpack.c.b16 %v2421, %v2418
  %v3898 = vpack.c.b16 %v2425, %v2422
  %v3899 = vpack.c.b16 %v2426, %v2423
  %v3900 = vpack.c.b16 %v2427, %v2424
  %v3901 = vpack.c.b16 %v2431, %v2428
  %v3902 = vpack.c.b16 %v2432, %v2429
  %v3903 = vpack.c.b16 %v2433, %v2430
  %v3904 = vpack.c.b16 %v2437, %v2434
  %v3905 = vpack.c.b16 %v2438, %v2435
  %v3906 = vpack.c.b16 %v2439, %v2436
  %v3907 = vpack.c.b16 %v2443, %v2440
  %v3908 = vpack.c.b16 %v2444, %v2441
  %v3909 = vpack.c.b16 %v2445, %v2442
  %v3910 = vpack.c.b16 %v2449, %v2446
  %v3911 = vpack.c.b16 %v2450, %v2447
  %v3912 = vpack.c.b16 %v2451, %v2448
  %v3913 = vpack.c.b16 %v2455, %v2452
  %v3914 = vpack.c.b16 %v2456, %v2453
  %v3915 = vpack.c.b16 %v2457, %v2454
  %v3916 = vpack.c.b16 %v2461, %v2458
  %v3917 = vpack.c.b16 %v2462, %v2459
  %v3918 = vpack.c.b16 %v2463, %v2460
  %v3919 = vpack.c.b16 %v2467, %v2464
  %v3920 = vpack.c.b16 %v2468, %v2465
  %v3921 = vpack.c.b16 %v2469, %v2466
  %v3922 = vpack.c.b16 %v2473, %v2470
  %v3923 = vpack.c.b16 %v2474, %v2471
  %v3924 = vpack.c.b16 %v2475, %v2472
  %v3925 = vpack.c.b16 %v2479, %v2476
  %v3926 = vpack.c.b16 %v2480, %v2477
  %v3927 = vpack.c.b16 %v2481, %v2478
  %v3928 = vpack.c.b16 %v2485, %v2482
  %v3929 = vpack.c.b16 %v2486, %v2483
  %v3930 = vpack.c.b16 %v2487, %v2484
  %v3931 = vpack.c.b16 %v2491, %v2488
  %v3932 = vpack.c.b16 %v2492, %v2489
  %v3933 = vpack.c.b16 %v2493, %v2490
  %v3934 = vpack.c.b16 %v2497, %v2494
  %v3935 = vpack.c.b16 %v2498, %v2495
  %v3936 = vpack.c.b16 %v2499, %v2496
  %v3937 = vpack.c.b16 %v2503, %v2500
  %v3938 = vpack.c.b16 %v2504, %v2501
  %v3939 = vpack.c.b16 %v2505, %v2502
  %v3940 = vpack.c.b16 %v2509, %v2506
  %v3941 = vpack.c.b16 %v2510, %v2507
  %v3942 = vpack.c.b16 %v2511, %v2508
  %v3943 = vpack.c.b16 %v2515, %v2512
  %v3944 = vpack.c.b16 %v2516, %v2513
  %v3945 = vpack.c.b16 %v2517, %v2514
  %v3946 = vpack.c.b16 %v2521, %v2518
  %v3947 = vpack.c.b16 %v2522, %v2519
  %v3948 = vpack.c.b16 %v2523, %v2520
  %v3949 = vpack.c.b16 %v2527, %v2524
  %v3950 = vpack.c.b16 %v2528, %v2525
  %v3951 = vpack.c.b16 %v2529, %v2526
  %v3952 = vpack.c.b16 %v2533, %v2530
  %v3953 = vpack.c.b16 %v2534, %v2531
  %v3954 = vpack.c.b16 %v2535, %v2532
  %v3955 = vpack.c.b16 %v2539, %v2536
  %v3956 = vpack.c.b16 %v2540, %v2537
  %v3957 = vpack.c.b16 %v2541, %v2538
  %v3958 = vpack.c.b16 %v2545, %v2542
  %v3959 = vpack.c.b16 %v2546, %v2543
  %v3960 = vpack.c.b16 %v2547, %v2544
  %v3961 = vpack.c.b16 %v2551, %v2548
  %v3962 = vpack.c.b16 %v2552, %v2549
  %v3963 = vpack.c.b16 %v2553, %v2550
  %v3964 = vpack.c.b16 %v2557, %v2554
  %v3965 = vpack.c.b16 %v2558, %v2555
  %v3966 = vpack.c.b16 %v2559, %v2556
  %v3967 = vpack.c.b16 %v2563, %v2560
  %v3968 = vpack.c.b16 %v2564, %v2561
  %v3969 = vpack.c.b16 %v2565, %v2562
  %v3970 = vpack.c.b16 %v2569, %v2566
  %v3971 = vpack.c.b16 %v2570, %v2567
  %v3972 = vpack.c.b16 %v2571, %v2568
  %v3973 = vpack.c.b16 %v2575, %v2572
  %v3974 = vpack.c.b16 %v2576, %v2573
  %v3975 = vpack.c.b16 %v2577, %v2574
  %v3976 = vpack.c.b16 %v2581, %v2578
  %v3977 = vpack.c.b16 %v2582, %v2579
  %v3978 = vpack.c.b16 %v2583, %v2580
  %v3979 = vpack.c.b16 %v2587, %v2584
  %v3980 = vpack.c.b16 %v2588, %v2585
  %v3981 = vpack.c.b16 %v2589, %v2586
  %v3982 = vpack.c.b16 %v2593, %v2590
  %v3983 = vpack.c.b16 %v2594, %v2591
  %v3984 = vpack.c.b16 %v2595, %v2592
  %v3985 = vpack.c.b16 %v2599, %v2596
  %v3986 = vpack.c.b16 %v2600, %v2597
  %v3987 = vpack.c.b16 %v2601, %v2598
  %v3988 = vpack.c.b16 %v2605, %v2602
  %v3989 = vpack.c.b16 %v2606, %v2603
  %v3990 = vpack.c.b16 %v2607, %v2604
  %v3991 = vpack.c.b16 %v2611, %v2608
  %v3992 = vpack.c.b16 %v2612, %v2609
  %v3993 = vpack.c.b16 %v2613, %v2610
  %v3994 = vpack.c.b16 %v2617, %v2614
  %v3995 = vpack.c.b16 %v2618, %v2615
  %v3996 = vpack.c.b16 %v2619, %v2616
  %v3997 = vpack.c.b16 %v2623, %v2620
  %v3998 = vpack.c.b16 %v2624, %v2621
  %v3999 = vpack.c.b16 %v2625, %v2622
  %v4000 = vpack.c.b16 %v2629, %v2626
  %v4001 = vpack.c.b16 %v2630, %v2627
  %v4002 = vpack.c.b16 %v2631, %v2628
  %v4003 = vpack.c.b16 %v2635, %v2632
  %v4004 = vpack.c.b16 %v2636, %v2633
  %v4005 = vpack.c.b16 %v2637, %v2634
  %v4006 = vpack.c.b16 %v2641, %v2638
  %v4007 = vpack.c.b16 %v2642, %v2639
  %v4008 = vpack.c.b16 %v2643, %v2640
  %v4009 = vpack.c.b16 %v2647, %v2644
  %v4010 = vpack.c.b16 %v2648, %v2645
  %v4011 = vpack.c.b16 %v2649, %v2646
  %v4012 = vpack.c.b16 %v2653, %v2650
  %v4013 = vpack.c.b16 %v2654, %v2651
  %v4014 = vpack.c.b16 %v2655, %v2652
  %v4015 = vpack.c.b16 %v2659, %v2656
  %v4016 = vpack.c.b16 %v2660, %v2657
  %v4017 = vpack.c.b16 %v2661, %v2658
  %v4018 = vpack.c.b16 %v2665, %v2662
  %v4019 = vpack.c.b16 %v2666, %v2663
  %v4020 = vpack.c.b16 %v2667, %v2664
  %v4021 = vpack.c.b16 %v2671, %v2668
  %v4022 = vpack.c.b16 %v2672, %v2669
  %v4023 = vpack.c.b16 %v2673, %v2670
  %v4024 = vpack.c.b16 %v2677, %v2674
  %v4025 = vpack.c.b16 %v2678, %v2675
  %v4026 = vpack.c.b16 %v2679, %v2676
  %v4027 = vpack.c.b16 %v2683, %v2680
  %v4028 = vpack.c.b16 %v2684, %v2681
  %v4029 = vpack.c.b16 %v2685, %v2682
  %v4030 = vpack.c.b16 %v2689, %v2686
  %v4031 = vpack.c.b16 %v2690, %v2687
  %v4032 = vpack.c.b16 %v2691, %v2688
  %v4033 = vpack.c.b16 %v2695, %v2692
  %v4034 = vpack.c.b16 %v2696, %v2693
  %v4035 = vpack.c.b16 %v2697, %v2694
  %v4036 = vpack.c.b16 %v2701, %v2698
  %v4037 = vpack.c.b16 %v2702, %v2699
  %v4038 = vpack.c.b16 %v2703, %v2700
  %v4039 = vpack.c.b16 %v2707, %v2704
  %v4040 = vpack.c.b16 %v2708, %v2705
  %v4041 = vpack.c.b16 %v2709, %v2706
  %v4042 = vpack.c.b16 %v2713, %v2710
  %v4043 = vpack.c.b16 %v2714, %v2711
  %v4044 = vpack.c.b16 %v2715, %v2712
  %v4045 = vpack.c.b16 %v2719, %v2716
  %v4046 = vpack.c.b16 %v2720, %v2717
  %v4047 = vpack.c.b16 %v2721, %v2718
  %v4048 = vpack.c.b16 %v2725, %v2722
  %v4049 = vpack.c.b16 %v2726, %v2723
  %v4050 = vpack.c.b16 %v2727, %v2724
  %v4051 = vpack.c.b16 %v2731, %v2728
  %v4052 = vpack.c.b16 %v2732, %v2729
  %v4053 = vpack.c.b16 %v2733, %v2730
  %v4054 = vpack.c.b16 %v2737, %v2734
  %v4055 = vpack.c.b16 %v2738, %v2735
  %v4056 = vpack.c.b16 %v2739, %v2736
  %v4057 = vpack.c.b16 %v2743, %v2740
  %v4058 = vpack.c.b16 %v2744, %v2741
  %v4059 = vpack.c.b16 %v2745, %v2742
  %v4060 = vpack.c.b16 %v2749, %v2746
  %v4061 = vpack.c.b16 %v2750, %v2747
  %v4062 = vpack.c.b16 %v2751, %v2748
  %v4063 = vpack.c.b16 %v2755, %v2752
  %v4064 = vpack.c.b16 %v2756, %v2753
  %v4065 = vpack.c.b16 %v2757, %v2754
  %v4066 = vpack.c.b16 %v2761, %v2758
  %v4067 = vpack.c.b16 %v2762, %v2759
  %v4068 = vpack.c.b16 %v2763, %v2760
  %v4069 = vpack.c.b16 %v2767, %v2764
  %v4070 = vpack.c.b16 %v2768, %v2765
  %v4071 = vpack.c.b16 %v2769, %v2766
  %v4072 = vpack.c.b16 %v2773, %v2770
  %v4073 = vpack.c.b16 %v2774, %v2771
  %v4074 = vpack.c.b16 %v2775, %v2772
  %v4075 = vpack.c.b16 %v2779, %v2776
  %v4076 = vpack.c.b16 %v2780, %v2777
  %v4077 = vpack.c.b16 %v2781, %v2778
  %v4078 = vpack.c.b16 %v2785, %v2782
  %v4079 = vpack.c.b16 %v2786, %v2783
  %v4080 = vpack.c.b16 %v2787, %v2784
  %v4081 = vpack.c.b16 %v2791, %v2788
  %v4082 = vpack.c.b16 %v2792, %v2789
  %v4083 = vpack.c.b16 %v2793, %v2790
  %v4084 = vpack.c.b16 %v2797, %v2794
  %v4085 = vpack.c.b16 %v2798, %v2795
  %v4086 = vpack.c.b16 %v2799, %v2796
  %v4087 = vpack.c.b16 %v2803, %v2800
  %v4088 = vpack.c.b16 %v2804, %v2801
  %v4089 = vpack.c.b16 %v2805, %v2802
  %v4090 = vpack.c.b16 %v2809, %v2806
  %v4091 = vpack.c.b16 %v2810, %v2807
  %v4092 = vpack.c.b16 %v2811, %v2808
  %v4093 = vpack.c.b16 %v2815, %v2812
  %v4094 = vpack.c.b16 %v2816, %v2813
  %v4095 = vpack.c.b16 %v2817, %v2814
  %v4096 = vpack.c.b16 %v2821, %v2818
  %v4097 = vpack.c.b16 %v2822, %v2819
  %v4098 = vpack.c.b16 %v2823, %v2820
  %v4099 = vpack.c.b16 %v2827, %v2824
  %v4100 = vpack.c.b16 %v2828, %v2825
  %v4101 = vpack.c.b16 %v2829, %v2826
  %v4102 = vpack.c.b16 %v2833, %v2830
  %v4103 = vpack.c.b16 %v2834, %v2831
  %v4104 = vpack.c.b16 %v2835, %v2832
  %v4105 = vpack.c.b16 %v2839, %v2836
  %v4106 = vpack.c.b16 %v2840, %v2837
  %v4107 = vpack.c.b16 %v2841, %v2838
  %v4108 = vpack.c.b16 %v2845, %v2842
  %v4109 = vpack.c.b16 %v2846, %v2843
  %v4110 = vpack.c.b16 %v2847, %v2844
  %v4111 = vpack.c.b16 %v2851, %v2848
  %v4112 = vpack.c.b16 %v2852, %v2849
  %v4113 = vpack.c.b16 %v2853, %v2850
  %v4114 = vpack.c.b16 %v2857, %v2854
  %v4115 = vpack.c.b16 %v2858, %v2855
  %v4116 = vpack.c.b16 %v2859, %v2856
  %v4117 = vpack.c.b16 %v2863, %v2860
  %v4118 = vpack.c.b16 %v2864, %v2861
  %v4119 = vpack.c.b16 %v2865, %v2862
  %v4120 = vpack.c.b16 %v2869, %v2866
  %v4121 = vpack.c.b16 %v2870, %v2867
  %v4122 = vpack.c.b16 %v2871, %v2868
  %v4123 = vpack.c.b16 %v2875, %v2872
  %v4124 = vpack.c.b16 %v2876, %v2873
  %v4125 = vpack.c.b16 %v2877, %v2874
  %v4126 = vpack.c.b16 %v2881, %v2878
  %v4127 = vpack.c.b16 %v2882, %v2879
  %v4128 = vpack.c.b16 %v2883, %v2880
  %v4129 = vpack.c.b16 %v2887, %v2884
  %v4130 = vpack.c.b16 %v2888, %v2885
  %v4131 = vpack.c.b16 %v2889, %v2886
  %v4132 = vpack.c.b16 %v2893, %v2890
  %v4133 = vpack.c.b16 %v2894, %v2891
  %v4134 = vpack.c.b16 %v2895, %v2892
  %v4135 = vpack.c.b16 %v2899, %v2896
  %v4136 = vpack.c.b16 %v2900, %v2897
  %v4137 = vpack.c.b16 %v2901, %v2898
  %v4138 = vpack.c.b16 %v2905, %v2902
  %v4139 = vpack.c.b16 %v2906, %v2903
  %v4140 = vpack.c.b16 %v2907, %v2904
  %v4141 = vpack.c.b16 %v2911, %v2908
  %v4142 = vpack.c.b16 %v2912, %v2909
  %v4143 = vpack.c.b16 %v2913, %v2910
  %v4144 = vpack.c.b16 %v2917, %v2914
  %v4145 = vpack.c.b16 %v2918, %v2915
  %v4146 = vpack.c.b16 %v2919, %v2916
  %v4147 = vpack.c.b16 %v2923, %v2920
  %v4148 = vpack.c.b16 %v2924, %v2921
  %v4149 = vpack.c.b16 %v2925, %v2922
  %v4150 = vpack.c.b16 %v2929, %v2926
  %v4151 = vpack.c.b16 %v2930, %v2927
  %v4152 = vpack.c.b16 %v2931, %v2928
  %v4153 = vpack.c.b16 %v2935, %v2932
  %v4154 = vpack.c.b16 %v2936, %v2933
  %v4155 = vpack.c.b16 %v2937, %v2934
  %v4156 = vpack.c.b16 %v2941, %v2938
  %v4157 = vpack.c.b16 %v2942, %v2939
  %v4158 = vpack.c.b16 %v2943, %v2940
  %v4159 = vpack.c.b16 %v2947, %v2944
  %v4160 = vpack.c.b16 %v2948, %v2945
  %v4161 = vpack.c.b16 %v2949, %v2946
  %v4162 = vpack.c.b16 %v2953, %v2950
  %v4163 = vpack.c.b16 %v2954, %v2951
  %v4164 = vpack.c.b16 %v2955, %v2952
  %v4165 = vpack.c.b16 %v2959, %v2956
  %v4166 = vpack.c.b16 %v2960, %v2957
  %v4167 = vpack.c.b16 %v2961, %v2958
  %v4168 = vpack.c.b16 %v2965, %v2962
  %v4169 = vpack.c.b16 %v2966, %v2963
  %v4170 = vpack.c.b16 %v2967, %v2964
  %v4171 = vpack.c.b16 %v2971, %v2968
  %v4172 = vpack.c.b16 %v2972, %v2969
  %v4173 = vpack.c.b16 %v2973, %v2970
  %v4174 = vpack.c.b16 %v2977, %v2974
  %v4175 = vpack.c.b16 %v2978, %v2975
  %v4176 = vpack.c.b16 %v2979, %v2976
  %v4177 = vpack.c.b16 %v2983, %v2980
  %v4178 = vpack.c.b16 %v2984, %v2981
  %v4179 = vpack.c.b16 %v2985, %v2982
  %v4180 = vpack.c.b16 %v2989, %v2986
  %v4181 = vpack.c.b16 %v2990, %v2987
  %v4182 = vpack.c.b16 %v2991, %v2988
  %v4183 = vpack.c.b16 %v2995, %v2992
  %v4184 = vpack.c.b16 %v2996, %v2993
  %v4185 = vpack.c.b16 %v2997, %v2994
  %v4186 = vpack.c.b16 %v3001, %v2998
  %v4187 = vpack.c.b16 %v3002, %v2999
  %v4188 = vpack.c.b16 %v3003, %v3000
  %v4189 = vpack.c.b16 %v3007, %v3004
  %v4190 = vpack.c.b16 %v3008, %v3005
  %v4191 = vpack.c.b16 %v3009, %v3006
  %v4192 = vpack.c.b16 %v3013, %v3010
  %v4193 = vpack.c.b16 %v3014, %v3011
  %v4194 = vpack.c.b16 %v3015, %v3012
  %v4195 = vpack.c.b16 %v3019, %v3016
  %v4196 = vpack.c.b16 %v3020, %v3017
  %v4197 = vpack.c.b16 %v3021, %v3018
  %v4198 = vpack.c.b16 %v3025, %v3022
  %v4199 = vpack.c.b16 %v3026, %v3023
  %v4200 = vpack.c.b16 %v3027, %v3024
  %v4201 = vpack.c.b16 %v3031, %v3028
  %v4202 = vpack.c.b16 %v3032, %v3029
  %v4203 = vpack.c.b16 %v3033, %v3030
  %v4204 = vpack.c.b16 %v3037, %v3034
  %v4205 = vpack.c.b16 %v3038, %v3035
  %v4206 = vpack.c.b16 %v3039, %v3036
  %v4207 = vpack.c.b16 %v3043, %v3040
  %v4208 = vpack.c.b16 %v3044, %v3041
  %v4209 = vpack.c.b16 %v3045, %v3042
  %v4210 = vpack.c.b16 %v3049, %v3046
  %v4211 = vpack.c.b16 %v3050, %v3047
  %v4212 = vpack.c.b16 %v3051, %v3048
  %v4213 = vpack.c.b16 %v3055, %v3052
  %v4214 = vpack.c.b16 %v3056, %v3053
  %v4215 = vpack.c.b16 %v3057, %v3054
  %v4216 = vpack.c.b16 %v3061, %v3058
  %v4217 = vpack.c.b16 %v3062, %v3059
  %v4218 = vpack.c.b16 %v3063, %v3060
  %v4219 = vpack.c.b16 %v3067, %v3064
  %v4220 = vpack.c.b16 %v3068, %v3065
  %v4221 = vpack.c.b16 %v3069, %v3066
  %v4222 = vpack.c.b16 %v3073, %v3070
  %v4223 = vpack.c.b16 %v3074, %v3071
  %v4224 = vpack.c.b16 %v3075, %v3072
  %v4225 = vpack.c.b16 %v3079, %v3076
  %v4226 = vpack.c.b16 %v3080, %v3077
  %v4227 = vpack.c.b16 %v3081, %v3078
  %v4228 = vpack.c.b16 %v3085, %v3082
  %v4229 = vpack.c.b16 %v3086, %v3083
  %v4230 = vpack.c.b16 %v3087, %v3084
  %v4231 = vpack.c.b16 %v3091, %v3088
  %v4232 = vpack.c.b16 %v3092, %v3089
  %v4233 = vpack.c.b16 %v3093, %v3090
  %v4234 = vpack.c.b16 %v3097, %v3094
  %v4235 = vpack.c.b16 %v3098, %v3095
  %v4236 = vpack.c.b16 %v3099, %v3096
  %v4237 = vpack.c.b16 %v3103, %v3100
  %v4238 = vpack.c.b16 %v3104, %v3101
  %v4239 = vpack.c.b16 %v3105, %v3102
  %v4240 = vpack.c.b16 %v3109, %v3106
  %v4241 = vpack.c.b16 %v3110, %v3107
  %v4242 = vpack.c.b16 %v3111, %v3108
  %v4243 = vpack.c.b16 %v3115, %v3112
  %v4244 = vpack.c.b16 %v3116, %v3113
  %v4245 = vpack.c.b16 %v3117, %v3114
  %v4246 = vpack.c.b16 %v3121, %v3118
  %v4247 = vpack.c.b16 %v3122, %v3119
  %v4248 = vpack.c.b16 %v3123, %v3120
  %v4249 = vpack.c.b16 %v3127, %v3124
  %v4250 = vpack.c.b16 %v3128, %v3125
  %v4251 = vpack.c.b16 %v3129, %v3126
  %v4252 = vpack.c.b16 %v3133, %v3130
  %v4253 = vpack.c.b16 %v3134, %v3131
  %v4254 = vpack.c.b16 %v3135, %v3132
  %v4255 = vpack.c.b16 %v3139, %v3136
  %v4256 = vpack.c.b16 %v3140, %v3137
  %v4257 = vpack.c.b16 %v3141, %v3138
  %v4258 = vpack.c.b16 %v3145, %v3142
  %v4259 = vpack.c.b16 %v3146, %v3143
  %v4260 = vpack.c.b16 %v3147, %v3144
  %v4261 = vpack.c.b16 %v3151, %v3148
  %v4262 = vpack.c.b16 %v3152, %v3149
  %v4263 = vpack.c.b16 %v3153, %v3150
  %v4264 = vpack.c.b16 %v3157, %v3154
  %v4265 = vpack.c.b16 %v3158, %v3155
  %v4266 = vpack.c.b16 %v3159, %v3156
  %v4267 = vpack.c.b16 %v3163, %v3160
  %v4268 = vpack.c.b16 %v3164, %v3161
  %v4269 = vpack.c.b16 %v3165, %v3162
  %v4270 = vpack.c.b16 %v3169, %v3166
  %v4271 = vpack.c.b16 %v3170, %v3167
  %v4272 = vpack.c.b16 %v3171, %v3168
  %v4273 = vpack.c.b16 %v3175, %v3172
  %v4274 = vpack.c.b16 %v3176, %v3173
  %v4275 = vpack.c.b16 %v3177, %v3174
  %v4276 = vpack.c.b16 %v3181, %v3178
  %v4277 = vpack.c.b16 %v3182, %v3179
  %v4278 = vpack.c.b16 %v3183, %v3180
  %v4279 = vpack.c.b16 %v3187, %v3184
  %v4280 = vpack.c.b16 %v3188, %v3185
  %v4281 = vpack.c.b16 %v3189, %v3186
  %v4282 = vpack.c.b16 %v3193, %v3190
  %v4283 = vpack.c.b16 %v3194, %v3191
  %v4284 = vpack.c.b16 %v3195, %v3192
  %v4285 = vpack.c.b16 %v3199, %v3196
  %v4286 = vpack.c.b16 %v3200, %v3197
  %v4287 = vpack.c.b16 %v3201, %v3198
  %v4288 = vpack.c.b16 %v3205, %v3202
  %v4289 = vpack.c.b16 %v3206, %v3203
  %v4290 = vpack.c.b16 %v3207, %v3204
  %v4291 = vpack.c.b16 %v3211, %v3208
  %v4292 = vpack.c.b16 %v3212, %v3209
  %v4293 = vpack.c.b16 %v3213, %v3210
  %v4294 = vpack.c.b16 %v3217, %v3214
  %v4295 = vpack.c.b16 %v3218, %v3215
  %v4296 = vpack.c.b16 %v3219, %v3216
  %v4297 = vpack.c.b16 %v3223, %v3220
  %v4298 = vpack.c.b16 %v3224, %v3221
  %v4299 = vpack.c.b16 %v3225, %v3222
  %v4300 = vpack.c.b16 %v3229, %v3226
  %v4301 = vpack.c.b16 %v3230, %v3227
  %v4302 = vpack.c.b16 %v3231, %v3228
  %v4303 = vpack.c.b16 %v3235, %v3232
  %v4304 = vpack.c.b16 %v3236, %v3233
  %v4305 = vpack.c.b16 %v3237, %v3234
  %v4306 = vpack.c.b16 %v3241, %v3238
  %v4307 = vpack.c.b16 %v3242, %v3239
  %v4308 = vpack.c.b16 %v3243, %v3240
  %v4309 = vpack.c.b16 %v3247, %v3244
  %v4310 = vpack.c.b16 %v3248, %v3245
  %v4311 = vpack.c.b16 %v3249, %v3246
  %v4312 = vpack.c.b16 %v3253, %v3250
  %v4313 = vpack.c.b16 %v3254, %v3251
  %v4314 = vpack.c.b16 %v3255, %v3252
  %v4315 = vpack.c.b16 %v3259, %v3256
  %v4316 = vpack.c.b16 %v3260, %v3257
  %v4317 = vpack.c.b16 %v3261, %v3258
  %v4318 = vpack.c.b16 %v3265, %v3262
  %v4319 = vpack.c.b16 %v3266, %v3263
  %v4320 = vpack.c.b16 %v3267, %v3264
  %v4321 = vpack.c.b16 %v3271, %v3268
  %v4322 = vpack.c.b16 %v3272, %v3269
  %v4323 = vpack.c.b16 %v3273, %v3270
  %v4324 = vpack.c.b16 %v3277, %v3274
  %v4325 = vpack.c.b16 %v3278, %v3275
  %v4326 = vpack.c.b16 %v3279, %v3276
  %v4327 = vpack.c.b16 %v3283, %v3280
  %v4328 = vpack.c.b16 %v3284, %v3281
  %v4329 = vpack.c.b16 %v3285, %v3282
  %v4330 = vpack.c.b16 %v3289, %v3286
  %v4331 = vpack.c.b16 %v3290, %v3287
  %v4332 = vpack.c.b16 %v3291, %v3288
  %v4333 = vpack.c.b16 %v3295, %v3292
  %v4334 = vpack.c.b16 %v3296, %v3293
  %v4335 = vpack.c.b16 %v3297, %v3294
  %v4336 = vpack.c.b16 %v3301, %v3298
  %v4337 = vpack.c.b16 %v3302, %v3299
  %v4338 = vpack.c.b16 %v3303, %v3300
  %v4339 = vpack.c.b16 %v3307, %v3304
  %v4340 = vpack.c.b16 %v3308, %v3305
  %v4341 = vpack.c.b16 %v3309, %v3306
  %v4342 = vpack.c.b16 %v3313, %v3310
  %v4343 = vpack.c.b16 %v3314, %v3311
  %v4344 = vpack.c.b16 %v3315, %v3312
  %v4345 = vpack.c.b16 %v3319, %v3316
  %v4346 = vpack.c.b16 %v3320, %v3317
  %v4347 = vpack.c.b16 %v3321, %v3318
  %v4348 = vpack.c.b16 %v3325, %v3322
  %v4349 = vpack.c.b16 %v3326, %v3323
  %v4350 = vpack.c.b16 %v3327, %v3324
  %v4351 = vpack.c.b16 %v3331, %v3328
  %v4352 = vpack.c.b16 %v3332, %v3329
  %v4353 = vpack.c.b16 %v3333, %v3330
  %v4354 = vpack.c.b16 %v3337, %v3334
  %v4355 = vpack.c.b16 %v3338, %v3335
  %v4356 = vpack.c.b16 %v3339, %v3336
  %v4357 = vpack.c.b16 %v3343, %v3340
  %v4358 = vpack.c.b16 %v3344, %v3341
  %v4359 = vpack.c.b16 %v3345, %v3342
  %v4360 = vpack.c.b16 %v3349, %v3346
  %v4361 = vpack.c.b16 %v3350, %v3347
  %v4362 = vpack.c.b16 %v3351, %v3348
  %v4363 = vpack.c.b16 %v3355, %v3352
  %v4364 = vpack.c.b16 %v3356, %v3353
  %v4365 = vpack.c.b16 %v3357, %v3354
  %v4366 = vpack.c.b16 %v3361, %v3358
  %v4367 = vpack.c.b16 %v3362, %v3359
  %v4368 = vpack.c.b16 %v3363, %v3360
  %v4369 = vpack.c.b16 %v3367, %v3364
  %v4370 = vpack.c.b16 %v3368, %v3365
  %v4371 = vpack.c.b16 %v3369, %v3366
  %v4372 = vpack.c.b16 %v3373, %v3370
  %v4373 = vpack.c.b16 %v3374, %v3371
  %v4374 = vpack.c.b16 %v3375, %v3372
  %v4375 = vpack.c.b16 %v3379, %v3376
  %v4376 = vpack.c.b16 %v3380, %v3377
  %v4377 = vpack.c.b16 %v3381, %v3378
  %v4378 = vpack.c.b16 %v3385, %v3382
  %v4379 = vpack.c.b16 %v3386, %v3383
  %v4380 = vpack.c.b16 %v3387, %v3384
  %v4381 = vpack.c.b16 %v3391, %v3388
  %v4382 = vpack.c.b16 %v3392, %v3389
  %v4383 = vpack.c.b16 %v3393, %v3390
  %v4384 = vpack.c.b16 %v3397, %v3394
  %v4385 = vpack.c.b16 %v3398, %v3395
  %v4386 = vpack.c.b16 %v3399, %v3396
  %v4387 = vpack.c.b16 %v3403, %v3400
  %v4388 = vpack.c.b16 %v3404, %v3401
  %v4389 = vpack.c.b16 %v3405, %v3402
  %v4390 = vpack.c.b16 %v3409, %v3406
  %v4391 = vpack.c.b16 %v3410, %v3407
  %v4392 = vpack.c.b16 %v3411, %v3408
  %v4393 = vpack.c.b16 %v3415, %v3412
  %v4394 = vpack.c.b16 %v3416, %v3413
  %v4395 = vpack.c.b16 %v3417, %v3414
  %v4396 = vpack.c.b16 %v3421, %v3418
  %v4397 = vpack.c.b16 %v3422, %v3419
  %v4398 = vpack.c.b16 %v3423, %v3420
  %v4399 = vpack.c.b16 %v3427, %v3424
  %v4400 = vpack.c.b16 %v3428, %v3425
  %v4401 = vpack.c.b16 %v3429, %v3426
  %v4402 = vpack.c.b16 %v3433, %v3430
  %v4403 = vpack.c.b16 %v3434, %v3431
  %v4404 = vpack.c.b16 %v3435, %v3432
  %v4405 = vpack.c.b16 %v3439, %v3436
  %v4406 = vpack.c.b16 %v3440, %v3437
  %v4407 = vpack.c.b16 %v3441, %v3438
  %v4408 = vpack.c.b16 %v3445, %v3442
  %v4409 = vpack.c.b16 %v3446, %v3443
  %v4410 = vpack.c.b16 %v3447, %v3444
  %v4411 = vpack.c.b16 %v3451, %v3448
  %v4412 = vpack.c.b16 %v3452, %v3449
  %v4413 = vpack.c.b16 %v3453, %v3450
  %v4414 = vpack.c.b16 %v3457, %v3454
  %v4415 = vpack.c.b16 %v3458, %v3455
  %v4416 = vpack.c.b16 %v3459, %v3456
  %v4417 = vpack.c.b16 %v3463, %v3460
  %v4418 = vpack.c.b16 %v3464, %v3461
  %v4419 = vpack.c.b16 %v3465, %v3462
  %v4420 = vpack.c.b16 %v3469, %v3466
  %v4421 = vpack.c.b16 %v3470, %v3467
  %v4422 = vpack.c.b16 %v3471, %v3468
  %v4423 = vpack.c.b16 %v3475, %v3472
  %v4424 = vpack.c.b16 %v3476, %v3473
  %v4425 = vpack.c.b16 %v3477, %v3474
  %v4426 = vpack.c.b16 %v3481, %v3478
  %v4427 = vpack.c.b16 %v3482, %v3479
  %v4428 = vpack.c.b16 %v3483, %v3480
  %v4429 = vpack.c.b16 %v3487, %v3484
  %v4430 = vpack.c.b16 %v3488, %v3485
  %v4431 = vpack.c.b16 %v3489, %v3486
  %v4432 = vpack.c.b16 %v3493, %v3490
  %v4433 = vpack.c.b16 %v3494, %v3491
  %v4434 = vpack.c.b16 %v3495, %v3492
  %v4435 = vpack.c.b16 %v3499, %v3496
  %v4436 = vpack.c.b16 %v3500, %v3497
  %v4437 = vpack.c.b16 %v3501, %v3498
  %v4438 = vpack.c.b16 %v3505, %v3502
  %v4439 = vpack.c.b16 %v3506, %v3503
  %v4440 = vpack.c.b16 %v3507, %v3504
  %v4441 = vpack.c.b16 %v3511, %v3508
  %v4442 = vpack.c.b16 %v3512, %v3509
  %v4443 = vpack.c.b16 %v3513, %v3510
  %v4444 = vpack.c.b16 %v3517, %v3514
  %v4445 = vpack.c.b16 %v3518, %v3515
  %v4446 = vpack.c.b16 %v3519, %v3516
  %v4447 = vpack.c.b16 %v3523, %v3520
  %v4448 = vpack.c.b16 %v3524, %v3521
  %v4449 = vpack.c.b16 %v3525, %v3522
  %v4450 = vpack.c.b16 %v3529, %v3526
  %v4451 = vpack.c.b16 %v3530, %v3527
  %v4452 = vpack.c.b16 %v3531, %v3528
  %v4453 = vpack.c.b16 %v3535, %v3532
  %v4454 = vpack.c.b16 %v3536, %v3533
  %v4455 = vpack.c.b16 %v3537, %v3534
  %v4456 = vpack.c.b16 %v3541, %v3538
  %v4457 = vpack.c.b16 %v3542, %v3539
  %v4458 = vpack.c.b16 %v3543, %v3540
  %v4459 = vpack.c.b16 %v3547, %v3544
  %v4460 = vpack.c.b16 %v3548, %v3545
  %v4461 = vpack.c.b16 %v3549, %v3546
  %v4462 = vpack.c.b16 %v3553, %v3550
  %v4463 = vpack.c.b16 %v3554, %v3551
  %v4464 = vpack.c.b16 %v3555, %v3552
  %v4465 = vpack.c.b16 %v3559, %v3556
  %v4466 = vpack.c.b16 %v3560, %v3557
  %v4467 = vpack.c.b16 %v3561, %v3558
  %v4468 = vpack.c.b16 %v3565, %v3562
  %v4469 = vpack.c.b16 %v3566, %v3563
  %v4470 = vpack.c.b16 %v3567, %v3564
  %v4471 = vpack.c.b16 %v3571, %v3568
  %v4472 = vpack.c.b16 %v3572, %v3569
  %v4473 = vpack.c.b16 %v3573, %v3570
  %v4474 = vpack.c.b16 %v3577, %v3574
  %v4475 = vpack.c.b16 %v3578, %v3575
  %v4476 = vpack.c.b16 %v3579, %v3576
  %v4477 = vpack.c.b16 %v3583, %v3580
  %v4478 = vpack.c.b16 %v3584, %v3581
  %v4479 = vpack.c.b16 %v3585, %v3582
  %v4480 = vpack.c.b16 %v3589, %v3586
  %v4481 = vpack.c.b16 %v3590, %v3587
  %v4482 = vpack.c.b16 %v3591, %v3588
  %v4483 = vpack.c.b16 %v3595, %v3592
  %v4484 = vpack.c.b16 %v3596, %v3593
  %v4485 = vpack.c.b16 %v3597, %v3594
  %v4486 = vpack.c.b16 %v3601, %v3598
  %v4487 = vpack.c.b16 %v3602, %v3599
  %v4488 = vpack.c.b16 %v3603, %v3600
  %v4489 = vpack.c.b16 %v3607, %v3604
  %v4490 = vpack.c.b16 %v3608, %v3605
  %v4491 = vpack.c.b16 %v3609, %v3606
  %v4492 = vpack.c.b16 %v3613, %v3610
  %v4493 = vpack.c.b16 %v3614, %v3611
  %v4494 = vpack.c.b16 %v3615, %v3612
  %v4495 = vpack.c.b16 %v3619, %v3616
  %v4496 = vpack.c.b16 %v3620, %v3617
  %v4497 = vpack.c.b16 %v3621, %v3618
  %v4498 = vpack.c.b16 %v3625, %v3622
  %v4499 = vpack.c.b16 %v3626, %v3623
  %v4500 = vpack.c.b16 %v3627, %v3624
  %v4501 = vpack.c.b16 %v3631, %v3628
  %v4502 = vpack.c.b16 %v3632, %v3629
  %v4503 = vpack.c.b16 %v3633, %v3630
  %v4504 = vpack.c.b16 %v3637, %v3634
  %v4505 = vpack.c.b16 %v3638, %v3635
  %v4506 = vpack.c.b16 %v3639, %v3636
  %v4507 = vpack.c.b16 %v3643, %v3640
  %v4508 = vpack.c.b16 %v3644, %v3641
  %v4509 = vpack.c.b16 %v3645, %v3642
  %v4510 = vpack.c.b16 %v3649, %v3646
  %v4511 = vpack.c.b16 %v3650, %v3647
  %v4512 = vpack.c.b16 %v3651, %v3648
  %v4513 = vpack.c.b16 %v3655, %v3652
  %v4514 = vpack.c.b16 %v3656, %v3653
  %v4515 = vpack.c.b16 %v3657, %v3654
  %v4516 = vpack.c.b16 %v3661, %v3658
  %v4517 = vpack.c.b16 %v3662, %v3659
  %v4518 = vpack.c.b16 %v3663, %v3660
  %v4519 = vpack.c.b16 %v3667, %v3664
  %v4520 = vpack.c.b16 %v3668, %v3665
  %v4521 = vpack.c.b16 %v3669, %v3666
  %v4522 = vpack.c.b16 %v3673, %v3670
  %v4523 = vpack.c.b16 %v3674, %v3671
  %v4524 = vpack.c.b16 %v3675, %v3672
  %v4525 = vpack.c.b16 %v3679, %v3676
  %v4526 = vpack.c.b16 %v3680, %v3677
  %v4527 = vpack.c.b16 %v3681, %v3678
  %v4528 = vpack.c.b16 %v3685, %v3682
  %v4529 = vpack.c.b16 %v3686, %v3683
  %v4530 = vpack.c.b16 %v3687, %v3684
  %v4531 = vpack.c.b16 %v3691, %v3688
  %v4532 = vpack.c.b16 %v3692, %v3689
  %v4533 = vpack.c.b16 %v3693, %v3690
  %v4534 = vpack.c.b16 %v3697, %v3694
  %v4535 = vpack.c.b16 %v3698, %v3695
  %v4536 = vpack.c.b16 %v3699, %v3696
  %v4537 = vpack.c.b16 %v3703, %v3700
  %v4538 = vpack.c.b16 %v3704, %v3701
  %v4539 = vpack.c.b16 %v3705, %v3702
  %v4540 = vpack.c.b16 %v3709, %v3706
  %v4541 = vpack.c.b16 %v3710, %v3707
  %v4542 = vpack.c.b16 %v3711, %v3708
  %v4543 = vpack.c.b16 %v3715, %v3712
  %v4544 = vpack.c.b16 %v3716, %v3713
  %v4545 = vpack.c.b16 %v3717, %v3714
  %v4546 = vpack.c.b16 %v3721, %v3718
  %v4547 = vpack.c.b16 %v3722, %v3719
  %v4548 = vpack.c.b16 %v3723, %v3720
  %v4549 = vpack.c.b16 %v3727, %v3724
  %v4550 = vpack.c.b16 %v3728, %v3725
  %v4551 = vpack.c.b16 %v3729, %v3726
  %v4552 = vpack.c.b16 %v3733, %v3730
  %v4553 = vpack.c.b16 %v3734, %v3731
  %v4554 = vpack.c.b16 %v3735, %v3732
  %v4555 = vpack.c.b16 %v3739, %v3736
  %v4556 = vpack.c.b16 %v3740, %v3737
  %v4557 = vpack.c.b16 %v3741, %v3738
  %v4558 = vpack.c.b16 %v3745, %v3742
  %v4559 = vpack.c.b16 %v3746, %v3743
  %v4560 = vpack.c.b16 %v3747, %v3744
  %v4561 = vpack.c.b16 %v3751, %v3748
  %v4562 = vpack.c.b16 %v3752, %v3749
  %v4563 = vpack.c.b16 %v3753, %v3750
  %v4564 = vpack.c.b16 %v3757, %v3754
  %v4565 = vpack.c.b16 %v3758, %v3755
  %v4566 = vpack.c.b16 %v3759, %v3756
  %v4567 = vpack.c.b16 %v3763, %v3760
  %v4568 = vpack.c.b16 %v3764, %v3761
  %v4569 = vpack.c.b16 %v3765, %v3762
  %v4570 = vpack.c.b16 %v3769, %v3766
  %v4571 = vpack.c.b16 %v3770, %v3767
  %v4572 = vpack.c.b16 %v3771, %v3768
  %v4573 = vpack.c.b16 %v3775, %v3772
  %v4574 = vpack.c.b16 %v3776, %v3773
  %v4575 = vpack.c.b16 %v3777, %v3774
  %v4576 = vpack.c.b16 %v3781, %v3778
  %v4577 = vpack.c.b16 %v3782, %v3779
  %v4578 = vpack.c.b16 %v3783, %v3780
  %v4579 = vpack.c.b16 %v3787, %v3784
  %v4580 = vpack.c.b16 %v3788, %v3785
  %v4581 = vpack.c.b16 %v3789, %v3786
  %v4582 = vpack.c.b16 %v3793, %v3790
  %v4583 = vpack.c.b16 %v3794, %v3791
  %v4584 = vpack.c.b16 %v3795, %v3792
  %v4585 = vpack.c.b16 %v3799, %v3796
  %v4586 = vpack.c.b16 %v3800, %v3797
  %v4587 = vpack.c.b16 %v3801, %v3798
  %v4588 = vpack.c.b16 %v3805, %v3802
  %v4589 = vpack.c.b16 %v3806, %v3803
  %v4590 = vpack.c.b16 %v3807, %v3804
  %v4591 = vpack.c.b16 %v3811, %v3808
  %v4592 = vpack.c.b16 %v3812, %v3809
  %v4593 = vpack.c.b16 %v3813, %v3810
  %v4594 = vpack.c.b16 %v3817, %v3814
  %v4595 = vpack.c.b16 %v3818, %v3815
  %v4596 = vpack.c.b16 %v3819, %v3816
  %v4597 = vpack.c.b16 %v3823, %v3820
  %v4598 = vpack.c.b16 %v3824, %v3821
  %v4599 = vpack.c.b16 %v3825, %v3822
  %v4600 = vpack.c.b16 %v3829, %v3826
  %v4601 = vpack.c.b16 %v3830, %v3827
  %v4602 = vpack.c.b16 %v3831, %v3828
  %v4603 = vpack.c.b16 %v3835, %v3832
  %v4604 = vpack.c.b16 %v3836, %v3833
  %v4605 = vpack.c.b16 %v3837, %v3834
  %5374 = vmatprep.subr.bf16.mxu0 %v3860
  %5375 = vmatpush1.bf16.msra.mxu0 %v3859
  %5376 = vmatprep.subr.bf16.mxu0 %v3857
  %5377 = vmatpush1.bf16.msra.mxu0 %v3856
  %5378 = vmatprep.subr.bf16.mxu0 %v3854
  %5379 = vmatpush1.bf16.msra.mxu0 %v3853
  %5380 = vmatprep.subr.bf16.mxu0 %v3851
  %5381 = vmatpush1.bf16.msra.mxu0 %v3850
  %5382 = vmatprep.subr.bf16.mxu0 %v3848
  %5383 = vmatpush1.bf16.msra.mxu0 %v3847
  %5384 = vmatprep.subr.bf16.mxu0 %v3845
  %5385 = vmatpush1.bf16.msra.mxu0 %v3844
  %5386 = vmatprep.subr.bf16.mxu0 %v3842
  %5387 = vmatpush1.bf16.msra.mxu0 %v3841
  %5388 = vmatprep.subr.bf16.mxu0 %v3839
  %5389 = vmatpush1.bf16.msra.mxu0 %v3838
  %5390 = vmatprep.subr.bf16.mxu0 %v3884
  %5391 = vmatpush2.bf16.msra.mxu0 %v3883
  %5392 = vmatprep.subr.bf16.mxu0 %v3881
  %5393 = vmatpush2.bf16.msra.mxu0 %v3880
  %5394 = vmatprep.subr.bf16.mxu0 %v3878
  %5395 = vmatpush2.bf16.msra.mxu0 %v3877
  %5396 = vmatprep.subr.bf16.mxu0 %v3875
  %5397 = vmatpush2.bf16.msra.mxu0 %v3874
  %5398 = vmatprep.subr.bf16.mxu0 %v3872
  %5399 = vmatpush2.bf16.msra.mxu0 %v3871
  %5400 = vmatprep.subr.bf16.mxu0 %v3869
  %5401 = vmatpush2.bf16.msra.mxu0 %v3868
  %5402 = vmatprep.subr.bf16.mxu0 %v3866
  %5403 = vmatpush2.bf16.msra.mxu0 %v3865
  %5404 = vmatprep.subr.bf16.mxu0 %v3863
  %5405 = vmatpush2.bf16.msra.mxu0 %v3862
  %5406 = vmatprep.mubr.bf16.mxu0 %v1215
  %5407 = vmatmul.mubr.bf16.gmra.mxu0 %v1214
  %v5408 = vpop.f32.mrf.mxu0
  %v5409 = vadd.f32 0.0, %v5408
  %v5410 = vpop.f32.mrf.mxu0
  %v5411 = vadd.f32 0.0, %v5410
  %v5412 = vpop.f32.mrf.mxu0
  %v5413 = vadd.f32 0.0, %v5412
  %v5414 = vpop.f32.mrf.mxu0
  %v5415 = vadd.f32 0.0, %v5414
  %5416 = vdwg.mxu0
  %5417 = vmatprep.subr.bf16.mxu0 %v3908
  %5418 = vmatpush1.bf16.msra.mxu0 %v3907
  %5419 = vmatprep.subr.bf16.mxu0 %v3905
  %5420 = vmatpush1.bf16.msra.mxu0 %v3904
  %5421 = vmatprep.subr.bf16.mxu0 %v3902
  %5422 = vmatpush1.bf16.msra.mxu0 %v3901
  %5423 = vmatprep.subr.bf16.mxu0 %v3899
  %5424 = vmatpush1.bf16.msra.mxu0 %v3898
  %5425 = vmatprep.subr.bf16.mxu0 %v3896
  %5426 = vmatpush1.bf16.msra.mxu0 %v3895
  %5427 = vmatprep.subr.bf16.mxu0 %v3893
  %5428 = vmatpush1.bf16.msra.mxu0 %v3892
  %5429 = vmatprep.subr.bf16.mxu0 %v3890
  %5430 = vmatpush1.bf16.msra.mxu0 %v3889
  %5431 = vmatprep.subr.bf16.mxu0 %v3887
  %5432 = vmatpush1.bf16.msra.mxu0 %v3886
  %5433 = vmatprep.subr.bf16.mxu0 %v3932
  %5434 = vmatpush2.bf16.msra.mxu0 %v3931
  %5435 = vmatprep.subr.bf16.mxu0 %v3929
  %5436 = vmatpush2.bf16.msra.mxu0 %v3928
  %5437 = vmatprep.subr.bf16.mxu0 %v3926
  %5438 = vmatpush2.bf16.msra.mxu0 %v3925
  %5439 = vmatprep.subr.bf16.mxu0 %v3923
  %5440 = vmatpush2.bf16.msra.mxu0 %v3922
  %5441 = vmatprep.subr.bf16.mxu0 %v3920
  %5442 = vmatpush2.bf16.msra.mxu0 %v3919
  %5443 = vmatprep.subr.bf16.mxu0 %v3917
  %5444 = vmatpush2.bf16.msra.mxu0 %v3916
  %5445 = vmatprep.subr.bf16.mxu0 %v3914
  %5446 = vmatpush2.bf16.msra.mxu0 %v3913
  %5447 = vmatprep.subr.bf16.mxu0 %v3911
  %5448 = vmatpush2.bf16.msra.mxu0 %v3910
  %5449 = vmatprep.mubr.bf16.mxu0 %v1217
  %5450 = vmatmul.mubr.bf16.gmra.mxu0 %v1216
  %v5451 = vpop.f32.mrf.mxu0
  %v5452 = vadd.f32 %v5409, %v5451
  %v5453 = vpop.f32.mrf.mxu0
  %v5454 = vadd.f32 %v5411, %v5453
  %v5455 = vpop.f32.mrf.mxu0
  %v5456 = vadd.f32 %v5413, %v5455
  %v5457 = vpop.f32.mrf.mxu0
  %v5458 = vadd.f32 %v5415, %v5457
  %5459 = vdwg.mxu0
  %5460 = vmatprep.subr.bf16.mxu0 %v3956
  %5461 = vmatpush1.bf16.msra.mxu0 %v3955
  %5462 = vmatprep.subr.bf16.mxu0 %v3953
  %5463 = vmatpush1.bf16.msra.mxu0 %v3952
  %5464 = vmatprep.subr.bf16.mxu0 %v3950
  %5465 = vmatpush1.bf16.msra.mxu0 %v3949
  %5466 = vmatprep.subr.bf16.mxu0 %v3947
  %5467 = vmatpush1.bf16.msra.mxu0 %v3946
  %5468 = vmatprep.subr.bf16.mxu0 %v3944
  %5469 = vmatpush1.bf16.msra.mxu0 %v3943
  %5470 = vmatprep.subr.bf16.mxu0 %v3941
  %5471 = vmatpush1.bf16.msra.mxu0 %v3940
  %5472 = vmatprep.subr.bf16.mxu0 %v3938
  %5473 = vmatpush1.bf16.msra.mxu0 %v3937
  %5474 = vmatprep.subr.bf16.mxu0 %v3935
  %5475 = vmatpush1.bf16.msra.mxu0 %v3934
  %5476 = vmatprep.subr.bf16.mxu0 %v3980
  %5477 = vmatpush2.bf16.msra.mxu0 %v3979
  %5478 = vmatprep.subr.bf16.mxu0 %v3977
  %5479 = vmatpush2.bf16.msra.mxu0 %v3976
  %5480 = vmatprep.subr.bf16.mxu0 %v3974
  %5481 = vmatpush2.bf16.msra.mxu0 %v3973
  %5482 = vmatprep.subr.bf16.mxu0 %v3971
  %5483 = vmatpush2.bf16.msra.mxu0 %v3970
  %5484 = vmatprep.subr.bf16.mxu0 %v3968
  %5485 = vmatpush2.bf16.msra.mxu0 %v3967
  %5486 = vmatprep.subr.bf16.mxu0 %v3965
  %5487 = vmatpush2.bf16.msra.mxu0 %v3964
  %5488 = vmatprep.subr.bf16.mxu0 %v3962
  %5489 = vmatpush2.bf16.msra.mxu0 %v3961
  %5490 = vmatprep.subr.bf16.mxu0 %v3959
  %5491 = vmatpush2.bf16.msra.mxu0 %v3958
  %5492 = vmatprep.mubr.bf16.mxu0 %v1219
  %5493 = vmatmul.mubr.bf16.gmra.mxu0 %v1218
  %v5494 = vpop.f32.mrf.mxu0
  %v5495 = vadd.f32 %v5452, %v5494
  %v5496 = vpop.f32.mrf.mxu0
  %v5497 = vadd.f32 %v5454, %v5496
  %v5498 = vpop.f32.mrf.mxu0
  %v5499 = vadd.f32 %v5456, %v5498
  %v5500 = vpop.f32.mrf.mxu0
  %v5501 = vadd.f32 %v5458, %v5500
  %5502 = vdwg.mxu0
  %5503 = vmatprep.subr.bf16.mxu0 %v4004
  %5504 = vmatpush1.bf16.msra.mxu0 %v4003
  %5505 = vmatprep.subr.bf16.mxu0 %v4001
  %5506 = vmatpush1.bf16.msra.mxu0 %v4000
  %5507 = vmatprep.subr.bf16.mxu0 %v3998
  %5508 = vmatpush1.bf16.msra.mxu0 %v3997
  %5509 = vmatprep.subr.bf16.mxu0 %v3995
  %5510 = vmatpush1.bf16.msra.mxu0 %v3994
  %5511 = vmatprep.subr.bf16.mxu0 %v3992
  %5512 = vmatpush1.bf16.msra.mxu0 %v3991
  %5513 = vmatprep.subr.bf16.mxu0 %v3989
  %5514 = vmatpush1.bf16.msra.mxu0 %v3988
  %5515 = vmatprep.subr.bf16.mxu0 %v3986
  %5516 = vmatpush1.bf16.msra.mxu0 %v3985
  %5517 = vmatprep.subr.bf16.mxu0 %v3983
  %5518 = vmatpush1.bf16.msra.mxu0 %v3982
  %5519 = vmatprep.subr.bf16.mxu0 %v4028
  %5520 = vmatpush2.bf16.msra.mxu0 %v4027
  %5521 = vmatprep.subr.bf16.mxu0 %v4025
  %5522 = vmatpush2.bf16.msra.mxu0 %v4024
  %5523 = vmatprep.subr.bf16.mxu0 %v4022
  %5524 = vmatpush2.bf16.msra.mxu0 %v4021
  %5525 = vmatprep.subr.bf16.mxu0 %v4019
  %5526 = vmatpush2.bf16.msra.mxu0 %v4018
  %5527 = vmatprep.subr.bf16.mxu0 %v4016
  %5528 = vmatpush2.bf16.msra.mxu0 %v4015
  %5529 = vmatprep.subr.bf16.mxu0 %v4013
  %5530 = vmatpush2.bf16.msra.mxu0 %v4012
  %5531 = vmatprep.subr.bf16.mxu0 %v4010
  %5532 = vmatpush2.bf16.msra.mxu0 %v4009
  %5533 = vmatprep.subr.bf16.mxu0 %v4007
  %5534 = vmatpush2.bf16.msra.mxu0 %v4006
  %5535 = vmatprep.mubr.bf16.mxu0 %v1221
  %5536 = vmatmul.mubr.bf16.gmra.mxu0 %v1220
  %v5537 = vpop.f32.mrf.mxu0
  %v5538 = vadd.f32 %v5495, %v5537
  %v5539 = vpop.f32.mrf.mxu0
  %v5540 = vadd.f32 %v5497, %v5539
  %v5541 = vpop.f32.mrf.mxu0
  %v5542 = vadd.f32 %v5499, %v5541
  %v5543 = vpop.f32.mrf.mxu0
  %v5544 = vadd.f32 %v5501, %v5543
  %5545 = vdwg.mxu0
  %5546 = vmatprep.subr.bf16.mxu0 %v4052
  %5547 = vmatpush1.bf16.msra.mxu0 %v4051
  %5548 = vmatprep.subr.bf16.mxu0 %v4049
  %5549 = vmatpush1.bf16.msra.mxu0 %v4048
  %5550 = vmatprep.subr.bf16.mxu0 %v4046
  %5551 = vmatpush1.bf16.msra.mxu0 %v4045
  %5552 = vmatprep.subr.bf16.mxu0 %v4043
  %5553 = vmatpush1.bf16.msra.mxu0 %v4042
  %5554 = vmatprep.subr.bf16.mxu0 %v4040
  %5555 = vmatpush1.bf16.msra.mxu0 %v4039
  %5556 = vmatprep.subr.bf16.mxu0 %v4037
  %5557 = vmatpush1.bf16.msra.mxu0 %v4036
  %5558 = vmatprep.subr.bf16.mxu0 %v4034
  %5559 = vmatpush1.bf16.msra.mxu0 %v4033
  %5560 = vmatprep.subr.bf16.mxu0 %v4031
  %5561 = vmatpush1.bf16.msra.mxu0 %v4030
  %5562 = vmatprep.subr.bf16.mxu0 %v4076
  %5563 = vmatpush2.bf16.msra.mxu0 %v4075
  %5564 = vmatprep.subr.bf16.mxu0 %v4073
  %5565 = vmatpush2.bf16.msra.mxu0 %v4072
  %5566 = vmatprep.subr.bf16.mxu0 %v4070
  %5567 = vmatpush2.bf16.msra.mxu0 %v4069
  %5568 = vmatprep.subr.bf16.mxu0 %v4067
  %5569 = vmatpush2.bf16.msra.mxu0 %v4066
  %5570 = vmatprep.subr.bf16.mxu0 %v4064
  %5571 = vmatpush2.bf16.msra.mxu0 %v4063
  %5572 = vmatprep.subr.bf16.mxu0 %v4061
  %5573 = vmatpush2.bf16.msra.mxu0 %v4060
  %5574 = vmatprep.subr.bf16.mxu0 %v4058
  %5575 = vmatpush2.bf16.msra.mxu0 %v4057
  %5576 = vmatprep.subr.bf16.mxu0 %v4055
  %5577 = vmatpush2.bf16.msra.mxu0 %v4054
  %5578 = vmatprep.mubr.bf16.mxu0 %v1223
  %5579 = vmatmul.mubr.bf16.gmra.mxu0 %v1222
  %v5580 = vpop.f32.mrf.mxu0
  %v5581 = vadd.f32 %v5538, %v5580
  %v5582 = vpop.f32.mrf.mxu0
  %v5583 = vadd.f32 %v5540, %v5582
  %v5584 = vpop.f32.mrf.mxu0
  %v5585 = vadd.f32 %v5542, %v5584
  %v5586 = vpop.f32.mrf.mxu0
  %v5587 = vadd.f32 %v5544, %v5586
  %5588 = vdwg.mxu0
  %5589 = vmatprep.subr.bf16.mxu0 %v4100
  %5590 = vmatpush1.bf16.msra.mxu0 %v4099
  %5591 = vmatprep.subr.bf16.mxu0 %v4097
  %5592 = vmatpush1.bf16.msra.mxu0 %v4096
  %5593 = vmatprep.subr.bf16.mxu0 %v4094
  %5594 = vmatpush1.bf16.msra.mxu0 %v4093
  %5595 = vmatprep.subr.bf16.mxu0 %v4091
  %5596 = vmatpush1.bf16.msra.mxu0 %v4090
  %5597 = vmatprep.subr.bf16.mxu0 %v4088
  %5598 = vmatpush1.bf16.msra.mxu0 %v4087
  %5599 = vmatprep.subr.bf16.mxu0 %v4085
  %5600 = vmatpush1.bf16.msra.mxu0 %v4084
  %5601 = vmatprep.subr.bf16.mxu0 %v4082
  %5602 = vmatpush1.bf16.msra.mxu0 %v4081
  %5603 = vmatprep.subr.bf16.mxu0 %v4079
  %5604 = vmatpush1.bf16.msra.mxu0 %v4078
  %5605 = vmatprep.subr.bf16.mxu0 %v4124
  %5606 = vmatpush2.bf16.msra.mxu0 %v4123
  %5607 = vmatprep.subr.bf16.mxu0 %v4121
  %5608 = vmatpush2.bf16.msra.mxu0 %v4120
  %5609 = vmatprep.subr.bf16.mxu0 %v4118
  %5610 = vmatpush2.bf16.msra.mxu0 %v4117
  %5611 = vmatprep.subr.bf16.mxu0 %v4115
  %5612 = vmatpush2.bf16.msra.mxu0 %v4114
  %5613 = vmatprep.subr.bf16.mxu0 %v4112
  %5614 = vmatpush2.bf16.msra.mxu0 %v4111
  %5615 = vmatprep.subr.bf16.mxu0 %v4109
  %5616 = vmatpush2.bf16.msra.mxu0 %v4108
  %5617 = vmatprep.subr.bf16.mxu0 %v4106
  %5618 = vmatpush2.bf16.msra.mxu0 %v4105
  %5619 = vmatprep.subr.bf16.mxu0 %v4103
  %5620 = vmatpush2.bf16.msra.mxu0 %v4102
  %5621 = vmatprep.mubr.bf16.mxu0 %v1225
  %5622 = vmatmul.mubr.bf16.gmra.mxu0 %v1224
  %v5623 = vpop.f32.mrf.mxu0
  %v5624 = vadd.f32 %v5581, %v5623
  %v5625 = vpop.f32.mrf.mxu0
  %v5626 = vadd.f32 %v5583, %v5625
  %v5627 = vpop.f32.mrf.mxu0
  %v5628 = vadd.f32 %v5585, %v5627
  %v5629 = vpop.f32.mrf.mxu0
  %v5630 = vadd.f32 %v5587, %v5629
  %5631 = vdwg.mxu0
  %5632 = vmatprep.subr.bf16.mxu0 %v4148
  %5633 = vmatpush1.bf16.msra.mxu0 %v4147
  %5634 = vmatprep.subr.bf16.mxu0 %v4145
  %5635 = vmatpush1.bf16.msra.mxu0 %v4144
  %5636 = vmatprep.subr.bf16.mxu0 %v4142
  %5637 = vmatpush1.bf16.msra.mxu0 %v4141
  %5638 = vmatprep.subr.bf16.mxu0 %v4139
  %5639 = vmatpush1.bf16.msra.mxu0 %v4138
  %5640 = vmatprep.subr.bf16.mxu0 %v4136
  %5641 = vmatpush1.bf16.msra.mxu0 %v4135
  %5642 = vmatprep.subr.bf16.mxu0 %v4133
  %5643 = vmatpush1.bf16.msra.mxu0 %v4132
  %5644 = vmatprep.subr.bf16.mxu0 %v4130
  %5645 = vmatpush1.bf16.msra.mxu0 %v4129
  %5646 = vmatprep.subr.bf16.mxu0 %v4127
  %5647 = vmatpush1.bf16.msra.mxu0 %v4126
  %5648 = vmatprep.subr.bf16.mxu0 %v4172
  %5649 = vmatpush2.bf16.msra.mxu0 %v4171
  %5650 = vmatprep.subr.bf16.mxu0 %v4169
  %5651 = vmatpush2.bf16.msra.mxu0 %v4168
  %5652 = vmatprep.subr.bf16.mxu0 %v4166
  %5653 = vmatpush2.bf16.msra.mxu0 %v4165
  %5654 = vmatprep.subr.bf16.mxu0 %v4163
  %5655 = vmatpush2.bf16.msra.mxu0 %v4162
  %5656 = vmatprep.subr.bf16.mxu0 %v4160
  %5657 = vmatpush2.bf16.msra.mxu0 %v4159
  %5658 = vmatprep.subr.bf16.mxu0 %v4157
  %5659 = vmatpush2.bf16.msra.mxu0 %v4156
  %5660 = vmatprep.subr.bf16.mxu0 %v4154
  %5661 = vmatpush2.bf16.msra.mxu0 %v4153
  %5662 = vmatprep.subr.bf16.mxu0 %v4151
  %5663 = vmatpush2.bf16.msra.mxu0 %v4150
  %5664 = vmatprep.mubr.bf16.mxu0 %v1227
  %5665 = vmatmul.mubr.bf16.gmra.mxu0 %v1226
  %v5666 = vpop.f32.mrf.mxu0
  %v5667 = vadd.f32 %v5624, %v5666
  %v5668 = vpop.f32.mrf.mxu0
  %v5669 = vadd.f32 %v5626, %v5668
  %v5670 = vpop.f32.mrf.mxu0
  %v5671 = vadd.f32 %v5628, %v5670
  %v5672 = vpop.f32.mrf.mxu0
  %v5673 = vadd.f32 %v5630, %v5672
  %5674 = vdwg.mxu0
  %5675 = vmatprep.subr.bf16.mxu0 %v4196
  %5676 = vmatpush1.bf16.msra.mxu0 %v4195
  %5677 = vmatprep.subr.bf16.mxu0 %v4193
  %5678 = vmatpush1.bf16.msra.mxu0 %v4192
  %5679 = vmatprep.subr.bf16.mxu0 %v4190
  %5680 = vmatpush1.bf16.msra.mxu0 %v4189
  %5681 = vmatprep.subr.bf16.mxu0 %v4187
  %5682 = vmatpush1.bf16.msra.mxu0 %v4186
  %5683 = vmatprep.subr.bf16.mxu0 %v4184
  %5684 = vmatpush1.bf16.msra.mxu0 %v4183
  %5685 = vmatprep.subr.bf16.mxu0 %v4181
  %5686 = vmatpush1.bf16.msra.mxu0 %v4180
  %5687 = vmatprep.subr.bf16.mxu0 %v4178
  %5688 = vmatpush1.bf16.msra.mxu0 %v4177
  %5689 = vmatprep.subr.bf16.mxu0 %v4175
  %5690 = vmatpush1.bf16.msra.mxu0 %v4174
  %5691 = vmatprep.subr.bf16.mxu0 %v4220
  %5692 = vmatpush2.bf16.msra.mxu0 %v4219
  %5693 = vmatprep.subr.bf16.mxu0 %v4217
  %5694 = vmatpush2.bf16.msra.mxu0 %v4216
  %5695 = vmatprep.subr.bf16.mxu0 %v4214
  %5696 = vmatpush2.bf16.msra.mxu0 %v4213
  %5697 = vmatprep.subr.bf16.mxu0 %v4211
  %5698 = vmatpush2.bf16.msra.mxu0 %v4210
  %5699 = vmatprep.subr.bf16.mxu0 %v4208
  %5700 = vmatpush2.bf16.msra.mxu0 %v4207
  %5701 = vmatprep.subr.bf16.mxu0 %v4205
  %5702 = vmatpush2.bf16.msra.mxu0 %v4204
  %5703 = vmatprep.subr.bf16.mxu0 %v4202
  %5704 = vmatpush2.bf16.msra.mxu0 %v4201
  %5705 = vmatprep.subr.bf16.mxu0 %v4199
  %5706 = vmatpush2.bf16.msra.mxu0 %v4198
  %5707 = vmatprep.mubr.bf16.mxu0 %v1229
  %5708 = vmatmul.mubr.bf16.gmra.mxu0 %v1228
  %v5709 = vpop.f32.mrf.mxu0
  %v5710 = vadd.f32 %v5667, %v5709
  %v5711 = vpop.f32.mrf.mxu0
  %v5712 = vadd.f32 %v5669, %v5711
  %v5713 = vpop.f32.mrf.mxu0
  %v5714 = vadd.f32 %v5671, %v5713
  %v5715 = vpop.f32.mrf.mxu0
  %v5716 = vadd.f32 %v5673, %v5715
  %5717 = vdwg.mxu0
  %5718 = vmatprep.subr.bf16.mxu0 %v4244
  %5719 = vmatpush1.bf16.msra.mxu0 %v4243
  %5720 = vmatprep.subr.bf16.mxu0 %v4241
  %5721 = vmatpush1.bf16.msra.mxu0 %v4240
  %5722 = vmatprep.subr.bf16.mxu0 %v4238
  %5723 = vmatpush1.bf16.msra.mxu0 %v4237
  %5724 = vmatprep.subr.bf16.mxu0 %v4235
  %5725 = vmatpush1.bf16.msra.mxu0 %v4234
  %5726 = vmatprep.subr.bf16.mxu0 %v4232
  %5727 = vmatpush1.bf16.msra.mxu0 %v4231
  %5728 = vmatprep.subr.bf16.mxu0 %v4229
  %5729 = vmatpush1.bf16.msra.mxu0 %v4228
  %5730 = vmatprep.subr.bf16.mxu0 %v4226
  %5731 = vmatpush1.bf16.msra.mxu0 %v4225
  %5732 = vmatprep.subr.bf16.mxu0 %v4223
  %5733 = vmatpush1.bf16.msra.mxu0 %v4222
  %5734 = vmatprep.subr.bf16.mxu0 %v4268
  %5735 = vmatpush2.bf16.msra.mxu0 %v4267
  %5736 = vmatprep.subr.bf16.mxu0 %v4265
  %5737 = vmatpush2.bf16.msra.mxu0 %v4264
  %5738 = vmatprep.subr.bf16.mxu0 %v4262
  %5739 = vmatpush2.bf16.msra.mxu0 %v4261
  %5740 = vmatprep.subr.bf16.mxu0 %v4259
  %5741 = vmatpush2.bf16.msra.mxu0 %v4258
  %5742 = vmatprep.subr.bf16.mxu0 %v4256
  %5743 = vmatpush2.bf16.msra.mxu0 %v4255
  %5744 = vmatprep.subr.bf16.mxu0 %v4253
  %5745 = vmatpush2.bf16.msra.mxu0 %v4252
  %5746 = vmatprep.subr.bf16.mxu0 %v4250
  %5747 = vmatpush2.bf16.msra.mxu0 %v4249
  %5748 = vmatprep.subr.bf16.mxu0 %v4247
  %5749 = vmatpush2.bf16.msra.mxu0 %v4246
  %5750 = vmatprep.mubr.bf16.mxu0 %v1231
  %5751 = vmatmul.mubr.bf16.gmra.mxu0 %v1230
  %v5752 = vpop.f32.mrf.mxu0
  %v5753 = vadd.f32 %v5710, %v5752
  %v5754 = vpop.f32.mrf.mxu0
  %v5755 = vadd.f32 %v5712, %v5754
  %v5756 = vpop.f32.mrf.mxu0
  %v5757 = vadd.f32 %v5714, %v5756
  %v5758 = vpop.f32.mrf.mxu0
  %v5759 = vadd.f32 %v5716, %v5758
  %5760 = vdwg.mxu0
  %5761 = vmatprep.subr.bf16.mxu0 %v4292
  %5762 = vmatpush1.bf16.msra.mxu0 %v4291
  %5763 = vmatprep.subr.bf16.mxu0 %v4289
  %5764 = vmatpush1.bf16.msra.mxu0 %v4288
  %5765 = vmatprep.subr.bf16.mxu0 %v4286
  %5766 = vmatpush1.bf16.msra.mxu0 %v4285
  %5767 = vmatprep.subr.bf16.mxu0 %v4283
  %5768 = vmatpush1.bf16.msra.mxu0 %v4282
  %5769 = vmatprep.subr.bf16.mxu0 %v4280
  %5770 = vmatpush1.bf16.msra.mxu0 %v4279
  %5771 = vmatprep.subr.bf16.mxu0 %v4277
  %5772 = vmatpush1.bf16.msra.mxu0 %v4276
  %5773 = vmatprep.subr.bf16.mxu0 %v4274
  %5774 = vmatpush1.bf16.msra.mxu0 %v4273
  %5775 = vmatprep.subr.bf16.mxu0 %v4271
  %5776 = vmatpush1.bf16.msra.mxu0 %v4270
  %5777 = vmatprep.subr.bf16.mxu0 %v4316
  %5778 = vmatpush2.bf16.msra.mxu0 %v4315
  %5779 = vmatprep.subr.bf16.mxu0 %v4313
  %5780 = vmatpush2.bf16.msra.mxu0 %v4312
  %5781 = vmatprep.subr.bf16.mxu0 %v4310
  %5782 = vmatpush2.bf16.msra.mxu0 %v4309
  %5783 = vmatprep.subr.bf16.mxu0 %v4307
  %5784 = vmatpush2.bf16.msra.mxu0 %v4306
  %5785 = vmatprep.subr.bf16.mxu0 %v4304
  %5786 = vmatpush2.bf16.msra.mxu0 %v4303
  %5787 = vmatprep.subr.bf16.mxu0 %v4301
  %5788 = vmatpush2.bf16.msra.mxu0 %v4300
  %5789 = vmatprep.subr.bf16.mxu0 %v4298
  %5790 = vmatpush2.bf16.msra.mxu0 %v4297
  %5791 = vmatprep.subr.bf16.mxu0 %v4295
  %5792 = vmatpush2.bf16.msra.mxu0 %v4294
  %5793 = vmatprep.mubr.bf16.mxu0 %v1233
  %5794 = vmatmul.mubr.bf16.gmra.mxu0 %v1232
  %v5795 = vpop.f32.mrf.mxu0
  %v5796 = vadd.f32 %v5753, %v5795
  %v5797 = vpop.f32.mrf.mxu0
  %v5798 = vadd.f32 %v5755, %v5797
  %v5799 = vpop.f32.mrf.mxu0
  %v5800 = vadd.f32 %v5757, %v5799
  %v5801 = vpop.f32.mrf.mxu0
  %v5802 = vadd.f32 %v5759, %v5801
  %5803 = vdwg.mxu0
  %5804 = vmatprep.subr.bf16.mxu0 %v4340
  %5805 = vmatpush1.bf16.msra.mxu0 %v4339
  %5806 = vmatprep.subr.bf16.mxu0 %v4337
  %5807 = vmatpush1.bf16.msra.mxu0 %v4336
  %5808 = vmatprep.subr.bf16.mxu0 %v4334
  %5809 = vmatpush1.bf16.msra.mxu0 %v4333
  %5810 = vmatprep.subr.bf16.mxu0 %v4331
  %5811 = vmatpush1.bf16.msra.mxu0 %v4330
  %5812 = vmatprep.subr.bf16.mxu0 %v4328
  %5813 = vmatpush1.bf16.msra.mxu0 %v4327
  %5814 = vmatprep.subr.bf16.mxu0 %v4325
  %5815 = vmatpush1.bf16.msra.mxu0 %v4324
  %5816 = vmatprep.subr.bf16.mxu0 %v4322
  %5817 = vmatpush1.bf16.msra.mxu0 %v4321
  %5818 = vmatprep.subr.bf16.mxu0 %v4319
  %5819 = vmatpush1.bf16.msra.mxu0 %v4318
  %5820 = vmatprep.subr.bf16.mxu0 %v4364
  %5821 = vmatpush2.bf16.msra.mxu0 %v4363
  %5822 = vmatprep.subr.bf16.mxu0 %v4361
  %5823 = vmatpush2.bf16.msra.mxu0 %v4360
  %5824 = vmatprep.subr.bf16.mxu0 %v4358
  %5825 = vmatpush2.bf16.msra.mxu0 %v4357
  %5826 = vmatprep.subr.bf16.mxu0 %v4355
  %5827 = vmatpush2.bf16.msra.mxu0 %v4354
  %5828 = vmatprep.subr.bf16.mxu0 %v4352
  %5829 = vmatpush2.bf16.msra.mxu0 %v4351
  %5830 = vmatprep.subr.bf16.mxu0 %v4349
  %5831 = vmatpush2.bf16.msra.mxu0 %v4348
  %5832 = vmatprep.subr.bf16.mxu0 %v4346
  %5833 = vmatpush2.bf16.msra.mxu0 %v4345
  %5834 = vmatprep.subr.bf16.mxu0 %v4343
  %5835 = vmatpush2.bf16.msra.mxu0 %v4342
  %5836 = vmatprep.mubr.bf16.mxu0 %v1235
  %5837 = vmatmul.mubr.bf16.gmra.mxu0 %v1234
  %v5838 = vpop.f32.mrf.mxu0
  %v5839 = vadd.f32 %v5796, %v5838
  %v5840 = vpop.f32.mrf.mxu0
  %v5841 = vadd.f32 %v5798, %v5840
  %v5842 = vpop.f32.mrf.mxu0
  %v5843 = vadd.f32 %v5800, %v5842
  %v5844 = vpop.f32.mrf.mxu0
  %v5845 = vadd.f32 %v5802, %v5844
  %5846 = vdwg.mxu0
  %5847 = vmatprep.subr.bf16.mxu0 %v4388
  %5848 = vmatpush1.bf16.msra.mxu0 %v4387
  %5849 = vmatprep.subr.bf16.mxu0 %v4385
  %5850 = vmatpush1.bf16.msra.mxu0 %v4384
  %5851 = vmatprep.subr.bf16.mxu0 %v4382
  %5852 = vmatpush1.bf16.msra.mxu0 %v4381
  %5853 = vmatprep.subr.bf16.mxu0 %v4379
  %5854 = vmatpush1.bf16.msra.mxu0 %v4378
  %5855 = vmatprep.subr.bf16.mxu0 %v4376
  %5856 = vmatpush1.bf16.msra.mxu0 %v4375
  %5857 = vmatprep.subr.bf16.mxu0 %v4373
  %5858 = vmatpush1.bf16.msra.mxu0 %v4372
  %5859 = vmatprep.subr.bf16.mxu0 %v4370
  %5860 = vmatpush1.bf16.msra.mxu0 %v4369
  %5861 = vmatprep.subr.bf16.mxu0 %v4367
  %5862 = vmatpush1.bf16.msra.mxu0 %v4366
  %5863 = vmatprep.subr.bf16.mxu0 %v4412
  %5864 = vmatpush2.bf16.msra.mxu0 %v4411
  %5865 = vmatprep.subr.bf16.mxu0 %v4409
  %5866 = vmatpush2.bf16.msra.mxu0 %v4408
  %5867 = vmatprep.subr.bf16.mxu0 %v4406
  %5868 = vmatpush2.bf16.msra.mxu0 %v4405
  %5869 = vmatprep.subr.bf16.mxu0 %v4403
  %5870 = vmatpush2.bf16.msra.mxu0 %v4402
  %5871 = vmatprep.subr.bf16.mxu0 %v4400
  %5872 = vmatpush2.bf16.msra.mxu0 %v4399
  %5873 = vmatprep.subr.bf16.mxu0 %v4397
  %5874 = vmatpush2.bf16.msra.mxu0 %v4396
  %5875 = vmatprep.subr.bf16.mxu0 %v4394
  %5876 = vmatpush2.bf16.msra.mxu0 %v4393
  %5877 = vmatprep.subr.bf16.mxu0 %v4391
  %5878 = vmatpush2.bf16.msra.mxu0 %v4390
  %5879 = vmatprep.mubr.bf16.mxu0 %v1237
  %5880 = vmatmul.mubr.bf16.gmra.mxu0 %v1236
  %v5881 = vpop.f32.mrf.mxu0
  %v5882 = vadd.f32 %v5839, %v5881
  %v5883 = vpop.f32.mrf.mxu0
  %v5884 = vadd.f32 %v5841, %v5883
  %v5885 = vpop.f32.mrf.mxu0
  %v5886 = vadd.f32 %v5843, %v5885
  %v5887 = vpop.f32.mrf.mxu0
  %v5888 = vadd.f32 %v5845, %v5887
  %5889 = vdwg.mxu0
  %5890 = vmatprep.subr.bf16.mxu0 %v4436
  %5891 = vmatpush1.bf16.msra.mxu0 %v4435
  %5892 = vmatprep.subr.bf16.mxu0 %v4433
  %5893 = vmatpush1.bf16.msra.mxu0 %v4432
  %5894 = vmatprep.subr.bf16.mxu0 %v4430
  %5895 = vmatpush1.bf16.msra.mxu0 %v4429
  %5896 = vmatprep.subr.bf16.mxu0 %v4427
  %5897 = vmatpush1.bf16.msra.mxu0 %v4426
  %5898 = vmatprep.subr.bf16.mxu0 %v4424
  %5899 = vmatpush1.bf16.msra.mxu0 %v4423
  %5900 = vmatprep.subr.bf16.mxu0 %v4421
  %5901 = vmatpush1.bf16.msra.mxu0 %v4420
  %5902 = vmatprep.subr.bf16.mxu0 %v4418
  %5903 = vmatpush1.bf16.msra.mxu0 %v4417
  %5904 = vmatprep.subr.bf16.mxu0 %v4415
  %5905 = vmatpush1.bf16.msra.mxu0 %v4414
  %5906 = vmatprep.subr.bf16.mxu0 %v4460
  %5907 = vmatpush2.bf16.msra.mxu0 %v4459
  %5908 = vmatprep.subr.bf16.mxu0 %v4457
  %5909 = vmatpush2.bf16.msra.mxu0 %v4456
  %5910 = vmatprep.subr.bf16.mxu0 %v4454
  %5911 = vmatpush2.bf16.msra.mxu0 %v4453
  %5912 = vmatprep.subr.bf16.mxu0 %v4451
  %5913 = vmatpush2.bf16.msra.mxu0 %v4450
  %5914 = vmatprep.subr.bf16.mxu0 %v4448
  %5915 = vmatpush2.bf16.msra.mxu0 %v4447
  %5916 = vmatprep.subr.bf16.mxu0 %v4445
  %5917 = vmatpush2.bf16.msra.mxu0 %v4444
  %5918 = vmatprep.subr.bf16.mxu0 %v4442
  %5919 = vmatpush2.bf16.msra.mxu0 %v4441
  %5920 = vmatprep.subr.bf16.mxu0 %v4439
  %5921 = vmatpush2.bf16.msra.mxu0 %v4438
  %5922 = vmatprep.mubr.bf16.mxu0 %v1239
  %5923 = vmatmul.mubr.bf16.gmra.mxu0 %v1238
  %v5924 = vpop.f32.mrf.mxu0
  %v5925 = vadd.f32 %v5882, %v5924
  %v5926 = vpop.f32.mrf.mxu0
  %v5927 = vadd.f32 %v5884, %v5926
  %v5928 = vpop.f32.mrf.mxu0
  %v5929 = vadd.f32 %v5886, %v5928
  %v5930 = vpop.f32.mrf.mxu0
  %v5931 = vadd.f32 %v5888, %v5930
  %5932 = vdwg.mxu0
  %5933 = vmatprep.subr.bf16.mxu0 %v4484
  %5934 = vmatpush1.bf16.msra.mxu0 %v4483
  %5935 = vmatprep.subr.bf16.mxu0 %v4481
  %5936 = vmatpush1.bf16.msra.mxu0 %v4480
  %5937 = vmatprep.subr.bf16.mxu0 %v4478
  %5938 = vmatpush1.bf16.msra.mxu0 %v4477
  %5939 = vmatprep.subr.bf16.mxu0 %v4475
  %5940 = vmatpush1.bf16.msra.mxu0 %v4474
  %5941 = vmatprep.subr.bf16.mxu0 %v4472
  %5942 = vmatpush1.bf16.msra.mxu0 %v4471
  %5943 = vmatprep.subr.bf16.mxu0 %v4469
  %5944 = vmatpush1.bf16.msra.mxu0 %v4468
  %5945 = vmatprep.subr.bf16.mxu0 %v4466
  %5946 = vmatpush1.bf16.msra.mxu0 %v4465
  %5947 = vmatprep.subr.bf16.mxu0 %v4463
  %5948 = vmatpush1.bf16.msra.mxu0 %v4462
  %5949 = vmatprep.subr.bf16.mxu0 %v4508
  %5950 = vmatpush2.bf16.msra.mxu0 %v4507
  %5951 = vmatprep.subr.bf16.mxu0 %v4505
  %5952 = vmatpush2.bf16.msra.mxu0 %v4504
  %5953 = vmatprep.subr.bf16.mxu0 %v4502
  %5954 = vmatpush2.bf16.msra.mxu0 %v4501
  %5955 = vmatprep.subr.bf16.mxu0 %v4499
  %5956 = vmatpush2.bf16.msra.mxu0 %v4498
  %5957 = vmatprep.subr.bf16.mxu0 %v4496
  %5958 = vmatpush2.bf16.msra.mxu0 %v4495
  %5959 = vmatprep.subr.bf16.mxu0 %v4493
  %5960 = vmatpush2.bf16.msra.mxu0 %v4492
  %5961 = vmatprep.subr.bf16.mxu0 %v4490
  %5962 = vmatpush2.bf16.msra.mxu0 %v4489
  %5963 = vmatprep.subr.bf16.mxu0 %v4487
  %5964 = vmatpush2.bf16.msra.mxu0 %v4486
  %5965 = vmatprep.mubr.bf16.mxu0 %v1241
  %5966 = vmatmul.mubr.bf16.gmra.mxu0 %v1240
  %v5967 = vpop.f32.mrf.mxu0
  %v5968 = vadd.f32 %v5925, %v5967
  %v5969 = vpop.f32.mrf.mxu0
  %v5970 = vadd.f32 %v5927, %v5969
  %v5971 = vpop.f32.mrf.mxu0
  %v5972 = vadd.f32 %v5929, %v5971
  %v5973 = vpop.f32.mrf.mxu0
  %v5974 = vadd.f32 %v5931, %v5973
  %5975 = vdwg.mxu0
  %5976 = vmatprep.subr.bf16.mxu0 %v4532
  %5977 = vmatpush1.bf16.msra.mxu0 %v4531
  %5978 = vmatprep.subr.bf16.mxu0 %v4529
  %5979 = vmatpush1.bf16.msra.mxu0 %v4528
  %5980 = vmatprep.subr.bf16.mxu0 %v4526
  %5981 = vmatpush1.bf16.msra.mxu0 %v4525
  %5982 = vmatprep.subr.bf16.mxu0 %v4523
  %5983 = vmatpush1.bf16.msra.mxu0 %v4522
  %5984 = vmatprep.subr.bf16.mxu0 %v4520
  %5985 = vmatpush1.bf16.msra.mxu0 %v4519
  %5986 = vmatprep.subr.bf16.mxu0 %v4517
  %5987 = vmatpush1.bf16.msra.mxu0 %v4516
  %5988 = vmatprep.subr.bf16.mxu0 %v4514
  %5989 = vmatpush1.bf16.msra.mxu0 %v4513
  %5990 = vmatprep.subr.bf16.mxu0 %v4511
  %5991 = vmatpush1.bf16.msra.mxu0 %v4510
  %5992 = vmatprep.subr.bf16.mxu0 %v4556
  %5993 = vmatpush2.bf16.msra.mxu0 %v4555
  %5994 = vmatprep.subr.bf16.mxu0 %v4553
  %5995 = vmatpush2.bf16.msra.mxu0 %v4552
  %5996 = vmatprep.subr.bf16.mxu0 %v4550
  %5997 = vmatpush2.bf16.msra.mxu0 %v4549
  %5998 = vmatprep.subr.bf16.mxu0 %v4547
  %5999 = vmatpush2.bf16.msra.mxu0 %v4546
  %6000 = vmatprep.subr.bf16.mxu0 %v4544
  %6001 = vmatpush2.bf16.msra.mxu0 %v4543
  %6002 = vmatprep.subr.bf16.mxu0 %v4541
  %6003 = vmatpush2.bf16.msra.mxu0 %v4540
  %6004 = vmatprep.subr.bf16.mxu0 %v4538
  %6005 = vmatpush2.bf16.msra.mxu0 %v4537
  %6006 = vmatprep.subr.bf16.mxu0 %v4535
  %6007 = vmatpush2.bf16.msra.mxu0 %v4534
  %6008 = vmatprep.mubr.bf16.mxu0 %v1243
  %6009 = vmatmul.mubr.bf16.gmra.mxu0 %v1242
  %v6010 = vpop.f32.mrf.mxu0
  %v6011 = vadd.f32 %v5968, %v6010
  %v6012 = vpop.f32.mrf.mxu0
  %v6013 = vadd.f32 %v5970, %v6012
  %v6014 = vpop.f32.mrf.mxu0
  %v6015 = vadd.f32 %v5972, %v6014
  %v6016 = vpop.f32.mrf.mxu0
  %v6017 = vadd.f32 %v5974, %v6016
  %6018 = vdwg.mxu0
  %6019 = vmatprep.subr.bf16.mxu0 %v4580
  %6020 = vmatpush1.bf16.msra.mxu0 %v4579
  %6021 = vmatprep.subr.bf16.mxu0 %v4577
  %6022 = vmatpush1.bf16.msra.mxu0 %v4576
  %6023 = vmatprep.subr.bf16.mxu0 %v4574
  %6024 = vmatpush1.bf16.msra.mxu0 %v4573
  %6025 = vmatprep.subr.bf16.mxu0 %v4571
  %6026 = vmatpush1.bf16.msra.mxu0 %v4570
  %6027 = vmatprep.subr.bf16.mxu0 %v4568
  %6028 = vmatpush1.bf16.msra.mxu0 %v4567
  %6029 = vmatprep.subr.bf16.mxu0 %v4565
  %6030 = vmatpush1.bf16.msra.mxu0 %v4564
  %6031 = vmatprep.subr.bf16.mxu0 %v4562
  %6032 = vmatpush1.bf16.msra.mxu0 %v4561
  %6033 = vmatprep.subr.bf16.mxu0 %v4559
  %6034 = vmatpush1.bf16.msra.mxu0 %v4558
  %6035 = vmatprep.subr.bf16.mxu0 %v4604
  %6036 = vmatpush2.bf16.msra.mxu0 %v4603
  %6037 = vmatprep.subr.bf16.mxu0 %v4601
  %6038 = vmatpush2.bf16.msra.mxu0 %v4600
  %6039 = vmatprep.subr.bf16.mxu0 %v4598
  %6040 = vmatpush2.bf16.msra.mxu0 %v4597
  %6041 = vmatprep.subr.bf16.mxu0 %v4595
  %6042 = vmatpush2.bf16.msra.mxu0 %v4594
  %6043 = vmatprep.subr.bf16.mxu0 %v4592
  %6044 = vmatpush2.bf16.msra.mxu0 %v4591
  %6045 = vmatprep.subr.bf16.mxu0 %v4589
  %6046 = vmatpush2.bf16.msra.mxu0 %v4588
  %6047 = vmatprep.subr.bf16.mxu0 %v4586
  %6048 = vmatpush2.bf16.msra.mxu0 %v4585
  %6049 = vmatprep.subr.bf16.mxu0 %v4583
  %6050 = vmatpush2.bf16.msra.mxu0 %v4582
  %6051 = vmatprep.mubr.bf16.mxu0 %v1245
  %6052 = vmatmul.mubr.bf16.gmra.mxu0 %v1244
  %v6053 = vpop.f32.mrf.mxu0
  %v6054 = vadd.f32 %v6011, %v6053
  %v6055 = vpop.f32.mrf.mxu0
  %v6056 = vadd.f32 %v6013, %v6055
  %v6057 = vpop.f32.mrf.mxu0
  %v6058 = vadd.f32 %v6015, %v6057
  %v6059 = vpop.f32.mrf.mxu0
  %v6060 = vadd.f32 %v6017, %v6059
  %6061 = vdwg.mxu0
  %6062 = vmatprep.subr.bf16.mxu0 0
  %6063 = vmatpush1.bf16.msra.mxu0 %v3861
  %6064 = vmatprep.subr.bf16.mxu0 0
  %6065 = vmatpush1.bf16.msra.mxu0 %v3858
  %6066 = vmatprep.subr.bf16.mxu0 0
  %6067 = vmatpush1.bf16.msra.mxu0 %v3855
  %6068 = vmatprep.subr.bf16.mxu0 0
  %6069 = vmatpush1.bf16.msra.mxu0 %v3852
  %6070 = vmatprep.subr.bf16.mxu0 0
  %6071 = vmatpush1.bf16.msra.mxu0 %v3849
  %6072 = vmatprep.subr.bf16.mxu0 0
  %6073 = vmatpush1.bf16.msra.mxu0 %v3846
  %6074 = vmatprep.subr.bf16.mxu0 0
  %6075 = vmatpush1.bf16.msra.mxu0 %v3843
  %6076 = vmatprep.subr.bf16.mxu0 0
  %6077 = vmatpush1.bf16.msra.mxu0 %v3840
  %6078 = vmatprep.subr.bf16.mxu0 0
  %6079 = vmatpush2.bf16.msra.mxu0 %v3885
  %6080 = vmatprep.subr.bf16.mxu0 0
  %6081 = vmatpush2.bf16.msra.mxu0 %v3882
  %6082 = vmatprep.subr.bf16.mxu0 0
  %6083 = vmatpush2.bf16.msra.mxu0 %v3879
  %6084 = vmatprep.subr.bf16.mxu0 0
  %6085 = vmatpush2.bf16.msra.mxu0 %v3876
  %6086 = vmatprep.subr.bf16.mxu0 0
  %6087 = vmatpush2.bf16.msra.mxu0 %v3873
  %6088 = vmatprep.subr.bf16.mxu0 0
  %6089 = vmatpush2.bf16.msra.mxu0 %v3870
  %6090 = vmatprep.subr.bf16.mxu0 0
  %6091 = vmatpush2.bf16.msra.mxu0 %v3867
  %6092 = vmatprep.subr.bf16.mxu0 0
  %6093 = vmatpush2.bf16.msra.mxu0 %v3864
  %6094 = vmatprep.mubr.bf16.mxu0 %v1215
  %6095 = vmatmul.mubr.bf16.gmra.mxu0 %v1214
  %v6096 = vpop.f32.mrf.mxu0
  %v6097 = vadd.f32 0.0, %v6096
  %v6098 = vpop.f32.mrf.mxu0
  %v6099 = vpop.f32.mrf.mxu0
  %v6100 = vadd.f32 0.0, %v6099
  %v6101 = vpop.f32.mrf.mxu0
  %6102 = vdwg.mxu0
  %6103 = vmatprep.subr.bf16.mxu0 0
  %6104 = vmatpush1.bf16.msra.mxu0 %v3909
  %6105 = vmatprep.subr.bf16.mxu0 0
  %6106 = vmatpush1.bf16.msra.mxu0 %v3906
  %6107 = vmatprep.subr.bf16.mxu0 0
  %6108 = vmatpush1.bf16.msra.mxu0 %v3903
  %6109 = vmatprep.subr.bf16.mxu0 0
  %6110 = vmatpush1.bf16.msra.mxu0 %v3900
  %6111 = vmatprep.subr.bf16.mxu0 0
  %6112 = vmatpush1.bf16.msra.mxu0 %v3897
  %6113 = vmatprep.subr.bf16.mxu0 0
  %6114 = vmatpush1.bf16.msra.mxu0 %v3894
  %6115 = vmatprep.subr.bf16.mxu0 0
  %6116 = vmatpush1.bf16.msra.mxu0 %v3891
  %6117 = vmatprep.subr.bf16.mxu0 0
  %6118 = vmatpush1.bf16.msra.mxu0 %v3888
  %6119 = vmatprep.subr.bf16.mxu0 0
  %6120 = vmatpush2.bf16.msra.mxu0 %v3933
  %6121 = vmatprep.subr.bf16.mxu0 0
  %6122 = vmatpush2.bf16.msra.mxu0 %v3930
  %6123 = vmatprep.subr.bf16.mxu0 0
  %6124 = vmatpush2.bf16.msra.mxu0 %v3927
  %6125 = vmatprep.subr.bf16.mxu0 0
  %6126 = vmatpush2.bf16.msra.mxu0 %v3924
  %6127 = vmatprep.subr.bf16.mxu0 0
  %6128 = vmatpush2.bf16.msra.mxu0 %v3921
  %6129 = vmatprep.subr.bf16.mxu0 0
  %6130 = vmatpush2.bf16.msra.mxu0 %v3918
  %6131 = vmatprep.subr.bf16.mxu0 0
  %6132 = vmatpush2.bf16.msra.mxu0 %v3915
  %6133 = vmatprep.subr.bf16.mxu0 0
  %6134 = vmatpush2.bf16.msra.mxu0 %v3912
  %6135 = vmatprep.mubr.bf16.mxu0 %v1217
  %6136 = vmatmul.mubr.bf16.gmra.mxu0 %v1216
  %v6137 = vpop.f32.mrf.mxu0
  %v6138 = vadd.f32 %v6097, %v6137
  %v6139 = vpop.f32.mrf.mxu0
  %v6140 = vpop.f32.mrf.mxu0
  %v6141 = vadd.f32 %v6100, %v6140
  %v6142 = vpop.f32.mrf.mxu0
  %6143 = vdwg.mxu0
  %6144 = vmatprep.subr.bf16.mxu0 0
  %6145 = vmatpush1.bf16.msra.mxu0 %v3957
  %6146 = vmatprep.subr.bf16.mxu0 0
  %6147 = vmatpush1.bf16.msra.mxu0 %v3954
  %6148 = vmatprep.subr.bf16.mxu0 0
  %6149 = vmatpush1.bf16.msra.mxu0 %v3951
  %6150 = vmatprep.subr.bf16.mxu0 0
  %6151 = vmatpush1.bf16.msra.mxu0 %v3948
  %6152 = vmatprep.subr.bf16.mxu0 0
  %6153 = vmatpush1.bf16.msra.mxu0 %v3945
  %6154 = vmatprep.subr.bf16.mxu0 0
  %6155 = vmatpush1.bf16.msra.mxu0 %v3942
  %6156 = vmatprep.subr.bf16.mxu0 0
  %6157 = vmatpush1.bf16.msra.mxu0 %v3939
  %6158 = vmatprep.subr.bf16.mxu0 0
  %6159 = vmatpush1.bf16.msra.mxu0 %v3936
  %6160 = vmatprep.subr.bf16.mxu0 0
  %6161 = vmatpush2.bf16.msra.mxu0 %v3981
  %6162 = vmatprep.subr.bf16.mxu0 0
  %6163 = vmatpush2.bf16.msra.mxu0 %v3978
  %6164 = vmatprep.subr.bf16.mxu0 0
  %6165 = vmatpush2.bf16.msra.mxu0 %v3975
  %6166 = vmatprep.subr.bf16.mxu0 0
  %6167 = vmatpush2.bf16.msra.mxu0 %v3972
  %6168 = vmatprep.subr.bf16.mxu0 0
  %6169 = vmatpush2.bf16.msra.mxu0 %v3969
  %6170 = vmatprep.subr.bf16.mxu0 0
  %6171 = vmatpush2.bf16.msra.mxu0 %v3966
  %6172 = vmatprep.subr.bf16.mxu0 0
  %6173 = vmatpush2.bf16.msra.mxu0 %v3963
  %6174 = vmatprep.subr.bf16.mxu0 0
  %6175 = vmatpush2.bf16.msra.mxu0 %v3960
  %6176 = vmatprep.mubr.bf16.mxu0 %v1219
  %6177 = vmatmul.mubr.bf16.gmra.mxu0 %v1218
  %v6178 = vpop.f32.mrf.mxu0
  %v6179 = vadd.f32 %v6138, %v6178
  %v6180 = vpop.f32.mrf.mxu0
  %v6181 = vpop.f32.mrf.mxu0
  %v6182 = vadd.f32 %v6141, %v6181
  %v6183 = vpop.f32.mrf.mxu0
  %6184 = vdwg.mxu0
  %6185 = vmatprep.subr.bf16.mxu0 0
  %6186 = vmatpush1.bf16.msra.mxu0 %v4005
  %6187 = vmatprep.subr.bf16.mxu0 0
  %6188 = vmatpush1.bf16.msra.mxu0 %v4002
  %6189 = vmatprep.subr.bf16.mxu0 0
  %6190 = vmatpush1.bf16.msra.mxu0 %v3999
  %6191 = vmatprep.subr.bf16.mxu0 0
  %6192 = vmatpush1.bf16.msra.mxu0 %v3996
  %6193 = vmatprep.subr.bf16.mxu0 0
  %6194 = vmatpush1.bf16.msra.mxu0 %v3993
  %6195 = vmatprep.subr.bf16.mxu0 0
  %6196 = vmatpush1.bf16.msra.mxu0 %v3990
  %6197 = vmatprep.subr.bf16.mxu0 0
  %6198 = vmatpush1.bf16.msra.mxu0 %v3987
  %6199 = vmatprep.subr.bf16.mxu0 0
  %6200 = vmatpush1.bf16.msra.mxu0 %v3984
  %6201 = vmatprep.subr.bf16.mxu0 0
  %6202 = vmatpush2.bf16.msra.mxu0 %v4029
  %6203 = vmatprep.subr.bf16.mxu0 0
  %6204 = vmatpush2.bf16.msra.mxu0 %v4026
  %6205 = vmatprep.subr.bf16.mxu0 0
  %6206 = vmatpush2.bf16.msra.mxu0 %v4023
  %6207 = vmatprep.subr.bf16.mxu0 0
  %6208 = vmatpush2.bf16.msra.mxu0 %v4020
  %6209 = vmatprep.subr.bf16.mxu0 0
  %6210 = vmatpush2.bf16.msra.mxu0 %v4017
  %6211 = vmatprep.subr.bf16.mxu0 0
  %6212 = vmatpush2.bf16.msra.mxu0 %v4014
  %6213 = vmatprep.subr.bf16.mxu0 0
  %6214 = vmatpush2.bf16.msra.mxu0 %v4011
  %6215 = vmatprep.subr.bf16.mxu0 0
  %6216 = vmatpush2.bf16.msra.mxu0 %v4008
  %6217 = vmatprep.mubr.bf16.mxu0 %v1221
  %6218 = vmatmul.mubr.bf16.gmra.mxu0 %v1220
  %v6219 = vpop.f32.mrf.mxu0
  %v6220 = vadd.f32 %v6179, %v6219
  %v6221 = vpop.f32.mrf.mxu0
  %v6222 = vpop.f32.mrf.mxu0
  %v6223 = vadd.f32 %v6182, %v6222
  %v6224 = vpop.f32.mrf.mxu0
  %6225 = vdwg.mxu0
  %6226 = vmatprep.subr.bf16.mxu0 0
  %6227 = vmatpush1.bf16.msra.mxu0 %v4053
  %6228 = vmatprep.subr.bf16.mxu0 0
  %6229 = vmatpush1.bf16.msra.mxu0 %v4050
  %6230 = vmatprep.subr.bf16.mxu0 0
  %6231 = vmatpush1.bf16.msra.mxu0 %v4047
  %6232 = vmatprep.subr.bf16.mxu0 0
  %6233 = vmatpush1.bf16.msra.mxu0 %v4044
  %6234 = vmatprep.subr.bf16.mxu0 0
  %6235 = vmatpush1.bf16.msra.mxu0 %v4041
  %6236 = vmatprep.subr.bf16.mxu0 0
  %6237 = vmatpush1.bf16.msra.mxu0 %v4038
  %6238 = vmatprep.subr.bf16.mxu0 0
  %6239 = vmatpush1.bf16.msra.mxu0 %v4035
  %6240 = vmatprep.subr.bf16.mxu0 0
  %6241 = vmatpush1.bf16.msra.mxu0 %v4032
  %6242 = vmatprep.subr.bf16.mxu0 0
  %6243 = vmatpush2.bf16.msra.mxu0 %v4077
  %6244 = vmatprep.subr.bf16.mxu0 0
  %6245 = vmatpush2.bf16.msra.mxu0 %v4074
  %6246 = vmatprep.subr.bf16.mxu0 0
  %6247 = vmatpush2.bf16.msra.mxu0 %v4071
  %6248 = vmatprep.subr.bf16.mxu0 0
  %6249 = vmatpush2.bf16.msra.mxu0 %v4068
  %6250 = vmatprep.subr.bf16.mxu0 0
  %6251 = vmatpush2.bf16.msra.mxu0 %v4065
  %6252 = vmatprep.subr.bf16.mxu0 0
  %6253 = vmatpush2.bf16.msra.mxu0 %v4062
  %6254 = vmatprep.subr.bf16.mxu0 0
  %6255 = vmatpush2.bf16.msra.mxu0 %v4059
  %6256 = vmatprep.subr.bf16.mxu0 0
  %6257 = vmatpush2.bf16.msra.mxu0 %v4056
  %6258 = vmatprep.mubr.bf16.mxu0 %v1223
  %6259 = vmatmul.mubr.bf16.gmra.mxu0 %v1222
  %v6260 = vpop.f32.mrf.mxu0
  %v6261 = vadd.f32 %v6220, %v6260
  %v6262 = vpop.f32.mrf.mxu0
  %v6263 = vpop.f32.mrf.mxu0
  %v6264 = vadd.f32 %v6223, %v6263
  %v6265 = vpop.f32.mrf.mxu0
  %6266 = vdwg.mxu0
  %6267 = vmatprep.subr.bf16.mxu0 0
  %6268 = vmatpush1.bf16.msra.mxu0 %v4101
  %6269 = vmatprep.subr.bf16.mxu0 0
  %6270 = vmatpush1.bf16.msra.mxu0 %v4098
  %6271 = vmatprep.subr.bf16.mxu0 0
  %6272 = vmatpush1.bf16.msra.mxu0 %v4095
  %6273 = vmatprep.subr.bf16.mxu0 0
  %6274 = vmatpush1.bf16.msra.mxu0 %v4092
  %6275 = vmatprep.subr.bf16.mxu0 0
  %6276 = vmatpush1.bf16.msra.mxu0 %v4089
  %6277 = vmatprep.subr.bf16.mxu0 0
  %6278 = vmatpush1.bf16.msra.mxu0 %v4086
  %6279 = vmatprep.subr.bf16.mxu0 0
  %6280 = vmatpush1.bf16.msra.mxu0 %v4083
  %6281 = vmatprep.subr.bf16.mxu0 0
  %6282 = vmatpush1.bf16.msra.mxu0 %v4080
  %6283 = vmatprep.subr.bf16.mxu0 0
  %6284 = vmatpush2.bf16.msra.mxu0 %v4125
  %6285 = vmatprep.subr.bf16.mxu0 0
  %6286 = vmatpush2.bf16.msra.mxu0 %v4122
  %6287 = vmatprep.subr.bf16.mxu0 0
  %6288 = vmatpush2.bf16.msra.mxu0 %v4119
  %6289 = vmatprep.subr.bf16.mxu0 0
  %6290 = vmatpush2.bf16.msra.mxu0 %v4116
  %6291 = vmatprep.subr.bf16.mxu0 0
  %6292 = vmatpush2.bf16.msra.mxu0 %v4113
  %6293 = vmatprep.subr.bf16.mxu0 0
  %6294 = vmatpush2.bf16.msra.mxu0 %v4110
  %6295 = vmatprep.subr.bf16.mxu0 0
  %6296 = vmatpush2.bf16.msra.mxu0 %v4107
  %6297 = vmatprep.subr.bf16.mxu0 0
  %6298 = vmatpush2.bf16.msra.mxu0 %v4104
  %6299 = vmatprep.mubr.bf16.mxu0 %v1225
  %6300 = vmatmul.mubr.bf16.gmra.mxu0 %v1224
  %v6301 = vpop.f32.mrf.mxu0
  %v6302 = vadd.f32 %v6261, %v6301
  %v6303 = vpop.f32.mrf.mxu0
  %v6304 = vpop.f32.mrf.mxu0
  %v6305 = vadd.f32 %v6264, %v6304
  %v6306 = vpop.f32.mrf.mxu0
  %6307 = vdwg.mxu0
  %6308 = vmatprep.subr.bf16.mxu0 0
  %6309 = vmatpush1.bf16.msra.mxu0 %v4149
  %6310 = vmatprep.subr.bf16.mxu0 0
  %6311 = vmatpush1.bf16.msra.mxu0 %v4146
  %6312 = vmatprep.subr.bf16.mxu0 0
  %6313 = vmatpush1.bf16.msra.mxu0 %v4143
  %6314 = vmatprep.subr.bf16.mxu0 0
  %6315 = vmatpush1.bf16.msra.mxu0 %v4140
  %6316 = vmatprep.subr.bf16.mxu0 0
  %6317 = vmatpush1.bf16.msra.mxu0 %v4137
  %6318 = vmatprep.subr.bf16.mxu0 0
  %6319 = vmatpush1.bf16.msra.mxu0 %v4134
  %6320 = vmatprep.subr.bf16.mxu0 0
  %6321 = vmatpush1.bf16.msra.mxu0 %v4131
  %6322 = vmatprep.subr.bf16.mxu0 0
  %6323 = vmatpush1.bf16.msra.mxu0 %v4128
  %6324 = vmatprep.subr.bf16.mxu0 0
  %6325 = vmatpush2.bf16.msra.mxu0 %v4173
  %6326 = vmatprep.subr.bf16.mxu0 0
  %6327 = vmatpush2.bf16.msra.mxu0 %v4170
  %6328 = vmatprep.subr.bf16.mxu0 0
  %6329 = vmatpush2.bf16.msra.mxu0 %v4167
  %6330 = vmatprep.subr.bf16.mxu0 0
  %6331 = vmatpush2.bf16.msra.mxu0 %v4164
  %6332 = vmatprep.subr.bf16.mxu0 0
  %6333 = vmatpush2.bf16.msra.mxu0 %v4161
  %6334 = vmatprep.subr.bf16.mxu0 0
  %6335 = vmatpush2.bf16.msra.mxu0 %v4158
  %6336 = vmatprep.subr.bf16.mxu0 0
  %6337 = vmatpush2.bf16.msra.mxu0 %v4155
  %6338 = vmatprep.subr.bf16.mxu0 0
  %6339 = vmatpush2.bf16.msra.mxu0 %v4152
  %6340 = vmatprep.mubr.bf16.mxu0 %v1227
  %6341 = vmatmul.mubr.bf16.gmra.mxu0 %v1226
  %v6342 = vpop.f32.mrf.mxu0
  %v6343 = vadd.f32 %v6302, %v6342
  %v6344 = vpop.f32.mrf.mxu0
  %v6345 = vpop.f32.mrf.mxu0
  %v6346 = vadd.f32 %v6305, %v6345
  %v6347 = vpop.f32.mrf.mxu0
  %6348 = vdwg.mxu0
  %6349 = vmatprep.subr.bf16.mxu0 0
  %6350 = vmatpush1.bf16.msra.mxu0 %v4197
  %6351 = vmatprep.subr.bf16.mxu0 0
  %6352 = vmatpush1.bf16.msra.mxu0 %v4194
  %6353 = vmatprep.subr.bf16.mxu0 0
  %6354 = vmatpush1.bf16.msra.mxu0 %v4191
  %6355 = vmatprep.subr.bf16.mxu0 0
  %6356 = vmatpush1.bf16.msra.mxu0 %v4188
  %6357 = vmatprep.subr.bf16.mxu0 0
  %6358 = vmatpush1.bf16.msra.mxu0 %v4185
  %6359 = vmatprep.subr.bf16.mxu0 0
  %6360 = vmatpush1.bf16.msra.mxu0 %v4182
  %6361 = vmatprep.subr.bf16.mxu0 0
  %6362 = vmatpush1.bf16.msra.mxu0 %v4179
  %6363 = vmatprep.subr.bf16.mxu0 0
  %6364 = vmatpush1.bf16.msra.mxu0 %v4176
  %6365 = vmatprep.subr.bf16.mxu0 0
  %6366 = vmatpush2.bf16.msra.mxu0 %v4221
  %6367 = vmatprep.subr.bf16.mxu0 0
  %6368 = vmatpush2.bf16.msra.mxu0 %v4218
  %6369 = vmatprep.subr.bf16.mxu0 0
  %6370 = vmatpush2.bf16.msra.mxu0 %v4215
  %6371 = vmatprep.subr.bf16.mxu0 0
  %6372 = vmatpush2.bf16.msra.mxu0 %v4212
  %6373 = vmatprep.subr.bf16.mxu0 0
  %6374 = vmatpush2.bf16.msra.mxu0 %v4209
  %6375 = vmatprep.subr.bf16.mxu0 0
  %6376 = vmatpush2.bf16.msra.mxu0 %v4206
  %6377 = vmatprep.subr.bf16.mxu0 0
  %6378 = vmatpush2.bf16.msra.mxu0 %v4203
  %6379 = vmatprep.subr.bf16.mxu0 0
  %6380 = vmatpush2.bf16.msra.mxu0 %v4200
  %6381 = vmatprep.mubr.bf16.mxu0 %v1229
  %6382 = vmatmul.mubr.bf16.gmra.mxu0 %v1228
  %v6383 = vpop.f32.mrf.mxu0
  %v6384 = vadd.f32 %v6343, %v6383
  %v6385 = vpop.f32.mrf.mxu0
  %v6386 = vpop.f32.mrf.mxu0
  %v6387 = vadd.f32 %v6346, %v6386
  %v6388 = vpop.f32.mrf.mxu0
  %6389 = vdwg.mxu0
  %6390 = vmatprep.subr.bf16.mxu0 0
  %6391 = vmatpush1.bf16.msra.mxu0 %v4245
  %6392 = vmatprep.subr.bf16.mxu0 0
  %6393 = vmatpush1.bf16.msra.mxu0 %v4242
  %6394 = vmatprep.subr.bf16.mxu0 0
  %6395 = vmatpush1.bf16.msra.mxu0 %v4239
  %6396 = vmatprep.subr.bf16.mxu0 0
  %6397 = vmatpush1.bf16.msra.mxu0 %v4236
  %6398 = vmatprep.subr.bf16.mxu0 0
  %6399 = vmatpush1.bf16.msra.mxu0 %v4233
  %6400 = vmatprep.subr.bf16.mxu0 0
  %6401 = vmatpush1.bf16.msra.mxu0 %v4230
  %6402 = vmatprep.subr.bf16.mxu0 0
  %6403 = vmatpush1.bf16.msra.mxu0 %v4227
  %6404 = vmatprep.subr.bf16.mxu0 0
  %6405 = vmatpush1.bf16.msra.mxu0 %v4224
  %6406 = vmatprep.subr.bf16.mxu0 0
  %6407 = vmatpush2.bf16.msra.mxu0 %v4269
  %6408 = vmatprep.subr.bf16.mxu0 0
  %6409 = vmatpush2.bf16.msra.mxu0 %v4266
  %6410 = vmatprep.subr.bf16.mxu0 0
  %6411 = vmatpush2.bf16.msra.mxu0 %v4263
  %6412 = vmatprep.subr.bf16.mxu0 0
  %6413 = vmatpush2.bf16.msra.mxu0 %v4260
  %6414 = vmatprep.subr.bf16.mxu0 0
  %6415 = vmatpush2.bf16.msra.mxu0 %v4257
  %6416 = vmatprep.subr.bf16.mxu0 0
  %6417 = vmatpush2.bf16.msra.mxu0 %v4254
  %6418 = vmatprep.subr.bf16.mxu0 0
  %6419 = vmatpush2.bf16.msra.mxu0 %v4251
  %6420 = vmatprep.subr.bf16.mxu0 0
  %6421 = vmatpush2.bf16.msra.mxu0 %v4248
  %6422 = vmatprep.mubr.bf16.mxu0 %v1231
  %6423 = vmatmul.mubr.bf16.gmra.mxu0 %v1230
  %v6424 = vpop.f32.mrf.mxu0
  %v6425 = vadd.f32 %v6384, %v6424
  %v6426 = vpop.f32.mrf.mxu0
  %v6427 = vpop.f32.mrf.mxu0
  %v6428 = vadd.f32 %v6387, %v6427
  %v6429 = vpop.f32.mrf.mxu0
  %6430 = vdwg.mxu0
  %6431 = vmatprep.subr.bf16.mxu0 0
  %6432 = vmatpush1.bf16.msra.mxu0 %v4293
  %6433 = vmatprep.subr.bf16.mxu0 0
  %6434 = vmatpush1.bf16.msra.mxu0 %v4290
  %6435 = vmatprep.subr.bf16.mxu0 0
  %6436 = vmatpush1.bf16.msra.mxu0 %v4287
  %6437 = vmatprep.subr.bf16.mxu0 0
  %6438 = vmatpush1.bf16.msra.mxu0 %v4284
  %6439 = vmatprep.subr.bf16.mxu0 0
  %6440 = vmatpush1.bf16.msra.mxu0 %v4281
  %6441 = vmatprep.subr.bf16.mxu0 0
  %6442 = vmatpush1.bf16.msra.mxu0 %v4278
  %6443 = vmatprep.subr.bf16.mxu0 0
  %6444 = vmatpush1.bf16.msra.mxu0 %v4275
  %6445 = vmatprep.subr.bf16.mxu0 0
  %6446 = vmatpush1.bf16.msra.mxu0 %v4272
  %6447 = vmatprep.subr.bf16.mxu0 0
  %6448 = vmatpush2.bf16.msra.mxu0 %v4317
  %6449 = vmatprep.subr.bf16.mxu0 0
  %6450 = vmatpush2.bf16.msra.mxu0 %v4314
  %6451 = vmatprep.subr.bf16.mxu0 0
  %6452 = vmatpush2.bf16.msra.mxu0 %v4311
  %6453 = vmatprep.subr.bf16.mxu0 0
  %6454 = vmatpush2.bf16.msra.mxu0 %v4308
  %6455 = vmatprep.subr.bf16.mxu0 0
  %6456 = vmatpush2.bf16.msra.mxu0 %v4305
  %6457 = vmatprep.subr.bf16.mxu0 0
  %6458 = vmatpush2.bf16.msra.mxu0 %v4302
  %6459 = vmatprep.subr.bf16.mxu0 0
  %6460 = vmatpush2.bf16.msra.mxu0 %v4299
  %6461 = vmatprep.subr.bf16.mxu0 0
  %6462 = vmatpush2.bf16.msra.mxu0 %v4296
  %6463 = vmatprep.mubr.bf16.mxu0 %v1233
  %6464 = vmatmul.mubr.bf16.gmra.mxu0 %v1232
  %v6465 = vpop.f32.mrf.mxu0
  %v6466 = vadd.f32 %v6425, %v6465
  %v6467 = vpop.f32.mrf.mxu0
  %v6468 = vpop.f32.mrf.mxu0
  %v6469 = vadd.f32 %v6428, %v6468
  %v6470 = vpop.f32.mrf.mxu0
  %6471 = vdwg.mxu0
  %6472 = vmatprep.subr.bf16.mxu0 0
  %6473 = vmatpush1.bf16.msra.mxu0 %v4341
  %6474 = vmatprep.subr.bf16.mxu0 0
  %6475 = vmatpush1.bf16.msra.mxu0 %v4338
  %6476 = vmatprep.subr.bf16.mxu0 0
  %6477 = vmatpush1.bf16.msra.mxu0 %v4335
  %6478 = vmatprep.subr.bf16.mxu0 0
  %6479 = vmatpush1.bf16.msra.mxu0 %v4332
  %6480 = vmatprep.subr.bf16.mxu0 0
  %6481 = vmatpush1.bf16.msra.mxu0 %v4329
  %6482 = vmatprep.subr.bf16.mxu0 0
  %6483 = vmatpush1.bf16.msra.mxu0 %v4326
  %6484 = vmatprep.subr.bf16.mxu0 0
  %6485 = vmatpush1.bf16.msra.mxu0 %v4323
  %6486 = vmatprep.subr.bf16.mxu0 0
  %6487 = vmatpush1.bf16.msra.mxu0 %v4320
  %6488 = vmatprep.subr.bf16.mxu0 0
  %6489 = vmatpush2.bf16.msra.mxu0 %v4365
  %6490 = vmatprep.subr.bf16.mxu0 0
  %6491 = vmatpush2.bf16.msra.mxu0 %v4362
  %6492 = vmatprep.subr.bf16.mxu0 0
  %6493 = vmatpush2.bf16.msra.mxu0 %v4359
  %6494 = vmatprep.subr.bf16.mxu0 0
  %6495 = vmatpush2.bf16.msra.mxu0 %v4356
  %6496 = vmatprep.subr.bf16.mxu0 0
  %6497 = vmatpush2.bf16.msra.mxu0 %v4353
  %6498 = vmatprep.subr.bf16.mxu0 0
  %6499 = vmatpush2.bf16.msra.mxu0 %v4350
  %6500 = vmatprep.subr.bf16.mxu0 0
  %6501 = vmatpush2.bf16.msra.mxu0 %v4347
  %6502 = vmatprep.subr.bf16.mxu0 0
  %6503 = vmatpush2.bf16.msra.mxu0 %v4344
  %6504 = vmatprep.mubr.bf16.mxu0 %v1235
  %6505 = vmatmul.mubr.bf16.gmra.mxu0 %v1234
  %v6506 = vpop.f32.mrf.mxu0
  %v6507 = vadd.f32 %v6466, %v6506
  %v6508 = vpop.f32.mrf.mxu0
  %v6509 = vpop.f32.mrf.mxu0
  %v6510 = vadd.f32 %v6469, %v6509
  %v6511 = vpop.f32.mrf.mxu0
  %6512 = vdwg.mxu0
  %6513 = vmatprep.subr.bf16.mxu0 0
  %6514 = vmatpush1.bf16.msra.mxu0 %v4389
  %6515 = vmatprep.subr.bf16.mxu0 0
  %6516 = vmatpush1.bf16.msra.mxu0 %v4386
  %6517 = vmatprep.subr.bf16.mxu0 0
  %6518 = vmatpush1.bf16.msra.mxu0 %v4383
  %6519 = vmatprep.subr.bf16.mxu0 0
  %6520 = vmatpush1.bf16.msra.mxu0 %v4380
  %6521 = vmatprep.subr.bf16.mxu0 0
  %6522 = vmatpush1.bf16.msra.mxu0 %v4377
  %6523 = vmatprep.subr.bf16.mxu0 0
  %6524 = vmatpush1.bf16.msra.mxu0 %v4374
  %6525 = vmatprep.subr.bf16.mxu0 0
  %6526 = vmatpush1.bf16.msra.mxu0 %v4371
  %6527 = vmatprep.subr.bf16.mxu0 0
  %6528 = vmatpush1.bf16.msra.mxu0 %v4368
  %6529 = vmatprep.subr.bf16.mxu0 0
  %6530 = vmatpush2.bf16.msra.mxu0 %v4413
  %6531 = vmatprep.subr.bf16.mxu0 0
  %6532 = vmatpush2.bf16.msra.mxu0 %v4410
  %6533 = vmatprep.subr.bf16.mxu0 0
  %6534 = vmatpush2.bf16.msra.mxu0 %v4407
  %6535 = vmatprep.subr.bf16.mxu0 0
  %6536 = vmatpush2.bf16.msra.mxu0 %v4404
  %6537 = vmatprep.subr.bf16.mxu0 0
  %6538 = vmatpush2.bf16.msra.mxu0 %v4401
  %6539 = vmatprep.subr.bf16.mxu0 0
  %6540 = vmatpush2.bf16.msra.mxu0 %v4398
  %6541 = vmatprep.subr.bf16.mxu0 0
  %6542 = vmatpush2.bf16.msra.mxu0 %v4395
  %6543 = vmatprep.subr.bf16.mxu0 0
  %6544 = vmatpush2.bf16.msra.mxu0 %v4392
  %6545 = vmatprep.mubr.bf16.mxu0 %v1237
  %6546 = vmatmul.mubr.bf16.gmra.mxu0 %v1236
  %v6547 = vpop.f32.mrf.mxu0
  %v6548 = vadd.f32 %v6507, %v6547
  %v6549 = vpop.f32.mrf.mxu0
  %v6550 = vpop.f32.mrf.mxu0
  %v6551 = vadd.f32 %v6510, %v6550
  %v6552 = vpop.f32.mrf.mxu0
  %6553 = vdwg.mxu0
  %6554 = vmatprep.subr.bf16.mxu0 0
  %6555 = vmatpush1.bf16.msra.mxu0 %v4437
  %6556 = vmatprep.subr.bf16.mxu0 0
  %6557 = vmatpush1.bf16.msra.mxu0 %v4434
  %6558 = vmatprep.subr.bf16.mxu0 0
  %6559 = vmatpush1.bf16.msra.mxu0 %v4431
  %6560 = vmatprep.subr.bf16.mxu0 0
  %6561 = vmatpush1.bf16.msra.mxu0 %v4428
  %6562 = vmatprep.subr.bf16.mxu0 0
  %6563 = vmatpush1.bf16.msra.mxu0 %v4425
  %6564 = vmatprep.subr.bf16.mxu0 0
  %6565 = vmatpush1.bf16.msra.mxu0 %v4422
  %6566 = vmatprep.subr.bf16.mxu0 0
  %6567 = vmatpush1.bf16.msra.mxu0 %v4419
  %6568 = vmatprep.subr.bf16.mxu0 0
  %6569 = vmatpush1.bf16.msra.mxu0 %v4416
  %6570 = vmatprep.subr.bf16.mxu0 0
  %6571 = vmatpush2.bf16.msra.mxu0 %v4461
  %6572 = vmatprep.subr.bf16.mxu0 0
  %6573 = vmatpush2.bf16.msra.mxu0 %v4458
  %6574 = vmatprep.subr.bf16.mxu0 0
  %6575 = vmatpush2.bf16.msra.mxu0 %v4455
  %6576 = vmatprep.subr.bf16.mxu0 0
  %6577 = vmatpush2.bf16.msra.mxu0 %v4452
  %6578 = vmatprep.subr.bf16.mxu0 0
  %6579 = vmatpush2.bf16.msra.mxu0 %v4449
  %6580 = vmatprep.subr.bf16.mxu0 0
  %6581 = vmatpush2.bf16.msra.mxu0 %v4446
  %6582 = vmatprep.subr.bf16.mxu0 0
  %6583 = vmatpush2.bf16.msra.mxu0 %v4443
  %6584 = vmatprep.subr.bf16.mxu0 0
  %6585 = vmatpush2.bf16.msra.mxu0 %v4440
  %6586 = vmatprep.mubr.bf16.mxu0 %v1239
  %6587 = vmatmul.mubr.bf16.gmra.mxu0 %v1238
  %v6588 = vpop.f32.mrf.mxu0
  %v6589 = vadd.f32 %v6548, %v6588
  %v6590 = vpop.f32.mrf.mxu0
  %v6591 = vpop.f32.mrf.mxu0
  %v6592 = vadd.f32 %v6551, %v6591
  %v6593 = vpop.f32.mrf.mxu0
  %6594 = vdwg.mxu0
  %6595 = vmatprep.subr.bf16.mxu0 0
  %6596 = vmatpush1.bf16.msra.mxu0 %v4485
  %6597 = vmatprep.subr.bf16.mxu0 0
  %6598 = vmatpush1.bf16.msra.mxu0 %v4482
  %6599 = vmatprep.subr.bf16.mxu0 0
  %6600 = vmatpush1.bf16.msra.mxu0 %v4479
  %6601 = vmatprep.subr.bf16.mxu0 0
  %6602 = vmatpush1.bf16.msra.mxu0 %v4476
  %6603 = vmatprep.subr.bf16.mxu0 0
  %6604 = vmatpush1.bf16.msra.mxu0 %v4473
  %6605 = vmatprep.subr.bf16.mxu0 0
  %6606 = vmatpush1.bf16.msra.mxu0 %v4470
  %6607 = vmatprep.subr.bf16.mxu0 0
  %6608 = vmatpush1.bf16.msra.mxu0 %v4467
  %6609 = vmatprep.subr.bf16.mxu0 0
  %6610 = vmatpush1.bf16.msra.mxu0 %v4464
  %6611 = vmatprep.subr.bf16.mxu0 0
  %6612 = vmatpush2.bf16.msra.mxu0 %v4509
  %6613 = vmatprep.subr.bf16.mxu0 0
  %6614 = vmatpush2.bf16.msra.mxu0 %v4506
  %6615 = vmatprep.subr.bf16.mxu0 0
  %6616 = vmatpush2.bf16.msra.mxu0 %v4503
  %6617 = vmatprep.subr.bf16.mxu0 0
  %6618 = vmatpush2.bf16.msra.mxu0 %v4500
  %6619 = vmatprep.subr.bf16.mxu0 0
  %6620 = vmatpush2.bf16.msra.mxu0 %v4497
  %6621 = vmatprep.subr.bf16.mxu0 0
  %6622 = vmatpush2.bf16.msra.mxu0 %v4494
  %6623 = vmatprep.subr.bf16.mxu0 0
  %6624 = vmatpush2.bf16.msra.mxu0 %v4491
  %6625 = vmatprep.subr.bf16.mxu0 0
  %6626 = vmatpush2.bf16.msra.mxu0 %v4488
  %6627 = vmatprep.mubr.bf16.mxu0 %v1241
  %6628 = vmatmul.mubr.bf16.gmra.mxu0 %v1240
  %v6629 = vpop.f32.mrf.mxu0
  %v6630 = vadd.f32 %v6589, %v6629
  %v6631 = vpop.f32.mrf.mxu0
  %v6632 = vpop.f32.mrf.mxu0
  %v6633 = vadd.f32 %v6592, %v6632
  %v6634 = vpop.f32.mrf.mxu0
  %6635 = vdwg.mxu0
  %6636 = vmatprep.subr.bf16.mxu0 0
  %6637 = vmatpush1.bf16.msra.mxu0 %v4533
  %6638 = vmatprep.subr.bf16.mxu0 0
  %6639 = vmatpush1.bf16.msra.mxu0 %v4530
  %6640 = vmatprep.subr.bf16.mxu0 0
  %6641 = vmatpush1.bf16.msra.mxu0 %v4527
  %6642 = vmatprep.subr.bf16.mxu0 0
  %6643 = vmatpush1.bf16.msra.mxu0 %v4524
  %6644 = vmatprep.subr.bf16.mxu0 0
  %6645 = vmatpush1.bf16.msra.mxu0 %v4521
  %6646 = vmatprep.subr.bf16.mxu0 0
  %6647 = vmatpush1.bf16.msra.mxu0 %v4518
  %6648 = vmatprep.subr.bf16.mxu0 0
  %6649 = vmatpush1.bf16.msra.mxu0 %v4515
  %6650 = vmatprep.subr.bf16.mxu0 0
  %6651 = vmatpush1.bf16.msra.mxu0 %v4512
  %6652 = vmatprep.subr.bf16.mxu0 0
  %6653 = vmatpush2.bf16.msra.mxu0 %v4557
  %6654 = vmatprep.subr.bf16.mxu0 0
  %6655 = vmatpush2.bf16.msra.mxu0 %v4554
  %6656 = vmatprep.subr.bf16.mxu0 0
  %6657 = vmatpush2.bf16.msra.mxu0 %v4551
  %6658 = vmatprep.subr.bf16.mxu0 0
  %6659 = vmatpush2.bf16.msra.mxu0 %v4548
  %6660 = vmatprep.subr.bf16.mxu0 0
  %6661 = vmatpush2.bf16.msra.mxu0 %v4545
  %6662 = vmatprep.subr.bf16.mxu0 0
  %6663 = vmatpush2.bf16.msra.mxu0 %v4542
  %6664 = vmatprep.subr.bf16.mxu0 0
  %6665 = vmatpush2.bf16.msra.mxu0 %v4539
  %6666 = vmatprep.subr.bf16.mxu0 0
  %6667 = vmatpush2.bf16.msra.mxu0 %v4536
  %6668 = vmatprep.mubr.bf16.mxu0 %v1243
  %6669 = vmatmul.mubr.bf16.gmra.mxu0 %v1242
  %v6670 = vpop.f32.mrf.mxu0
  %v6671 = vadd.f32 %v6630, %v6670
  %v6672 = vpop.f32.mrf.mxu0
  %v6673 = vpop.f32.mrf.mxu0
  %v6674 = vadd.f32 %v6633, %v6673
  %v6675 = vpop.f32.mrf.mxu0
  %6676 = vdwg.mxu0
  %6677 = vmatprep.subr.bf16.mxu0 0
  %6678 = vmatpush1.bf16.msra.mxu0 %v4581
  %6679 = vmatprep.subr.bf16.mxu0 0
  %6680 = vmatpush1.bf16.msra.mxu0 %v4578
  %6681 = vmatprep.subr.bf16.mxu0 0
  %6682 = vmatpush1.bf16.msra.mxu0 %v4575
  %6683 = vmatprep.subr.bf16.mxu0 0
  %6684 = vmatpush1.bf16.msra.mxu0 %v4572
  %6685 = vmatprep.subr.bf16.mxu0 0
  %6686 = vmatpush1.bf16.msra.mxu0 %v4569
  %6687 = vmatprep.subr.bf16.mxu0 0
  %6688 = vmatpush1.bf16.msra.mxu0 %v4566
  %6689 = vmatprep.subr.bf16.mxu0 0
  %6690 = vmatpush1.bf16.msra.mxu0 %v4563
  %6691 = vmatprep.subr.bf16.mxu0 0
  %6692 = vmatpush1.bf16.msra.mxu0 %v4560
  %6693 = vmatprep.subr.bf16.mxu0 0
  %6694 = vmatpush2.bf16.msra.mxu0 %v4605
  %6695 = vmatprep.subr.bf16.mxu0 0
  %6696 = vmatpush2.bf16.msra.mxu0 %v4602
  %6697 = vmatprep.subr.bf16.mxu0 0
  %6698 = vmatpush2.bf16.msra.mxu0 %v4599
  %6699 = vmatprep.subr.bf16.mxu0 0
  %6700 = vmatpush2.bf16.msra.mxu0 %v4596
  %6701 = vmatprep.subr.bf16.mxu0 0
  %6702 = vmatpush2.bf16.msra.mxu0 %v4593
  %6703 = vmatprep.subr.bf16.mxu0 0
  %6704 = vmatpush2.bf16.msra.mxu0 %v4590
  %6705 = vmatprep.subr.bf16.mxu0 0
  %6706 = vmatpush2.bf16.msra.mxu0 %v4587
  %6707 = vmatprep.subr.bf16.mxu0 0
  %6708 = vmatpush2.bf16.msra.mxu0 %v4584
  %6709 = vmatprep.mubr.bf16.mxu0 %v1245
  %6710 = vmatmul.mubr.bf16.gmra.mxu0 %v1244
  %v6711 = vpop.f32.mrf.mxu0
  %v6712 = vadd.f32 %v6671, %v6711
  %v6713 = vpop.f32.mrf.mxu0
  %v6714 = vpop.f32.mrf.mxu0
  %v6715 = vadd.f32 %v6674, %v6714
  %v6716 = vpop.f32.mrf.mxu0
  %6717 = vdwg.mxu0
  %v6718 = vld [vmem:[%s2] sm:$0xff]
  %v6719 = vld [vmem:[%s2 + $0x8] sm:$0xff]
  %v6720 = vld [vmem:[%s2 + $0x10] sm:$0xff]
  %v6721 = vld [vmem:[%s2 + $0x18] sm:$0xff]
  %v6722 = vld [vmem:[%s2 + $0x20] sm:$0xff]
  %v6723 = vld [vmem:[%s2 + $0x28] sm:$0xff]
  %v6724 = vld [vmem:[%s2 + $0x30] sm:$0xff]
  %v6725 = vld [vmem:[%s2 + $0x38] sm:$0xff]
  %v6726 = vld [vmem:[%s2 + $0x40] sm:$0xff]
  %v6727 = vld [vmem:[%s2 + $0x48] sm:$0xff]
  %v6728 = vld [vmem:[%s2 + $0x50] sm:$0xff]
  %v6729 = vld [vmem:[%s2 + $0x58] sm:$0xff]
  %v6730 = vld [vmem:[%s2 + $0x60] sm:$0xff]
  %v6731 = vld [vmem:[%s2 + $0x68] sm:$0xff]
  %v6732 = vld [vmem:[%s2 + $0x70] sm:$0xff]
  %v6733 = vld [vmem:[%s2 + $0x78] sm:$0xff]
  %v6734 = vld [vmem:[%s2 + $0x80] sm:$0xff]
  %v6735 = vld [vmem:[%s2 + $0x88] sm:$0xff]
  %v6736 = vld [vmem:[%s2 + $0x90] sm:$0xff]
  %v6737 = vld [vmem:[%s2 + $0x98] sm:$0xff]
  %v6738 = vld [vmem:[%s2 + $0xa0] sm:$0xff]
  %v6739 = vld [vmem:[%s2 + $0xa8] sm:$0xff]
  %v6740 = vld [vmem:[%s2 + $0xb0] sm:$0xff]
  %v6741 = vld [vmem:[%s2 + $0xb8] sm:$0xff]
  %v6742 = vld [vmem:[%s2 + $0xc0] sm:$0xff]
  %v6743 = vld [vmem:[%s2 + $0xc8] sm:$0xff]
  %v6744 = vld [vmem:[%s2 + $0xd0] sm:$0xff]
  %v6745 = vld [vmem:[%s2 + $0xd8] sm:$0xff]
  %v6746 = vld [vmem:[%s2 + $0xe0] sm:$0xff]
  %v6747 = vld [vmem:[%s2 + $0xe8] sm:$0xff]
  %v6748 = vld [vmem:[%s2 + $0xf0] sm:$0xff]
  %v6749 = vld [vmem:[%s2 + $0xf8] sm:$0xff]
  %v6750 = vld [vmem:[%s2 + $0x100] sm:$0xff]
  %v6751 = vld [vmem:[%s2 + $0x108] sm:$0xff]
  %v6752 = vld [vmem:[%s2 + $0x110] sm:$0xff]
  %v6753 = vld [vmem:[%s2 + $0x118] sm:$0xff]
  %v6754 = vld [vmem:[%s2 + $0x120] sm:$0xff]
  %v6755 = vld [vmem:[%s2 + $0x128] sm:$0xff]
  %v6756 = vld [vmem:[%s2 + $0x130] sm:$0xff]
  %v6757 = vld [vmem:[%s2 + $0x138] sm:$0xff]
  %v6758 = vld [vmem:[%s2 + $0x140] sm:$0xff]
  %v6759 = vld [vmem:[%s2 + $0x148] sm:$0xff]
  %v6760 = vld [vmem:[%s2 + $0x150] sm:$0xff]
  %v6761 = vld [vmem:[%s2 + $0x158] sm:$0xff]
  %v6762 = vld [vmem:[%s2 + $0x160] sm:$0xff]
  %v6763 = vld [vmem:[%s2 + $0x168] sm:$0xff]
  %v6764 = vld [vmem:[%s2 + $0x170] sm:$0xff]
  %v6765 = vld [vmem:[%s2 + $0x178] sm:$0xff]
  %v6766 = vld [vmem:[%s2 + $0x180] sm:$0xff]
  %v6767 = vld [vmem:[%s2 + $0x188] sm:$0xff]
  %v6768 = vld [vmem:[%s2 + $0x190] sm:$0xff]
  %v6769 = vld [vmem:[%s2 + $0x198] sm:$0xff]
  %v6770 = vld [vmem:[%s2 + $0x1a0] sm:$0xff]
  %v6771 = vld [vmem:[%s2 + $0x1a8] sm:$0xff]
  %v6772 = vld [vmem:[%s2 + $0x1b0] sm:$0xff]
  %v6773 = vld [vmem:[%s2 + $0x1b8] sm:$0xff]
  %v6774 = vld [vmem:[%s2 + $0x1c0] sm:$0xff]
  %v6775 = vld [vmem:[%s2 + $0x1c8] sm:$0xff]
  %v6776 = vld [vmem:[%s2 + $0x1d0] sm:$0xff]
  %v6777 = vld [vmem:[%s2 + $0x1d8] sm:$0xff]
  %v6778 = vld [vmem:[%s2 + $0x1e0] sm:$0xff]
  %v6779 = vld [vmem:[%s2 + $0x1e8] sm:$0xff]
  %v6780 = vld [vmem:[%s2 + $0x1f0] sm:$0xff]
  %v6781 = vld [vmem:[%s2 + $0x1f8] sm:$0xff]
  %v6782 = vld [vmem:[%s2 + $0x200] sm:$0xff]
  %v6783 = vld [vmem:[%s2 + $0x208] sm:$0xff]
  %v6784 = vld [vmem:[%s2 + $0x210] sm:$0xff]
  %v6785 = vld [vmem:[%s2 + $0x218] sm:$0xff]
  %v6786 = vld [vmem:[%s2 + $0x220] sm:$0xff]
  %v6787 = vld [vmem:[%s2 + $0x228] sm:$0xff]
  %v6788 = vld [vmem:[%s2 + $0x230] sm:$0xff]
  %v6789 = vld [vmem:[%s2 + $0x238] sm:$0xff]
  %v6790 = vld [vmem:[%s2 + $0x240] sm:$0xff]
  %v6791 = vld [vmem:[%s2 + $0x248] sm:$0xff]
  %v6792 = vld [vmem:[%s2 + $0x250] sm:$0xff]
  %v6793 = vld [vmem:[%s2 + $0x258] sm:$0xff]
  %v6794 = vld [vmem:[%s2 + $0x260] sm:$0xff]
  %v6795 = vld [vmem:[%s2 + $0x268] sm:$0xff]
  %v6796 = vld [vmem:[%s2 + $0x270] sm:$0xff]
  %v6797 = vld [vmem:[%s2 + $0x278] sm:$0xff]
  %v6798 = vld [vmem:[%s2 + $0x280] sm:$0xff]
  %v6799 = vld [vmem:[%s2 + $0x288] sm:$0xff]
  %v6800 = vld [vmem:[%s2 + $0x290] sm:$0xff]
  %v6801 = vld [vmem:[%s2 + $0x298] sm:$0xff]
  %v6802 = vld [vmem:[%s2 + $0x2a0] sm:$0xff]
  %v6803 = vld [vmem:[%s2 + $0x2a8] sm:$0xff]
  %v6804 = vld [vmem:[%s2 + $0x2b0] sm:$0xff]
  %v6805 = vld [vmem:[%s2 + $0x2b8] sm:$0xff]
  %v6806 = vld [vmem:[%s2 + $0x2c0] sm:$0xff]
  %v6807 = vld [vmem:[%s2 + $0x2c8] sm:$0xff]
  %v6808 = vld [vmem:[%s2 + $0x2d0] sm:$0xff]
  %v6809 = vld [vmem:[%s2 + $0x2d8] sm:$0xff]
  %v6810 = vld [vmem:[%s2 + $0x2e0] sm:$0xff]
  %v6811 = vld [vmem:[%s2 + $0x2e8] sm:$0xff]
  %v6812 = vld [vmem:[%s2 + $0x2f0] sm:$0xff]
  %v6813 = vld [vmem:[%s2 + $0x2f8] sm:$0xff]
  %v6814 = vld [vmem:[%s3] sm:$0x3]
  %v6816 = vlaneseq
  %v6817 = vshrl.u32 %v6816, 7
  %v6818 = vsub.s32 0, %v6817
  %v6819 = vrot.slane %v6814, %v6818
  %v6820 = vlaneseq
  %v6821 = vshrl.u32 %v6820, 7
  %v6822 = vsub.s32 1, %v6821
  %v6823 = vrot.slane %v6814, %v6822
  %6826 = vmatprep.subr.mxu0 %v6749
  %6827 = vmatpush1.msra.mxu0 %v6748
  %6828 = vmatprep.subr.mxu0 %v6747
  %6829 = vmatpush1.msra.mxu0 %v6746
  %6830 = vmatprep.subr.mxu0 %v6745
  %6831 = vmatpush1.msra.mxu0 %v6744
  %6832 = vmatprep.subr.mxu0 %v6743
  %6833 = vmatpush1.msra.mxu0 %v6742
  %6834 = vmatprep.subr.mxu0 %v6741
  %6835 = vmatpush1.msra.mxu0 %v6740
  %6836 = vmatprep.subr.mxu0 %v6739
  %6837 = vmatpush1.msra.mxu0 %v6738
  %6838 = vmatprep.subr.mxu0 %v6737
  %6839 = vmatpush1.msra.mxu0 %v6736
  %6840 = vmatprep.subr.mxu0 %v6735
  %6841 = vmatpush1.msra.mxu0 %v6734
  %6842 = vmatprep.subr.mxu0 %v6733
  %6843 = vmatpush1.msra.mxu0 %v6732
  %6844 = vmatprep.subr.mxu0 %v6731
  %6845 = vmatpush1.msra.mxu0 %v6730
  %6846 = vmatprep.subr.mxu0 %v6729
  %6847 = vmatpush1.msra.mxu0 %v6728
  %6848 = vmatprep.subr.mxu0 %v6727
  %6849 = vmatpush1.msra.mxu0 %v6726
  %6850 = vmatprep.subr.mxu0 %v6725
  %6851 = vmatpush1.msra.mxu0 %v6724
  %6852 = vmatprep.subr.mxu0 %v6723
  %6853 = vmatpush1.msra.mxu0 %v6722
  %6854 = vmatprep.subr.mxu0 %v6721
  %6855 = vmatpush1.msra.mxu0 %v6720
  %6856 = vmatprep.subr.mxu0 %v6719
  %6857 = vmatpush1.msra.mxu0 %v6718
  %6858 = vmatprep.subr.mxu0 %v6781
  %6859 = vmatpush2.msra.mxu0 %v6780
  %6860 = vmatprep.subr.mxu0 %v6779
  %6861 = vmatpush2.msra.mxu0 %v6778
  %6862 = vmatprep.subr.mxu0 %v6777
  %6863 = vmatpush2.msra.mxu0 %v6776
  %6864 = vmatprep.subr.mxu0 %v6775
  %6865 = vmatpush2.msra.mxu0 %v6774
  %6866 = vmatprep.subr.mxu0 %v6773
  %6867 = vmatpush2.msra.mxu0 %v6772
  %6868 = vmatprep.subr.mxu0 %v6771
  %6869 = vmatpush2.msra.mxu0 %v6770
  %6870 = vmatprep.subr.mxu0 %v6769
  %6871 = vmatpush2.msra.mxu0 %v6768
  %6872 = vmatprep.subr.mxu0 %v6767
  %6873 = vmatpush2.msra.mxu0 %v6766
  %6874 = vmatprep.subr.mxu0 %v6765
  %6875 = vmatpush2.msra.mxu0 %v6764
  %6876 = vmatprep.subr.mxu0 %v6763
  %6877 = vmatpush2.msra.mxu0 %v6762
  %6878 = vmatprep.subr.mxu0 %v6761
  %6879 = vmatpush2.msra.mxu0 %v6760
  %6880 = vmatprep.subr.mxu0 %v6759
  %6881 = vmatpush2.msra.mxu0 %v6758
  %6882 = vmatprep.subr.mxu0 %v6757
  %6883 = vmatpush2.msra.mxu0 %v6756
  %6884 = vmatprep.subr.mxu0 %v6755
  %6885 = vmatpush2.msra.mxu0 %v6754
  %6886 = vmatprep.subr.mxu0 %v6753
  %6887 = vmatpush2.msra.mxu0 %v6752
  %6888 = vmatprep.subr.mxu0 %v6751
  %6889 = vmatpush2.msra.mxu0 %v6750
  %6890 = vmatprep.mubr.f32.mxu0 %v6056
  %6891 = vmatmul.mubr.f32.gmra.mxu0 %v6054
  %v6892 = vpop.f32.mrf.mxu0
  %v6893 = vadd.f32 %v6819, %v6892
  %v6894 = vpop.f32.mrf.mxu0
  %v6895 = vadd.f32 %v6823, %v6894
  %6896 = vmatprep.mubr.f32.mxu0 %v6060
  %6897 = vmatmul.mubr.f32.gmra.mxu0 %v6058
  %v6898 = vpop.f32.mrf.mxu0
  %v6899 = vadd.f32 %v6819, %v6898
  %v6900 = vpop.f32.mrf.mxu0
  %v6901 = vadd.f32 %v6823, %v6900
  %6902 = vdwg.mxu0
  %6903 = vmatprep.subr.mxu0 %v6813
  %6904 = vmatpush1.msra.mxu0 %v6812
  %6905 = vmatprep.subr.mxu0 %v6811
  %6906 = vmatpush1.msra.mxu0 %v6810
  %6907 = vmatprep.subr.mxu0 %v6809
  %6908 = vmatpush1.msra.mxu0 %v6808
  %6909 = vmatprep.subr.mxu0 %v6807
  %6910 = vmatpush1.msra.mxu0 %v6806
  %6911 = vmatprep.subr.mxu0 %v6805
  %6912 = vmatpush1.msra.mxu0 %v6804
  %6913 = vmatprep.subr.mxu0 %v6803
  %6914 = vmatpush1.msra.mxu0 %v6802
  %6915 = vmatprep.subr.mxu0 %v6801
  %6916 = vmatpush1.msra.mxu0 %v6800
  %6917 = vmatprep.subr.mxu0 %v6799
  %6918 = vmatpush1.msra.mxu0 %v6798
  %6919 = vmatprep.subr.mxu0 %v6797
  %6920 = vmatpush1.msra.mxu0 %v6796
  %6921 = vmatprep.subr.mxu0 %v6795
  %6922 = vmatpush1.msra.mxu0 %v6794
  %6923 = vmatprep.subr.mxu0 %v6793
  %6924 = vmatpush1.msra.mxu0 %v6792
  %6925 = vmatprep.subr.mxu0 %v6791
  %6926 = vmatpush1.msra.mxu0 %v6790
  %6927 = vmatprep.subr.mxu0 %v6789
  %6928 = vmatpush1.msra.mxu0 %v6788
  %6929 = vmatprep.subr.mxu0 %v6787
  %6930 = vmatpush1.msra.mxu0 %v6786
  %6931 = vmatprep.subr.mxu0 %v6785
  %6932 = vmatpush1.msra.mxu0 %v6784
  %6933 = vmatprep.subr.mxu0 %v6783
  %6934 = vmatpush1.msra.mxu0 %v6782
  %6935 = vmatprep.subr.mxu0 0.0
  %6936 = vmatpush2.msra.mxu0 0.0
  %6937 = vmatprep.subr.mxu0 0.0
  %6938 = vmatpush2.msra.mxu0 0.0
  %6939 = vmatprep.subr.mxu0 0.0
  %6940 = vmatpush2.msra.mxu0 0.0
  %6941 = vmatprep.subr.mxu0 0.0
  %6942 = vmatpush2.msra.mxu0 0.0
  %6943 = vmatprep.subr.mxu0 0.0
  %6944 = vmatpush2.msra.mxu0 0.0
  %6945 = vmatprep.subr.mxu0 0.0
  %6946 = vmatpush2.msra.mxu0 0.0
  %6947 = vmatprep.subr.mxu0 0.0
  %6948 = vmatpush2.msra.mxu0 0.0
  %6949 = vmatprep.subr.mxu0 0.0
  %6950 = vmatpush2.msra.mxu0 0.0
  %6951 = vmatprep.subr.mxu0 0.0
  %6952 = vmatpush2.msra.mxu0 0.0
  %6953 = vmatprep.subr.mxu0 0.0
  %6954 = vmatpush2.msra.mxu0 0.0
  %6955 = vmatprep.subr.mxu0 0.0
  %6956 = vmatpush2.msra.mxu0 0.0
  %6957 = vmatprep.subr.mxu0 0.0
  %6958 = vmatpush2.msra.mxu0 0.0
  %6959 = vmatprep.subr.mxu0 0.0
  %6960 = vmatpush2.msra.mxu0 0.0
  %6961 = vmatprep.subr.mxu0 0.0
  %6962 = vmatpush2.msra.mxu0 0.0
  %6963 = vmatprep.subr.mxu0 0.0
  %6964 = vmatpush2.msra.mxu0 0.0
  %6965 = vmatprep.subr.mxu0 0.0
  %6966 = vmatpush2.msra.mxu0 0.0
  %6967 = vmatprep.mubr.f32.mxu0 0.0
  %6968 = vmatmul.mubr.f32.gmra.mxu0 %v6712
  %v6969 = vpop.f32.mrf.mxu0
  %v6970 = vadd.f32 %v6893, %v6969
  %v6971 = vpop.f32.mrf.mxu0
  %v6972 = vadd.f32 %v6895, %v6971
  %6973 = vmatprep.mubr.f32.mxu0 0.0
  %6974 = vmatmul.mubr.f32.gmra.mxu0 %v6715
  %v6975 = vpop.f32.mrf.mxu0
  %v6976 = vadd.f32 %v6899, %v6975
  %v6977 = vpop.f32.mrf.mxu0
  %v6978 = vadd.f32 %v6901, %v6977
  %6979 = vdwg.mxu0
  %v6980 = vmax.f32 %v6970, 0.0
  %v6981 = vmax.f32 %v6972, 0.0
  %v6982 = vmax.f32 %v6976, 0.0
  %v6983 = vmax.f32 %v6978, 0.0
  %s6984 = smul.u32 0, 16
  %s6985 = sshra.s32 %s6984, 3
  %s6986 = sand.u32 %s6984, 7
  %s6987 = smul.u32 %s6985, 2
  %s6988 = smul.addr %s6987, 8
  %s6989 = scalar_lea.vmem [#allocation2], %s6988
  %6990 = vst [vmem:[%s6989] sm:$0xff] %v6980
  %vm6991 = vcmask 523264
  %6992 = vst.msk [vmem:[%s6989 + $0x8] sm:$0xff] %vm6991, %v6981
  %6993 = vst [vmem:[%s6989 + $0x10] sm:$0xff] %v6982
  %6994 = vst.msk [vmem:[%s6989 + $0x18] sm:$0xff] %vm6991, %v6983
  %p6995 = scmp.eq.s32.totalorder 0, 0
  // Predicated region
  $region74: #{hipt_lgp_fc_forward.1} parent=0 // pred_check
    %p6996 = pneg %p6995
  $region75: #{hipt_lgp_fc_forward.1} parent=0 // pred_check_branch
    %6998 = sbr.rel (%p6996) target = $region77
  $region76: #{hipt_lgp_fc_forward.1} parent=0 // pred_region
    %v6999 = vld [vmem:[#allocation2] sm:$0xff]
    %v7000 = vld [vmem:[#allocation2 + $0x8] sm:$0xff]
    %v7001 = vld [vmem:[#allocation2 + $0x10] sm:$0xff]
    %v7002 = vld [vmem:[#allocation2 + $0x18] sm:$0xff]
    %v7003 = vlaneseq
    %v7004 = vand.u32 %v7003, 127
    %vm7005 = vcmp.lt.s32.totalorder %v7004, 12
    %v7006 = vsel %vm7005, 0.0, -1e+30
    loop: start=0, step=1, limit=2
    $region78: #{hipt_lgp_fc_forward.1} parent=76 // loop_pre_header
      _
    $region79: #{hipt_lgp_fc_forward.1} parent=76 // loop_header
      %s7008 = sphi 0, %s7012
      %p7009 = scmp.ge.s32.totalorder %s7008, 2
      %v7013 = vphi %v6999, %v8653
      %v7014 = vphi %v7000, %v8654
      %v7015 = vphi %v7001, %v8655
      %v7016 = vphi %v7002, %v8656
    $region80: #{hipt_lgp_fc_forward.1} parent=76 // loop_header_branch
      %7011 = sbr.rel (%p7009) target = $region84
    $region81: #{hipt_lgp_fc_forward.1} parent=76 // loop_body
      %s7017 = smul.u32 %s7008, 4
      %s7018 = smul.u32 %s7017, 48
      %s7019 = smul.addr %s7018, 8
      %s7020 = scalar_lea.vmem %s4, %s7019
      %v7021 = vld [vmem:[%s7020] sm:$0xff]
      %v7022 = vld [vmem:[%s7020 + $0x8] sm:$0xff]
      %v7023 = vld [vmem:[%s7020 + $0x10] sm:$0xff]
      %v7024 = vld [vmem:[%s7020 + $0x18] sm:$0xff]
      %v7025 = vld [vmem:[%s7020 + $0x20] sm:$0xff]
      %v7026 = vld [vmem:[%s7020 + $0x28] sm:$0xff]
      %v7027 = vld [vmem:[%s7020 + $0x30] sm:$0xff]
      %v7028 = vld [vmem:[%s7020 + $0x38] sm:$0xff]
      %v7029 = vld [vmem:[%s7020 + $0x40] sm:$0xff]
      %v7030 = vld [vmem:[%s7020 + $0x48] sm:$0xff]
      %v7031 = vld [vmem:[%s7020 + $0x50] sm:$0xff]
      %v7032 = vld [vmem:[%s7020 + $0x58] sm:$0xff]
      %v7033 = vld [vmem:[%s7020 + $0x60] sm:$0xff]
      %v7034 = vld [vmem:[%s7020 + $0x68] sm:$0xff]
      %v7035 = vld [vmem:[%s7020 + $0x70] sm:$0xff]
      %v7036 = vld [vmem:[%s7020 + $0x78] sm:$0xff]
      %v7037 = vld [vmem:[%s7020 + $0x80] sm:$0xff]
      %v7038 = vld [vmem:[%s7020 + $0x88] sm:$0xff]
      %v7039 = vld [vmem:[%s7020 + $0x90] sm:$0xff]
      %v7040 = vld [vmem:[%s7020 + $0x98] sm:$0xff]
      %v7041 = vld [vmem:[%s7020 + $0xa0] sm:$0xff]
      %v7042 = vld [vmem:[%s7020 + $0xa8] sm:$0xff]
      %v7043 = vld [vmem:[%s7020 + $0xb0] sm:$0xff]
      %v7044 = vld [vmem:[%s7020 + $0xb8] sm:$0xff]
      %v7045 = vld [vmem:[%s7020 + $0xc0] sm:$0xff]
      %v7046 = vld [vmem:[%s7020 + $0xc8] sm:$0xff]
      %v7047 = vld [vmem:[%s7020 + $0xd0] sm:$0xff]
      %v7048 = vld [vmem:[%s7020 + $0xd8] sm:$0xff]
      %v7049 = vld [vmem:[%s7020 + $0xe0] sm:$0xff]
      %v7050 = vld [vmem:[%s7020 + $0xe8] sm:$0xff]
      %v7051 = vld [vmem:[%s7020 + $0xf0] sm:$0xff]
      %v7052 = vld [vmem:[%s7020 + $0xf8] sm:$0xff]
      %v7053 = vld [vmem:[%s7020 + $0x100] sm:$0xff]
      %v7054 = vld [vmem:[%s7020 + $0x108] sm:$0xff]
      %v7055 = vld [vmem:[%s7020 + $0x110] sm:$0xff]
      %v7056 = vld [vmem:[%s7020 + $0x118] sm:$0xff]
      %v7057 = vld [vmem:[%s7020 + $0x120] sm:$0xff]
      %v7058 = vld [vmem:[%s7020 + $0x128] sm:$0xff]
      %v7059 = vld [vmem:[%s7020 + $0x130] sm:$0xff]
      %v7060 = vld [vmem:[%s7020 + $0x138] sm:$0xff]
      %v7061 = vld [vmem:[%s7020 + $0x140] sm:$0xff]
      %v7062 = vld [vmem:[%s7020 + $0x148] sm:$0xff]
      %v7063 = vld [vmem:[%s7020 + $0x150] sm:$0xff]
      %v7064 = vld [vmem:[%s7020 + $0x158] sm:$0xff]
      %v7065 = vld [vmem:[%s7020 + $0x160] sm:$0xff]
      %v7066 = vld [vmem:[%s7020 + $0x168] sm:$0xff]
      %v7067 = vld [vmem:[%s7020 + $0x170] sm:$0xff]
      %v7068 = vld [vmem:[%s7020 + $0x178] sm:$0xff]
      %s7069 = smul.u32 %s7017, 2
      %s7070 = scalar_lea.vmem %s5, %s7069
      %v7071 = vld [vmem:[%s7070] sm:$0x3]
      %v7073 = vlaneseq
      %v7074 = vshrl.u32 %v7073, 7
      %v7075 = vsub.s32 0, %v7074
      %v7076 = vrot.slane %v7071, %v7075
      %v7077 = vlaneseq
      %v7078 = vshrl.u32 %v7077, 7
      %v7079 = vsub.s32 1, %v7078
      %v7080 = vrot.slane %v7071, %v7079
      %v7084 = vsel %vm6991, %v7014, 0
      %v7087 = vsel %vm6991, %v7016, 0
      %7089 = vmatprep.subr.mxu0 %v7052
      %7090 = vmatpush1.msra.mxu0 %v7051
      %7091 = vmatprep.subr.mxu0 %v7050
      %7092 = vmatpush1.msra.mxu0 %v7049
      %7093 = vmatprep.subr.mxu0 %v7048
      %7094 = vmatpush1.msra.mxu0 %v7047
      %7095 = vmatprep.subr.mxu0 %v7046
      %7096 = vmatpush1.msra.mxu0 %v7045
      %7097 = vmatprep.subr.mxu0 %v7044
      %7098 = vmatpush1.msra.mxu0 %v7043
      %7099 = vmatprep.subr.mxu0 %v7042
      %7100 = vmatpush1.msra.mxu0 %v7041
      %7101 = vmatprep.subr.mxu0 %v7040
      %7102 = vmatpush1.msra.mxu0 %v7039
      %7103 = vmatprep.subr.mxu0 %v7038
      %7104 = vmatpush1.msra.mxu0 %v7037
      %7105 = vmatprep.subr.mxu0 %v7036
      %7106 = vmatpush1.msra.mxu0 %v7035
      %7107 = vmatprep.subr.mxu0 %v7034
      %7108 = vmatpush1.msra.mxu0 %v7033
      %7109 = vmatprep.subr.mxu0 %v7032
      %7110 = vmatpush1.msra.mxu0 %v7031
      %7111 = vmatprep.subr.mxu0 %v7030
      %7112 = vmatpush1.msra.mxu0 %v7029
      %7113 = vmatprep.subr.mxu0 %v7028
      %7114 = vmatpush1.msra.mxu0 %v7027
      %7115 = vmatprep.subr.mxu0 %v7026
      %7116 = vmatpush1.msra.mxu0 %v7025
      %7117 = vmatprep.subr.mxu0 %v7024
      %7118 = vmatpush1.msra.mxu0 %v7023
      %7119 = vmatprep.subr.mxu0 %v7022
      %7120 = vmatpush1.msra.mxu0 %v7021
      %7121 = vmatprep.subr.mxu0 0.0
      %7122 = vmatpush2.msra.mxu0 0.0
      %7123 = vmatprep.subr.mxu0 0.0
      %7124 = vmatpush2.msra.mxu0 0.0
      %7125 = vmatprep.subr.mxu0 0.0
      %7126 = vmatpush2.msra.mxu0 0.0
      %7127 = vmatprep.subr.mxu0 0.0
      %7128 = vmatpush2.msra.mxu0 0.0
      %7129 = vmatprep.subr.mxu0 0.0
      %7130 = vmatpush2.msra.mxu0 0.0
      %7131 = vmatprep.subr.mxu0 0.0
      %7132 = vmatpush2.msra.mxu0 0.0
      %7133 = vmatprep.subr.mxu0 0.0
      %7134 = vmatpush2.msra.mxu0 0.0
      %7135 = vmatprep.subr.mxu0 0.0
      %7136 = vmatpush2.msra.mxu0 0.0
      %7137 = vmatprep.subr.mxu0 %v7068
      %7138 = vmatpush2.msra.mxu0 %v7067
      %7139 = vmatprep.subr.mxu0 %v7066
      %7140 = vmatpush2.msra.mxu0 %v7065
      %7141 = vmatprep.subr.mxu0 %v7064
      %7142 = vmatpush2.msra.mxu0 %v7063
      %7143 = vmatprep.subr.mxu0 %v7062
      %7144 = vmatpush2.msra.mxu0 %v7061
      %7145 = vmatprep.subr.mxu0 %v7060
      %7146 = vmatpush2.msra.mxu0 %v7059
      %7147 = vmatprep.subr.mxu0 %v7058
      %7148 = vmatpush2.msra.mxu0 %v7057
      %7149 = vmatprep.subr.mxu0 %v7056
      %7150 = vmatpush2.msra.mxu0 %v7055
      %7151 = vmatprep.subr.mxu0 %v7054
      %7152 = vmatpush2.msra.mxu0 %v7053
      %7153 = vmatprep.mubr.f32.mxu0 %v7084
      %7154 = vmatmul.mubr.f32.gmra.mxu0 %v7013
      %v7155 = vpop.f32.mrf.mxu0
      %v7156 = vadd.f32 %v7076, %v7155
      %v7157 = vpop.f32.mrf.mxu0
      %v7158 = vadd.f32 %v7080, %v7157
      %7159 = vmatprep.mubr.f32.mxu0 %v7087
      %7160 = vmatmul.mubr.f32.gmra.mxu0 %v7015
      %v7161 = vpop.f32.mrf.mxu0
      %v7162 = vadd.f32 %v7076, %v7161
      %v7163 = vpop.f32.mrf.mxu0
      %v7164 = vadd.f32 %v7080, %v7163
      %7165 = vdwg.mxu0
      %s7166 = sadd.s32 %s7017, 1
      %s7167 = smul.u32 %s7166, 48
      %s7168 = smul.addr %s7167, 8
      %s7169 = scalar_lea.vmem %s4, %s7168
      %v7170 = vld [vmem:[%s7169] sm:$0xff]
      %v7171 = vld [vmem:[%s7169 + $0x8] sm:$0xff]
      %v7172 = vld [vmem:[%s7169 + $0x10] sm:$0xff]
      %v7173 = vld [vmem:[%s7169 + $0x18] sm:$0xff]
      %v7174 = vld [vmem:[%s7169 + $0x20] sm:$0xff]
      %v7175 = vld [vmem:[%s7169 + $0x28] sm:$0xff]
      %v7176 = vld [vmem:[%s7169 + $0x30] sm:$0xff]
      %v7177 = vld [vmem:[%s7169 + $0x38] sm:$0xff]
      %v7178 = vld [vmem:[%s7169 + $0x40] sm:$0xff]
      %v7179 = vld [vmem:[%s7169 + $0x48] sm:$0xff]
      %v7180 = vld [vmem:[%s7169 + $0x50] sm:$0xff]
      %v7181 = vld [vmem:[%s7169 + $0x58] sm:$0xff]
      %v7182 = vld [vmem:[%s7169 + $0x60] sm:$0xff]
      %v7183 = vld [vmem:[%s7169 + $0x68] sm:$0xff]
      %v7184 = vld [vmem:[%s7169 + $0x70] sm:$0xff]
      %v7185 = vld [vmem:[%s7169 + $0x78] sm:$0xff]
      %v7186 = vld [vmem:[%s7169 + $0x80] sm:$0xff]
      %v7187 = vld [vmem:[%s7169 + $0x88] sm:$0xff]
      %v7188 = vld [vmem:[%s7169 + $0x90] sm:$0xff]
      %v7189 = vld [vmem:[%s7169 + $0x98] sm:$0xff]
      %v7190 = vld [vmem:[%s7169 + $0xa0] sm:$0xff]
      %v7191 = vld [vmem:[%s7169 + $0xa8] sm:$0xff]
      %v7192 = vld [vmem:[%s7169 + $0xb0] sm:$0xff]
      %v7193 = vld [vmem:[%s7169 + $0xb8] sm:$0xff]
      %v7194 = vld [vmem:[%s7169 + $0xc0] sm:$0xff]
      %v7195 = vld [vmem:[%s7169 + $0xc8] sm:$0xff]
      %v7196 = vld [vmem:[%s7169 + $0xd0] sm:$0xff]
      %v7197 = vld [vmem:[%s7169 + $0xd8] sm:$0xff]
      %v7198 = vld [vmem:[%s7169 + $0xe0] sm:$0xff]
      %v7199 = vld [vmem:[%s7169 + $0xe8] sm:$0xff]
      %v7200 = vld [vmem:[%s7169 + $0xf0] sm:$0xff]
      %v7201 = vld [vmem:[%s7169 + $0xf8] sm:$0xff]
      %v7202 = vld [vmem:[%s7169 + $0x100] sm:$0xff]
      %v7203 = vld [vmem:[%s7169 + $0x108] sm:$0xff]
      %v7204 = vld [vmem:[%s7169 + $0x110] sm:$0xff]
      %v7205 = vld [vmem:[%s7169 + $0x118] sm:$0xff]
      %v7206 = vld [vmem:[%s7169 + $0x120] sm:$0xff]
      %v7207 = vld [vmem:[%s7169 + $0x128] sm:$0xff]
      %v7208 = vld [vmem:[%s7169 + $0x130] sm:$0xff]
      %v7209 = vld [vmem:[%s7169 + $0x138] sm:$0xff]
      %v7210 = vld [vmem:[%s7169 + $0x140] sm:$0xff]
      %v7211 = vld [vmem:[%s7169 + $0x148] sm:$0xff]
      %v7212 = vld [vmem:[%s7169 + $0x150] sm:$0xff]
      %v7213 = vld [vmem:[%s7169 + $0x158] sm:$0xff]
      %v7214 = vld [vmem:[%s7169 + $0x160] sm:$0xff]
      %v7215 = vld [vmem:[%s7169 + $0x168] sm:$0xff]
      %v7216 = vld [vmem:[%s7169 + $0x170] sm:$0xff]
      %v7217 = vld [vmem:[%s7169 + $0x178] sm:$0xff]
      %s7218 = smul.u32 %s7166, 2
      %s7219 = scalar_lea.vmem %s5, %s7218
      %v7220 = vld [vmem:[%s7219] sm:$0x3]
      %v7222 = vlaneseq
      %v7223 = vshrl.u32 %v7222, 7
      %v7224 = vsub.s32 0, %v7223
      %v7225 = vrot.slane %v7220, %v7224
      %v7226 = vlaneseq
      %v7227 = vshrl.u32 %v7226, 7
      %v7228 = vsub.s32 1, %v7227
      %v7229 = vrot.slane %v7220, %v7228
      %7232 = vmatprep.subr.mxu0 %v7201
      %7233 = vmatpush1.msra.mxu0 %v7200
      %7234 = vmatprep.subr.mxu0 %v7199
      %7235 = vmatpush1.msra.mxu0 %v7198
      %7236 = vmatprep.subr.mxu0 %v7197
      %7237 = vmatpush1.msra.mxu0 %v7196
      %7238 = vmatprep.subr.mxu0 %v7195
      %7239 = vmatpush1.msra.mxu0 %v7194
      %7240 = vmatprep.subr.mxu0 %v7193
      %7241 = vmatpush1.msra.mxu0 %v7192
      %7242 = vmatprep.subr.mxu0 %v7191
      %7243 = vmatpush1.msra.mxu0 %v7190
      %7244 = vmatprep.subr.mxu0 %v7189
      %7245 = vmatpush1.msra.mxu0 %v7188
      %7246 = vmatprep.subr.mxu0 %v7187
      %7247 = vmatpush1.msra.mxu0 %v7186
      %7248 = vmatprep.subr.mxu0 %v7185
      %7249 = vmatpush1.msra.mxu0 %v7184
      %7250 = vmatprep.subr.mxu0 %v7183
      %7251 = vmatpush1.msra.mxu0 %v7182
      %7252 = vmatprep.subr.mxu0 %v7181
      %7253 = vmatpush1.msra.mxu0 %v7180
      %7254 = vmatprep.subr.mxu0 %v7179
      %7255 = vmatpush1.msra.mxu0 %v7178
      %7256 = vmatprep.subr.mxu0 %v7177
      %7257 = vmatpush1.msra.mxu0 %v7176
      %7258 = vmatprep.subr.mxu0 %v7175
      %7259 = vmatpush1.msra.mxu0 %v7174
      %7260 = vmatprep.subr.mxu0 %v7173
      %7261 = vmatpush1.msra.mxu0 %v7172
      %7262 = vmatprep.subr.mxu0 %v7171
      %7263 = vmatpush1.msra.mxu0 %v7170
      %7264 = vmatprep.subr.mxu0 0.0
      %7265 = vmatpush2.msra.mxu0 0.0
      %7266 = vmatprep.subr.mxu0 0.0
      %7267 = vmatpush2.msra.mxu0 0.0
      %7268 = vmatprep.subr.mxu0 0.0
      %7269 = vmatpush2.msra.mxu0 0.0
      %7270 = vmatprep.subr.mxu0 0.0
      %7271 = vmatpush2.msra.mxu0 0.0
      %7272 = vmatprep.subr.mxu0 0.0
      %7273 = vmatpush2.msra.mxu0 0.0
      %7274 = vmatprep.subr.mxu0 0.0
      %7275 = vmatpush2.msra.mxu0 0.0
      %7276 = vmatprep.subr.mxu0 0.0
      %7277 = vmatpush2.msra.mxu0 0.0
      %7278 = vmatprep.subr.mxu0 0.0
      %7279 = vmatpush2.msra.mxu0 0.0
      %7280 = vmatprep.subr.mxu0 %v7217
      %7281 = vmatpush2.msra.mxu0 %v7216
      %7282 = vmatprep.subr.mxu0 %v7215
      %7283 = vmatpush2.msra.mxu0 %v7214
      %7284 = vmatprep.subr.mxu0 %v7213
      %7285 = vmatpush2.msra.mxu0 %v7212
      %7286 = vmatprep.subr.mxu0 %v7211
      %7287 = vmatpush2.msra.mxu0 %v7210
      %7288 = vmatprep.subr.mxu0 %v7209
      %7289 = vmatpush2.msra.mxu0 %v7208
      %7290 = vmatprep.subr.mxu0 %v7207
      %7291 = vmatpush2.msra.mxu0 %v7206
      %7292 = vmatprep.subr.mxu0 %v7205
      %7293 = vmatpush2.msra.mxu0 %v7204
      %7294 = vmatprep.subr.mxu0 %v7203
      %7295 = vmatpush2.msra.mxu0 %v7202
      %7296 = vmatprep.mubr.f32.mxu0 %v7084
      %7297 = vmatmul.mubr.f32.gmra.mxu0 %v7013
      %v7298 = vpop.f32.mrf.mxu0
      %v7299 = vadd.f32 %v7225, %v7298
      %v7300 = vpop.f32.mrf.mxu0
      %v7301 = vadd.f32 %v7229, %v7300
      %7302 = vmatprep.mubr.f32.mxu0 %v7087
      %7303 = vmatmul.mubr.f32.gmra.mxu0 %v7015
      %v7304 = vpop.f32.mrf.mxu0
      %v7305 = vadd.f32 %v7225, %v7304
      %v7306 = vpop.f32.mrf.mxu0
      %v7307 = vadd.f32 %v7229, %v7306
      %7308 = vdwg.mxu0
      %s7309 = sadd.s32 %s7017, 2
      %s7310 = smul.u32 %s7309, 48
      %s7311 = smul.addr %s7310, 8
      %s7312 = scalar_lea.vmem %s4, %s7311
      %v7313 = vld [vmem:[%s7312] sm:$0xff]
      %v7314 = vld [vmem:[%s7312 + $0x8] sm:$0xff]
      %v7315 = vld [vmem:[%s7312 + $0x10] sm:$0xff]
      %v7316 = vld [vmem:[%s7312 + $0x18] sm:$0xff]
      %v7317 = vld [vmem:[%s7312 + $0x20] sm:$0xff]
      %v7318 = vld [vmem:[%s7312 + $0x28] sm:$0xff]
      %v7319 = vld [vmem:[%s7312 + $0x30] sm:$0xff]
      %v7320 = vld [vmem:[%s7312 + $0x38] sm:$0xff]
      %v7321 = vld [vmem:[%s7312 + $0x40] sm:$0xff]
      %v7322 = vld [vmem:[%s7312 + $0x48] sm:$0xff]
      %v7323 = vld [vmem:[%s7312 + $0x50] sm:$0xff]
      %v7324 = vld [vmem:[%s7312 + $0x58] sm:$0xff]
      %v7325 = vld [vmem:[%s7312 + $0x60] sm:$0xff]
      %v7326 = vld [vmem:[%s7312 + $0x68] sm:$0xff]
      %v7327 = vld [vmem:[%s7312 + $0x70] sm:$0xff]
      %v7328 = vld [vmem:[%s7312 + $0x78] sm:$0xff]
      %v7329 = vld [vmem:[%s7312 + $0x80] sm:$0xff]
      %v7330 = vld [vmem:[%s7312 + $0x88] sm:$0xff]
      %v7331 = vld [vmem:[%s7312 + $0x90] sm:$0xff]
      %v7332 = vld [vmem:[%s7312 + $0x98] sm:$0xff]
      %v7333 = vld [vmem:[%s7312 + $0xa0] sm:$0xff]
      %v7334 = vld [vmem:[%s7312 + $0xa8] sm:$0xff]
      %v7335 = vld [vmem:[%s7312 + $0xb0] sm:$0xff]
      %v7336 = vld [vmem:[%s7312 + $0xb8] sm:$0xff]
      %v7337 = vld [vmem:[%s7312 + $0xc0] sm:$0xff]
      %v7338 = vld [vmem:[%s7312 + $0xc8] sm:$0xff]
      %v7339 = vld [vmem:[%s7312 + $0xd0] sm:$0xff]
      %v7340 = vld [vmem:[%s7312 + $0xd8] sm:$0xff]
      %v7341 = vld [vmem:[%s7312 + $0xe0] sm:$0xff]
      %v7342 = vld [vmem:[%s7312 + $0xe8] sm:$0xff]
      %v7343 = vld [vmem:[%s7312 + $0xf0] sm:$0xff]
      %v7344 = vld [vmem:[%s7312 + $0xf8] sm:$0xff]
      %v7345 = vld [vmem:[%s7312 + $0x100] sm:$0xff]
      %v7346 = vld [vmem:[%s7312 + $0x108] sm:$0xff]
      %v7347 = vld [vmem:[%s7312 + $0x110] sm:$0xff]
      %v7348 = vld [vmem:[%s7312 + $0x118] sm:$0xff]
      %v7349 = vld [vmem:[%s7312 + $0x120] sm:$0xff]
      %v7350 = vld [vmem:[%s7312 + $0x128] sm:$0xff]
      %v7351 = vld [vmem:[%s7312 + $0x130] sm:$0xff]
      %v7352 = vld [vmem:[%s7312 + $0x138] sm:$0xff]
      %v7353 = vld [vmem:[%s7312 + $0x140] sm:$0xff]
      %v7354 = vld [vmem:[%s7312 + $0x148] sm:$0xff]
      %v7355 = vld [vmem:[%s7312 + $0x150] sm:$0xff]
      %v7356 = vld [vmem:[%s7312 + $0x158] sm:$0xff]
      %v7357 = vld [vmem:[%s7312 + $0x160] sm:$0xff]
      %v7358 = vld [vmem:[%s7312 + $0x168] sm:$0xff]
      %v7359 = vld [vmem:[%s7312 + $0x170] sm:$0xff]
      %v7360 = vld [vmem:[%s7312 + $0x178] sm:$0xff]
      %s7361 = smul.u32 %s7309, 2
      %s7362 = scalar_lea.vmem %s5, %s7361
      %v7363 = vld [vmem:[%s7362] sm:$0x3]
      %v7365 = vlaneseq
      %v7366 = vshrl.u32 %v7365, 7
      %v7367 = vsub.s32 0, %v7366
      %v7368 = vrot.slane %v7363, %v7367
      %v7369 = vlaneseq
      %v7370 = vshrl.u32 %v7369, 7
      %v7371 = vsub.s32 1, %v7370
      %v7372 = vrot.slane %v7363, %v7371
      %7375 = vmatprep.subr.mxu0 %v7344
      %7376 = vmatpush1.msra.mxu0 %v7343
      %7377 = vmatprep.subr.mxu0 %v7342
      %7378 = vmatpush1.msra.mxu0 %v7341
      %7379 = vmatprep.subr.mxu0 %v7340
      %7380 = vmatpush1.msra.mxu0 %v7339
      %7381 = vmatprep.subr.mxu0 %v7338
      %7382 = vmatpush1.msra.mxu0 %v7337
      %7383 = vmatprep.subr.mxu0 %v7336
      %7384 = vmatpush1.msra.mxu0 %v7335
      %7385 = vmatprep.subr.mxu0 %v7334
      %7386 = vmatpush1.msra.mxu0 %v7333
      %7387 = vmatprep.subr.mxu0 %v7332
      %7388 = vmatpush1.msra.mxu0 %v7331
      %7389 = vmatprep.subr.mxu0 %v7330
      %7390 = vmatpush1.msra.mxu0 %v7329
      %7391 = vmatprep.subr.mxu0 %v7328
      %7392 = vmatpush1.msra.mxu0 %v7327
      %7393 = vmatprep.subr.mxu0 %v7326
      %7394 = vmatpush1.msra.mxu0 %v7325
      %7395 = vmatprep.subr.mxu0 %v7324
      %7396 = vmatpush1.msra.mxu0 %v7323
      %7397 = vmatprep.subr.mxu0 %v7322
      %7398 = vmatpush1.msra.mxu0 %v7321
      %7399 = vmatprep.subr.mxu0 %v7320
      %7400 = vmatpush1.msra.mxu0 %v7319
      %7401 = vmatprep.subr.mxu0 %v7318
      %7402 = vmatpush1.msra.mxu0 %v7317
      %7403 = vmatprep.subr.mxu0 %v7316
      %7404 = vmatpush1.msra.mxu0 %v7315
      %7405 = vmatprep.subr.mxu0 %v7314
      %7406 = vmatpush1.msra.mxu0 %v7313
      %7407 = vmatprep.subr.mxu0 0.0
      %7408 = vmatpush2.msra.mxu0 0.0
      %7409 = vmatprep.subr.mxu0 0.0
      %7410 = vmatpush2.msra.mxu0 0.0
      %7411 = vmatprep.subr.mxu0 0.0
      %7412 = vmatpush2.msra.mxu0 0.0
      %7413 = vmatprep.subr.mxu0 0.0
      %7414 = vmatpush2.msra.mxu0 0.0
      %7415 = vmatprep.subr.mxu0 0.0
      %7416 = vmatpush2.msra.mxu0 0.0
      %7417 = vmatprep.subr.mxu0 0.0
      %7418 = vmatpush2.msra.mxu0 0.0
      %7419 = vmatprep.subr.mxu0 0.0
      %7420 = vmatpush2.msra.mxu0 0.0
      %7421 = vmatprep.subr.mxu0 0.0
      %7422 = vmatpush2.msra.mxu0 0.0
      %7423 = vmatprep.subr.mxu0 %v7360
      %7424 = vmatpush2.msra.mxu0 %v7359
      %7425 = vmatprep.subr.mxu0 %v7358
      %7426 = vmatpush2.msra.mxu0 %v7357
      %7427 = vmatprep.subr.mxu0 %v7356
      %7428 = vmatpush2.msra.mxu0 %v7355
      %7429 = vmatprep.subr.mxu0 %v7354
      %7430 = vmatpush2.msra.mxu0 %v7353
      %7431 = vmatprep.subr.mxu0 %v7352
      %7432 = vmatpush2.msra.mxu0 %v7351
      %7433 = vmatprep.subr.mxu0 %v7350
      %7434 = vmatpush2.msra.mxu0 %v7349
      %7435 = vmatprep.subr.mxu0 %v7348
      %7436 = vmatpush2.msra.mxu0 %v7347
      %7437 = vmatprep.subr.mxu0 %v7346
      %7438 = vmatpush2.msra.mxu0 %v7345
      %7439 = vmatprep.mubr.f32.mxu0 %v7084
      %7440 = vmatmul.mubr.f32.gmra.mxu0 %v7013
      %v7441 = vpop.f32.mrf.mxu0
      %v7442 = vadd.f32 %v7368, %v7441
      %v7443 = vpop.f32.mrf.mxu0
      %v7444 = vadd.f32 %v7372, %v7443
      %7445 = vmatprep.mubr.f32.mxu0 %v7087
      %7446 = vmatmul.mubr.f32.gmra.mxu0 %v7015
      %v7447 = vpop.f32.mrf.mxu0
      %v7448 = vadd.f32 %v7368, %v7447
      %v7449 = vpop.f32.mrf.mxu0
      %v7450 = vadd.f32 %v7372, %v7449
      %7451 = vdwg.mxu0
      %v7453 = vsel %vm6991, %v7156, 0
      %v7456 = vsel %vm6991, %v7162, 0
      %v7459 = vsel %vm6991, %v7299, 0
      %v7462 = vsel %vm6991, %v7305, 0
      %7464 = vmatprep.subr.mxu0 0.0
      %7465 = vmatpush1.xpose.msra.mxu0 0.0
      %7466 = vmatprep.subr.mxu0 0.0
      %7467 = vmatpush1.xpose.msra.mxu0 0.0
      %7468 = vmatprep.subr.mxu0 0.0
      %7469 = vmatpush1.xpose.msra.mxu0 0.0
      %7470 = vmatprep.subr.mxu0 0.0
      %7471 = vmatpush1.xpose.msra.mxu0 0.0
      %7472 = vmatprep.subr.mxu0 0.0
      %7473 = vmatpush1.xpose.msra.mxu0 0.0
      %7474 = vmatprep.subr.mxu0 0.0
      %7475 = vmatpush1.xpose.msra.mxu0 0.0
      %7476 = vmatprep.subr.mxu0 0.0
      %7477 = vmatpush1.xpose.msra.mxu0 0.0
      %7478 = vmatprep.subr.mxu0 0.0
      %7479 = vmatpush1.xpose.msra.mxu0 0.0
      %7480 = vmatprep.subr.mxu0 0.0
      %7481 = vmatpush1.xpose.msra.mxu0 0.0
      %7482 = vmatprep.subr.mxu0 0.0
      %7483 = vmatpush1.xpose.msra.mxu0 0.0
      %7484 = vmatprep.subr.mxu0 0.0
      %7485 = vmatpush1.xpose.msra.mxu0 0.0
      %7486 = vmatprep.subr.mxu0 0.0
      %7487 = vmatpush1.xpose.msra.mxu0 0.0
      %7488 = vmatprep.subr.mxu0 0.0
      %7489 = vmatpush1.xpose.msra.mxu0 0.0
      %7490 = vmatprep.subr.mxu0 0.0
      %7491 = vmatpush1.xpose.msra.mxu0 0.0
      %7492 = vmatprep.subr.mxu0 0.0
      %7493 = vmatpush1.xpose.msra.mxu0 %v7462
      %7494 = vmatprep.subr.mxu0 0.0
      %7495 = vmatpush1.xpose.msra.mxu0 %v7459
      %7496 = vmatprep.subr.mxu0 0.0
      %7497 = vmatpush2.xpose.msra.mxu0 0.0
      %7498 = vmatprep.subr.mxu0 0.0
      %7499 = vmatpush2.xpose.msra.mxu0 0.0
      %7500 = vmatprep.subr.mxu0 0.0
      %7501 = vmatpush2.xpose.msra.mxu0 0.0
      %7502 = vmatprep.subr.mxu0 0.0
      %7503 = vmatpush2.xpose.msra.mxu0 0.0
      %7504 = vmatprep.subr.mxu0 0.0
      %7505 = vmatpush2.xpose.msra.mxu0 0.0
      %7506 = vmatprep.subr.mxu0 0.0
      %7507 = vmatpush2.xpose.msra.mxu0 0.0
      %7508 = vmatprep.subr.mxu0 0.0
      %7509 = vmatpush2.xpose.msra.mxu0 0.0
      %7510 = vmatprep.subr.mxu0 0.0
      %7511 = vmatpush2.xpose.msra.mxu0 0.0
      %7512 = vmatprep.subr.mxu0 0.0
      %7513 = vmatpush2.xpose.msra.mxu0 0.0
      %7514 = vmatprep.subr.mxu0 0.0
      %7515 = vmatpush2.xpose.msra.mxu0 0.0
      %7516 = vmatprep.subr.mxu0 0.0
      %7517 = vmatpush2.xpose.msra.mxu0 0.0
      %7518 = vmatprep.subr.mxu0 0.0
      %7519 = vmatpush2.xpose.msra.mxu0 0.0
      %7520 = vmatprep.subr.mxu0 0.0
      %7521 = vmatpush2.xpose.msra.mxu0 0.0
      %7522 = vmatprep.subr.mxu0 0.0
      %7523 = vmatpush2.xpose.msra.mxu0 0.0
      %7524 = vmatprep.subr.mxu0 0.0
      %7525 = vmatpush2.xpose.msra.mxu0 0.0
      %7526 = vmatprep.subr.mxu0 0.0
      %7527 = vmatpush2.xpose.msra.mxu0 0.0
      %7528 = vmatprep.mubr.f32.mxu0 0.0
      %7529 = vmatmul.mubr.f32.gmra.mxu0 %v7453
      %v7530 = vpop.f32.mrf.mxu0
      %v7531 = vadd.f32 0.0, %v7530
      %v7532 = vpop.f32.mrf.mxu0
      %7533 = vmatprep.mubr.f32.mxu0 0.0
      %7534 = vmatmul.mubr.f32.gmra.mxu0 %v7456
      %v7535 = vpop.f32.mrf.mxu0
      %v7536 = vadd.f32 0.0, %v7535
      %v7537 = vpop.f32.mrf.mxu0
      %7538 = vdwg.mxu0
      %v7539 = vmul.f32 %v7531, 0.125
      %v7540 = vmul.f32 %v7536, 0.125
      %v7541 = vadd.f32 %v7539, %v7006
      %v7542 = vadd.f32 %v7540, %v7006
      %vm7543 = vcmask 130048
      %v7544 = vsel %vm7543, %v7541, -inf
      %7545 = vmax.xlane.f32.xlu0 %v7544
      %v7546 = vpop.xlane.xlu0 %7545
      %v7547 = vsel %vm7543, %v7542, -inf
      %7548 = vmax.xlane.f32.xlu0 %v7547
      %v7549 = vpop.xlane.xlu0 %7548
      %v7550 = vsub.f32 %v7541, %v7546
      %v7551 = vsub.f32 %v7542, %v7549
      %v7552 = vmul.f32 %v7550, 1.442695
      %v7553 = vpow.pop %v7552
      %v7554 = vmul.f32 %v7551, 1.442695
      %v7555 = vpow.pop %v7554
      %v7557 = vsel %vm7543, %v7553, 0
      %v7560 = vsel %vm7543, %v7555, 0
      %7562 = vmatprep.subr.mxu0 0.0
      %7563 = vmatpush1.msra.mxu0 0.0
      %7564 = vmatprep.subr.mxu0 0.0
      %7565 = vmatpush1.msra.mxu0 0.0
      %7566 = vmatprep.subr.mxu0 0.0
      %7567 = vmatpush1.msra.mxu0 0.0
      %7568 = vmatprep.subr.mxu0 0.0
      %7569 = vmatpush1.msra.mxu0 0.0
      %7570 = vmatprep.subr.mxu0 0.0
      %7571 = vmatpush1.msra.mxu0 0.0
      %7572 = vmatprep.subr.mxu0 0.0
      %7573 = vmatpush1.msra.mxu0 0.0
      %7574 = vmatprep.subr.mxu0 0.0
      %7575 = vmatpush1.msra.mxu0 0.0
      %7576 = vmatprep.subr.mxu0 0.0
      %7577 = vmatpush1.msra.mxu0 0.0
      %7578 = vmatprep.subr.mxu0 0.0
      %7579 = vmatpush1.msra.mxu0 0.0
      %7580 = vmatprep.subr.mxu0 0.0
      %7581 = vmatpush1.msra.mxu0 0.0
      %7582 = vmatprep.subr.mxu0 0.0
      %7583 = vmatpush1.msra.mxu0 0.0
      %7584 = vmatprep.subr.mxu0 0.0
      %7585 = vmatpush1.msra.mxu0 0.0
      %7586 = vmatprep.subr.mxu0 0.0
      %7587 = vmatpush1.msra.mxu0 0.0
      %7588 = vmatprep.subr.mxu0 0.0
      %7589 = vmatpush1.msra.mxu0 0.0
      %7590 = vmatprep.subr.mxu0 0.0
      %7591 = vmatpush1.msra.mxu0 %v7448
      %7592 = vmatprep.subr.mxu0 0.0
      %7593 = vmatpush1.msra.mxu0 %v7442
      %7594 = vmatprep.subr.mxu0 0.0
      %7595 = vmatpush2.msra.mxu0 0.0
      %7596 = vmatprep.subr.mxu0 0.0
      %7597 = vmatpush2.msra.mxu0 0.0
      %7598 = vmatprep.subr.mxu0 0.0
      %7599 = vmatpush2.msra.mxu0 0.0
      %7600 = vmatprep.subr.mxu0 0.0
      %7601 = vmatpush2.msra.mxu0 0.0
      %7602 = vmatprep.subr.mxu0 0.0
      %7603 = vmatpush2.msra.mxu0 0.0
      %7604 = vmatprep.subr.mxu0 0.0
      %7605 = vmatpush2.msra.mxu0 0.0
      %7606 = vmatprep.subr.mxu0 0.0
      %7607 = vmatpush2.msra.mxu0 0.0
      %7608 = vmatprep.subr.mxu0 0.0
      %7609 = vmatpush2.msra.mxu0 0.0
      %7610 = vmatprep.subr.mxu0 0.0
      %7611 = vmatpush2.msra.mxu0 0.0
      %7612 = vmatprep.subr.mxu0 0.0
      %7613 = vmatpush2.msra.mxu0 0.0
      %7614 = vmatprep.subr.mxu0 0.0
      %7615 = vmatpush2.msra.mxu0 0.0
      %7616 = vmatprep.subr.mxu0 0.0
      %7617 = vmatpush2.msra.mxu0 0.0
      %7618 = vmatprep.subr.mxu0 0.0
      %7619 = vmatpush2.msra.mxu0 0.0
      %7620 = vmatprep.subr.mxu0 0.0
      %7621 = vmatpush2.msra.mxu0 0.0
      %7622 = vmatprep.subr.mxu0 0.0
      %7623 = vmatpush2.msra.mxu0 0.0
      %7624 = vmatprep.subr.mxu0 0.0
      %7625 = vmatpush2.msra.mxu0 0.0
      %7626 = vmatprep.mubr.f32.mxu0 0.0
      %7627 = vmatmul.mubr.f32.gmra.mxu0 %v7557
      %v7628 = vpop.f32.mrf.mxu0
      %v7629 = vadd.f32 0.0, %v7628
      %v7630 = vpop.f32.mrf.mxu0
      %7631 = vmatprep.mubr.f32.mxu0 0.0
      %7632 = vmatmul.mubr.f32.gmra.mxu0 %v7560
      %v7633 = vpop.f32.mrf.mxu0
      %v7634 = vadd.f32 0.0, %v7633
      %v7635 = vpop.f32.mrf.mxu0
      %7636 = vdwg.mxu0
      %v7637 = vsel %vm7543, %v7553, 0.0
      %7638 = vadd.xlane.f32.xlu0 %v7637
      %v7639 = vpop.xlane.xlu0 %7638
      %v7640 = vsel %vm7543, %v7555, 0.0
      %7641 = vadd.xlane.f32.xlu0 %v7640
      %v7642 = vpop.xlane.xlu0 %7641
      %v7643 = vrcp.pop %v7639
      %v7644 = vrcp.pop %v7642
      %v7645 = vmul.f32 %v7629, %v7643
      %v7646 = vmul.f32 %v7634, %v7644
      %7647 = vrot.lane.b32.xlu0 %v7156, 64
      %v7648 = vpop.permute.xlu0 %7647
      %7649 = vrot.lane.b32.xlu0 %v7162, 64
      %v7650 = vpop.permute.xlu0 %7649
      %7651 = vrot.lane.b32.xlu0 %v7299, 64
      %v7652 = vpop.permute.xlu0 %7651
      %7653 = vrot.lane.b32.xlu0 %v7305, 64
      %v7654 = vpop.permute.xlu0 %7653
      %v7655 = vsel %vm6991, %v7648, 0
      %v7657 = vsel %vm6991, %v7650, 0
      %v7659 = vsel %vm6991, %v7652, 0
      %v7661 = vsel %vm6991, %v7654, 0
      %7663 = vmatprep.subr.mxu0 0.0
      %7664 = vmatpush1.xpose.msra.mxu0 0.0
      %7665 = vmatprep.subr.mxu0 0.0
      %7666 = vmatpush1.xpose.msra.mxu0 0.0
      %7667 = vmatprep.subr.mxu0 0.0
      %7668 = vmatpush1.xpose.msra.mxu0 0.0
      %7669 = vmatprep.subr.mxu0 0.0
      %7670 = vmatpush1.xpose.msra.mxu0 0.0
      %7671 = vmatprep.subr.mxu0 0.0
      %7672 = vmatpush1.xpose.msra.mxu0 0.0
      %7673 = vmatprep.subr.mxu0 0.0
      %7674 = vmatpush1.xpose.msra.mxu0 0.0
      %7675 = vmatprep.subr.mxu0 0.0
      %7676 = vmatpush1.xpose.msra.mxu0 0.0
      %7677 = vmatprep.subr.mxu0 0.0
      %7678 = vmatpush1.xpose.msra.mxu0 0.0
      %7679 = vmatprep.subr.mxu0 0.0
      %7680 = vmatpush1.xpose.msra.mxu0 0.0
      %7681 = vmatprep.subr.mxu0 0.0
      %7682 = vmatpush1.xpose.msra.mxu0 0.0
      %7683 = vmatprep.subr.mxu0 0.0
      %7684 = vmatpush1.xpose.msra.mxu0 0.0
      %7685 = vmatprep.subr.mxu0 0.0
      %7686 = vmatpush1.xpose.msra.mxu0 0.0
      %7687 = vmatprep.subr.mxu0 0.0
      %7688 = vmatpush1.xpose.msra.mxu0 0.0
      %7689 = vmatprep.subr.mxu0 0.0
      %7690 = vmatpush1.xpose.msra.mxu0 0.0
      %7691 = vmatprep.subr.mxu0 0.0
      %7692 = vmatpush1.xpose.msra.mxu0 %v7661
      %7693 = vmatprep.subr.mxu0 0.0
      %7694 = vmatpush1.xpose.msra.mxu0 %v7659
      %7695 = vmatprep.subr.mxu0 0.0
      %7696 = vmatpush2.xpose.msra.mxu0 0.0
      %7697 = vmatprep.subr.mxu0 0.0
      %7698 = vmatpush2.xpose.msra.mxu0 0.0
      %7699 = vmatprep.subr.mxu0 0.0
      %7700 = vmatpush2.xpose.msra.mxu0 0.0
      %7701 = vmatprep.subr.mxu0 0.0
      %7702 = vmatpush2.xpose.msra.mxu0 0.0
      %7703 = vmatprep.subr.mxu0 0.0
      %7704 = vmatpush2.xpose.msra.mxu0 0.0
      %7705 = vmatprep.subr.mxu0 0.0
      %7706 = vmatpush2.xpose.msra.mxu0 0.0
      %7707 = vmatprep.subr.mxu0 0.0
      %7708 = vmatpush2.xpose.msra.mxu0 0.0
      %7709 = vmatprep.subr.mxu0 0.0
      %7710 = vmatpush2.xpose.msra.mxu0 0.0
      %7711 = vmatprep.subr.mxu0 0.0
      %7712 = vmatpush2.xpose.msra.mxu0 0.0
      %7713 = vmatprep.subr.mxu0 0.0
      %7714 = vmatpush2.xpose.msra.mxu0 0.0
      %7715 = vmatprep.subr.mxu0 0.0
      %7716 = vmatpush2.xpose.msra.mxu0 0.0
      %7717 = vmatprep.subr.mxu0 0.0
      %7718 = vmatpush2.xpose.msra.mxu0 0.0
      %7719 = vmatprep.subr.mxu0 0.0
      %7720 = vmatpush2.xpose.msra.mxu0 0.0
      %7721 = vmatprep.subr.mxu0 0.0
      %7722 = vmatpush2.xpose.msra.mxu0 0.0
      %7723 = vmatprep.subr.mxu0 0.0
      %7724 = vmatpush2.xpose.msra.mxu0 0.0
      %7725 = vmatprep.subr.mxu0 0.0
      %7726 = vmatpush2.xpose.msra.mxu0 0.0
      %7727 = vmatprep.mubr.f32.mxu0 0.0
      %7728 = vmatmul.mubr.f32.gmra.mxu0 %v7655
      %v7729 = vpop.f32.mrf.mxu0
      %v7730 = vadd.f32 0.0, %v7729
      %v7731 = vpop.f32.mrf.mxu0
      %7732 = vmatprep.mubr.f32.mxu0 0.0
      %7733 = vmatmul.mubr.f32.gmra.mxu0 %v7657
      %v7734 = vpop.f32.mrf.mxu0
      %v7735 = vadd.f32 0.0, %v7734
      %v7736 = vpop.f32.mrf.mxu0
      %7737 = vdwg.mxu0
      %v7738 = vmul.f32 %v7730, 0.125
      %v7739 = vmul.f32 %v7735, 0.125
      %v7740 = vadd.f32 %v7738, %v7006
      %v7741 = vadd.f32 %v7739, %v7006
      %v7742 = vsel %vm7543, %v7740, -inf
      %7743 = vmax.xlane.f32.xlu0 %v7742
      %v7744 = vpop.xlane.xlu0 %7743
      %v7745 = vsel %vm7543, %v7741, -inf
      %7746 = vmax.xlane.f32.xlu0 %v7745
      %v7747 = vpop.xlane.xlu0 %7746
      %v7748 = vsub.f32 %v7740, %v7744
      %v7749 = vsub.f32 %v7741, %v7747
      %v7750 = vmul.f32 %v7748, 1.442695
      %v7751 = vpow.pop %v7750
      %v7752 = vmul.f32 %v7749, 1.442695
      %v7753 = vpow.pop %v7752
      %7756 = vrot.lane.b32.xlu0 %v7442, 64
      %v7757 = vpop.permute.xlu0 %7756
      %7758 = vrot.lane.b32.xlu0 %v7448, 64
      %v7759 = vpop.permute.xlu0 %7758
      %v7763 = vsel %vm7543, %v7751, 0
      %v7766 = vsel %vm7543, %v7753, 0
      %7768 = vmatprep.subr.mxu0 0.0
      %7769 = vmatpush1.msra.mxu0 0.0
      %7770 = vmatprep.subr.mxu0 0.0
      %7771 = vmatpush1.msra.mxu0 0.0
      %7772 = vmatprep.subr.mxu0 0.0
      %7773 = vmatpush1.msra.mxu0 0.0
      %7774 = vmatprep.subr.mxu0 0.0
      %7775 = vmatpush1.msra.mxu0 0.0
      %7776 = vmatprep.subr.mxu0 0.0
      %7777 = vmatpush1.msra.mxu0 0.0
      %7778 = vmatprep.subr.mxu0 0.0
      %7779 = vmatpush1.msra.mxu0 0.0
      %7780 = vmatprep.subr.mxu0 0.0
      %7781 = vmatpush1.msra.mxu0 0.0
      %7782 = vmatprep.subr.mxu0 0.0
      %7783 = vmatpush1.msra.mxu0 0.0
      %7784 = vmatprep.subr.mxu0 0.0
      %7785 = vmatpush1.msra.mxu0 0.0
      %7786 = vmatprep.subr.mxu0 0.0
      %7787 = vmatpush1.msra.mxu0 0.0
      %7788 = vmatprep.subr.mxu0 0.0
      %7789 = vmatpush1.msra.mxu0 0.0
      %7790 = vmatprep.subr.mxu0 0.0
      %7791 = vmatpush1.msra.mxu0 0.0
      %7792 = vmatprep.subr.mxu0 0.0
      %7793 = vmatpush1.msra.mxu0 0.0
      %7794 = vmatprep.subr.mxu0 0.0
      %7795 = vmatpush1.msra.mxu0 0.0
      %7796 = vmatprep.subr.mxu0 0.0
      %7797 = vmatpush1.msra.mxu0 %v7759
      %7798 = vmatprep.subr.mxu0 0.0
      %7799 = vmatpush1.msra.mxu0 %v7757
      %7800 = vmatprep.subr.mxu0 0.0
      %7801 = vmatpush2.msra.mxu0 0.0
      %7802 = vmatprep.subr.mxu0 0.0
      %7803 = vmatpush2.msra.mxu0 0.0
      %7804 = vmatprep.subr.mxu0 0.0
      %7805 = vmatpush2.msra.mxu0 0.0
      %7806 = vmatprep.subr.mxu0 0.0
      %7807 = vmatpush2.msra.mxu0 0.0
      %7808 = vmatprep.subr.mxu0 0.0
      %7809 = vmatpush2.msra.mxu0 0.0
      %7810 = vmatprep.subr.mxu0 0.0
      %7811 = vmatpush2.msra.mxu0 0.0
      %7812 = vmatprep.subr.mxu0 0.0
      %7813 = vmatpush2.msra.mxu0 0.0
      %7814 = vmatprep.subr.mxu0 0.0
      %7815 = vmatpush2.msra.mxu0 0.0
      %7816 = vmatprep.subr.mxu0 0.0
      %7817 = vmatpush2.msra.mxu0 0.0
      %7818 = vmatprep.subr.mxu0 0.0
      %7819 = vmatpush2.msra.mxu0 0.0
      %7820 = vmatprep.subr.mxu0 0.0
      %7821 = vmatpush2.msra.mxu0 0.0
      %7822 = vmatprep.subr.mxu0 0.0
      %7823 = vmatpush2.msra.mxu0 0.0
      %7824 = vmatprep.subr.mxu0 0.0
      %7825 = vmatpush2.msra.mxu0 0.0
      %7826 = vmatprep.subr.mxu0 0.0
      %7827 = vmatpush2.msra.mxu0 0.0
      %7828 = vmatprep.subr.mxu0 0.0
      %7829 = vmatpush2.msra.mxu0 0.0
      %7830 = vmatprep.subr.mxu0 0.0
      %7831 = vmatpush2.msra.mxu0 0.0
      %7832 = vmatprep.mubr.f32.mxu0 0.0
      %7833 = vmatmul.mubr.f32.gmra.mxu0 %v7763
      %v7834 = vpop.f32.mrf.mxu0
      %v7835 = vadd.f32 0.0, %v7834
      %v7836 = vpop.f32.mrf.mxu0
      %7837 = vmatprep.mubr.f32.mxu0 0.0
      %7838 = vmatmul.mubr.f32.gmra.mxu0 %v7766
      %v7839 = vpop.f32.mrf.mxu0
      %v7840 = vadd.f32 0.0, %v7839
      %v7841 = vpop.f32.mrf.mxu0
      %7842 = vdwg.mxu0
      %v7843 = vsel %vm7543, %v7751, 0.0
      %7844 = vadd.xlane.f32.xlu0 %v7843
      %v7845 = vpop.xlane.xlu0 %7844
      %v7846 = vsel %vm7543, %v7753, 0.0
      %7847 = vadd.xlane.f32.xlu0 %v7846
      %v7848 = vpop.xlane.xlu0 %7847
      %v7849 = vrcp.pop %v7845
      %v7850 = vrcp.pop %v7848
      %v7851 = vmul.f32 %v7835, %v7849
      %v7852 = vmul.f32 %v7840, %v7850
      %v7854 = vsel %vm6991, %v7158, 0
      %v7857 = vsel %vm6991, %v7164, 0
      %v7860 = vsel %vm6991, %v7301, 0
      %v7863 = vsel %vm6991, %v7307, 0
      %7865 = vmatprep.subr.mxu0 0.0
      %7866 = vmatpush1.xpose.msra.mxu0 0.0
      %7867 = vmatprep.subr.mxu0 0.0
      %7868 = vmatpush1.xpose.msra.mxu0 0.0
      %7869 = vmatprep.subr.mxu0 0.0
      %7870 = vmatpush1.xpose.msra.mxu0 0.0
      %7871 = vmatprep.subr.mxu0 0.0
      %7872 = vmatpush1.xpose.msra.mxu0 0.0
      %7873 = vmatprep.subr.mxu0 0.0
      %7874 = vmatpush1.xpose.msra.mxu0 0.0
      %7875 = vmatprep.subr.mxu0 0.0
      %7876 = vmatpush1.xpose.msra.mxu0 0.0
      %7877 = vmatprep.subr.mxu0 0.0
      %7878 = vmatpush1.xpose.msra.mxu0 0.0
      %7879 = vmatprep.subr.mxu0 0.0
      %7880 = vmatpush1.xpose.msra.mxu0 0.0
      %7881 = vmatprep.subr.mxu0 0.0
      %7882 = vmatpush1.xpose.msra.mxu0 0.0
      %7883 = vmatprep.subr.mxu0 0.0
      %7884 = vmatpush1.xpose.msra.mxu0 0.0
      %7885 = vmatprep.subr.mxu0 0.0
      %7886 = vmatpush1.xpose.msra.mxu0 0.0
      %7887 = vmatprep.subr.mxu0 0.0
      %7888 = vmatpush1.xpose.msra.mxu0 0.0
      %7889 = vmatprep.subr.mxu0 0.0
      %7890 = vmatpush1.xpose.msra.mxu0 0.0
      %7891 = vmatprep.subr.mxu0 0.0
      %7892 = vmatpush1.xpose.msra.mxu0 0.0
      %7893 = vmatprep.subr.mxu0 0.0
      %7894 = vmatpush1.xpose.msra.mxu0 %v7863
      %7895 = vmatprep.subr.mxu0 0.0
      %7896 = vmatpush1.xpose.msra.mxu0 %v7860
      %7897 = vmatprep.subr.mxu0 0.0
      %7898 = vmatpush2.xpose.msra.mxu0 0.0
      %7899 = vmatprep.subr.mxu0 0.0
      %7900 = vmatpush2.xpose.msra.mxu0 0.0
      %7901 = vmatprep.subr.mxu0 0.0
      %7902 = vmatpush2.xpose.msra.mxu0 0.0
      %7903 = vmatprep.subr.mxu0 0.0
      %7904 = vmatpush2.xpose.msra.mxu0 0.0
      %7905 = vmatprep.subr.mxu0 0.0
      %7906 = vmatpush2.xpose.msra.mxu0 0.0
      %7907 = vmatprep.subr.mxu0 0.0
      %7908 = vmatpush2.xpose.msra.mxu0 0.0
      %7909 = vmatprep.subr.mxu0 0.0
      %7910 = vmatpush2.xpose.msra.mxu0 0.0
      %7911 = vmatprep.subr.mxu0 0.0
      %7912 = vmatpush2.xpose.msra.mxu0 0.0
      %7913 = vmatprep.subr.mxu0 0.0
      %7914 = vmatpush2.xpose.msra.mxu0 0.0
      %7915 = vmatprep.subr.mxu0 0.0
      %7916 = vmatpush2.xpose.msra.mxu0 0.0
      %7917 = vmatprep.subr.mxu0 0.0
      %7918 = vmatpush2.xpose.msra.mxu0 0.0
      %7919 = vmatprep.subr.mxu0 0.0
      %7920 = vmatpush2.xpose.msra.mxu0 0.0
      %7921 = vmatprep.subr.mxu0 0.0
      %7922 = vmatpush2.xpose.msra.mxu0 0.0
      %7923 = vmatprep.subr.mxu0 0.0
      %7924 = vmatpush2.xpose.msra.mxu0 0.0
      %7925 = vmatprep.subr.mxu0 0.0
      %7926 = vmatpush2.xpose.msra.mxu0 0.0
      %7927 = vmatprep.subr.mxu0 0.0
      %7928 = vmatpush2.xpose.msra.mxu0 0.0
      %7929 = vmatprep.mubr.f32.mxu0 0.0
      %7930 = vmatmul.mubr.f32.gmra.mxu0 %v7854
      %v7931 = vpop.f32.mrf.mxu0
      %v7932 = vadd.f32 0.0, %v7931
      %v7933 = vpop.f32.mrf.mxu0
      %7934 = vmatprep.mubr.f32.mxu0 0.0
      %7935 = vmatmul.mubr.f32.gmra.mxu0 %v7857
      %v7936 = vpop.f32.mrf.mxu0
      %v7937 = vadd.f32 0.0, %v7936
      %v7938 = vpop.f32.mrf.mxu0
      %7939 = vdwg.mxu0
      %v7940 = vmul.f32 %v7932, 0.125
      %v7941 = vmul.f32 %v7937, 0.125
      %v7942 = vadd.f32 %v7940, %v7006
      %v7943 = vadd.f32 %v7941, %v7006
      %v7944 = vsel %vm7543, %v7942, -inf
      %7945 = vmax.xlane.f32.xlu0 %v7944
      %v7946 = vpop.xlane.xlu0 %7945
      %v7947 = vsel %vm7543, %v7943, -inf
      %7948 = vmax.xlane.f32.xlu0 %v7947
      %v7949 = vpop.xlane.xlu0 %7948
      %v7950 = vsub.f32 %v7942, %v7946
      %v7951 = vsub.f32 %v7943, %v7949
      %v7952 = vmul.f32 %v7950, 1.442695
      %v7953 = vpow.pop %v7952
      %v7954 = vmul.f32 %v7951, 1.442695
      %v7955 = vpow.pop %v7954
      %v7957 = vsel %vm7543, %v7953, 0
      %v7960 = vsel %vm7543, %v7955, 0
      %7962 = vmatprep.subr.mxu0 0.0
      %7963 = vmatpush1.msra.mxu0 0.0
      %7964 = vmatprep.subr.mxu0 0.0
      %7965 = vmatpush1.msra.mxu0 0.0
      %7966 = vmatprep.subr.mxu0 0.0
      %7967 = vmatpush1.msra.mxu0 0.0
      %7968 = vmatprep.subr.mxu0 0.0
      %7969 = vmatpush1.msra.mxu0 0.0
      %7970 = vmatprep.subr.mxu0 0.0
      %7971 = vmatpush1.msra.mxu0 0.0
      %7972 = vmatprep.subr.mxu0 0.0
      %7973 = vmatpush1.msra.mxu0 0.0
      %7974 = vmatprep.subr.mxu0 0.0
      %7975 = vmatpush1.msra.mxu0 0.0
      %7976 = vmatprep.subr.mxu0 0.0
      %7977 = vmatpush1.msra.mxu0 0.0
      %7978 = vmatprep.subr.mxu0 0.0
      %7979 = vmatpush1.msra.mxu0 0.0
      %7980 = vmatprep.subr.mxu0 0.0
      %7981 = vmatpush1.msra.mxu0 0.0
      %7982 = vmatprep.subr.mxu0 0.0
      %7983 = vmatpush1.msra.mxu0 0.0
      %7984 = vmatprep.subr.mxu0 0.0
      %7985 = vmatpush1.msra.mxu0 0.0
      %7986 = vmatprep.subr.mxu0 0.0
      %7987 = vmatpush1.msra.mxu0 0.0
      %7988 = vmatprep.subr.mxu0 0.0
      %7989 = vmatpush1.msra.mxu0 0.0
      %7990 = vmatprep.subr.mxu0 0.0
      %7991 = vmatpush1.msra.mxu0 %v7450
      %7992 = vmatprep.subr.mxu0 0.0
      %7993 = vmatpush1.msra.mxu0 %v7444
      %7994 = vmatprep.subr.mxu0 0.0
      %7995 = vmatpush2.msra.mxu0 0.0
      %7996 = vmatprep.subr.mxu0 0.0
      %7997 = vmatpush2.msra.mxu0 0.0
      %7998 = vmatprep.subr.mxu0 0.0
      %7999 = vmatpush2.msra.mxu0 0.0
      %8000 = vmatprep.subr.mxu0 0.0
      %8001 = vmatpush2.msra.mxu0 0.0
      %8002 = vmatprep.subr.mxu0 0.0
      %8003 = vmatpush2.msra.mxu0 0.0
      %8004 = vmatprep.subr.mxu0 0.0
      %8005 = vmatpush2.msra.mxu0 0.0
      %8006 = vmatprep.subr.mxu0 0.0
      %8007 = vmatpush2.msra.mxu0 0.0
      %8008 = vmatprep.subr.mxu0 0.0
      %8009 = vmatpush2.msra.mxu0 0.0
      %8010 = vmatprep.subr.mxu0 0.0
      %8011 = vmatpush2.msra.mxu0 0.0
      %8012 = vmatprep.subr.mxu0 0.0
      %8013 = vmatpush2.msra.mxu0 0.0
      %8014 = vmatprep.subr.mxu0 0.0
      %8015 = vmatpush2.msra.mxu0 0.0
      %8016 = vmatprep.subr.mxu0 0.0
      %8017 = vmatpush2.msra.mxu0 0.0
      %8018 = vmatprep.subr.mxu0 0.0
      %8019 = vmatpush2.msra.mxu0 0.0
      %8020 = vmatprep.subr.mxu0 0.0
      %8021 = vmatpush2.msra.mxu0 0.0
      %8022 = vmatprep.subr.mxu0 0.0
      %8023 = vmatpush2.msra.mxu0 0.0
      %8024 = vmatprep.subr.mxu0 0.0
      %8025 = vmatpush2.msra.mxu0 0.0
      %8026 = vmatprep.mubr.f32.mxu0 0.0
      %8027 = vmatmul.mubr.f32.gmra.mxu0 %v7957
      %v8028 = vpop.f32.mrf.mxu0
      %v8029 = vadd.f32 0.0, %v8028
      %v8030 = vpop.f32.mrf.mxu0
      %8031 = vmatprep.mubr.f32.mxu0 0.0
      %8032 = vmatmul.mubr.f32.gmra.mxu0 %v7960
      %v8033 = vpop.f32.mrf.mxu0
      %v8034 = vadd.f32 0.0, %v8033
      %v8035 = vpop.f32.mrf.mxu0
      %8036 = vdwg.mxu0
      %v8037 = vsel %vm7543, %v7953, 0.0
      %8038 = vadd.xlane.f32.xlu0 %v8037
      %v8039 = vpop.xlane.xlu0 %8038
      %v8040 = vsel %vm7543, %v7955, 0.0
      %8041 = vadd.xlane.f32.xlu0 %v8040
      %v8042 = vpop.xlane.xlu0 %8041
      %v8043 = vrcp.pop %v8039
      %v8044 = vrcp.pop %v8042
      %v8045 = vmul.f32 %v8029, %v8043
      %v8046 = vmul.f32 %v8034, %v8044
      %8049 = vrot.lane.b32.xlu0 %v7851, 64
      %v8050 = vpop.permute.xlu0 %8049
      %8051 = vrot.lane.b32.xlu0 %v7852, 64
      %v8052 = vpop.permute.xlu0 %8051
      %v8055 = vsel %vm6991, %v7645, %v8050
      %v8056 = vsel %vm6991, %v7646, %v8052
      %s8057 = sadd.s32 %s7017, 3
      %s8058 = smul.u32 %s8057, 48
      %s8059 = smul.addr %s8058, 8
      %s8060 = scalar_lea.vmem %s4, %s8059
      %v8061 = vld [vmem:[%s8060] sm:$0xff]
      %v8062 = vld [vmem:[%s8060 + $0x8] sm:$0xff]
      %v8063 = vld [vmem:[%s8060 + $0x10] sm:$0xff]
      %v8064 = vld [vmem:[%s8060 + $0x18] sm:$0xff]
      %v8065 = vld [vmem:[%s8060 + $0x20] sm:$0xff]
      %v8066 = vld [vmem:[%s8060 + $0x28] sm:$0xff]
      %v8067 = vld [vmem:[%s8060 + $0x30] sm:$0xff]
      %v8068 = vld [vmem:[%s8060 + $0x38] sm:$0xff]
      %v8069 = vld [vmem:[%s8060 + $0x40] sm:$0xff]
      %v8070 = vld [vmem:[%s8060 + $0x48] sm:$0xff]
      %v8071 = vld [vmem:[%s8060 + $0x50] sm:$0xff]
      %v8072 = vld [vmem:[%s8060 + $0x58] sm:$0xff]
      %v8073 = vld [vmem:[%s8060 + $0x60] sm:$0xff]
      %v8074 = vld [vmem:[%s8060 + $0x68] sm:$0xff]
      %v8075 = vld [vmem:[%s8060 + $0x70] sm:$0xff]
      %v8076 = vld [vmem:[%s8060 + $0x78] sm:$0xff]
      %v8077 = vld [vmem:[%s8060 + $0x80] sm:$0xff]
      %v8078 = vld [vmem:[%s8060 + $0x88] sm:$0xff]
      %v8079 = vld [vmem:[%s8060 + $0x90] sm:$0xff]
      %v8080 = vld [vmem:[%s8060 + $0x98] sm:$0xff]
      %v8081 = vld [vmem:[%s8060 + $0xa0] sm:$0xff]
      %v8082 = vld [vmem:[%s8060 + $0xa8] sm:$0xff]
      %v8083 = vld [vmem:[%s8060 + $0xb0] sm:$0xff]
      %v8084 = vld [vmem:[%s8060 + $0xb8] sm:$0xff]
      %v8085 = vld [vmem:[%s8060 + $0xc0] sm:$0xff]
      %v8086 = vld [vmem:[%s8060 + $0xc8] sm:$0xff]
      %v8087 = vld [vmem:[%s8060 + $0xd0] sm:$0xff]
      %v8088 = vld [vmem:[%s8060 + $0xd8] sm:$0xff]
      %v8089 = vld [vmem:[%s8060 + $0xe0] sm:$0xff]
      %v8090 = vld [vmem:[%s8060 + $0xe8] sm:$0xff]
      %v8091 = vld [vmem:[%s8060 + $0xf0] sm:$0xff]
      %v8092 = vld [vmem:[%s8060 + $0xf8] sm:$0xff]
      %v8093 = vld [vmem:[%s8060 + $0x100] sm:$0xff]
      %v8094 = vld [vmem:[%s8060 + $0x108] sm:$0xff]
      %v8095 = vld [vmem:[%s8060 + $0x110] sm:$0xff]
      %v8096 = vld [vmem:[%s8060 + $0x118] sm:$0xff]
      %v8097 = vld [vmem:[%s8060 + $0x120] sm:$0xff]
      %v8098 = vld [vmem:[%s8060 + $0x128] sm:$0xff]
      %v8099 = vld [vmem:[%s8060 + $0x130] sm:$0xff]
      %v8100 = vld [vmem:[%s8060 + $0x138] sm:$0xff]
      %v8101 = vld [vmem:[%s8060 + $0x140] sm:$0xff]
      %v8102 = vld [vmem:[%s8060 + $0x148] sm:$0xff]
      %v8103 = vld [vmem:[%s8060 + $0x150] sm:$0xff]
      %v8104 = vld [vmem:[%s8060 + $0x158] sm:$0xff]
      %v8105 = vld [vmem:[%s8060 + $0x160] sm:$0xff]
      %v8106 = vld [vmem:[%s8060 + $0x168] sm:$0xff]
      %v8107 = vld [vmem:[%s8060 + $0x170] sm:$0xff]
      %v8108 = vld [vmem:[%s8060 + $0x178] sm:$0xff]
      %s8109 = smul.u32 %s8057, 2
      %s8110 = scalar_lea.vmem %s5, %s8109
      %v8111 = vld [vmem:[%s8110] sm:$0x3]
      %v8113 = vlaneseq
      %v8114 = vshrl.u32 %v8113, 7
      %v8115 = vsub.s32 0, %v8114
      %v8116 = vrot.slane %v8111, %v8115
      %v8117 = vlaneseq
      %v8118 = vshrl.u32 %v8117, 7
      %v8119 = vsub.s32 1, %v8118
      %v8120 = vrot.slane %v8111, %v8119
      %v8124 = vsel %vm6991, %v8045, 0
      %v8127 = vsel %vm6991, %v8046, 0
      %8129 = vmatprep.subr.mxu0 %v8092
      %8130 = vmatpush1.msra.mxu0 %v8091
      %8131 = vmatprep.subr.mxu0 %v8090
      %8132 = vmatpush1.msra.mxu0 %v8089
      %8133 = vmatprep.subr.mxu0 %v8088
      %8134 = vmatpush1.msra.mxu0 %v8087
      %8135 = vmatprep.subr.mxu0 %v8086
      %8136 = vmatpush1.msra.mxu0 %v8085
      %8137 = vmatprep.subr.mxu0 %v8084
      %8138 = vmatpush1.msra.mxu0 %v8083
      %8139 = vmatprep.subr.mxu0 %v8082
      %8140 = vmatpush1.msra.mxu0 %v8081
      %8141 = vmatprep.subr.mxu0 %v8080
      %8142 = vmatpush1.msra.mxu0 %v8079
      %8143 = vmatprep.subr.mxu0 %v8078
      %8144 = vmatpush1.msra.mxu0 %v8077
      %8145 = vmatprep.subr.mxu0 %v8076
      %8146 = vmatpush1.msra.mxu0 %v8075
      %8147 = vmatprep.subr.mxu0 %v8074
      %8148 = vmatpush1.msra.mxu0 %v8073
      %8149 = vmatprep.subr.mxu0 %v8072
      %8150 = vmatpush1.msra.mxu0 %v8071
      %8151 = vmatprep.subr.mxu0 %v8070
      %8152 = vmatpush1.msra.mxu0 %v8069
      %8153 = vmatprep.subr.mxu0 %v8068
      %8154 = vmatpush1.msra.mxu0 %v8067
      %8155 = vmatprep.subr.mxu0 %v8066
      %8156 = vmatpush1.msra.mxu0 %v8065
      %8157 = vmatprep.subr.mxu0 %v8064
      %8158 = vmatpush1.msra.mxu0 %v8063
      %8159 = vmatprep.subr.mxu0 %v8062
      %8160 = vmatpush1.msra.mxu0 %v8061
      %8161 = vmatprep.subr.mxu0 0.0
      %8162 = vmatpush2.msra.mxu0 0.0
      %8163 = vmatprep.subr.mxu0 0.0
      %8164 = vmatpush2.msra.mxu0 0.0
      %8165 = vmatprep.subr.mxu0 0.0
      %8166 = vmatpush2.msra.mxu0 0.0
      %8167 = vmatprep.subr.mxu0 0.0
      %8168 = vmatpush2.msra.mxu0 0.0
      %8169 = vmatprep.subr.mxu0 0.0
      %8170 = vmatpush2.msra.mxu0 0.0
      %8171 = vmatprep.subr.mxu0 0.0
      %8172 = vmatpush2.msra.mxu0 0.0
      %8173 = vmatprep.subr.mxu0 0.0
      %8174 = vmatpush2.msra.mxu0 0.0
      %8175 = vmatprep.subr.mxu0 0.0
      %8176 = vmatpush2.msra.mxu0 0.0
      %8177 = vmatprep.subr.mxu0 %v8108
      %8178 = vmatpush2.msra.mxu0 %v8107
      %8179 = vmatprep.subr.mxu0 %v8106
      %8180 = vmatpush2.msra.mxu0 %v8105
      %8181 = vmatprep.subr.mxu0 %v8104
      %8182 = vmatpush2.msra.mxu0 %v8103
      %8183 = vmatprep.subr.mxu0 %v8102
      %8184 = vmatpush2.msra.mxu0 %v8101
      %8185 = vmatprep.subr.mxu0 %v8100
      %8186 = vmatpush2.msra.mxu0 %v8099
      %8187 = vmatprep.subr.mxu0 %v8098
      %8188 = vmatpush2.msra.mxu0 %v8097
      %8189 = vmatprep.subr.mxu0 %v8096
      %8190 = vmatpush2.msra.mxu0 %v8095
      %8191 = vmatprep.subr.mxu0 %v8094
      %8192 = vmatpush2.msra.mxu0 %v8093
      %8193 = vmatprep.mubr.f32.mxu0 %v8124
      %8194 = vmatmul.mubr.f32.gmra.mxu0 %v8055
      %v8195 = vpop.f32.mrf.mxu0
      %v8196 = vadd.f32 %v8116, %v8195
      %v8197 = vpop.f32.mrf.mxu0
      %v8198 = vadd.f32 %v8120, %v8197
      %8199 = vmatprep.mubr.f32.mxu0 %v8127
      %8200 = vmatmul.mubr.f32.gmra.mxu0 %v8056
      %v8201 = vpop.f32.mrf.mxu0
      %v8202 = vadd.f32 %v8116, %v8201
      %v8203 = vpop.f32.mrf.mxu0
      %v8204 = vadd.f32 %v8120, %v8203
      %8205 = vdwg.mxu0
      %v8206 = vadd.f32 %v7013, %v8196
      %v8207 = vadd.f32 %v7014, %v8198
      %v8208 = vadd.f32 %v7015, %v8202
      %v8209 = vadd.f32 %v7016, %v8204
      %s8210 = smul.u32 %s7008, 2
      %s8211 = smul.u32 %s8210, 2
      %s8212 = scalar_lea.vmem %s8, %s8211
      %v8213 = vld [vmem:[%s8212] sm:$0x3]
      %s8214 = scalar_lea.vmem %s9, %s8211
      %v8215 = vld [vmem:[%s8214] sm:$0x3]
      %v8216 = vsel %vm6991, %v8207, 0.0
      %v8217 = vadd.f32 %v8206, %v8216
      %8218 = vadd.xlane.f32.xlu0 %v8217
      %v8219 = vpop.xlane.xlu0 %8218
      %v8220 = vsel %vm6991, %v8209, 0.0
      %v8221 = vadd.f32 %v8208, %v8220
      %8222 = vadd.xlane.f32.xlu0 %v8221
      %v8223 = vpop.xlane.xlu0 %8222
      %v8224 = vrcp.pop 192.0
      %v8225 = vmul.f32 %v8219, %v8224
      %v8226 = vmul.f32 %v8223, %v8224
      %v8227 = vsub.f32 %v8206, %v8225
      %v8228 = vsub.f32 %v8207, %v8225
      %v8229 = vsub.f32 %v8208, %v8226
      %v8230 = vsub.f32 %v8209, %v8226
      %v8231 = vmul.f32 %v8227, %v8227
      %v8232 = vmul.f32 %v8228, %v8228
      %v8233 = vmul.f32 %v8229, %v8229
      %v8234 = vmul.f32 %v8230, %v8230
      %v8235 = vsel %vm6991, %v8232, 0.0
      %v8236 = vadd.f32 %v8231, %v8235
      %8237 = vadd.xlane.f32.xlu0 %v8236
      %v8238 = vpop.xlane.xlu0 %8237
      %v8239 = vsel %vm6991, %v8234, 0.0
      %v8240 = vadd.f32 %v8233, %v8239
      %8241 = vadd.xlane.f32.xlu0 %v8240
      %v8242 = vpop.xlane.xlu0 %8241
      %v8243 = vmul.f32 %v8238, %v8224
      %v8244 = vmul.f32 %v8242, %v8224
      %v8245 = vadd.f32 %v8243, 1e-05
      %v8246 = vadd.f32 %v8244, 1e-05
      %v8247 = vrsqrt.pop %v8245
      %v8248 = vrsqrt.pop %v8246
      %v8249 = vmul.f32 %v8227, %v8247
      %v8250 = vmul.f32 %v8228, %v8247
      %v8251 = vmul.f32 %v8229, %v8248
      %v8252 = vmul.f32 %v8230, %v8248
      %v8254 = vlaneseq
      %v8255 = vshrl.u32 %v8254, 7
      %v8256 = vsub.s32 0, %v8255
      %v8257 = vrot.slane %v8213, %v8256
      %v8258 = vlaneseq
      %v8259 = vshrl.u32 %v8258, 7
      %v8260 = vsub.s32 1, %v8259
      %v8261 = vrot.slane %v8213, %v8260
      %v8264 = vmul.f32 %v8249, %v8257
      %v8265 = vmul.f32 %v8250, %v8261
      %v8266 = vmul.f32 %v8251, %v8257
      %v8267 = vmul.f32 %v8252, %v8261
      %v8269 = vlaneseq
      %v8270 = vshrl.u32 %v8269, 7
      %v8271 = vsub.s32 0, %v8270
      %v8272 = vrot.slane %v8215, %v8271
      %v8273 = vlaneseq
      %v8274 = vshrl.u32 %v8273, 7
      %v8275 = vsub.s32 1, %v8274
      %v8276 = vrot.slane %v8215, %v8275
      %v8279 = vadd.f32 %v8264, %v8272
      %v8280 = vadd.f32 %v8265, %v8276
      %v8281 = vadd.f32 %v8266, %v8272
      %v8282 = vadd.f32 %v8267, %v8276
      %s8283 = smul.u32 %s8210, 48
      %s8284 = smul.addr %s8283, 8
      %s8285 = scalar_lea.vmem %s6, %s8284
      %v8286 = vld [vmem:[%s8285] sm:$0xff]
      %v8287 = vld [vmem:[%s8285 + $0x8] sm:$0xff]
      %v8288 = vld [vmem:[%s8285 + $0x10] sm:$0xff]
      %v8289 = vld [vmem:[%s8285 + $0x18] sm:$0xff]
      %v8290 = vld [vmem:[%s8285 + $0x20] sm:$0xff]
      %v8291 = vld [vmem:[%s8285 + $0x28] sm:$0xff]
      %v8292 = vld [vmem:[%s8285 + $0x30] sm:$0xff]
      %v8293 = vld [vmem:[%s8285 + $0x38] sm:$0xff]
      %v8294 = vld [vmem:[%s8285 + $0x40] sm:$0xff]
      %v8295 = vld [vmem:[%s8285 + $0x48] sm:$0xff]
      %v8296 = vld [vmem:[%s8285 + $0x50] sm:$0xff]
      %v8297 = vld [vmem:[%s8285 + $0x58] sm:$0xff]
      %v8298 = vld [vmem:[%s8285 + $0x60] sm:$0xff]
      %v8299 = vld [vmem:[%s8285 + $0x68] sm:$0xff]
      %v8300 = vld [vmem:[%s8285 + $0x70] sm:$0xff]
      %v8301 = vld [vmem:[%s8285 + $0x78] sm:$0xff]
      %v8302 = vld [vmem:[%s8285 + $0x80] sm:$0xff]
      %v8303 = vld [vmem:[%s8285 + $0x88] sm:$0xff]
      %v8304 = vld [vmem:[%s8285 + $0x90] sm:$0xff]
      %v8305 = vld [vmem:[%s8285 + $0x98] sm:$0xff]
      %v8306 = vld [vmem:[%s8285 + $0xa0] sm:$0xff]
      %v8307 = vld [vmem:[%s8285 + $0xa8] sm:$0xff]
      %v8308 = vld [vmem:[%s8285 + $0xb0] sm:$0xff]
      %v8309 = vld [vmem:[%s8285 + $0xb8] sm:$0xff]
      %v8310 = vld [vmem:[%s8285 + $0xc0] sm:$0xff]
      %v8311 = vld [vmem:[%s8285 + $0xc8] sm:$0xff]
      %v8312 = vld [vmem:[%s8285 + $0xd0] sm:$0xff]
      %v8313 = vld [vmem:[%s8285 + $0xd8] sm:$0xff]
      %v8314 = vld [vmem:[%s8285 + $0xe0] sm:$0xff]
      %v8315 = vld [vmem:[%s8285 + $0xe8] sm:$0xff]
      %v8316 = vld [vmem:[%s8285 + $0xf0] sm:$0xff]
      %v8317 = vld [vmem:[%s8285 + $0xf8] sm:$0xff]
      %v8318 = vld [vmem:[%s8285 + $0x100] sm:$0xff]
      %v8319 = vld [vmem:[%s8285 + $0x108] sm:$0xff]
      %v8320 = vld [vmem:[%s8285 + $0x110] sm:$0xff]
      %v8321 = vld [vmem:[%s8285 + $0x118] sm:$0xff]
      %v8322 = vld [vmem:[%s8285 + $0x120] sm:$0xff]
      %v8323 = vld [vmem:[%s8285 + $0x128] sm:$0xff]
      %v8324 = vld [vmem:[%s8285 + $0x130] sm:$0xff]
      %v8325 = vld [vmem:[%s8285 + $0x138] sm:$0xff]
      %v8326 = vld [vmem:[%s8285 + $0x140] sm:$0xff]
      %v8327 = vld [vmem:[%s8285 + $0x148] sm:$0xff]
      %v8328 = vld [vmem:[%s8285 + $0x150] sm:$0xff]
      %v8329 = vld [vmem:[%s8285 + $0x158] sm:$0xff]
      %v8330 = vld [vmem:[%s8285 + $0x160] sm:$0xff]
      %v8331 = vld [vmem:[%s8285 + $0x168] sm:$0xff]
      %v8332 = vld [vmem:[%s8285 + $0x170] sm:$0xff]
      %v8333 = vld [vmem:[%s8285 + $0x178] sm:$0xff]
      %s8334 = scalar_lea.vmem %s7, %s8211
      %v8335 = vld [vmem:[%s8334] sm:$0x3]
      %v8337 = vlaneseq
      %v8338 = vshrl.u32 %v8337, 7
      %v8339 = vsub.s32 0, %v8338
      %v8340 = vrot.slane %v8335, %v8339
      %v8341 = vlaneseq
      %v8342 = vshrl.u32 %v8341, 7
      %v8343 = vsub.s32 1, %v8342
      %v8344 = vrot.slane %v8335, %v8343
      %v8348 = vsel %vm6991, %v8280, 0
      %v8351 = vsel %vm6991, %v8282, 0
      %8353 = vmatprep.subr.mxu0 %v8317
      %8354 = vmatpush1.msra.mxu0 %v8316
      %8355 = vmatprep.subr.mxu0 %v8315
      %8356 = vmatpush1.msra.mxu0 %v8314
      %8357 = vmatprep.subr.mxu0 %v8313
      %8358 = vmatpush1.msra.mxu0 %v8312
      %8359 = vmatprep.subr.mxu0 %v8311
      %8360 = vmatpush1.msra.mxu0 %v8310
      %8361 = vmatprep.subr.mxu0 %v8309
      %8362 = vmatpush1.msra.mxu0 %v8308
      %8363 = vmatprep.subr.mxu0 %v8307
      %8364 = vmatpush1.msra.mxu0 %v8306
      %8365 = vmatprep.subr.mxu0 %v8305
      %8366 = vmatpush1.msra.mxu0 %v8304
      %8367 = vmatprep.subr.mxu0 %v8303
      %8368 = vmatpush1.msra.mxu0 %v8302
      %8369 = vmatprep.subr.mxu0 %v8301
      %8370 = vmatpush1.msra.mxu0 %v8300
      %8371 = vmatprep.subr.mxu0 %v8299
      %8372 = vmatpush1.msra.mxu0 %v8298
      %8373 = vmatprep.subr.mxu0 %v8297
      %8374 = vmatpush1.msra.mxu0 %v8296
      %8375 = vmatprep.subr.mxu0 %v8295
      %8376 = vmatpush1.msra.mxu0 %v8294
      %8377 = vmatprep.subr.mxu0 %v8293
      %8378 = vmatpush1.msra.mxu0 %v8292
      %8379 = vmatprep.subr.mxu0 %v8291
      %8380 = vmatpush1.msra.mxu0 %v8290
      %8381 = vmatprep.subr.mxu0 %v8289
      %8382 = vmatpush1.msra.mxu0 %v8288
      %8383 = vmatprep.subr.mxu0 %v8287
      %8384 = vmatpush1.msra.mxu0 %v8286
      %8385 = vmatprep.subr.mxu0 0.0
      %8386 = vmatpush2.msra.mxu0 0.0
      %8387 = vmatprep.subr.mxu0 0.0
      %8388 = vmatpush2.msra.mxu0 0.0
      %8389 = vmatprep.subr.mxu0 0.0
      %8390 = vmatpush2.msra.mxu0 0.0
      %8391 = vmatprep.subr.mxu0 0.0
      %8392 = vmatpush2.msra.mxu0 0.0
      %8393 = vmatprep.subr.mxu0 0.0
      %8394 = vmatpush2.msra.mxu0 0.0
      %8395 = vmatprep.subr.mxu0 0.0
      %8396 = vmatpush2.msra.mxu0 0.0
      %8397 = vmatprep.subr.mxu0 0.0
      %8398 = vmatpush2.msra.mxu0 0.0
      %8399 = vmatprep.subr.mxu0 0.0
      %8400 = vmatpush2.msra.mxu0 0.0
      %8401 = vmatprep.subr.mxu0 %v8333
      %8402 = vmatpush2.msra.mxu0 %v8332
      %8403 = vmatprep.subr.mxu0 %v8331
      %8404 = vmatpush2.msra.mxu0 %v8330
      %8405 = vmatprep.subr.mxu0 %v8329
      %8406 = vmatpush2.msra.mxu0 %v8328
      %8407 = vmatprep.subr.mxu0 %v8327
      %8408 = vmatpush2.msra.mxu0 %v8326
      %8409 = vmatprep.subr.mxu0 %v8325
      %8410 = vmatpush2.msra.mxu0 %v8324
      %8411 = vmatprep.subr.mxu0 %v8323
      %8412 = vmatpush2.msra.mxu0 %v8322
      %8413 = vmatprep.subr.mxu0 %v8321
      %8414 = vmatpush2.msra.mxu0 %v8320
      %8415 = vmatprep.subr.mxu0 %v8319
      %8416 = vmatpush2.msra.mxu0 %v8318
      %8417 = vmatprep.mubr.f32.mxu0 %v8348
      %8418 = vmatmul.mubr.f32.gmra.mxu0 %v8279
      %v8419 = vpop.f32.mrf.mxu0
      %v8420 = vadd.f32 %v8340, %v8419
      %v8421 = vpop.f32.mrf.mxu0
      %v8422 = vadd.f32 %v8344, %v8421
      %8423 = vmatprep.mubr.f32.mxu0 %v8351
      %8424 = vmatmul.mubr.f32.gmra.mxu0 %v8281
      %v8425 = vpop.f32.mrf.mxu0
      %v8426 = vadd.f32 %v8340, %v8425
      %v8427 = vpop.f32.mrf.mxu0
      %v8428 = vadd.f32 %v8344, %v8427
      %8429 = vdwg.mxu0
      %v8430 = vmax.f32 %v8420, 0.0
      %v8431 = vmax.f32 %v8422, 0.0
      %v8432 = vmax.f32 %v8426, 0.0
      %v8433 = vmax.f32 %v8428, 0.0
      %s8434 = sadd.s32 %s8210, 1
      %s8435 = smul.u32 %s8434, 48
      %s8436 = smul.addr %s8435, 8
      %s8437 = scalar_lea.vmem %s6, %s8436
      %v8438 = vld [vmem:[%s8437] sm:$0xff]
      %v8439 = vld [vmem:[%s8437 + $0x8] sm:$0xff]
      %v8440 = vld [vmem:[%s8437 + $0x10] sm:$0xff]
      %v8441 = vld [vmem:[%s8437 + $0x18] sm:$0xff]
      %v8442 = vld [vmem:[%s8437 + $0x20] sm:$0xff]
      %v8443 = vld [vmem:[%s8437 + $0x28] sm:$0xff]
      %v8444 = vld [vmem:[%s8437 + $0x30] sm:$0xff]
      %v8445 = vld [vmem:[%s8437 + $0x38] sm:$0xff]
      %v8446 = vld [vmem:[%s8437 + $0x40] sm:$0xff]
      %v8447 = vld [vmem:[%s8437 + $0x48] sm:$0xff]
      %v8448 = vld [vmem:[%s8437 + $0x50] sm:$0xff]
      %v8449 = vld [vmem:[%s8437 + $0x58] sm:$0xff]
      %v8450 = vld [vmem:[%s8437 + $0x60] sm:$0xff]
      %v8451 = vld [vmem:[%s8437 + $0x68] sm:$0xff]
      %v8452 = vld [vmem:[%s8437 + $0x70] sm:$0xff]
      %v8453 = vld [vmem:[%s8437 + $0x78] sm:$0xff]
      %v8454 = vld [vmem:[%s8437 + $0x80] sm:$0xff]
      %v8455 = vld [vmem:[%s8437 + $0x88] sm:$0xff]
      %v8456 = vld [vmem:[%s8437 + $0x90] sm:$0xff]
      %v8457 = vld [vmem:[%s8437 + $0x98] sm:$0xff]
      %v8458 = vld [vmem:[%s8437 + $0xa0] sm:$0xff]
      %v8459 = vld [vmem:[%s8437 + $0xa8] sm:$0xff]
      %v8460 = vld [vmem:[%s8437 + $0xb0] sm:$0xff]
      %v8461 = vld [vmem:[%s8437 + $0xb8] sm:$0xff]
      %v8462 = vld [vmem:[%s8437 + $0xc0] sm:$0xff]
      %v8463 = vld [vmem:[%s8437 + $0xc8] sm:$0xff]
      %v8464 = vld [vmem:[%s8437 + $0xd0] sm:$0xff]
      %v8465 = vld [vmem:[%s8437 + $0xd8] sm:$0xff]
      %v8466 = vld [vmem:[%s8437 + $0xe0] sm:$0xff]
      %v8467 = vld [vmem:[%s8437 + $0xe8] sm:$0xff]
      %v8468 = vld [vmem:[%s8437 + $0xf0] sm:$0xff]
      %v8469 = vld [vmem:[%s8437 + $0xf8] sm:$0xff]
      %v8470 = vld [vmem:[%s8437 + $0x100] sm:$0xff]
      %v8471 = vld [vmem:[%s8437 + $0x108] sm:$0xff]
      %v8472 = vld [vmem:[%s8437 + $0x110] sm:$0xff]
      %v8473 = vld [vmem:[%s8437 + $0x118] sm:$0xff]
      %v8474 = vld [vmem:[%s8437 + $0x120] sm:$0xff]
      %v8475 = vld [vmem:[%s8437 + $0x128] sm:$0xff]
      %v8476 = vld [vmem:[%s8437 + $0x130] sm:$0xff]
      %v8477 = vld [vmem:[%s8437 + $0x138] sm:$0xff]
      %v8478 = vld [vmem:[%s8437 + $0x140] sm:$0xff]
      %v8479 = vld [vmem:[%s8437 + $0x148] sm:$0xff]
      %v8480 = vld [vmem:[%s8437 + $0x150] sm:$0xff]
      %v8481 = vld [vmem:[%s8437 + $0x158] sm:$0xff]
      %v8482 = vld [vmem:[%s8437 + $0x160] sm:$0xff]
      %v8483 = vld [vmem:[%s8437 + $0x168] sm:$0xff]
      %v8484 = vld [vmem:[%s8437 + $0x170] sm:$0xff]
      %v8485 = vld [vmem:[%s8437 + $0x178] sm:$0xff]
      %s8486 = smul.u32 %s8434, 2
      %s8487 = scalar_lea.vmem %s7, %s8486
      %v8488 = vld [vmem:[%s8487] sm:$0x3]
      %v8490 = vlaneseq
      %v8491 = vshrl.u32 %v8490, 7
      %v8492 = vsub.s32 0, %v8491
      %v8493 = vrot.slane %v8488, %v8492
      %v8494 = vlaneseq
      %v8495 = vshrl.u32 %v8494, 7
      %v8496 = vsub.s32 1, %v8495
      %v8497 = vrot.slane %v8488, %v8496
      %v8501 = vsel %vm6991, %v8431, 0
      %v8504 = vsel %vm6991, %v8433, 0
      %8506 = vmatprep.subr.mxu0 %v8469
      %8507 = vmatpush1.msra.mxu0 %v8468
      %8508 = vmatprep.subr.mxu0 %v8467
      %8509 = vmatpush1.msra.mxu0 %v8466
      %8510 = vmatprep.subr.mxu0 %v8465
      %8511 = vmatpush1.msra.mxu0 %v8464
      %8512 = vmatprep.subr.mxu0 %v8463
      %8513 = vmatpush1.msra.mxu0 %v8462
      %8514 = vmatprep.subr.mxu0 %v8461
      %8515 = vmatpush1.msra.mxu0 %v8460
      %8516 = vmatprep.subr.mxu0 %v8459
      %8517 = vmatpush1.msra.mxu0 %v8458
      %8518 = vmatprep.subr.mxu0 %v8457
      %8519 = vmatpush1.msra.mxu0 %v8456
      %8520 = vmatprep.subr.mxu0 %v8455
      %8521 = vmatpush1.msra.mxu0 %v8454
      %8522 = vmatprep.subr.mxu0 %v8453
      %8523 = vmatpush1.msra.mxu0 %v8452
      %8524 = vmatprep.subr.mxu0 %v8451
      %8525 = vmatpush1.msra.mxu0 %v8450
      %8526 = vmatprep.subr.mxu0 %v8449
      %8527 = vmatpush1.msra.mxu0 %v8448
      %8528 = vmatprep.subr.mxu0 %v8447
      %8529 = vmatpush1.msra.mxu0 %v8446
      %8530 = vmatprep.subr.mxu0 %v8445
      %8531 = vmatpush1.msra.mxu0 %v8444
      %8532 = vmatprep.subr.mxu0 %v8443
      %8533 = vmatpush1.msra.mxu0 %v8442
      %8534 = vmatprep.subr.mxu0 %v8441
      %8535 = vmatpush1.msra.mxu0 %v8440
      %8536 = vmatprep.subr.mxu0 %v8439
      %8537 = vmatpush1.msra.mxu0 %v8438
      %8538 = vmatprep.subr.mxu0 0.0
      %8539 = vmatpush2.msra.mxu0 0.0
      %8540 = vmatprep.subr.mxu0 0.0
      %8541 = vmatpush2.msra.mxu0 0.0
      %8542 = vmatprep.subr.mxu0 0.0
      %8543 = vmatpush2.msra.mxu0 0.0
      %8544 = vmatprep.subr.mxu0 0.0
      %8545 = vmatpush2.msra.mxu0 0.0
      %8546 = vmatprep.subr.mxu0 0.0
      %8547 = vmatpush2.msra.mxu0 0.0
      %8548 = vmatprep.subr.mxu0 0.0
      %8549 = vmatpush2.msra.mxu0 0.0
      %8550 = vmatprep.subr.mxu0 0.0
      %8551 = vmatpush2.msra.mxu0 0.0
      %8552 = vmatprep.subr.mxu0 0.0
      %8553 = vmatpush2.msra.mxu0 0.0
      %8554 = vmatprep.subr.mxu0 %v8485
      %8555 = vmatpush2.msra.mxu0 %v8484
      %8556 = vmatprep.subr.mxu0 %v8483
      %8557 = vmatpush2.msra.mxu0 %v8482
      %8558 = vmatprep.subr.mxu0 %v8481
      %8559 = vmatpush2.msra.mxu0 %v8480
      %8560 = vmatprep.subr.mxu0 %v8479
      %8561 = vmatpush2.msra.mxu0 %v8478
      %8562 = vmatprep.subr.mxu0 %v8477
      %8563 = vmatpush2.msra.mxu0 %v8476
      %8564 = vmatprep.subr.mxu0 %v8475
      %8565 = vmatpush2.msra.mxu0 %v8474
      %8566 = vmatprep.subr.mxu0 %v8473
      %8567 = vmatpush2.msra.mxu0 %v8472
      %8568 = vmatprep.subr.mxu0 %v8471
      %8569 = vmatpush2.msra.mxu0 %v8470
      %8570 = vmatprep.mubr.f32.mxu0 %v8501
      %8571 = vmatmul.mubr.f32.gmra.mxu0 %v8430
      %v8572 = vpop.f32.mrf.mxu0
      %v8573 = vadd.f32 %v8493, %v8572
      %v8574 = vpop.f32.mrf.mxu0
      %v8575 = vadd.f32 %v8497, %v8574
      %8576 = vmatprep.mubr.f32.mxu0 %v8504
      %8577 = vmatmul.mubr.f32.gmra.mxu0 %v8432
      %v8578 = vpop.f32.mrf.mxu0
      %v8579 = vadd.f32 %v8493, %v8578
      %v8580 = vpop.f32.mrf.mxu0
      %v8581 = vadd.f32 %v8497, %v8580
      %8582 = vdwg.mxu0
      %v8583 = vadd.f32 %v8279, %v8573
      %v8584 = vadd.f32 %v8280, %v8575
      %v8585 = vadd.f32 %v8281, %v8579
      %v8586 = vadd.f32 %v8282, %v8581
      %s8587 = scalar_lea.vmem %s8, %s8486
      %v8588 = vld [vmem:[%s8587] sm:$0x3]
      %s8589 = scalar_lea.vmem %s9, %s8486
      %v8590 = vld [vmem:[%s8589] sm:$0x3]
      %v8591 = vsel %vm6991, %v8584, 0.0
      %v8592 = vadd.f32 %v8583, %v8591
      %8593 = vadd.xlane.f32.xlu0 %v8592
      %v8594 = vpop.xlane.xlu0 %8593
      %v8595 = vsel %vm6991, %v8586, 0.0
      %v8596 = vadd.f32 %v8585, %v8595
      %8597 = vadd.xlane.f32.xlu0 %v8596
      %v8598 = vpop.xlane.xlu0 %8597
      %v8599 = vmul.f32 %v8594, %v8224
      %v8600 = vmul.f32 %v8598, %v8224
      %v8601 = vsub.f32 %v8583, %v8599
      %v8602 = vsub.f32 %v8584, %v8599
      %v8603 = vsub.f32 %v8585, %v8600
      %v8604 = vsub.f32 %v8586, %v8600
      %v8605 = vmul.f32 %v8601, %v8601
      %v8606 = vmul.f32 %v8602, %v8602
      %v8607 = vmul.f32 %v8603, %v8603
      %v8608 = vmul.f32 %v8604, %v8604
      %v8609 = vsel %vm6991, %v8606, 0.0
      %v8610 = vadd.f32 %v8605, %v8609
      %8611 = vadd.xlane.f32.xlu0 %v8610
      %v8612 = vpop.xlane.xlu0 %8611
      %v8613 = vsel %vm6991, %v8608, 0.0
      %v8614 = vadd.f32 %v8607, %v8613
      %8615 = vadd.xlane.f32.xlu0 %v8614
      %v8616 = vpop.xlane.xlu0 %8615
      %v8617 = vmul.f32 %v8612, %v8224
      %v8618 = vmul.f32 %v8616, %v8224
      %v8619 = vadd.f32 %v8617, 1e-05
      %v8620 = vadd.f32 %v8618, 1e-05
      %v8621 = vrsqrt.pop %v8619
      %v8622 = vrsqrt.pop %v8620
      %v8623 = vmul.f32 %v8601, %v8621
      %v8624 = vmul.f32 %v8602, %v8621
      %v8625 = vmul.f32 %v8603, %v8622
      %v8626 = vmul.f32 %v8604, %v8622
      %v8628 = vlaneseq
      %v8629 = vshrl.u32 %v8628, 7
      %v8630 = vsub.s32 0, %v8629
      %v8631 = vrot.slane %v8588, %v8630
      %v8632 = vlaneseq
      %v8633 = vshrl.u32 %v8632, 7
      %v8634 = vsub.s32 1, %v8633
      %v8635 = vrot.slane %v8588, %v8634
      %v8638 = vmul.f32 %v8623, %v8631
      %v8639 = vmul.f32 %v8624, %v8635
      %v8640 = vmul.f32 %v8625, %v8631
      %v8641 = vmul.f32 %v8626, %v8635
      %v8643 = vlaneseq
      %v8644 = vshrl.u32 %v8643, 7
      %v8645 = vsub.s32 0, %v8644
      %v8646 = vrot.slane %v8590, %v8645
      %v8647 = vlaneseq
      %v8648 = vshrl.u32 %v8647, 7
      %v8649 = vsub.s32 1, %v8648
      %v8650 = vrot.slane %v8590, %v8649
      %v8653 = vadd.f32 %v8638, %v8646
      %v8654 = vadd.f32 %v8639, %v8650
      %v8655 = vadd.f32 %v8640, %v8646
      %v8656 = vadd.f32 %v8641, %v8650
    $region82: #{hipt_lgp_fc_forward.1} parent=76 // loop_footer
      %s7012 = sadd.s32 1, %s7008
    $region83: #{hipt_lgp_fc_forward.1} parent=76 // loop_footer_branch
      %7007 = sbr.rel target = $region79
    $region84: #{hipt_lgp_fc_forward.1} parent=76 // loop_exit
      _
    %v8657 = vld [vmem:[%s10] sm:$0xff]
    %v8658 = vld [vmem:[%s10 + $0x8] sm:$0xff]
    %v8659 = vld [vmem:[%s10 + $0x10] sm:$0xff]
    %v8660 = vld [vmem:[%s10 + $0x18] sm:$0xff]
    %v8661 = vld [vmem:[%s10 + $0x20] sm:$0xff]
    %v8662 = vld [vmem:[%s10 + $0x28] sm:$0xff]
    %v8663 = vld [vmem:[%s10 + $0x30] sm:$0xff]
    %v8664 = vld [vmem:[%s10 + $0x38] sm:$0xff]
    %v8665 = vld [vmem:[%s10 + $0x40] sm:$0xff]
    %v8666 = vld [vmem:[%s10 + $0x48] sm:$0xff]
    %v8667 = vld [vmem:[%s10 + $0x50] sm:$0xff]
    %v8668 = vld [vmem:[%s10 + $0x58] sm:$0xff]
    %v8669 = vld [vmem:[%s10 + $0x60] sm:$0xff]
    %v8670 = vld [vmem:[%s10 + $0x68] sm:$0xff]
    %v8671 = vld [vmem:[%s10 + $0x70] sm:$0xff]
    %v8672 = vld [vmem:[%s10 + $0x78] sm:$0xff]
    %v8673 = vld [vmem:[%s10 + $0x80] sm:$0xff]
    %v8674 = vld [vmem:[%s10 + $0x88] sm:$0xff]
    %v8675 = vld [vmem:[%s10 + $0x90] sm:$0xff]
    %v8676 = vld [vmem:[%s10 + $0x98] sm:$0xff]
    %v8677 = vld [vmem:[%s10 + $0xa0] sm:$0xff]
    %v8678 = vld [vmem:[%s10 + $0xa8] sm:$0xff]
    %v8679 = vld [vmem:[%s10 + $0xb0] sm:$0xff]
    %v8680 = vld [vmem:[%s10 + $0xb8] sm:$0xff]
    %v8681 = vld [vmem:[%s10 + $0xc0] sm:$0xff]
    %v8682 = vld [vmem:[%s10 + $0xc8] sm:$0xff]
    %v8683 = vld [vmem:[%s10 + $0xd0] sm:$0xff]
    %v8684 = vld [vmem:[%s10 + $0xd8] sm:$0xff]
    %v8685 = vld [vmem:[%s10 + $0xe0] sm:$0xff]
    %v8686 = vld [vmem:[%s10 + $0xe8] sm:$0xff]
    %v8687 = vld [vmem:[%s10 + $0xf0] sm:$0xff]
    %v8688 = vld [vmem:[%s10 + $0xf8] sm:$0xff]
    %v8689 = vld [vmem:[%s10 + $0x100] sm:$0xff]
    %v8690 = vld [vmem:[%s10 + $0x108] sm:$0xff]
    %v8691 = vld [vmem:[%s10 + $0x110] sm:$0xff]
    %v8692 = vld [vmem:[%s10 + $0x118] sm:$0xff]
    %v8693 = vld [vmem:[%s10 + $0x120] sm:$0xff]
    %v8694 = vld [vmem:[%s10 + $0x128] sm:$0xff]
    %v8695 = vld [vmem:[%s10 + $0x130] sm:$0xff]
    %v8696 = vld [vmem:[%s10 + $0x138] sm:$0xff]
    %v8697 = vld [vmem:[%s10 + $0x140] sm:$0xff]
    %v8698 = vld [vmem:[%s10 + $0x148] sm:$0xff]
    %v8699 = vld [vmem:[%s10 + $0x150] sm:$0xff]
    %v8700 = vld [vmem:[%s10 + $0x158] sm:$0xff]
    %v8701 = vld [vmem:[%s10 + $0x160] sm:$0xff]
    %v8702 = vld [vmem:[%s10 + $0x168] sm:$0xff]
    %v8703 = vld [vmem:[%s10 + $0x170] sm:$0xff]
    %v8704 = vld [vmem:[%s10 + $0x178] sm:$0xff]
    %v8705 = vld [vmem:[%s11] sm:$0x3]
    %v8707 = vlaneseq
    %v8708 = vshrl.u32 %v8707, 7
    %v8709 = vsub.s32 0, %v8708
    %v8710 = vrot.slane %v8705, %v8709
    %v8711 = vlaneseq
    %v8712 = vshrl.u32 %v8711, 7
    %v8713 = vsub.s32 1, %v8712
    %v8714 = vrot.slane %v8705, %v8713
    %v8718 = vsel %vm6991, %v7014, 0
    %v8721 = vsel %vm6991, %v7016, 0
    %8723 = vmatprep.subr.mxu0 %v8688
    %8724 = vmatpush1.msra.mxu0 %v8687
    %8725 = vmatprep.subr.mxu0 %v8686
    %8726 = vmatpush1.msra.mxu0 %v8685
    %8727 = vmatprep.subr.mxu0 %v8684
    %8728 = vmatpush1.msra.mxu0 %v8683
    %8729 = vmatprep.subr.mxu0 %v8682
    %8730 = vmatpush1.msra.mxu0 %v8681
    %8731 = vmatprep.subr.mxu0 %v8680
    %8732 = vmatpush1.msra.mxu0 %v8679
    %8733 = vmatprep.subr.mxu0 %v8678
    %8734 = vmatpush1.msra.mxu0 %v8677
    %8735 = vmatprep.subr.mxu0 %v8676
    %8736 = vmatpush1.msra.mxu0 %v8675
    %8737 = vmatprep.subr.mxu0 %v8674
    %8738 = vmatpush1.msra.mxu0 %v8673
    %8739 = vmatprep.subr.mxu0 %v8672
    %8740 = vmatpush1.msra.mxu0 %v8671
    %8741 = vmatprep.subr.mxu0 %v8670
    %8742 = vmatpush1.msra.mxu0 %v8669
    %8743 = vmatprep.subr.mxu0 %v8668
    %8744 = vmatpush1.msra.mxu0 %v8667
    %8745 = vmatprep.subr.mxu0 %v8666
    %8746 = vmatpush1.msra.mxu0 %v8665
    %8747 = vmatprep.subr.mxu0 %v8664
    %8748 = vmatpush1.msra.mxu0 %v8663
    %8749 = vmatprep.subr.mxu0 %v8662
    %8750 = vmatpush1.msra.mxu0 %v8661
    %8751 = vmatprep.subr.mxu0 %v8660
    %8752 = vmatpush1.msra.mxu0 %v8659
    %8753 = vmatprep.subr.mxu0 %v8658
    %8754 = vmatpush1.msra.mxu0 %v8657
    %8755 = vmatprep.subr.mxu0 0.0
    %8756 = vmatpush2.msra.mxu0 0.0
    %8757 = vmatprep.subr.mxu0 0.0
    %8758 = vmatpush2.msra.mxu0 0.0
    %8759 = vmatprep.subr.mxu0 0.0
    %8760 = vmatpush2.msra.mxu0 0.0
    %8761 = vmatprep.subr.mxu0 0.0
    %8762 = vmatpush2.msra.mxu0 0.0
    %8763 = vmatprep.subr.mxu0 0.0
    %8764 = vmatpush2.msra.mxu0 0.0
    %8765 = vmatprep.subr.mxu0 0.0
    %8766 = vmatpush2.msra.mxu0 0.0
    %8767 = vmatprep.subr.mxu0 0.0
    %8768 = vmatpush2.msra.mxu0 0.0
    %8769 = vmatprep.subr.mxu0 0.0
    %8770 = vmatpush2.msra.mxu0 0.0
    %8771 = vmatprep.subr.mxu0 %v8704
    %8772 = vmatpush2.msra.mxu0 %v8703
    %8773 = vmatprep.subr.mxu0 %v8702
    %8774 = vmatpush2.msra.mxu0 %v8701
    %8775 = vmatprep.subr.mxu0 %v8700
    %8776 = vmatpush2.msra.mxu0 %v8699
    %8777 = vmatprep.subr.mxu0 %v8698
    %8778 = vmatpush2.msra.mxu0 %v8697
    %8779 = vmatprep.subr.mxu0 %v8696
    %8780 = vmatpush2.msra.mxu0 %v8695
    %8781 = vmatprep.subr.mxu0 %v8694
    %8782 = vmatpush2.msra.mxu0 %v8693
    %8783 = vmatprep.subr.mxu0 %v8692
    %8784 = vmatpush2.msra.mxu0 %v8691
    %8785 = vmatprep.subr.mxu0 %v8690
    %8786 = vmatpush2.msra.mxu0 %v8689
    %8787 = vmatprep.mubr.f32.mxu0 %v8718
    %8788 = vmatmul.mubr.f32.gmra.mxu0 %v7013
    %v8789 = vpop.f32.mrf.mxu0
    %v8790 = vadd.f32 %v8710, %v8789
    %v8791 = vpop.f32.mrf.mxu0
    %v8792 = vadd.f32 %v8714, %v8791
    %8793 = vmatprep.mubr.f32.mxu0 %v8721
    %8794 = vmatmul.mubr.f32.gmra.mxu0 %v7015
    %v8795 = vpop.f32.mrf.mxu0
    %v8796 = vadd.f32 %v8710, %v8795
    %v8797 = vpop.f32.mrf.mxu0
    %v8798 = vadd.f32 %v8714, %v8797
    %8799 = vdwg.mxu0
    %v8800 = vtanh.pop %v8790
    %v8801 = vtanh.pop %v8792
    %v8802 = vtanh.pop %v8796
    %v8803 = vtanh.pop %v8798
    %s8804 = scalar_lea.vmem %s10, 384
    %v8805 = vld [vmem:[%s8804] sm:$0xff]
    %v8806 = vld [vmem:[%s8804 + $0x8] sm:$0xff]
    %v8807 = vld [vmem:[%s8804 + $0x10] sm:$0xff]
    %v8808 = vld [vmem:[%s8804 + $0x18] sm:$0xff]
    %v8809 = vld [vmem:[%s8804 + $0x20] sm:$0xff]
    %v8810 = vld [vmem:[%s8804 + $0x28] sm:$0xff]
    %v8811 = vld [vmem:[%s8804 + $0x30] sm:$0xff]
    %v8812 = vld [vmem:[%s8804 + $0x38] sm:$0xff]
    %v8813 = vld [vmem:[%s8804 + $0x40] sm:$0xff]
    %v8814 = vld [vmem:[%s8804 + $0x48] sm:$0xff]
    %v8815 = vld [vmem:[%s8804 + $0x50] sm:$0xff]
    %v8816 = vld [vmem:[%s8804 + $0x58] sm:$0xff]
    %v8817 = vld [vmem:[%s8804 + $0x60] sm:$0xff]
    %v8818 = vld [vmem:[%s8804 + $0x68] sm:$0xff]
    %v8819 = vld [vmem:[%s8804 + $0x70] sm:$0xff]
    %v8820 = vld [vmem:[%s8804 + $0x78] sm:$0xff]
    %v8821 = vld [vmem:[%s8804 + $0x80] sm:$0xff]
    %v8822 = vld [vmem:[%s8804 + $0x88] sm:$0xff]
    %v8823 = vld [vmem:[%s8804 + $0x90] sm:$0xff]
    %v8824 = vld [vmem:[%s8804 + $0x98] sm:$0xff]
    %v8825 = vld [vmem:[%s8804 + $0xa0] sm:$0xff]
    %v8826 = vld [vmem:[%s8804 + $0xa8] sm:$0xff]
    %v8827 = vld [vmem:[%s8804 + $0xb0] sm:$0xff]
    %v8828 = vld [vmem:[%s8804 + $0xb8] sm:$0xff]
    %v8829 = vld [vmem:[%s8804 + $0xc0] sm:$0xff]
    %v8830 = vld [vmem:[%s8804 + $0xc8] sm:$0xff]
    %v8831 = vld [vmem:[%s8804 + $0xd0] sm:$0xff]
    %v8832 = vld [vmem:[%s8804 + $0xd8] sm:$0xff]
    %v8833 = vld [vmem:[%s8804 + $0xe0] sm:$0xff]
    %v8834 = vld [vmem:[%s8804 + $0xe8] sm:$0xff]
    %v8835 = vld [vmem:[%s8804 + $0xf0] sm:$0xff]
    %v8836 = vld [vmem:[%s8804 + $0xf8] sm:$0xff]
    %v8837 = vld [vmem:[%s8804 + $0x100] sm:$0xff]
    %v8838 = vld [vmem:[%s8804 + $0x108] sm:$0xff]
    %v8839 = vld [vmem:[%s8804 + $0x110] sm:$0xff]
    %v8840 = vld [vmem:[%s8804 + $0x118] sm:$0xff]
    %v8841 = vld [vmem:[%s8804 + $0x120] sm:$0xff]
    %v8842 = vld [vmem:[%s8804 + $0x128] sm:$0xff]
    %v8843 = vld [vmem:[%s8804 + $0x130] sm:$0xff]
    %v8844 = vld [vmem:[%s8804 + $0x138] sm:$0xff]
    %v8845 = vld [vmem:[%s8804 + $0x140] sm:$0xff]
    %v8846 = vld [vmem:[%s8804 + $0x148] sm:$0xff]
    %v8847 = vld [vmem:[%s8804 + $0x150] sm:$0xff]
    %v8848 = vld [vmem:[%s8804 + $0x158] sm:$0xff]
    %v8849 = vld [vmem:[%s8804 + $0x160] sm:$0xff]
    %v8850 = vld [vmem:[%s8804 + $0x168] sm:$0xff]
    %v8851 = vld [vmem:[%s8804 + $0x170] sm:$0xff]
    %v8852 = vld [vmem:[%s8804 + $0x178] sm:$0xff]
    %s8853 = scalar_lea.vmem %s11, 2
    %v8854 = vld [vmem:[%s8853] sm:$0x3]
    %v8856 = vlaneseq
    %v8857 = vshrl.u32 %v8856, 7
    %v8858 = vsub.s32 0, %v8857
    %v8859 = vrot.slane %v8854, %v8858
    %v8860 = vlaneseq
    %v8861 = vshrl.u32 %v8860, 7
    %v8862 = vsub.s32 1, %v8861
    %v8863 = vrot.slane %v8854, %v8862
    %8866 = vmatprep.subr.mxu0 %v8836
    %8867 = vmatpush1.msra.mxu0 %v8835
    %8868 = vmatprep.subr.mxu0 %v8834
    %8869 = vmatpush1.msra.mxu0 %v8833
    %8870 = vmatprep.subr.mxu0 %v8832
    %8871 = vmatpush1.msra.mxu0 %v8831
    %8872 = vmatprep.subr.mxu0 %v8830
    %8873 = vmatpush1.msra.mxu0 %v8829
    %8874 = vmatprep.subr.mxu0 %v8828
    %8875 = vmatpush1.msra.mxu0 %v8827
    %8876 = vmatprep.subr.mxu0 %v8826
    %8877 = vmatpush1.msra.mxu0 %v8825
    %8878 = vmatprep.subr.mxu0 %v8824
    %8879 = vmatpush1.msra.mxu0 %v8823
    %8880 = vmatprep.subr.mxu0 %v8822
    %8881 = vmatpush1.msra.mxu0 %v8821
    %8882 = vmatprep.subr.mxu0 %v8820
    %8883 = vmatpush1.msra.mxu0 %v8819
    %8884 = vmatprep.subr.mxu0 %v8818
    %8885 = vmatpush1.msra.mxu0 %v8817
    %8886 = vmatprep.subr.mxu0 %v8816
    %8887 = vmatpush1.msra.mxu0 %v8815
    %8888 = vmatprep.subr.mxu0 %v8814
    %8889 = vmatpush1.msra.mxu0 %v8813
    %8890 = vmatprep.subr.mxu0 %v8812
    %8891 = vmatpush1.msra.mxu0 %v8811
    %8892 = vmatprep.subr.mxu0 %v8810
    %8893 = vmatpush1.msra.mxu0 %v8809
    %8894 = vmatprep.subr.mxu0 %v8808
    %8895 = vmatpush1.msra.mxu0 %v8807
    %8896 = vmatprep.subr.mxu0 %v8806
    %8897 = vmatpush1.msra.mxu0 %v8805
    %8898 = vmatprep.subr.mxu0 0.0
    %8899 = vmatpush2.msra.mxu0 0.0
    %8900 = vmatprep.subr.mxu0 0.0
    %8901 = vmatpush2.msra.mxu0 0.0
    %8902 = vmatprep.subr.mxu0 0.0
    %8903 = vmatpush2.msra.mxu0 0.0
    %8904 = vmatprep.subr.mxu0 0.0
    %8905 = vmatpush2.msra.mxu0 0.0
    %8906 = vmatprep.subr.mxu0 0.0
    %8907 = vmatpush2.msra.mxu0 0.0
    %8908 = vmatprep.subr.mxu0 0.0
    %8909 = vmatpush2.msra.mxu0 0.0
    %8910 = vmatprep.subr.mxu0 0.0
    %8911 = vmatpush2.msra.mxu0 0.0
    %8912 = vmatprep.subr.mxu0 0.0
    %8913 = vmatpush2.msra.mxu0 0.0
    %8914 = vmatprep.subr.mxu0 %v8852
    %8915 = vmatpush2.msra.mxu0 %v8851
    %8916 = vmatprep.subr.mxu0 %v8850
    %8917 = vmatpush2.msra.mxu0 %v8849
    %8918 = vmatprep.subr.mxu0 %v8848
    %8919 = vmatpush2.msra.mxu0 %v8847
    %8920 = vmatprep.subr.mxu0 %v8846
    %8921 = vmatpush2.msra.mxu0 %v8845
    %8922 = vmatprep.subr.mxu0 %v8844
    %8923 = vmatpush2.msra.mxu0 %v8843
    %8924 = vmatprep.subr.mxu0 %v8842
    %8925 = vmatpush2.msra.mxu0 %v8841
    %8926 = vmatprep.subr.mxu0 %v8840
    %8927 = vmatpush2.msra.mxu0 %v8839
    %8928 = vmatprep.subr.mxu0 %v8838
    %8929 = vmatpush2.msra.mxu0 %v8837
    %8930 = vmatprep.mubr.f32.mxu0 %v8718
    %8931 = vmatmul.mubr.f32.gmra.mxu0 %v7013
    %v8932 = vpop.f32.mrf.mxu0
    %v8933 = vadd.f32 %v8859, %v8932
    %v8934 = vpop.f32.mrf.mxu0
    %v8935 = vadd.f32 %v8863, %v8934
    %8936 = vmatprep.mubr.f32.mxu0 %v8721
    %8937 = vmatmul.mubr.f32.gmra.mxu0 %v7015
    %v8938 = vpop.f32.mrf.mxu0
    %v8939 = vadd.f32 %v8859, %v8938
    %v8940 = vpop.f32.mrf.mxu0
    %v8941 = vadd.f32 %v8863, %v8940
    %8942 = vdwg.mxu0
    %v8943 = vxor.u32 %v8933, 2147483648
    %v8944 = vxor.u32 %v8935, 2147483648
    %v8945 = vxor.u32 %v8939, 2147483648
    %v8946 = vxor.u32 %v8941, 2147483648
    %v8947 = vmul.f32 %v8943, 1.442695
    %v8948 = vpow.pop %v8947
    %v8949 = vmul.f32 %v8944, 1.442695
    %v8950 = vpow.pop %v8949
    %v8951 = vmul.f32 %v8945, 1.442695
    %v8952 = vpow.pop %v8951
    %v8953 = vmul.f32 %v8946, 1.442695
    %v8954 = vpow.pop %v8953
    %v8955 = vadd.f32 %v8948, 1.0
    %v8956 = vadd.f32 %v8950, 1.0
    %v8957 = vadd.f32 %v8952, 1.0
    %v8958 = vadd.f32 %v8954, 1.0
    %v8959 = vrcp.pop %v8955
    %v8960 = vmul.f32 1.0, %v8959
    %v8961 = vrcp.pop %v8956
    %v8962 = vmul.f32 1.0, %v8961
    %v8963 = vrcp.pop %v8957
    %v8964 = vmul.f32 1.0, %v8963
    %v8965 = vrcp.pop %v8958
    %v8966 = vmul.f32 1.0, %v8965
    %v8967 = vmul.f32 %v8800, %v8960
    %v8968 = vmul.f32 %v8801, %v8962
    %v8969 = vmul.f32 %v8802, %v8964
    %v8970 = vmul.f32 %v8803, %v8966
    %v8971 = vld [vmem:[%s12] sm:$0xff]
    %v8972 = vld [vmem:[%s12 + $0x8] sm:$0xff]
    %v8973 = vld [vmem:[%s12 + $0x10] sm:$0xff]
    %v8974 = vld [vmem:[%s12 + $0x18] sm:$0xff]
    %v8975 = vld [vmem:[%s12 + $0x20] sm:$0xff]
    %v8976 = vld [vmem:[%s12 + $0x28] sm:$0xff]
    %v8977 = vld [vmem:[%s12 + $0x30] sm:$0xff]
    %v8978 = vld [vmem:[%s12 + $0x38] sm:$0xff]
    %v8979 = vld [vmem:[%s12 + $0x40] sm:$0xff]
    %v8980 = vld [vmem:[%s12 + $0x48] sm:$0xff]
    %v8981 = vld [vmem:[%s12 + $0x50] sm:$0xff]
    %v8982 = vld [vmem:[%s12 + $0x58] sm:$0xff]
    %v8983 = vld [vmem:[%s12 + $0x60] sm:$0xff]
    %v8984 = vld [vmem:[%s12 + $0x68] sm:$0xff]
    %v8985 = vld [vmem:[%s12 + $0x70] sm:$0xff]
    %v8986 = vld [vmem:[%s12 + $0x78] sm:$0xff]
    %v8987 = vld [vmem:[%s12 + $0x80] sm:$0xff]
    %v8988 = vld [vmem:[%s12 + $0x88] sm:$0xff]
    %v8989 = vld [vmem:[%s12 + $0x90] sm:$0xff]
    %v8990 = vld [vmem:[%s12 + $0x98] sm:$0xff]
    %v8991 = vld [vmem:[%s12 + $0xa0] sm:$0xff]
    %v8992 = vld [vmem:[%s12 + $0xa8] sm:$0xff]
    %v8993 = vld [vmem:[%s12 + $0xb0] sm:$0xff]
    %v8994 = vld [vmem:[%s12 + $0xb8] sm:$0xff]
    %v8995 = vld [vmem:[#allocation3] sm:$0x1]
    %v8997 = vlaneseq
    %v8998 = vshrl.u32 %v8997, 7
    %v8999 = vsub.s32 0, %v8998
    %v9000 = vrot.slane %v8995, %v8999
    %v9003 = vsel %vm6991, %v8968, 0
    %v9006 = vsel %vm6991, %v8970, 0
    %9008 = vmatprep.subr.mxu0 0.0
    %9009 = vmatpush1.msra.mxu0 %v8986
    %9010 = vmatprep.subr.mxu0 0.0
    %9011 = vmatpush1.msra.mxu0 %v8985
    %9012 = vmatprep.subr.mxu0 0.0
    %9013 = vmatpush1.msra.mxu0 %v8984
    %9014 = vmatprep.subr.mxu0 0.0
    %9015 = vmatpush1.msra.mxu0 %v8983
    %9016 = vmatprep.subr.mxu0 0.0
    %9017 = vmatpush1.msra.mxu0 %v8982
    %9018 = vmatprep.subr.mxu0 0.0
    %9019 = vmatpush1.msra.mxu0 %v8981
    %9020 = vmatprep.subr.mxu0 0.0
    %9021 = vmatpush1.msra.mxu0 %v8980
    %9022 = vmatprep.subr.mxu0 0.0
    %9023 = vmatpush1.msra.mxu0 %v8979
    %9024 = vmatprep.subr.mxu0 0.0
    %9025 = vmatpush1.msra.mxu0 %v8978
    %9026 = vmatprep.subr.mxu0 0.0
    %9027 = vmatpush1.msra.mxu0 %v8977
    %9028 = vmatprep.subr.mxu0 0.0
    %9029 = vmatpush1.msra.mxu0 %v8976
    %9030 = vmatprep.subr.mxu0 0.0
    %9031 = vmatpush1.msra.mxu0 %v8975
    %9032 = vmatprep.subr.mxu0 0.0
    %9033 = vmatpush1.msra.mxu0 %v8974
    %9034 = vmatprep.subr.mxu0 0.0
    %9035 = vmatpush1.msra.mxu0 %v8973
    %9036 = vmatprep.subr.mxu0 0.0
    %9037 = vmatpush1.msra.mxu0 %v8972
    %9038 = vmatprep.subr.mxu0 0.0
    %9039 = vmatpush1.msra.mxu0 %v8971
    %9040 = vmatprep.subr.mxu0 0.0
    %9041 = vmatpush2.msra.mxu0 0.0
    %9042 = vmatprep.subr.mxu0 0.0
    %9043 = vmatpush2.msra.mxu0 0.0
    %9044 = vmatprep.subr.mxu0 0.0
    %9045 = vmatpush2.msra.mxu0 0.0
    %9046 = vmatprep.subr.mxu0 0.0
    %9047 = vmatpush2.msra.mxu0 0.0
    %9048 = vmatprep.subr.mxu0 0.0
    %9049 = vmatpush2.msra.mxu0 0.0
    %9050 = vmatprep.subr.mxu0 0.0
    %9051 = vmatpush2.msra.mxu0 0.0
    %9052 = vmatprep.subr.mxu0 0.0
    %9053 = vmatpush2.msra.mxu0 0.0
    %9054 = vmatprep.subr.mxu0 0.0
    %9055 = vmatpush2.msra.mxu0 0.0
    %9056 = vmatprep.subr.mxu0 0.0
    %9057 = vmatpush2.msra.mxu0 %v8994
    %9058 = vmatprep.subr.mxu0 0.0
    %9059 = vmatpush2.msra.mxu0 %v8993
    %9060 = vmatprep.subr.mxu0 0.0
    %9061 = vmatpush2.msra.mxu0 %v8992
    %9062 = vmatprep.subr.mxu0 0.0
    %9063 = vmatpush2.msra.mxu0 %v8991
    %9064 = vmatprep.subr.mxu0 0.0
    %9065 = vmatpush2.msra.mxu0 %v8990
    %9066 = vmatprep.subr.mxu0 0.0
    %9067 = vmatpush2.msra.mxu0 %v8989
    %9068 = vmatprep.subr.mxu0 0.0
    %9069 = vmatpush2.msra.mxu0 %v8988
    %9070 = vmatprep.subr.mxu0 0.0
    %9071 = vmatpush2.msra.mxu0 %v8987
    %9072 = vmatprep.mubr.f32.mxu0 %v9003
    %9073 = vmatmul.mubr.f32.gmra.mxu0 %v8967
    %v9074 = vpop.f32.mrf.mxu0
    %v9075 = vadd.f32 %v9000, %v9074
    %v9076 = vpop.f32.mrf.mxu0
    %9077 = vmatprep.mubr.f32.mxu0 %v9006
    %9078 = vmatmul.mubr.f32.gmra.mxu0 %v8969
    %v9079 = vpop.f32.mrf.mxu0
    %v9080 = vadd.f32 %v9000, %v9079
    %v9081 = vpop.f32.mrf.mxu0
    %9082 = vdwg.mxu0
    %v9083 = vlaneseq
    %v9084 = vshrl.u32 %v9083, 7
    %v9085 = vadd.s32 %v9084, 8
    %vm9086 = vcmp.lt.s32.totalorder %v9084, 12
    %vm9087 = vcmp.lt.s32.totalorder %v9085, 12
    %v9088 = vsel %vm9086, %v9075, -1e+30
    %v9089 = vsel %vm9087, %v9080, -1e+30
    %vm9090 = vcmask 7168
    %v9091 = vsel %vm9090, %v9088, -inf
    %v9092 = vsel %vm9090, %v9089, -inf
    %v9093 = vmax.f32 %v9091, %v9092
    %v9094 = vrot.slane %v9093, 4
    %v9095 = vmax.f32 %v9093, %v9094
    %v9096 = vrot.slane %v9095, 2
    %v9097 = vmax.f32 %v9095, %v9096
    %v9098 = vrot.slane %v9097, 1
    %v9099 = vmax.f32 %v9097, %v9098
    %v9100 = vsub.f32 %v9088, %v9099
    %v9101 = vsub.f32 %v9089, %v9099
    %v9102 = vmul.f32 %v9100, 1.442695
    %v9103 = vpow.pop %v9102
    %v9104 = vmul.f32 %v9101, 1.442695
    %v9105 = vpow.pop %v9104
    %v9106 = vsel %vm9090, %v9103, 0.0
    %v9107 = vsel %vm9090, %v9105, 0.0
    %v9108 = vadd.f32 %v9106, %v9107
    %v9109 = vrot.slane %v9108, 4
    %v9110 = vadd.f32 %v9108, %v9109
    %v9111 = vrot.slane %v9110, 2
    %v9112 = vadd.f32 %v9110, %v9111
    %v9113 = vrot.slane %v9112, 1
    %v9114 = vadd.f32 %v9112, %v9113
    %v9115 = vrcp.pop %v9114
    %v9116 = vmul.f32 %v9103, %v9115
    %v9117 = vmul.f32 %v9105, %v9115
    %9118 = vxpose.xlu0.b32.start [1/16] %v9116, 128
    %9119 = vxpose.xlu0.b32.cont [2/16] %v9117, 128
    %9120 = vxpose.xlu0.b32.cont [3/16] 0.0, 128
    %9121 = vxpose.xlu0.b32.cont [4/16] 0.0, 128
    %9122 = vxpose.xlu0.b32.cont [5/16] 0.0, 128
    %9123 = vxpose.xlu0.b32.cont [6/16] 0.0, 128
    %9124 = vxpose.xlu0.b32.cont [7/16] 0.0, 128
    %9125 = vxpose.xlu0.b32.cont [8/16] 0.0, 128
    %9126 = vxpose.xlu0.b32.cont [9/16] 0.0, 128
    %9127 = vxpose.xlu0.b32.cont [10/16] 0.0, 128
    %9128 = vxpose.xlu0.b32.cont [11/16] 0.0, 128
    %9129 = vxpose.xlu0.b32.cont [12/16] 0.0, 128
    %9130 = vxpose.xlu0.b32.cont [13/16] 0.0, 128
    %9131 = vxpose.xlu0.b32.cont [14/16] 0.0, 128
    %9132 = vxpose.xlu0.b32.cont [15/16] 0.0, 128
    %9133 = vxpose.xlu0.b32.end [16/16] 0.0, 128
    %v9134 = vpop.trf.xlu0
    %v9135 = vpop.trf.xlu0
    %v9136 = vpop.trf.xlu0
    %v9137 = vpop.trf.xlu0
    %v9138 = vpop.trf.xlu0
    %v9139 = vpop.trf.xlu0
    %v9140 = vpop.trf.xlu0
    %v9141 = vpop.trf.xlu0
    %v9142 = vpop.trf.xlu0
    %v9143 = vpop.trf.xlu0
    %v9144 = vpop.trf.xlu0
    %v9145 = vpop.trf.xlu0
    %v9146 = vpop.trf.xlu0
    %v9147 = vpop.trf.xlu0
    %v9148 = vpop.trf.xlu0
    %v9149 = vpop.trf.xlu0
    %vm9150 = vcmask 130048
    %v9152 = vsel %vm9150, %v9134, 0
    %9154 = vmatprep.subr.mxu0 0.0
    %9155 = vmatpush1.msra.mxu0 0.0
    %9156 = vmatprep.subr.mxu0 0.0
    %9157 = vmatpush1.msra.mxu0 0.0
    %9158 = vmatprep.subr.mxu0 0.0
    %9159 = vmatpush1.msra.mxu0 0.0
    %9160 = vmatprep.subr.mxu0 0.0
    %9161 = vmatpush1.msra.mxu0 0.0
    %9162 = vmatprep.subr.mxu0 0.0
    %9163 = vmatpush1.msra.mxu0 0.0
    %9164 = vmatprep.subr.mxu0 0.0
    %9165 = vmatpush1.msra.mxu0 0.0
    %9166 = vmatprep.subr.mxu0 0.0
    %9167 = vmatpush1.msra.mxu0 0.0
    %9168 = vmatprep.subr.mxu0 0.0
    %9169 = vmatpush1.msra.mxu0 0.0
    %9170 = vmatprep.subr.mxu0 0.0
    %9171 = vmatpush1.msra.mxu0 0.0
    %9172 = vmatprep.subr.mxu0 0.0
    %9173 = vmatpush1.msra.mxu0 0.0
    %9174 = vmatprep.subr.mxu0 0.0
    %9175 = vmatpush1.msra.mxu0 0.0
    %9176 = vmatprep.subr.mxu0 0.0
    %9177 = vmatpush1.msra.mxu0 0.0
    %9178 = vmatprep.subr.mxu0 0.0
    %9179 = vmatpush1.msra.mxu0 0.0
    %9180 = vmatprep.subr.mxu0 0.0
    %9181 = vmatpush1.msra.mxu0 0.0
    %9182 = vmatprep.subr.mxu0 %v7016
    %9183 = vmatpush1.msra.mxu0 %v7015
    %9184 = vmatprep.subr.mxu0 %v7014
    %9185 = vmatpush1.msra.mxu0 %v7013
    %9186 = vmatprep.subr.mxu0 0.0
    %9187 = vmatpush2.msra.mxu0 0.0
    %9188 = vmatprep.subr.mxu0 0.0
    %9189 = vmatpush2.msra.mxu0 0.0
    %9190 = vmatprep.subr.mxu0 0.0
    %9191 = vmatpush2.msra.mxu0 0.0
    %9192 = vmatprep.subr.mxu0 0.0
    %9193 = vmatpush2.msra.mxu0 0.0
    %9194 = vmatprep.subr.mxu0 0.0
    %9195 = vmatpush2.msra.mxu0 0.0
    %9196 = vmatprep.subr.mxu0 0.0
    %9197 = vmatpush2.msra.mxu0 0.0
    %9198 = vmatprep.subr.mxu0 0.0
    %9199 = vmatpush2.msra.mxu0 0.0
    %9200 = vmatprep.subr.mxu0 0.0
    %9201 = vmatpush2.msra.mxu0 0.0
    %9202 = vmatprep.subr.mxu0 0.0
    %9203 = vmatpush2.msra.mxu0 0.0
    %9204 = vmatprep.subr.mxu0 0.0
    %9205 = vmatpush2.msra.mxu0 0.0
    %9206 = vmatprep.subr.mxu0 0.0
    %9207 = vmatpush2.msra.mxu0 0.0
    %9208 = vmatprep.subr.mxu0 0.0
    %9209 = vmatpush2.msra.mxu0 0.0
    %9210 = vmatprep.subr.mxu0 0.0
    %9211 = vmatpush2.msra.mxu0 0.0
    %9212 = vmatprep.subr.mxu0 0.0
    %9213 = vmatpush2.msra.mxu0 0.0
    %9214 = vmatprep.subr.mxu0 0.0
    %9215 = vmatpush2.msra.mxu0 0.0
    %9216 = vmatprep.subr.mxu0 0.0
    %9217 = vmatpush2.msra.mxu0 0.0
    %9218 = vmatprep.mubr.f32.mxu0 0.0
    %9219 = vmatmul.mubr.f32.gmra.mxu0 %v9152
    %v9220 = vpop.f32.mrf.mxu0
    %v9221 = vadd.f32 0.0, %v9220
    %v9222 = vpop.f32.mrf.mxu0
    %v9223 = vadd.f32 0.0, %v9222
    %9224 = vdwg.mxu0
    %v9225 = vld [vmem:[%s14] sm:$0xff]
    %v9226 = vld [vmem:[%s14 + $0x8] sm:$0xff]
    %v9227 = vld [vmem:[%s14 + $0x10] sm:$0xff]
    %v9228 = vld [vmem:[%s14 + $0x18] sm:$0xff]
    %v9229 = vld [vmem:[%s14 + $0x20] sm:$0xff]
    %v9230 = vld [vmem:[%s14 + $0x28] sm:$0xff]
    %v9231 = vld [vmem:[%s14 + $0x30] sm:$0xff]
    %v9232 = vld [vmem:[%s14 + $0x38] sm:$0xff]
    %v9233 = vld [vmem:[%s14 + $0x40] sm:$0xff]
    %v9234 = vld [vmem:[%s14 + $0x48] sm:$0xff]
    %v9235 = vld [vmem:[%s14 + $0x50] sm:$0xff]
    %v9236 = vld [vmem:[%s14 + $0x58] sm:$0xff]
    %v9237 = vld [vmem:[%s14 + $0x60] sm:$0xff]
    %v9238 = vld [vmem:[%s14 + $0x68] sm:$0xff]
    %v9239 = vld [vmem:[%s14 + $0x70] sm:$0xff]
    %v9240 = vld [vmem:[%s14 + $0x78] sm:$0xff]
    %v9241 = vld [vmem:[%s14 + $0x80] sm:$0xff]
    %v9242 = vld [vmem:[%s14 + $0x88] sm:$0xff]
    %v9243 = vld [vmem:[%s14 + $0x90] sm:$0xff]
    %v9244 = vld [vmem:[%s14 + $0x98] sm:$0xff]
    %v9245 = vld [vmem:[%s14 + $0xa0] sm:$0xff]
    %v9246 = vld [vmem:[%s14 + $0xa8] sm:$0xff]
    %v9247 = vld [vmem:[%s14 + $0xb0] sm:$0xff]
    %v9248 = vld [vmem:[%s14 + $0xb8] sm:$0xff]
    %v9249 = vld [vmem:[%s14 + $0xc0] sm:$0xff]
    %v9250 = vld [vmem:[%s14 + $0xc8] sm:$0xff]
    %v9251 = vld [vmem:[%s14 + $0xd0] sm:$0xff]
    %v9252 = vld [vmem:[%s14 + $0xd8] sm:$0xff]
    %v9253 = vld [vmem:[%s14 + $0xe0] sm:$0xff]
    %v9254 = vld [vmem:[%s14 + $0xe8] sm:$0xff]
    %v9255 = vld [vmem:[%s14 + $0xf0] sm:$0xff]
    %v9256 = vld [vmem:[%s14 + $0xf8] sm:$0xff]
    %v9257 = vld [vmem:[%s14 + $0x100] sm:$0xff]
    %v9258 = vld [vmem:[%s14 + $0x108] sm:$0xff]
    %v9259 = vld [vmem:[%s14 + $0x110] sm:$0xff]
    %v9260 = vld [vmem:[%s14 + $0x118] sm:$0xff]
    %v9261 = vld [vmem:[%s14 + $0x120] sm:$0xff]
    %v9262 = vld [vmem:[%s14 + $0x128] sm:$0xff]
    %v9263 = vld [vmem:[%s14 + $0x130] sm:$0xff]
    %v9264 = vld [vmem:[%s14 + $0x138] sm:$0xff]
    %v9265 = vld [vmem:[%s14 + $0x140] sm:$0xff]
    %v9266 = vld [vmem:[%s14 + $0x148] sm:$0xff]
    %v9267 = vld [vmem:[%s14 + $0x150] sm:$0xff]
    %v9268 = vld [vmem:[%s14 + $0x158] sm:$0xff]
    %v9269 = vld [vmem:[%s14 + $0x160] sm:$0xff]
    %v9270 = vld [vmem:[%s14 + $0x168] sm:$0xff]
    %v9271 = vld [vmem:[%s14 + $0x170] sm:$0xff]
    %v9272 = vld [vmem:[%s14 + $0x178] sm:$0xff]
    %v9273 = vld [vmem:[%s15] sm:$0x3]
    %v9275 = vlaneseq
    %v9276 = vshrl.u32 %v9275, 7
    %v9277 = vsub.s32 0, %v9276
    %v9278 = vrot.slane %v9273, %v9277
    %v9279 = vlaneseq
    %v9280 = vshrl.u32 %v9279, 7
    %v9281 = vsub.s32 1, %v9280
    %v9282 = vrot.slane %v9273, %v9281
    %v9286 = vsel %vm6991, %v9223, 0
    %9288 = vmatprep.subr.mxu0 %v9256
    %9289 = vmatpush1.msra.mxu0 %v9255
    %9290 = vmatprep.subr.mxu0 %v9254
    %9291 = vmatpush1.msra.mxu0 %v9253
    %9292 = vmatprep.subr.mxu0 %v9252
    %9293 = vmatpush1.msra.mxu0 %v9251
    %9294 = vmatprep.subr.mxu0 %v9250
    %9295 = vmatpush1.msra.mxu0 %v9249
    %9296 = vmatprep.subr.mxu0 %v9248
    %9297 = vmatpush1.msra.mxu0 %v9247
    %9298 = vmatprep.subr.mxu0 %v9246
    %9299 = vmatpush1.msra.mxu0 %v9245
    %9300 = vmatprep.subr.mxu0 %v9244
    %9301 = vmatpush1.msra.mxu0 %v9243
    %9302 = vmatprep.subr.mxu0 %v9242
    %9303 = vmatpush1.msra.mxu0 %v9241
    %9304 = vmatprep.subr.mxu0 %v9240
    %9305 = vmatpush1.msra.mxu0 %v9239
    %9306 = vmatprep.subr.mxu0 %v9238
    %9307 = vmatpush1.msra.mxu0 %v9237
    %9308 = vmatprep.subr.mxu0 %v9236
    %9309 = vmatpush1.msra.mxu0 %v9235
    %9310 = vmatprep.subr.mxu0 %v9234
    %9311 = vmatpush1.msra.mxu0 %v9233
    %9312 = vmatprep.subr.mxu0 %v9232
    %9313 = vmatpush1.msra.mxu0 %v9231
    %9314 = vmatprep.subr.mxu0 %v9230
    %9315 = vmatpush1.msra.mxu0 %v9229
    %9316 = vmatprep.subr.mxu0 %v9228
    %9317 = vmatpush1.msra.mxu0 %v9227
    %9318 = vmatprep.subr.mxu0 %v9226
    %9319 = vmatpush1.msra.mxu0 %v9225
    %9320 = vmatprep.subr.mxu0 0.0
    %9321 = vmatpush2.msra.mxu0 0.0
    %9322 = vmatprep.subr.mxu0 0.0
    %9323 = vmatpush2.msra.mxu0 0.0
    %9324 = vmatprep.subr.mxu0 0.0
    %9325 = vmatpush2.msra.mxu0 0.0
    %9326 = vmatprep.subr.mxu0 0.0
    %9327 = vmatpush2.msra.mxu0 0.0
    %9328 = vmatprep.subr.mxu0 0.0
    %9329 = vmatpush2.msra.mxu0 0.0
    %9330 = vmatprep.subr.mxu0 0.0
    %9331 = vmatpush2.msra.mxu0 0.0
    %9332 = vmatprep.subr.mxu0 0.0
    %9333 = vmatpush2.msra.mxu0 0.0
    %9334 = vmatprep.subr.mxu0 0.0
    %9335 = vmatpush2.msra.mxu0 0.0
    %9336 = vmatprep.subr.mxu0 %v9272
    %9337 = vmatpush2.msra.mxu0 %v9271
    %9338 = vmatprep.subr.mxu0 %v9270
    %9339 = vmatpush2.msra.mxu0 %v9269
    %9340 = vmatprep.subr.mxu0 %v9268
    %9341 = vmatpush2.msra.mxu0 %v9267
    %9342 = vmatprep.subr.mxu0 %v9266
    %9343 = vmatpush2.msra.mxu0 %v9265
    %9344 = vmatprep.subr.mxu0 %v9264
    %9345 = vmatpush2.msra.mxu0 %v9263
    %9346 = vmatprep.subr.mxu0 %v9262
    %9347 = vmatpush2.msra.mxu0 %v9261
    %9348 = vmatprep.subr.mxu0 %v9260
    %9349 = vmatpush2.msra.mxu0 %v9259
    %9350 = vmatprep.subr.mxu0 %v9258
    %9351 = vmatpush2.msra.mxu0 %v9257
    %9352 = vmatprep.mubr.f32.mxu0 %v9286
    %9353 = vmatmul.mubr.f32.gmra.mxu0 %v9221
    %v9354 = vpop.f32.mrf.mxu0
    %v9355 = vadd.f32 %v9278, %v9354
    %v9356 = vpop.f32.mrf.mxu0
    %v9357 = vadd.f32 %v9282, %v9356
    %9358 = vdwg.mxu0
    %v9359 = vmax.f32 %v9355, 0.0
    %v9360 = vmax.f32 %v9357, 0.0
    %v9361 = vld [vmem:[%s16] sm:$0xff]
    %v9362 = vld [vmem:[%s16 + $0x8] sm:$0xff]
    %v9363 = vld [vmem:[%s16 + $0x10] sm:$0xff]
    %v9364 = vld [vmem:[%s16 + $0x18] sm:$0xff]
    %v9365 = vld [vmem:[%s16 + $0x20] sm:$0xff]
    %v9366 = vld [vmem:[%s16 + $0x28] sm:$0xff]
    %v9367 = vld [vmem:[%s16 + $0x30] sm:$0xff]
    %v9368 = vld [vmem:[%s16 + $0x38] sm:$0xff]
    %v9369 = vld [vmem:[%s16 + $0x40] sm:$0xff]
    %v9370 = vld [vmem:[%s16 + $0x48] sm:$0xff]
    %v9371 = vld [vmem:[%s16 + $0x50] sm:$0xff]
    %v9372 = vld [vmem:[%s16 + $0x58] sm:$0xff]
    %v9373 = vld [vmem:[%s16 + $0x60] sm:$0xff]
    %v9374 = vld [vmem:[%s16 + $0x68] sm:$0xff]
    %v9375 = vld [vmem:[%s16 + $0x70] sm:$0xff]
    %v9376 = vld [vmem:[%s16 + $0x78] sm:$0xff]
    %v9377 = vld [vmem:[%s16 + $0x80] sm:$0xff]
    %v9378 = vld [vmem:[%s16 + $0x88] sm:$0xff]
    %v9379 = vld [vmem:[%s16 + $0x90] sm:$0xff]
    %v9380 = vld [vmem:[%s16 + $0x98] sm:$0xff]
    %v9381 = vld [vmem:[%s16 + $0xa0] sm:$0xff]
    %v9382 = vld [vmem:[%s16 + $0xa8] sm:$0xff]
    %v9383 = vld [vmem:[%s16 + $0xb0] sm:$0xff]
    %v9384 = vld [vmem:[%s16 + $0xb8] sm:$0xff]
    %v9385 = vld [vmem:[%s17] sm:$0x1]
    %v9387 = vsel %vm6991, %v9360, 0
    %9389 = vmatprep.subr.mxu0 0.0
    %9390 = vmatpush1.msra.mxu0 %v9376
    %9391 = vmatprep.subr.mxu0 0.0
    %9392 = vmatpush1.msra.mxu0 %v9375
    %9393 = vmatprep.subr.mxu0 0.0
    %9394 = vmatpush1.msra.mxu0 %v9374
    %9395 = vmatprep.subr.mxu0 0.0
    %9396 = vmatpush1.msra.mxu0 %v9373
    %9397 = vmatprep.subr.mxu0 0.0
    %9398 = vmatpush1.msra.mxu0 %v9372
    %9399 = vmatprep.subr.mxu0 0.0
    %9400 = vmatpush1.msra.mxu0 %v9371
    %9401 = vmatprep.subr.mxu0 0.0
    %9402 = vmatpush1.msra.mxu0 %v9370
    %9403 = vmatprep.subr.mxu0 0.0
    %9404 = vmatpush1.msra.mxu0 %v9369
    %9405 = vmatprep.subr.mxu0 0.0
    %9406 = vmatpush1.msra.mxu0 %v9368
    %9407 = vmatprep.subr.mxu0 0.0
    %9408 = vmatpush1.msra.mxu0 %v9367
    %9409 = vmatprep.subr.mxu0 0.0
    %9410 = vmatpush1.msra.mxu0 %v9366
    %9411 = vmatprep.subr.mxu0 0.0
    %9412 = vmatpush1.msra.mxu0 %v9365
    %9413 = vmatprep.subr.mxu0 0.0
    %9414 = vmatpush1.msra.mxu0 %v9364
    %9415 = vmatprep.subr.mxu0 0.0
    %9416 = vmatpush1.msra.mxu0 %v9363
    %9417 = vmatprep.subr.mxu0 0.0
    %9418 = vmatpush1.msra.mxu0 %v9362
    %9419 = vmatprep.subr.mxu0 0.0
    %9420 = vmatpush1.msra.mxu0 %v9361
    %9421 = vmatprep.subr.mxu0 0.0
    %9422 = vmatpush2.msra.mxu0 0.0
    %9423 = vmatprep.subr.mxu0 0.0
    %9424 = vmatpush2.msra.mxu0 0.0
    %9425 = vmatprep.subr.mxu0 0.0
    %9426 = vmatpush2.msra.mxu0 0.0
    %9427 = vmatprep.subr.mxu0 0.0
    %9428 = vmatpush2.msra.mxu0 0.0
    %9429 = vmatprep.subr.mxu0 0.0
    %9430 = vmatpush2.msra.mxu0 0.0
    %9431 = vmatprep.subr.mxu0 0.0
    %9432 = vmatpush2.msra.mxu0 0.0
    %9433 = vmatprep.subr.mxu0 0.0
    %9434 = vmatpush2.msra.mxu0 0.0
    %9435 = vmatprep.subr.mxu0 0.0
    %9436 = vmatpush2.msra.mxu0 0.0
    %9437 = vmatprep.subr.mxu0 0.0
    %9438 = vmatpush2.msra.mxu0 %v9384
    %9439 = vmatprep.subr.mxu0 0.0
    %9440 = vmatpush2.msra.mxu0 %v9383
    %9441 = vmatprep.subr.mxu0 0.0
    %9442 = vmatpush2.msra.mxu0 %v9382
    %9443 = vmatprep.subr.mxu0 0.0
    %9444 = vmatpush2.msra.mxu0 %v9381
    %9445 = vmatprep.subr.mxu0 0.0
    %9446 = vmatpush2.msra.mxu0 %v9380
    %9447 = vmatprep.subr.mxu0 0.0
    %9448 = vmatpush2.msra.mxu0 %v9379
    %9449 = vmatprep.subr.mxu0 0.0
    %9450 = vmatpush2.msra.mxu0 %v9378
    %9451 = vmatprep.subr.mxu0 0.0
    %9452 = vmatpush2.msra.mxu0 %v9377
    %9453 = vmatprep.mubr.f32.mxu0 %v9387
    %9454 = vmatmul.mubr.f32.gmra.mxu0 %v9359
    %v9455 = vpop.f32.mrf.mxu0
    %v9456 = vadd.f32 %v9385, %v9455
    %v9457 = vpop.f32.mrf.mxu0
    %9458 = vdwg.mxu0
    %vm9459 = vcmask 24576
    %9460 = vst.msk [vmem:[%s18] sm:$0x1] %vm9459, %v9456
  $region77: #{hipt_lgp_fc_forward.1} parent=0 // pred_fallthru
    _
  // Predicated region
  $region85: #{hipt_lgp_fc_forward.1} parent=0 // pred_check
    _
  $region86: #{hipt_lgp_fc_forward.1} parent=0 // pred_check_branch
    %9462 = sbr.rel (0) target = $region88
  $region87: #{hipt_lgp_fc_forward.1} parent=0 // pred_region
    _
  $region88: #{hipt_lgp_fc_forward.1} parent=0 // pred_fallthru
    _
  // Predicated region
  $region89: #{hipt_lgp_fc_forward.1} parent=0 // pred_check
    _
  $region90: #{hipt_lgp_fc_forward.1} parent=0 // pred_check_branch
    %9464 = sbr.rel (0) target = $region92
  $region91: #{hipt_lgp_fc_forward.1} parent=0 // pred_region
    _
  $region92: #{hipt_lgp_fc_forward.1} parent=0 // pred_fallthru
    _

</llo_original>
